<compile_context>
chip_gen: v6e
topology: v6e:2x2x1
jax: 0.10.0
libtpu: 0.0.40
codegen_flags: <defaults>
</compile_context>

<pallas_src>
import math
import functools

import jax
import jax.numpy as jnp
from jax.experimental import pallas as pl
from jax.experimental.pallas import tpu as pltpu

NEG_INF = -1e9
PREFIX = 4  # image prefix tokens


# ----------------------------------------------------------------------------
# in-kernel helpers (traced inside Pallas kernels)
# ----------------------------------------------------------------------------

def _ln(x, g, b, eps):
    mu = jnp.mean(x, axis=-1, keepdims=True)
    xc = x - mu
    var = jnp.mean(xc * xc, axis=-1, keepdims=True)
    return xc * jax.lax.rsqrt(var + eps) * g + b


def _log_softmax(x):
    m = jnp.max(x, axis=-1, keepdims=True)
    s = x - m
    return s - jnp.log(jnp.sum(jnp.exp(s), axis=-1, keepdims=True))


def _mha(q_all, k_all, v_all, bias, wo, bo, nhead, scale, exact_softmax=False):
    """Multi-head attention with the output projection folded per head.

    q_all:(Lq,D)  k_all/v_all:(Lk,D)  bias:(1,Lk) or (Lq,Lk)  wo:(D,D)  bo:(1,D)
    Returns (out:(Lq,D), p_sum:(Lq,Lk) = sum over heads of attn probabilities).
    No lane-dim concatenation: out = bo + sum_h o_h @ wo[h*Dh:(h+1)*Dh, :].
    """
    Lq, D = q_all.shape
    Dh = D // nhead
    out = jnp.zeros((Lq, D), jnp.float32)
    p_sum = None
    for h in range(nhead):
        sl = slice(h * Dh, (h + 1) * Dh)
        s = jnp.einsum("qd,kd->qk", q_all[:, sl], k_all[:, sl],
                       preferred_element_type=jnp.float32) * scale + bias
        m = jnp.max(s, axis=-1, keepdims=True)
        e = jnp.exp(s - m)
        den = jnp.sum(e, axis=-1, keepdims=True)
        if exact_softmax:
            p = e / den
        else:
            p = e * pl.reciprocal(den, approx=True)
        o_h = jnp.dot(p, v_all[:, sl], preferred_element_type=jnp.float32)
        out = out + jnp.dot(o_h, wo[sl, :], preferred_element_type=jnp.float32)
        p_sum = p if p_sum is None else p_sum + p
    return out + bo, p_sum


# ----------------------------------------------------------------------------
# Pallas kernels
# ----------------------------------------------------------------------------

def _img_stem_kernel(img_ref, w1_ref, b1_ref, w2_ref, b2_ref, o_ref):
    # TODO(synk): surrogate for the timm 'nf_resnet26' backbone (the real model
    # emits 1000 features; surrogate uses a lane-aligned 1024-wide hidden).
    h = jnp.maximum(
        jnp.dot(img_ref[...], w1_ref[...], preferred_element_type=jnp.float32)
        + b1_ref[...], 0.0)
    o_ref[...] = jnp.dot(h, w2_ref[...], preferred_element_type=jnp.float32) + b2_ref[...]


def _encoder_stack_kernel(x_ref, kbias_ref, wqkv_ref, wo_ref, w1_ref, w2_ref,
                          slab_ref, o_ref, *, nhead, eps):
    """Whole encoder stack; grid=(B, L_enc). The output block (constant across the
    layer axis) is the VMEM-resident activation carry."""
    l = pl.program_id(1)

    @pl.when(l == 0)
    def _():
        o_ref[0] = x_ref[0]

    x = o_ref[0]                        # (Ls, D) running activation
    kbias = kbias_ref[0]                # (1, Ls) additive key-padding bias
    slab = slab_ref[0]                  # (8, W) packed biases / LN params
    D = x.shape[-1]
    dff = w1_ref.shape[-1]
    scale = 1.0 / math.sqrt(D // nhead)

    # fused QKV projection + self-attention
    qkv = jnp.dot(x, wqkv_ref[0], preferred_element_type=jnp.float32) + slab[0:1, :3 * D]
    attn, _ = _mha(qkv[:, :D], qkv[:, D:2 * D], qkv[:, 2 * D:], kbias,
                   wo_ref[0], slab[1:2, :D], nhead, scale)
    x = _ln(x + attn, slab[2:3, :D], slab[3:4, :D], eps)

    # feed-forward
    f = jnp.maximum(
        jnp.dot(x, w1_ref[0], preferred_element_type=jnp.float32) + slab[4:5, :dff], 0.0)
    f = jnp.dot(f, w2_ref[0], preferred_element_type=jnp.float32) + slab[5:6, :D]
    o_ref[0] = _ln(x + f, slab[6:7, :D], slab[7:8, :D], eps)


def _decoder_stack_kernel(tgt_ref, mem_ref, kbias_ref,
                          sa_wqkv_ref, sa_wo_ref,
                          ca_wq_ref, ca_wkv_ref, ca_wo_ref,
                          w1_ref, w2_ref, slab_ref,
                          head_w_ref, head_b_ref,
                          logits_ref, idx_ref,
                          y_scr,
                          *, nhead, eps, prefix, n_op):
    """Whole decoder stack + fused op/tok heads + pointer log-probs;
    grid=(B, L_dec). Activation carried in a VMEM scratch; heads and pointer
    log-probs only computed/written on the last layer iteration."""
    l = pl.program_id(1)
    nl = pl.num_programs(1)

    @pl.when(l == 0)
    def _():
        y_scr[...] = tgt_ref[0]

    y = y_scr[...]                      # (Ne, D)
    mem = mem_ref[0]                    # (Ls, D)
    kbias = kbias_ref[0]                # (1, Ls)
    slab = slab_ref[0]                  # (16, W)
    Ne, D = y.shape
    dff = w1_ref.shape[-1]
    scale = 1.0 / math.sqrt(D // nhead)

    # causal mask built in-kernel (no HBM traffic)
    row = jax.lax.broadcasted_iota(jnp.int32, (Ne, Ne), 0)
    col = jax.lax.broadcasted_iota(jnp.int32, (Ne, Ne), 1)
    causal_bias = jnp.where(col > row, NEG_INF, 0.0).astype(jnp.float32)

    # --- masked self-attention ------------------------------------------------
    qkv = jnp.dot(y, sa_wqkv_ref[0], preferred_element_type=jnp.float32) + slab[0:1, :3 * D]
    sa, _ = _mha(qkv[:, :D], qkv[:, D:2 * D], qkv[:, 2 * D:], causal_bias,
                 sa_wo_ref[0], slab[1:2, :D], nhead, scale)
    y = _ln(y + sa, slab[2:3, :D], slab[3:4, :D], eps)

    # --- cross-attention (exact softmax: probabilities feed pointer log-probs) --
    q = jnp.dot(y, ca_wq_ref[0], preferred_element_type=jnp.float32) + slab[4:5, :D]
    kv = jnp.dot(mem, ca_wkv_ref[0], preferred_element_type=jnp.float32) + slab[5:6, :2 * D]
    ca, p_sum = _mha(q, kv[:, :D], kv[:, D:], kbias, ca_wo_ref[0], slab[6:7, :D],
                     nhead, scale, exact_softmax=True)
    y = _ln(y + ca, slab[7:8, :D], slab[8:9, :D], eps)

    # --- feed-forward ------------------------------------------------------------
    f = jnp.maximum(
        jnp.dot(y, w1_ref[0], preferred_element_type=jnp.float32) + slab[9:10, :dff], 0.0)
    f = jnp.dot(f, w2_ref[0], preferred_element_type=jnp.float32) + slab[10:11, :D]
    y = _ln(y + f, slab[11:12, :D], slab[12:13, :D], eps)

    y_scr[...] = y

    # --- last layer only: pointer/idx log-probs + fused op/tok heads -------------
    @pl.when(l == nl - 1)
    def _():
        w_avg = p_sum * (1.0 / nhead)                          # head-avg (Ne, Ls)
        iw = jnp.log(jnp.clip(w_avg, 1e-7, 1.0 - 1e-7))[:, prefix:]
        idx_ref[0] = _log_softmax(iw)
        logits = jnp.dot(y, head_w_ref[...],
                         preferred_element_type=jnp.float32) + head_b_ref[...]
        logits_ref[0] = jnp.concatenate(
            [_log_softmax(logits[:, :n_op]), _log_softmax(logits[:, n_op:])], axis=-1)


# ----------------------------------------------------------------------------
# Kernel wrappers
# ----------------------------------------------------------------------------

_STACK_SEM = pltpu.CompilerParams(
    dimension_semantics=("parallel", "arbitrary"))   # batch parallel (v7x 2 TCs), layer sequential


def image_stem(imgs_flat, params):
    B = imgs_flat.shape[0]
    F2 = params["img_w2"].shape[1]
    return pl.pallas_call(
        _img_stem_kernel,
        out_shape=jax.ShapeDtypeStruct((B, F2), jnp.float32),
    )(imgs_flat, params["img_w1"], params["img_b1"],
      params["img_w2"], params["img_b2"])


def encoder_stack(x, kbias, p, nhead, eps):
    B, Ls, D = x.shape
    Le = p["enc_wqkv"].shape[0]
    dff = p["enc_w1"].shape[-1]
    R, W = p["enc_slab"].shape[1:]
    return pl.pallas_call(
        functools.partial(_encoder_stack_kernel, nhead=nhead, eps=eps),
        grid=(B, Le),
        out_shape=jax.ShapeDtypeStruct((B, Ls, D), jnp.float32),
        in_specs=[
            pl.BlockSpec((1, Ls, D), lambda b, l: (b, 0, 0)),
            pl.BlockSpec((1, 1, Ls), lambda b, l: (b, 0, 0)),
            pl.BlockSpec((1, D, 3 * D), lambda b, l: (l, 0, 0)),
            pl.BlockSpec((1, D, D), lambda b, l: (l, 0, 0)),
            pl.BlockSpec((1, D, dff), lambda b, l: (l, 0, 0)),
            pl.BlockSpec((1, dff, D), lambda b, l: (l, 0, 0)),
            pl.BlockSpec((1, R, W), lambda b, l: (l, 0, 0)),
        ],
        out_specs=pl.BlockSpec((1, Ls, D), lambda b, l: (b, 0, 0)),
        compiler_params=_STACK_SEM,
    )(x, kbias, p["enc_wqkv"], p["enc_wo"], p["enc_w1"], p["enc_w2"], p["enc_slab"])


def decoder_stack(tgt, mem, kbias, p, nhead, eps, prefix, n_op):
    B, Ne, D = tgt.shape
    Ls = mem.shape[1]
    Ld = p["dec_sa_wqkv"].shape[0]
    dff = p["dec_w1"].shape[-1]
    R, W = p["dec_slab"].shape[1:]
    n_tot = p["head_w"].shape[-1]
    logits_ls, idx_probs = pl.pallas_call(
        functools.partial(_decoder_stack_kernel, nhead=nhead, eps=eps,
                          prefix=prefix, n_op=n_op),
        grid=(B, Ld),
        out_shape=[jax.ShapeDtypeStruct((B, Ne, n_tot), jnp.float32),
                   jax.ShapeDtypeStruct((B, Ne, Ls - prefix), jnp.float32)],
        in_specs=[
            pl.BlockSpec((1, Ne, D), lambda b, l: (b, 0, 0)),
            pl.BlockSpec((1, Ls, D), lambda b, l: (b, 0, 0)),
            pl.BlockSpec((1, 1, Ls), lambda b, l: (b, 0, 0)),
            pl.BlockSpec((1, D, 3 * D), lambda b, l: (l, 0, 0)),
            pl.BlockSpec((1, D, D), lambda b, l: (l, 0, 0)),
            pl.BlockSpec((1, D, D), lambda b, l: (l, 0, 0)),
            pl.BlockSpec((1, D, 2 * D), lambda b, l: (l, 0, 0)),
            pl.BlockSpec((1, D, D), lambda b, l: (l, 0, 0)),
            pl.BlockSpec((1, D, dff), lambda b, l: (l, 0, 0)),
            pl.BlockSpec((1, dff, D), lambda b, l: (l, 0, 0)),
            pl.BlockSpec((1, R, W), lambda b, l: (l, 0, 0)),
            pl.BlockSpec((D, n_tot), lambda b, l: (0, 0)),
            pl.BlockSpec((1, n_tot), lambda b, l: (0, 0)),
        ],
        out_specs=[pl.BlockSpec((1, Ne, n_tot), lambda b, l: (b, 0, 0)),
                   pl.BlockSpec((1, Ne, Ls - prefix), lambda b, l: (b, 0, 0))],
        scratch_shapes=[pltpu.VMEM((Ne, D), jnp.float32)],
        compiler_params=_STACK_SEM,
    )(tgt, mem, kbias,
      p["dec_sa_wqkv"], p["dec_sa_wo"],
      p["dec_ca_wq"], p["dec_ca_wkv"], p["dec_ca_wo"],
      p["dec_w1"], p["dec_w2"], p["dec_slab"],
      p["head_w"], p["head_b"])
    return logits_ls, idx_probs


# ----------------------------------------------------------------------------
# Parameter initialization (synthetic; stacked per-layer weights + packed bias slabs)
# ----------------------------------------------------------------------------

def _uni(key, shape, lim):
    return jax.random.uniform(key, shape, jnp.float32, -lim, lim)


def _pack_rows(rows, width, total_rows):
    padded = []
    for r in rows:
        r = r.reshape(1, -1)
        padded.append(jnp.pad(r, ((0, 0), (0, width - r.shape[1]))))
    slab = jnp.concatenate(padded, axis=0)
    if slab.shape[0] < total_rows:
        slab = jnp.pad(slab, ((0, total_rows - slab.shape[0]), (0, 0)))
    return slab


def sinusoidal_table(max_len, d_model):
    pos = jnp.arange(max_len, dtype=jnp.float32)[:, None]
    div = jnp.exp(jnp.arange(0, d_model, 2, dtype=jnp.float32)
                  * (-math.log(10000.0) / d_model))
    pe = jnp.zeros((max_len, d_model), jnp.float32)
    pe = pe.at[:, 0::2].set(jnp.sin(pos * div))
    pe = pe.at[:, 1::2].set(jnp.cos(pos * div))
    return pe


def init_evolver_params(key, cfg, img_hw):
    d, dff, v = cfg["d_model"], cfg["dim_feedforward"], cfg["vocab_size"]
    W = max(3 * d, dff)
    li, lf = 1.0 / math.sqrt(d), 1.0 / math.sqrt(dff)
    ks = jax.random.split(key, 9)

    def enc_layer(k):
        kk = jax.random.split(k, 8)
        slab = _pack_rows(
            [_uni(kk[1], (3 * d,), li),                         # bqkv
             _uni(kk[3], (d,), li),                             # bo
             jnp.ones((d,), jnp.float32), jnp.zeros((d,), jnp.float32),   # ln1
             _uni(kk[5], (dff,), li),                           # b1
             _uni(kk[7], (d,), lf),                             # b2
             jnp.ones((d,), jnp.float32), jnp.zeros((d,), jnp.float32)],  # ln2
            W, 8)
        return dict(wqkv=_uni(kk[0], (d, 3 * d), li),
                    wo=_uni(kk[2], (d, d), li),
                    w1=_uni(kk[4], (d, dff), li),
                    w2=_uni(kk[6], (dff, d), lf),
                    slab=slab)

    def dec_layer(k):
        kk = jax.random.split(k, 14)
        slab = _pack_rows(
            [_uni(kk[1], (3 * d,), li),                         # sa_bqkv
             _uni(kk[3], (d,), li),                             # sa_bo
             jnp.ones((d,), jnp.float32), jnp.zeros((d,), jnp.float32),   # ln1
             _uni(kk[5], (d,), li),                             # ca_bq
             _uni(kk[7], (2 * d,), li),                         # ca_bkv
             _uni(kk[9], (d,), li),                             # ca_bo
             jnp.ones((d,), jnp.float32), jnp.zeros((d,), jnp.float32),   # ln2
             _uni(kk[11], (dff,), li),                          # b1
             _uni(kk[13], (d,), lf),                            # b2
             jnp.ones((d,), jnp.float32), jnp.zeros((d,), jnp.float32)],  # ln3
            W, 16)
        return dict(sa_wqkv=_uni(kk[0], (d, 3 * d), li),
                    sa_wo=_uni(kk[2], (d, d), li),
                    ca_wq=_uni(kk[4], (d, d), li),
                    ca_wkv=_uni(kk[6], (d, 2 * d), li),
                    ca_wo=_uni(kk[8], (d, d), li),
                    w1=_uni(kk[10], (d, dff), li),
                    w2=_uni(kk[12], (dff, d), lf),
                    slab=slab)

    enc = [enc_layer(k) for k in jax.random.split(ks[5], cfg["encoder_layers"])]
    dec = [dec_layer(k) for k in jax.random.split(ks[6], cfg["decoder_layers"])]

    def stack(layers, name):
        return jnp.stack([lyr[name] for lyr in layers], axis=0)

    hidden = 1024  # TODO(synk): nf_resnet26 backbone emits 1000 feats; surrogate uses 1024 (lane aligned).
    return {
        "tok_emb": jax.random.normal(ks[0], (v, d), jnp.float32),
        "pe": sinusoidal_table(cfg["max_len"] + 1, d),
        "img_w1": _uni(ks[1], (img_hw, hidden), 1.0 / math.sqrt(img_hw)),
        "img_b1": _uni(ks[2], (1, hidden), 1.0 / math.sqrt(img_hw)),
        "img_w2": _uni(ks[3], (hidden, PREFIX * d), 1.0 / math.sqrt(hidden)),
        "img_b2": _uni(ks[4], (1, PREFIX * d), 1.0 / math.sqrt(hidden)),
        # op_head (d->3) and tok_head (d->vocab) concatenated into one matmul
        "head_w": _uni(ks[7], (d, 3 + v), li),
        "head_b": _uni(ks[8], (1, 3 + v), li),
        "enc_wqkv": stack(enc, "wqkv"), "enc_wo": stack(enc, "wo"),
        "enc_w1": stack(enc, "w1"), "enc_w2": stack(enc, "w2"),
        "enc_slab": stack(enc, "slab"),
        "dec_sa_wqkv": stack(dec, "sa_wqkv"), "dec_sa_wo": stack(dec, "sa_wo"),
        "dec_ca_wq": stack(dec, "ca_wq"), "dec_ca_wkv": stack(dec, "ca_wkv"),
        "dec_ca_wo": stack(dec, "ca_wo"),
        "dec_w1": stack(dec, "w1"), "dec_w2": stack(dec, "w2"),
        "dec_slab": stack(dec, "slab"),
        # MultiheadPointer is constructed by the module but unused in forward().
    }


# ----------------------------------------------------------------------------
# Evolver forward
# ----------------------------------------------------------------------------

def evolver_forward(params, imgs, input_ids, edit_ids, cfg):
    op_ids, tok_ids, idx_ids = edit_ids
    B, N = input_ids.shape
    Ne = op_ids.shape[1]
    d_model = cfg["d_model"]
    H = cfg["nhead"]
    eps = cfg["layer_norm_eps"]
    prefix = PREFIX
    pe = params["pe"]
    sqrt_d = math.sqrt(d_model)

    # key-padding additive bias (B, 1, 4+N): broadcast happens inside the kernels
    attn_mask = (input_ids == cfg["pad_token_id"])
    concat_attn_mask = jnp.concatenate(
        [jnp.zeros((B, prefix), dtype=bool), attn_mask], axis=1)
    kbias = jnp.where(concat_attn_mask, NEG_INF, 0.0).astype(jnp.float32)[:, None, :]

    # ImageEncoder (surrogate backbone + ffn, whole batch in one program)
    img_emb = image_stem(imgs.reshape(B, -1), params)             # (B, 4*d)
    img_emb = img_emb.reshape(B, prefix, d_model)

    # embed(input_ids)
    tok_table = params["tok_emb"]
    inp_emb = jnp.take(tok_table, input_ids, axis=0) * sqrt_d + pe[:N][None]
    src = jnp.concatenate([img_emb, inp_emb], axis=1)              # (B, 4+N, d)

    # encoder (all layers in ONE pallas_call)
    mem = encoder_stack(src, kbias, params, H, eps)                # (B, 4+N, d)

    # compute_tgt (static=False path) — data-dependent gathers stay in JAX
    # TODO(synk): could be folded into the decoder call via a one-hot (Ne,N)x(N,D) matmul.
    mem_tok = mem[:, prefix:] - pe[:N][None]       # positional_embedding(mem, d=-1)
    bidx = jnp.arange(B)[:, None]
    idx_safe = jnp.clip(idx_ids, 0, N - 1)         # -1 entries are masked out anyway
    permuted_mem = mem_tok[bidx, idx_safe]                         # (B, Ne, d)
    permuted_input_ids = input_ids[bidx, idx_safe]                 # (B, Ne)
    tok_safe = jnp.clip(tok_ids, 0, cfg["vocab_size"] - 1)
    new_emb = jnp.take(tok_table, tok_safe, axis=0) * sqrt_d
    old_emb = jnp.take(tok_table, permuted_input_ids, axis=0) * sqrt_d
    ins_mask = (op_ids == 0)[..., None]
    cpy_mask = (op_ids == 1)[..., None]
    sub_mask = (op_ids == 2)[..., None]
    tgt = jnp.zeros((B, Ne, d_model), jnp.float32)
    tgt = jnp.where(cpy_mask, permuted_mem, tgt)
    tgt = jnp.where(ins_mask, new_emb, tgt)
    tgt = jnp.where(sub_mask, permuted_mem - old_emb + new_emb, tgt)
    tgt = tgt + pe[:Ne][None]                      # positional_embedding(tgt, d=1)

    # decoder + pointer log-probs + fused op/tok heads (all in ONE pallas_call)
    logits_ls, idx_probs = decoder_stack(tgt, mem, kbias, params, H, eps, prefix, n_op=3)
    op_probs = logits_ls[..., :3]
    tok_probs = logits_ls[..., 3:]

    return (op_probs, tok_probs, idx_probs), tgt


# ----------------------------------------------------------------------------
# Main
# ----------------------------------------------------------------------------

if __name__ == "__main__":
    cfg = dict(d_model=32, dim_feedforward=64, nhead=4, dropout=0.0,
               layer_norm_eps=1e-5, encoder_layers=2, decoder_layers=2,
               vocab_size=16, max_len=16, pad_token_id=0, bos_token_id=1,
               eos_token_id=2, root_id=3)

    B, N, Ne, IMG = 2, 8, 8, 16
    key = jax.random.PRNGKey(0)
    k_param, k_img, k_inp, k_op, k_tok, k_idx = jax.random.split(key, 6)

    params = init_evolver_params(k_param, cfg, img_hw=IMG * IMG)

    imgs = jax.random.normal(k_img, (B, 1, IMG, IMG), jnp.float32)   # NCHW, in_chans=1

    input_ids = jax.random.randint(k_inp, (B, N), 3, cfg["vocab_size"], jnp.int32)
    input_ids = input_ids.at[:, 0].set(cfg["bos_token_id"])
    input_ids = input_ids.at[:, 1].set(cfg["root_id"])
    input_ids = input_ids.at[:, 2].set(cfg["eos_token_id"])
    input_ids = input_ids.at[:, -2:].set(cfg["pad_token_id"])        # some padding

    op_ids = jax.random.randint(k_op, (B, Ne), 0, 3, jnp.int32)      # 0=INS 1=CPY 2=SUB
    tok_ids = jax.random.randint(k_tok, (B, Ne), 0, cfg["vocab_size"], jnp.int32)
    idx_ids = jax.random.randint(k_idx, (B, Ne), 0, N, jnp.int32)

    fwd = jax.jit(lambda im, ii, op, tk, ix:
                  evolver_forward(params, im, ii, (op, tk, ix), cfg))
    (op_probs, tok_probs, idx_probs), tgt = fwd(imgs, input_ids, op_ids, tok_ids, idx_ids)

    jax.block_until_ready((op_probs, tok_probs, idx_probs, tgt))
    assert op_probs.shape == (B, Ne, 3)
    assert tok_probs.shape == (B, Ne, cfg["vocab_size"])
    assert idx_probs.shape == (B, Ne, N)
    assert tgt.shape == (B, Ne, cfg["d_model"])
    print("KERNEL_OK")
</pallas_src>

<mosaic_0001>
module attributes {stable_mosaic.version = 11 : i64} {
  func.func @_img_stem_kernel(%arg0: memref<2x256xf32, #tpu.memory_space<vmem>>, %arg1: memref<256x1024xf32, #tpu.memory_space<vmem>>, %arg2: memref<1x1024xf32, #tpu.memory_space<vmem>>, %arg3: memref<1024x128xf32, #tpu.memory_space<vmem>>, %arg4: memref<1x128xf32, #tpu.memory_space<vmem>>, %arg5: memref<2x128xf32, #tpu.memory_space<vmem>>) attributes {dimension_semantics = [], scalar_prefetch = 0 : i64, scratch_operands = 0 : i64, tpu.core_type = #tpu.core_type<tc>} {
    %c0 = arith.constant 0 : index
    %c0_0 = arith.constant 0 : index
    %0 = vector.load %arg0[%c0, %c0_0] : memref<2x256xf32, #tpu.memory_space<vmem>>, vector<2x256xf32>
    %c0_1 = arith.constant 0 : index
    %c0_2 = arith.constant 0 : index
    %1 = vector.load %arg1[%c0_1, %c0_2] : memref<256x1024xf32, #tpu.memory_space<vmem>>, vector<256x1024xf32>
    %cst = arith.constant dense<0.000000e+00> : vector<2x1024xf32>
    %2 = tpu.matmul %0, %1, %cst {dimension_numbers = #tpu.dot_dimension_numbers<[1], [0], [0], [1], [0, 0, 1, 1], [], []>} : vector<2x256xf32>, vector<256x1024xf32>, vector<2x1024xf32> -> vector<2x1024xf32>
    %c0_3 = arith.constant 0 : index
    %c0_4 = arith.constant 0 : index
    %3 = vector.load %arg2[%c0_3, %c0_4] : memref<1x1024xf32, #tpu.memory_space<vmem>>, vector<1x1024xf32>
    %4 = vector.broadcast %3 : vector<1x1024xf32> to vector<2x1024xf32>
    %5 = arith.addf %2, %4 : vector<2x1024xf32>
    %cst_5 = arith.constant 0.000000e+00 : f32
    %6 = vector.broadcast %cst_5 : f32 to vector<2x1024xf32>
    %7 = arith.maximumf %5, %6 : vector<2x1024xf32>
    %c0_6 = arith.constant 0 : index
    %c0_7 = arith.constant 0 : index
    %8 = vector.load %arg3[%c0_6, %c0_7] : memref<1024x128xf32, #tpu.memory_space<vmem>>, vector<1024x128xf32>
    %cst_8 = arith.constant dense<0.000000e+00> : vector<2x128xf32>
    %9 = tpu.matmul %7, %8, %cst_8 {dimension_numbers = #tpu.dot_dimension_numbers<[1], [0], [0], [1], [0, 0, 1, 1], [], []>} : vector<2x1024xf32>, vector<1024x128xf32>, vector<2x128xf32> -> vector<2x128xf32>
    %c0_9 = arith.constant 0 : index
    %c0_10 = arith.constant 0 : index
    %10 = vector.load %arg4[%c0_9, %c0_10] : memref<1x128xf32, #tpu.memory_space<vmem>>, vector<1x128xf32>
    %11 = vector.broadcast %10 : vector<1x128xf32> to vector<2x128xf32>
    %12 = arith.addf %9, %11 : vector<2x128xf32>
    %c0_11 = arith.constant 0 : index
    %c0_12 = arith.constant 0 : index
    %13 = vector.load %arg5[%c0_11, %c0_12] : memref<2x128xf32, #tpu.memory_space<vmem>>, vector<2x128xf32>
    tpu.vector_store %arg5[%c0_11, %c0_12], %12 {strides = array<i32>} : memref<2x128xf32, #tpu.memory_space<vmem>>, vector<2x128xf32>,
    return
  }
}

module attributes {stable_mosaic.version = 11 : i64} {
  func.func @_encoder_stack_kernel(%arg0: i32, %arg1: i32, %arg2: memref<1x12x32xf32, #tpu.memory_space<vmem>>, %arg3: memref<1x1x12xf32, #tpu.memory_space<vmem>>, %arg4: memref<1x32x96xf32, #tpu.memory_space<vmem>>, %arg5: memref<1x32x32xf32, #tpu.memory_space<vmem>>, %arg6: memref<1x32x64xf32, #tpu.memory_space<vmem>>, %arg7: memref<1x64x32xf32, #tpu.memory_space<vmem>>, %arg8: memref<1x8x96xf32, #tpu.memory_space<vmem>>, %arg9: memref<1x12x32xf32, #tpu.memory_space<vmem>>) attributes {dimension_semantics = [#tpu.dimension_semantics<parallel>, #tpu.dimension_semantics<arbitrary>], iteration_bounds = array<i64: 2, 2>, scalar_prefetch = 0 : i64, scratch_operands = 0 : i64, tpu.core_type = #tpu.core_type<tc>, window_params = [{transform_indices = @transform_0, window_bounds = array<i64: 1, 12, 32>}, {transform_indices = @transform_1, window_bounds = array<i64: 1, 1, 12>}, {transform_indices = @transform_2, window_bounds = array<i64: 1, 32, 96>}, {transform_indices = @transform_3, window_bounds = array<i64: 1, 32, 32>}, {transform_indices = @transform_4, window_bounds = array<i64: 1, 32, 64>}, {transform_indices = @transform_5, window_bounds = array<i64: 1, 64, 32>}, {transform_indices = @transform_6, window_bounds = array<i64: 1, 8, 96>}, {transform_indices = @transform_7, window_bounds = array<i64: 1, 12, 32>}]} {
    %c0_i32 = arith.constant 0 : i32
    %0 = arith.cmpi eq, %arg1, %c0_i32 : i32
    %1 = arith.extui %0 : i1 to i32
    %c0_i32_0 = arith.constant 0 : i32
    %2 = arith.cmpi ne, %1, %c0_i32_0 : i32
    scf.if %2 {
      %c0_62 = arith.constant 0 : index
      %c0_63 = arith.constant 0 : index
      %c0_64 = arith.constant 0 : index
      %175 = vector.load %arg2[%c0_62, %c0_63, %c0_64] : memref<1x12x32xf32, #tpu.memory_space<vmem>>, vector<1x12x32xf32>
      %176 = vector.shape_cast %175 : vector<1x12x32xf32> to vector<12x32xf32>
      %c0_65 = arith.constant 0 : index
      %c0_66 = arith.constant 0 : index
      %c0_67 = arith.constant 0 : index
      %177 = vector.load %arg9[%c0_65, %c0_66, %c0_67] : memref<1x12x32xf32, #tpu.memory_space<vmem>>, vector<1x12x32xf32>
      %178 = vector.shape_cast %177 : vector<1x12x32xf32> to vector<12x32xf32>
      %179 = vector.shape_cast %176 : vector<12x32xf32> to vector<1x12x32xf32>
      tpu.vector_store %arg9[%c0_65, %c0_66, %c0_67], %179 {strides = array<i32>} : memref<1x12x32xf32, #tpu.memory_space<vmem>>, vector<1x12x32xf32>,
    } else {
    }
    %c0 = arith.constant 0 : index
    %c0_1 = arith.constant 0 : index
    %c0_2 = arith.constant 0 : index
    %3 = vector.load %arg9[%c0, %c0_1, %c0_2] : memref<1x12x32xf32, #tpu.memory_space<vmem>>, vector<1x12x32xf32>
    %4 = vector.shape_cast %3 : vector<1x12x32xf32> to vector<12x32xf32>
    %c0_3 = arith.constant 0 : index
    %c0_4 = arith.constant 0 : index
    %c0_5 = arith.constant 0 : index
    %5 = vector.load %arg3[%c0_3, %c0_4, %c0_5] : memref<1x1x12xf32, #tpu.memory_space<vmem>>, vector<1x1x12xf32>
    %6 = vector.shape_cast %5 : vector<1x1x12xf32> to vector<1x12xf32>
    %c0_6 = arith.constant 0 : index
    %c0_7 = arith.constant 0 : index
    %c0_8 = arith.constant 0 : index
    %7 = vector.load %arg8[%c0_6, %c0_7, %c0_8] : memref<1x8x96xf32, #tpu.memory_space<vmem>>, vector<1x8x96xf32>
    %8 = vector.shape_cast %7 : vector<1x8x96xf32> to vector<8x96xf32>
    %c0_9 = arith.constant 0 : index
    %c0_10 = arith.constant 0 : index
    %c0_11 = arith.constant 0 : index
    %9 = vector.load %arg4[%c0_9, %c0_10, %c0_11] : memref<1x32x96xf32, #tpu.memory_space<vmem>>, vector<1x32x96xf32>
    %10 = vector.shape_cast %9 : vector<1x32x96xf32> to vector<32x96xf32>
    %cst = arith.constant dense<0.000000e+00> : vector<12x96xf32>
    %11 = tpu.matmul %4, %10, %cst {dimension_numbers = #tpu.dot_dimension_numbers<[1], [0], [0], [1], [0, 0, 1, 1], [], []>} : vector<12x32xf32>, vector<32x96xf32>, vector<12x96xf32> -> vector<12x96xf32>
    %12 = vector.extract_strided_slice %8 {offsets = [0, 0], sizes = [1, 96], strides = [1, 1]} : vector<8x96xf32> to vector<1x96xf32>
    %13 = vector.broadcast %12 : vector<1x96xf32> to vector<12x96xf32>
    %14 = arith.addf %11, %13 : vector<12x96xf32>
    %15 = vector.extract_strided_slice %14 {offsets = [0, 0], sizes = [12, 32], strides = [1, 1]} : vector<12x96xf32> to vector<12x32xf32>
    %16 = vector.extract_strided_slice %14 {offsets = [0, 32], sizes = [12, 32], strides = [1, 1]} : vector<12x96xf32> to vector<12x32xf32>
    %17 = vector.extract_strided_slice %14 {offsets = [0, 64], sizes = [12, 32], strides = [1, 1]} : vector<12x96xf32> to vector<12x32xf32>
    %c0_12 = arith.constant 0 : index
    %c0_13 = arith.constant 0 : index
    %c0_14 = arith.constant 0 : index
    %18 = vector.load %arg5[%c0_12, %c0_13, %c0_14] : memref<1x32x32xf32, #tpu.memory_space<vmem>>, vector<1x32x32xf32>
    %19 = vector.shape_cast %18 : vector<1x32x32xf32> to vector<32x32xf32>
    %20 = vector.extract_strided_slice %8 {offsets = [1, 0], sizes = [1, 32], strides = [1, 1]} : vector<8x96xf32> to vector<1x32xf32>
    %cst_15 = arith.constant 0.000000e+00 : f32
    %21 = vector.broadcast %cst_15 : f32 to vector<12x32xf32>
    %22 = vector.extract_strided_slice %15 {offsets = [0, 0], sizes = [12, 8], strides = [1, 1]} : vector<12x32xf32> to vector<12x8xf32>
    %23 = vector.extract_strided_slice %16 {offsets = [0, 0], sizes = [12, 8], strides = [1, 1]} : vector<12x32xf32> to vector<12x8xf32>
    "tpu.trace_start"() <{level = 10 : i32, message = "qd,kd->qk"}> : () -> ()
    %cst_16 = arith.constant dense<0.000000e+00> : vector<12x12xf32>
    %24 = tpu.matmul %22, %23, %cst_16 {dimension_numbers = #tpu.dot_dimension_numbers<[1], [1], [0], [0], [0, 0, 1, 0], [], []>} : vector<12x8xf32>, vector<12x8xf32>, vector<12x12xf32> -> vector<12x12xf32>
    "tpu.trace_stop"() : () -> ()
    %cst_17 = arith.constant 0.353553385 : f32
    %25 = vector.broadcast %cst_17 : f32 to vector<12x12xf32>
    %26 = arith.mulf %24, %25 : vector<12x12xf32>
    %27 = vector.broadcast %6 : vector<1x12xf32> to vector<12x12xf32>
    %28 = arith.addf %26, %27 : vector<12x12xf32>
    %cst_18 = arith.constant dense<0xFF800000> : vector<12xf32>
    %29 = vector.multi_reduction <maximumf>, %28, %cst_18 [1] : vector<12x12xf32> to vector<12xf32>
    %30 = vector.shape_cast %29 : vector<12xf32> to vector<12x1xf32>
    %31 = vector.broadcast %30 : vector<12x1xf32> to vector<12x12xf32>
    %32 = arith.subf %28, %31 : vector<12x12xf32>
    %33 = math.exp %32 : vector<12x12xf32>
    %cst_19 = arith.constant dense<0.000000e+00> : vector<12xf32>
    %34 = vector.multi_reduction <add>, %33, %cst_19 [1] : vector<12x12xf32> to vector<12xf32>
    %35 = vector.shape_cast %34 : vector<12xf32> to vector<12x1xf32>
    %36 = tpu.reciprocal %35 {approx = true} : vector<12x1xf32> -> vector<12x1xf32>
    %37 = vector.broadcast %36 : vector<12x1xf32> to vector<12x12xf32>
    %38 = arith.mulf %33, %37 : vector<12x12xf32>
    %39 = vector.extract_strided_slice %17 {offsets = [0, 0], sizes = [12, 8], strides = [1, 1]} : vector<12x32xf32> to vector<12x8xf32>
    %cst_20 = arith.constant dense<0.000000e+00> : vector<12x8xf32>
    %40 = tpu.matmul %38, %39, %cst_20 {dimension_numbers = #tpu.dot_dimension_numbers<[1], [0], [0], [1], [0, 0, 1, 1], [], []>} : vector<12x12xf32>, vector<12x8xf32>, vector<12x8xf32> -> vector<12x8xf32>
    %41 = vector.extract_strided_slice %19 {offsets = [0, 0], sizes = [8, 32], strides = [1, 1]} : vector<32x32xf32> to vector<8x32xf32>
    %cst_21 = arith.constant dense<0.000000e+00> : vector<12x32xf32>
    %42 = tpu.matmul %40, %41, %cst_21 {dimension_numbers = #tpu.dot_dimension_numbers<[1], [0], [0], [1], [0, 0, 1, 1], [], []>} : vector<12x8xf32>, vector<8x32xf32>, vector<12x32xf32> -> vector<12x32xf32>
    %43 = arith.addf %21, %42 : vector<12x32xf32>
    %44 = vector.extract_strided_slice %15 {offsets = [0, 8], sizes = [12, 8], strides = [1, 1]} : vector<12x32xf32> to vector<12x8xf32>
    %45 = vector.extract_strided_slice %16 {offsets = [0, 8], sizes = [12, 8], strides = [1, 1]} : vector<12x32xf32> to vector<12x8xf32>
    "tpu.trace_start"() <{level = 10 : i32, message = "qd,kd->qk"}> : () -> ()
    %cst_22 = arith.constant dense<0.000000e+00> : vector<12x12xf32>
    %46 = tpu.matmul %44, %45, %cst_22 {dimension_numbers = #tpu.dot_dimension_numbers<[1], [1], [0], [0], [0, 0, 1, 0], [], []>} : vector<12x8xf32>, vector<12x8xf32>, vector<12x12xf32> -> vector<12x12xf32>
    "tpu.trace_stop"() : () -> ()
    %cst_23 = arith.constant 0.353553385 : f32
    %47 = vector.broadcast %cst_23 : f32 to vector<12x12xf32>
    %48 = arith.mulf %46, %47 : vector<12x12xf32>
    %49 = vector.broadcast %6 : vector<1x12xf32> to vector<12x12xf32>
    %50 = arith.addf %48, %49 : vector<12x12xf32>
    %cst_24 = arith.constant dense<0xFF800000> : vector<12xf32>
    %51 = vector.multi_reduction <maximumf>, %50, %cst_24 [1] : vector<12x12xf32> to vector<12xf32>
    %52 = vector.shape_cast %51 : vector<12xf32> to vector<12x1xf32>
    %53 = vector.broadcast %52 : vector<12x1xf32> to vector<12x12xf32>
    %54 = arith.subf %50, %53 : vector<12x12xf32>
    %55 = math.exp %54 : vector<12x12xf32>
    %cst_25 = arith.constant dense<0.000000e+00> : vector<12xf32>
    %56 = vector.multi_reduction <add>, %55, %cst_25 [1] : vector<12x12xf32> to vector<12xf32>
    %57 = vector.shape_cast %56 : vector<12xf32> to vector<12x1xf32>
    %58 = tpu.reciprocal %57 {approx = true} : vector<12x1xf32> -> vector<12x1xf32>
    %59 = vector.broadcast %58 : vector<12x1xf32> to vector<12x12xf32>
    %60 = arith.mulf %55, %59 : vector<12x12xf32>
    %61 = vector.extract_strided_slice %17 {offsets = [0, 8], sizes = [12, 8], strides = [1, 1]} : vector<12x32xf32> to vector<12x8xf32>
    %cst_26 = arith.constant dense<0.000000e+00> : vector<12x8xf32>
    %62 = tpu.matmul %60, %61, %cst_26 {dimension_numbers = #tpu.dot_dimension_numbers<[1], [0], [0], [1], [0, 0, 1, 1], [], []>} : vector<12x12xf32>, vector<12x8xf32>, vector<12x8xf32> -> vector<12x8xf32>
    %63 = vector.extract_strided_slice %19 {offsets = [8, 0], sizes = [8, 32], strides = [1, 1]} : vector<32x32xf32> to vector<8x32xf32>
    %cst_27 = arith.constant dense<0.000000e+00> : vector<12x32xf32>
    %64 = tpu.matmul %62, %63, %cst_27 {dimension_numbers = #tpu.dot_dimension_numbers<[1], [0], [0], [1], [0, 0, 1, 1], [], []>} : vector<12x8xf32>, vector<8x32xf32>, vector<12x32xf32> -> vector<12x32xf32>
    %65 = arith.addf %43, %64 : vector<12x32xf32>
    %66 = vector.extract_strided_slice %15 {offsets = [0, 16], sizes = [12, 8], strides = [1, 1]} : vector<12x32xf32> to vector<12x8xf32>
    %67 = vector.extract_strided_slice %16 {offsets = [0, 16], sizes = [12, 8], strides = [1, 1]} : vector<12x32xf32> to vector<12x8xf32>
    "tpu.trace_start"() <{level = 10 : i32, message = "qd,kd->qk"}> : () -> ()
    %cst_28 = arith.constant dense<0.000000e+00> : vector<12x12xf32>
    %68 = tpu.matmul %66, %67, %cst_28 {dimension_numbers = #tpu.dot_dimension_numbers<[1], [1], [0], [0], [0, 0, 1, 0], [], []>} : vector<12x8xf32>, vector<12x8xf32>, vector<12x12xf32> -> vector<12x12xf32>
    "tpu.trace_stop"() : () -> ()
    %cst_29 = arith.constant 0.353553385 : f32
    %69 = vector.broadcast %cst_29 : f32 to vector<12x12xf32>
    %70 = arith.mulf %68, %69 : vector<12x12xf32>
    %71 = vector.broadcast %6 : vector<1x12xf32> to vector<12x12xf32>
    %72 = arith.addf %70, %71 : vector<12x12xf32>
    %cst_30 = arith.constant dense<0xFF800000> : vector<12xf32>
    %73 = vector.multi_reduction <maximumf>, %72, %cst_30 [1] : vector<12x12xf32> to vector<12xf32>
    %74 = vector.shape_cast %73 : vector<12xf32> to vector<12x1xf32>
    %75 = vector.broadcast %74 : vector<12x1xf32> to vector<12x12xf32>
    %76 = arith.subf %72, %75 : vector<12x12xf32>
    %77 = math.exp %76 : vector<12x12xf32>
    %cst_31 = arith.constant dense<0.000000e+00> : vector<12xf32>
    %78 = vector.multi_reduction <add>, %77, %cst_31 [1] : vector<12x12xf32> to vector<12xf32>
    %79 = vector.shape_cast %78 : vector<12xf32> to vector<12x1xf32>
    %80 = tpu.reciprocal %79 {approx = true} : vector<12x1xf32> -> vector<12x1xf32>
    %81 = vector.broadcast %80 : vector<12x1xf32> to vector<12x12xf32>
    %82 = arith.mulf %77, %81 : vector<12x12xf32>
    %83 = vector.extract_strided_slice %17 {offsets = [0, 16], sizes = [12, 8], strides = [1, 1]} : vector<12x32xf32> to vector<12x8xf32>
    %cst_32 = arith.constant dense<0.000000e+00> : vector<12x8xf32>
    %84 = tpu.matmul %82, %83, %cst_32 {dimension_numbers = #tpu.dot_dimension_numbers<[1], [0], [0], [1], [0, 0, 1, 1], [], []>} : vector<12x12xf32>, vector<12x8xf32>, vector<12x8xf32> -> vector<12x8xf32>
    %85 = vector.extract_strided_slice %19 {offsets = [16, 0], sizes = [8, 32], strides = [1, 1]} : vector<32x32xf32> to vector<8x32xf32>
    %cst_33 = arith.constant dense<0.000000e+00> : vector<12x32xf32>
    %86 = tpu.matmul %84, %85, %cst_33 {dimension_numbers = #tpu.dot_dimension_numbers<[1], [0], [0], [1], [0, 0, 1, 1], [], []>} : vector<12x8xf32>, vector<8x32xf32>, vector<12x32xf32> -> vector<12x32xf32>
    %87 = arith.addf %65, %86 : vector<12x32xf32>
    %88 = vector.extract_strided_slice %15 {offsets = [0, 24], sizes = [12, 8], strides = [1, 1]} : vector<12x32xf32> to vector<12x8xf32>
    %89 = vector.extract_strided_slice %16 {offsets = [0, 24], sizes = [12, 8], strides = [1, 1]} : vector<12x32xf32> to vector<12x8xf32>
    "tpu.trace_start"() <{level = 10 : i32, message = "qd,kd->qk"}> : () -> ()
    %cst_34 = arith.constant dense<0.000000e+00> : vector<12x12xf32>
    %90 = tpu.matmul %88, %89, %cst_34 {dimension_numbers = #tpu.dot_dimension_numbers<[1], [1], [0], [0], [0, 0, 1, 0], [], []>} : vector<12x8xf32>, vector<12x8xf32>, vector<12x12xf32> -> vector<12x12xf32>
    "tpu.trace_stop"() : () -> ()
    %cst_35 = arith.constant 0.353553385 : f32
    %91 = vector.broadcast %cst_35 : f32 to vector<12x12xf32>
    %92 = arith.mulf %90, %91 : vector<12x12xf32>
    %93 = vector.broadcast %6 : vector<1x12xf32> to vector<12x12xf32>
    %94 = arith.addf %92, %93 : vector<12x12xf32>
    %cst_36 = arith.constant dense<0xFF800000> : vector<12xf32>
    %95 = vector.multi_reduction <maximumf>, %94, %cst_36 [1] : vector<12x12xf32> to vector<12xf32>
    %96 = vector.shape_cast %95 : vector<12xf32> to vector<12x1xf32>
    %97 = vector.broadcast %96 : vector<12x1xf32> to vector<12x12xf32>
    %98 = arith.subf %94, %97 : vector<12x12xf32>
    %99 = math.exp %98 : vector<12x12xf32>
    %cst_37 = arith.constant dense<0.000000e+00> : vector<12xf32>
    %100 = vector.multi_reduction <add>, %99, %cst_37 [1] : vector<12x12xf32> to vector<12xf32>
    %101 = vector.shape_cast %100 : vector<12xf32> to vector<12x1xf32>
    %102 = tpu.reciprocal %101 {approx = true} : vector<12x1xf32> -> vector<12x1xf32>
    %103 = vector.broadcast %102 : vector<12x1xf32> to vector<12x12xf32>
    %104 = arith.mulf %99, %103 : vector<12x12xf32>
    %105 = vector.extract_strided_slice %17 {offsets = [0, 24], sizes = [12, 8], strides = [1, 1]} : vector<12x32xf32> to vector<12x8xf32>
    %cst_38 = arith.constant dense<0.000000e+00> : vector<12x8xf32>
    %106 = tpu.matmul %104, %105, %cst_38 {dimension_numbers = #tpu.dot_dimension_numbers<[1], [0], [0], [1], [0, 0, 1, 1], [], []>} : vector<12x12xf32>, vector<12x8xf32>, vector<12x8xf32> -> vector<12x8xf32>
    %107 = vector.extract_strided_slice %19 {offsets = [24, 0], sizes = [8, 32], strides = [1, 1]} : vector<32x32xf32> to vector<8x32xf32>
    %cst_39 = arith.constant dense<0.000000e+00> : vector<12x32xf32>
    %108 = tpu.matmul %106, %107, %cst_39 {dimension_numbers = #tpu.dot_dimension_numbers<[1], [0], [0], [1], [0, 0, 1, 1], [], []>} : vector<12x8xf32>, vector<8x32xf32>, vector<12x32xf32> -> vector<12x32xf32>
    %109 = arith.addf %87, %108 : vector<12x32xf32>
    %110 = vector.broadcast %20 : vector<1x32xf32> to vector<12x32xf32>
    %111 = arith.addf %109, %110 : vector<12x32xf32>
    %112 = arith.addf %4, %111 : vector<12x32xf32>
    %113 = vector.extract_strided_slice %8 {offsets = [2, 0], sizes = [1, 32], strides = [1, 1]} : vector<8x96xf32> to vector<1x32xf32>
    %114 = vector.extract_strided_slice %8 {offsets = [3, 0], sizes = [1, 32], strides = [1, 1]} : vector<8x96xf32> to vector<1x32xf32>
    %cst_40 = arith.constant dense<0.000000e+00> : vector<12xf32>
    %115 = vector.multi_reduction <add>, %112, %cst_40 [1] : vector<12x32xf32> to vector<12xf32>
    %116 = vector.shape_cast %115 : vector<12xf32> to vector<12x1xf32>
    %cst_41 = arith.constant 3.200000e+01 : f32
    %117 = vector.broadcast %cst_41 : f32 to vector<12x1xf32>
    %118 = arith.divf %116, %117 : vector<12x1xf32>
    %119 = vector.broadcast %118 : vector<12x1xf32> to vector<12x32xf32>
    %120 = arith.subf %112, %119 : vector<12x32xf32>
    %121 = arith.mulf %120, %120 : vector<12x32xf32>
    %cst_42 = arith.constant dense<0.000000e+00> : vector<12xf32>
    %122 = vector.multi_reduction <add>, %121, %cst_42 [1] : vector<12x32xf32> to vector<12xf32>
    %123 = vector.shape_cast %122 : vector<12xf32> to vector<12x1xf32>
    %cst_43 = arith.constant 3.200000e+01 : f32
    %124 = vector.broadcast %cst_43 : f32 to vector<12x1xf32>
    %125 = arith.divf %123, %124 : vector<12x1xf32>
    %cst_44 = arith.constant 9.99999974E-6 : f32
    %126 = vector.broadcast %cst_44 : f32 to vector<12x1xf32>
    %127 = arith.addf %125, %126 : vector<12x1xf32>
    %128 = math.rsqrt %127 : vector<12x1xf32>
    %129 = vector.broadcast %128 : vector<12x1xf32> to vector<12x32xf32>
    %130 = arith.mulf %120, %129 : vector<12x32xf32>
    %131 = vector.broadcast %113 : vector<1x32xf32> to vector<12x32xf32>
    %132 = arith.mulf %130, %131 : vector<12x32xf32>
    %133 = vector.broadcast %114 : vector<1x32xf32> to vector<12x32xf32>
    %134 = arith.addf %132, %133 : vector<12x32xf32>
    %c0_45 = arith.constant 0 : index
    %c0_46 = arith.constant 0 : index
    %c0_47 = arith.constant 0 : index
    %135 = vector.load %arg6[%c0_45, %c0_46, %c0_47] : memref<1x32x64xf32, #tpu.memory_space<vmem>>, vector<1x32x64xf32>
    %136 = vector.shape_cast %135 : vector<1x32x64xf32> to vector<32x64xf32>
    %cst_48 = arith.constant dense<0.000000e+00> : vector<12x64xf32>
    %137 = tpu.matmul %134, %136, %cst_48 {dimension_numbers = #tpu.dot_dimension_numbers<[1], [0], [0], [1], [0, 0, 1, 1], [], []>} : vector<12x32xf32>, vector<32x64xf32>, vector<12x64xf32> -> vector<12x64xf32>
    %138 = vector.extract_strided_slice %8 {offsets = [4, 0], sizes = [1, 64], strides = [1, 1]} : vector<8x96xf32> to vector<1x64xf32>
    %139 = vector.broadcast %138 : vector<1x64xf32> to vector<12x64xf32>
    %140 = arith.addf %137, %139 : vector<12x64xf32>
    %cst_49 = arith.constant 0.000000e+00 : f32
    %141 = vector.broadcast %cst_49 : f32 to vector<12x64xf32>
    %142 = arith.maximumf %140, %141 : vector<12x64xf32>
    %c0_50 = arith.constant 0 : index
    %c0_51 = arith.constant 0 : index
    %c0_52 = arith.constant 0 : index
    %143 = vector.load %arg7[%c0_50, %c0_51, %c0_52] : memref<1x64x32xf32, #tpu.memory_space<vmem>>, vector<1x64x32xf32>
    %144 = vector.shape_cast %143 : vector<1x64x32xf32> to vector<64x32xf32>
    %cst_53 = arith.constant dense<0.000000e+00> : vector<12x32xf32>
    %145 = tpu.matmul %142, %144, %cst_53 {dimension_numbers = #tpu.dot_dimension_numbers<[1], [0], [0], [1], [0, 0, 1, 1], [], []>} : vector<12x64xf32>, vector<64x32xf32>, vector<12x32xf32> -> vector<12x32xf32>
    %146 = vector.extract_strided_slice %8 {offsets = [5, 0], sizes = [1, 32], strides = [1, 1]} : vector<8x96xf32> to vector<1x32xf32>
    %147 = vector.broadcast %146 : vector<1x32xf32> to vector<12x32xf32>
    %148 = arith.addf %145, %147 : vector<12x32xf32>
    %149 = arith.addf %134, %148 : vector<12x32xf32>
    %150 = vector.extract_strided_slice %8 {offsets = [6, 0], sizes = [1, 32], strides = [1, 1]} : vector<8x96xf32> to vector<1x32xf32>
    %151 = vector.extract_strided_slice %8 {offsets = [7, 0], sizes = [1, 32], strides = [1, 1]} : vector<8x96xf32> to vector<1x32xf32>
    %cst_54 = arith.constant dense<0.000000e+00> : vector<12xf32>
    %152 = vector.multi_reduction <add>, %149, %cst_54 [1] : vector<12x32xf32> to vector<12xf32>
    %153 = vector.shape_cast %152 : vector<12xf32> to vector<12x1xf32>
    %cst_55 = arith.constant 3.200000e+01 : f32
    %154 = vector.broadcast %cst_55 : f32 to vector<12x1xf32>
    %155 = arith.divf %153, %154 : vector<12x1xf32>
    %156 = vector.broadcast %155 : vector<12x1xf32> to vector<12x32xf32>
    %157 = arith.subf %149, %156 : vector<12x32xf32>
    %158 = arith.mulf %157, %157 : vector<12x32xf32>
    %cst_56 = arith.constant dense<0.000000e+00> : vector<12xf32>
    %159 = vector.multi_reduction <add>, %158, %cst_56 [1] : vector<12x32xf32> to vector<12xf32>
    %160 = vector.shape_cast %159 : vector<12xf32> to vector<12x1xf32>
    %cst_57 = arith.constant 3.200000e+01 : f32
    %161 = vector.broadcast %cst_57 : f32 to vector<12x1xf32>
    %162 = arith.divf %160, %161 : vector<12x1xf32>
    %cst_58 = arith.constant 9.99999974E-6 : f32
    %163 = vector.broadcast %cst_58 : f32 to vector<12x1xf32>
    %164 = arith.addf %162, %163 : vector<12x1xf32>
    %165 = math.rsqrt %164 : vector<12x1xf32>
    %166 = vector.broadcast %165 : vector<12x1xf32> to vector<12x32xf32>
    %167 = arith.mulf %157, %166 : vector<12x32xf32>
    %168 = vector.broadcast %150 : vector<1x32xf32> to vector<12x32xf32>
    %169 = arith.mulf %167, %168 : vector<12x32xf32>
    %170 = vector.broadcast %151 : vector<1x32xf32> to vector<12x32xf32>
    %171 = arith.addf %169, %170 : vector<12x32xf32>
    %c0_59 = arith.constant 0 : index
    %c0_60 = arith.constant 0 : index
    %c0_61 = arith.constant 0 : index
    %172 = vector.load %arg9[%c0_59, %c0_60, %c0_61] : memref<1x12x32xf32, #tpu.memory_space<vmem>>, vector<1x12x32xf32>
    %173 = vector.shape_cast %172 : vector<1x12x32xf32> to vector<12x32xf32>
    %174 = vector.shape_cast %171 : vector<12x32xf32> to vector<1x12x32xf32>
    tpu.vector_store %arg9[%c0_59, %c0_60, %c0_61], %174 {strides = array<i32>} : memref<1x12x32xf32, #tpu.memory_space<vmem>>, vector<1x12x32xf32>,
    return
  }
  func.func @transform_0(%arg0: i32, %arg1: i32) -> (i32, i32, i32) {
    %c0_i32 = arith.constant 0 : i32
    %c0_i32_0 = arith.constant 0 : i32
    %c0_i32_1 = arith.constant 0 : i32
    return %arg0, %c0_i32, %c0_i32_0 : i32, i32, i32
  }
  func.func @transform_1(%arg0: i32, %arg1: i32) -> (i32, i32, i32) {
    %c0_i32 = arith.constant 0 : i32
    %c0_i32_0 = arith.constant 0 : i32
    %c0_i32_1 = arith.constant 0 : i32
    return %arg0, %c0_i32, %c0_i32_0 : i32, i32, i32
  }
  func.func @transform_2(%arg0: i32, %arg1: i32) -> (i32, i32, i32) {
    %c0_i32 = arith.constant 0 : i32
    %c0_i32_0 = arith.constant 0 : i32
    %c0_i32_1 = arith.constant 0 : i32
    return %arg1, %c0_i32, %c0_i32_0 : i32, i32, i32
  }
  func.func @transform_3(%arg0: i32, %arg1: i32) -> (i32, i32, i32) {
    %c0_i32 = arith.constant 0 : i32
    %c0_i32_0 = arith.constant 0 : i32
    %c0_i32_1 = arith.constant 0 : i32
    return %arg1, %c0_i32, %c0_i32_0 : i32, i32, i32
  }
  func.func @transform_4(%arg0: i32, %arg1: i32) -> (i32, i32, i32) {
    %c0_i32 = arith.constant 0 : i32
    %c0_i32_0 = arith.constant 0 : i32
    %c0_i32_1 = arith.constant 0 : i32
    return %arg1, %c0_i32, %c0_i32_0 : i32, i32, i32
  }
  func.func @transform_5(%arg0: i32, %arg1: i32) -> (i32, i32, i32) {
    %c0_i32 = arith.constant 0 : i32
    %c0_i32_0 = arith.constant 0 : i32
    %c0_i32_1 = arith.constant 0 : i32
    return %arg1, %c0_i32, %c0_i32_0 : i32, i32, i32
  }
  func.func @transform_6(%arg0: i32, %arg1: i32) -> (i32, i32, i32) {
    %c0_i32 = arith.constant 0 : i32
    %c0_i32_0 = arith.constant 0 : i32
    %c0_i32_1 = arith.constant 0 : i32
    return %arg1, %c0_i32, %c0_i32_0 : i32, i32, i32
  }
  func.func @transform_7(%arg0: i32, %arg1: i32) -> (i32, i32, i32) {
    %c0_i32 = arith.constant 0 : i32
    %c0_i32_0 = arith.constant 0 : i32
    %c0_i32_1 = arith.constant 0 : i32
    return %arg0, %c0_i32, %c0_i32_0 : i32, i32, i32
  }
}

module attributes {stable_mosaic.version = 11 : i64} {
  func.func @_decoder_stack_kernel(%arg0: i32, %arg1: i32, %arg2: memref<1x8x32xf32, #tpu.memory_space<vmem>>, %arg3: memref<1x12x32xf32, #tpu.memory_space<vmem>>, %arg4: memref<1x1x12xf32, #tpu.memory_space<vmem>>, %arg5: memref<1x32x96xf32, #tpu.memory_space<vmem>>, %arg6: memref<1x32x32xf32, #tpu.memory_space<vmem>>, %arg7: memref<1x32x32xf32, #tpu.memory_space<vmem>>, %arg8: memref<1x32x64xf32, #tpu.memory_space<vmem>>, %arg9: memref<1x32x32xf32, #tpu.memory_space<vmem>>, %arg10: memref<1x32x64xf32, #tpu.memory_space<vmem>>, %arg11: memref<1x64x32xf32, #tpu.memory_space<vmem>>, %arg12: memref<1x16x96xf32, #tpu.memory_space<vmem>>, %arg13: memref<32x19xf32, #tpu.memory_space<vmem>>, %arg14: memref<1x19xf32, #tpu.memory_space<vmem>>, %arg15: memref<1x8x19xf32, #tpu.memory_space<vmem>>, %arg16: memref<1x8x8xf32, #tpu.memory_space<vmem>>, %arg17: memref<8x32xf32, #tpu.memory_space<vmem>>) attributes {dimension_semantics = [#tpu.dimension_semantics<parallel>, #tpu.dimension_semantics<arbitrary>], iteration_bounds = array<i64: 2, 2>, scalar_prefetch = 0 : i64, scratch_operands = 1 : i64, tpu.core_type = #tpu.core_type<tc>, window_params = [{transform_indices = @transform_0, window_bounds = array<i64: 1, 8, 32>}, {transform_indices = @transform_1, window_bounds = array<i64: 1, 12, 32>}, {transform_indices = @transform_2, window_bounds = array<i64: 1, 1, 12>}, {transform_indices = @transform_3, window_bounds = array<i64: 1, 32, 96>}, {transform_indices = @transform_4, window_bounds = array<i64: 1, 32, 32>}, {transform_indices = @transform_5, window_bounds = array<i64: 1, 32, 32>}, {transform_indices = @transform_6, window_bounds = array<i64: 1, 32, 64>}, {transform_indices = @transform_7, window_bounds = array<i64: 1, 32, 32>}, {transform_indices = @transform_8, window_bounds = array<i64: 1, 32, 64>}, {transform_indices = @transform_9, window_bounds = array<i64: 1, 64, 32>}, {transform_indices = @transform_10, window_bounds = array<i64: 1, 16, 96>}, {pipeline_mode = #tpu.pipeline_mode<synchronous>, transform_indices = @transform_11, window_bounds = array<i64: 32, 19>}, {pipeline_mode = #tpu.pipeline_mode<synchronous>, transform_indices = @transform_12, window_bounds = array<i64: 1, 19>}, {transform_indices = @transform_13, window_bounds = array<i64: 1, 8, 19>}, {transform_indices = @transform_14, window_bounds = array<i64: 1, 8, 8>}]} {
    %c0_i32 = arith.constant 0 : i32
    %0 = arith.cmpi eq, %arg1, %c0_i32 : i32
    %1 = arith.extui %0 : i1 to i32
    %c0_i32_0 = arith.constant 0 : i32
    %2 = arith.cmpi ne, %1, %c0_i32_0 : i32
    scf.if %2 {
      %c0_107 = arith.constant 0 : index
      %c0_108 = arith.constant 0 : index
      %c0_109 = arith.constant 0 : index
      %309 = vector.load %arg2[%c0_107, %c0_108, %c0_109] : memref<1x8x32xf32, #tpu.memory_space<vmem>>, vector<1x8x32xf32>
      %310 = vector.shape_cast %309 : vector<1x8x32xf32> to vector<8x32xf32>
      %c0_110 = arith.constant 0 : index
      %c0_111 = arith.constant 0 : index
      %311 = vector.load %arg17[%c0_110, %c0_111] : memref<8x32xf32, #tpu.memory_space<vmem>>, vector<8x32xf32>
      tpu.vector_store %arg17[%c0_110, %c0_111], %310 {strides = array<i32>} : memref<8x32xf32, #tpu.memory_space<vmem>>, vector<8x32xf32>,
    } else {
    }
    %c0 = arith.constant 0 : index
    %c0_1 = arith.constant 0 : index
    %3 = vector.load %arg17[%c0, %c0_1] : memref<8x32xf32, #tpu.memory_space<vmem>>, vector<8x32xf32>
    %c0_2 = arith.constant 0 : index
    %c0_3 = arith.constant 0 : index
    %c0_4 = arith.constant 0 : index
    %4 = vector.load %arg3[%c0_2, %c0_3, %c0_4] : memref<1x12x32xf32, #tpu.memory_space<vmem>>, vector<1x12x32xf32>
    %5 = vector.shape_cast %4 : vector<1x12x32xf32> to vector<12x32xf32>
    %c0_5 = arith.constant 0 : index
    %c0_6 = arith.constant 0 : index
    %c0_7 = arith.constant 0 : index
    %6 = vector.load %arg4[%c0_5, %c0_6, %c0_7] : memref<1x1x12xf32, #tpu.memory_space<vmem>>, vector<1x1x12xf32>
    %7 = vector.shape_cast %6 : vector<1x1x12xf32> to vector<1x12xf32>
    %c0_8 = arith.constant 0 : index
    %c0_9 = arith.constant 0 : index
    %c0_10 = arith.constant 0 : index
    %8 = vector.load %arg12[%c0_8, %c0_9, %c0_10] : memref<1x16x96xf32, #tpu.memory_space<vmem>>, vector<1x16x96xf32>
    %9 = vector.shape_cast %8 : vector<1x16x96xf32> to vector<16x96xf32>
    %10 = tpu.iota {dimensions = array<i32: 0>} : vector<8x8xi32>
    %11 = tpu.iota {dimensions = array<i32: 1>} : vector<8x8xi32>
    %12 = arith.cmpi sgt, %11, %10 : vector<8x8xi32>
    %cst = arith.constant -1.000000e+09 : f32
    %cst_11 = arith.constant 0.000000e+00 : f32
    %13 = vector.broadcast %cst : f32 to vector<8x8xf32>
    %14 = vector.broadcast %cst_11 : f32 to vector<8x8xf32>
    %15 = arith.select %12, %13, %14 : vector<8x8xi1>, vector<8x8xf32>
    %c0_12 = arith.constant 0 : index
    %c0_13 = arith.constant 0 : index
    %c0_14 = arith.constant 0 : index
    %16 = vector.load %arg5[%c0_12, %c0_13, %c0_14] : memref<1x32x96xf32, #tpu.memory_space<vmem>>, vector<1x32x96xf32>
    %17 = vector.shape_cast %16 : vector<1x32x96xf32> to vector<32x96xf32>
    %cst_15 = arith.constant dense<0.000000e+00> : vector<8x96xf32>
    %18 = tpu.matmul %3, %17, %cst_15 {dimension_numbers = #tpu.dot_dimension_numbers<[1], [0], [0], [1], [0, 0, 1, 1], [], []>} : vector<8x32xf32>, vector<32x96xf32>, vector<8x96xf32> -> vector<8x96xf32>
    %19 = vector.extract_strided_slice %9 {offsets = [0, 0], sizes = [1, 96], strides = [1, 1]} : vector<16x96xf32> to vector<1x96xf32>
    %20 = vector.broadcast %19 : vector<1x96xf32> to vector<8x96xf32>
    %21 = arith.addf %18, %20 : vector<8x96xf32>
    %22 = vector.extract_strided_slice %21 {offsets = [0, 0], sizes = [8, 32], strides = [1, 1]} : vector<8x96xf32> to vector<8x32xf32>
    %23 = vector.extract_strided_slice %21 {offsets = [0, 32], sizes = [8, 32], strides = [1, 1]} : vector<8x96xf32> to vector<8x32xf32>
    %24 = vector.extract_strided_slice %21 {offsets = [0, 64], sizes = [8, 32], strides = [1, 1]} : vector<8x96xf32> to vector<8x32xf32>
    %c0_16 = arith.constant 0 : index
    %c0_17 = arith.constant 0 : index
    %c0_18 = arith.constant 0 : index
    %25 = vector.load %arg6[%c0_16, %c0_17, %c0_18] : memref<1x32x32xf32, #tpu.memory_space<vmem>>, vector<1x32x32xf32>
    %26 = vector.shape_cast %25 : vector<1x32x32xf32> to vector<32x32xf32>
    %27 = vector.extract_strided_slice %9 {offsets = [1, 0], sizes = [1, 32], strides = [1, 1]} : vector<16x96xf32> to vector<1x32xf32>
    %cst_19 = arith.constant 0.000000e+00 : f32
    %28 = vector.broadcast %cst_19 : f32 to vector<8x32xf32>
    %29 = vector.extract_strided_slice %22 {offsets = [0, 0], sizes = [8, 8], strides = [1, 1]} : vector<8x32xf32> to vector<8x8xf32>
    %30 = vector.extract_strided_slice %23 {offsets = [0, 0], sizes = [8, 8], strides = [1, 1]} : vector<8x32xf32> to vector<8x8xf32>
    "tpu.trace_start"() <{level = 10 : i32, message = "qd,kd->qk"}> : () -> ()
    %cst_20 = arith.constant dense<0.000000e+00> : vector<8x8xf32>
    %31 = tpu.matmul %29, %30, %cst_20 {dimension_numbers = #tpu.dot_dimension_numbers<[1], [1], [0], [0], [0, 0, 1, 0], [], []>} : vector<8x8xf32>, vector<8x8xf32>, vector<8x8xf32> -> vector<8x8xf32>
    "tpu.trace_stop"() : () -> ()
    %cst_21 = arith.constant 0.353553385 : f32
    %32 = vector.broadcast %cst_21 : f32 to vector<8x8xf32>
    %33 = arith.mulf %31, %32 : vector<8x8xf32>
    %34 = arith.addf %33, %15 : vector<8x8xf32>
    %cst_22 = arith.constant dense<0xFF800000> : vector<8xf32>
    %35 = vector.multi_reduction <maximumf>, %34, %cst_22 [1] : vector<8x8xf32> to vector<8xf32>
    %36 = vector.shape_cast %35 : vector<8xf32> to vector<8x1xf32>
    %37 = vector.broadcast %36 : vector<8x1xf32> to vector<8x8xf32>
    %38 = arith.subf %34, %37 : vector<8x8xf32>
    %39 = math.exp %38 : vector<8x8xf32>
    %cst_23 = arith.constant dense<0.000000e+00> : vector<8xf32>
    %40 = vector.multi_reduction <add>, %39, %cst_23 [1] : vector<8x8xf32> to vector<8xf32>
    %41 = vector.shape_cast %40 : vector<8xf32> to vector<8x1xf32>
    %42 = tpu.reciprocal %41 {approx = true} : vector<8x1xf32> -> vector<8x1xf32>
    %43 = vector.broadcast %42 : vector<8x1xf32> to vector<8x8xf32>
    %44 = arith.mulf %39, %43 : vector<8x8xf32>
    %45 = vector.extract_strided_slice %24 {offsets = [0, 0], sizes = [8, 8], strides = [1, 1]} : vector<8x32xf32> to vector<8x8xf32>
    %cst_24 = arith.constant dense<0.000000e+00> : vector<8x8xf32>
    %46 = tpu.matmul %44, %45, %cst_24 {dimension_numbers = #tpu.dot_dimension_numbers<[1], [0], [0], [1], [0, 0, 1, 1], [], []>} : vector<8x8xf32>, vector<8x8xf32>, vector<8x8xf32> -> vector<8x8xf32>
    %47 = vector.extract_strided_slice %26 {offsets = [0, 0], sizes = [8, 32], strides = [1, 1]} : vector<32x32xf32> to vector<8x32xf32>
    %cst_25 = arith.constant dense<0.000000e+00> : vector<8x32xf32>
    %48 = tpu.matmul %46, %47, %cst_25 {dimension_numbers = #tpu.dot_dimension_numbers<[1], [0], [0], [1], [0, 0, 1, 1], [], []>} : vector<8x8xf32>, vector<8x32xf32>, vector<8x32xf32> -> vector<8x32xf32>
    %49 = arith.addf %28, %48 : vector<8x32xf32>
    %50 = vector.extract_strided_slice %22 {offsets = [0, 8], sizes = [8, 8], strides = [1, 1]} : vector<8x32xf32> to vector<8x8xf32>
    %51 = vector.extract_strided_slice %23 {offsets = [0, 8], sizes = [8, 8], strides = [1, 1]} : vector<8x32xf32> to vector<8x8xf32>
    "tpu.trace_start"() <{level = 10 : i32, message = "qd,kd->qk"}> : () -> ()
    %cst_26 = arith.constant dense<0.000000e+00> : vector<8x8xf32>
    %52 = tpu.matmul %50, %51, %cst_26 {dimension_numbers = #tpu.dot_dimension_numbers<[1], [1], [0], [0], [0, 0, 1, 0], [], []>} : vector<8x8xf32>, vector<8x8xf32>, vector<8x8xf32> -> vector<8x8xf32>
    "tpu.trace_stop"() : () -> ()
    %cst_27 = arith.constant 0.353553385 : f32
    %53 = vector.broadcast %cst_27 : f32 to vector<8x8xf32>
    %54 = arith.mulf %52, %53 : vector<8x8xf32>
    %55 = arith.addf %54, %15 : vector<8x8xf32>
    %cst_28 = arith.constant dense<0xFF800000> : vector<8xf32>
    %56 = vector.multi_reduction <maximumf>, %55, %cst_28 [1] : vector<8x8xf32> to vector<8xf32>
    %57 = vector.shape_cast %56 : vector<8xf32> to vector<8x1xf32>
    %58 = vector.broadcast %57 : vector<8x1xf32> to vector<8x8xf32>
    %59 = arith.subf %55, %58 : vector<8x8xf32>
    %60 = math.exp %59 : vector<8x8xf32>
    %cst_29 = arith.constant dense<0.000000e+00> : vector<8xf32>
    %61 = vector.multi_reduction <add>, %60, %cst_29 [1] : vector<8x8xf32> to vector<8xf32>
    %62 = vector.shape_cast %61 : vector<8xf32> to vector<8x1xf32>
    %63 = tpu.reciprocal %62 {approx = true} : vector<8x1xf32> -> vector<8x1xf32>
    %64 = vector.broadcast %63 : vector<8x1xf32> to vector<8x8xf32>
    %65 = arith.mulf %60, %64 : vector<8x8xf32>
    %66 = vector.extract_strided_slice %24 {offsets = [0, 8], sizes = [8, 8], strides = [1, 1]} : vector<8x32xf32> to vector<8x8xf32>
    %cst_30 = arith.constant dense<0.000000e+00> : vector<8x8xf32>
    %67 = tpu.matmul %65, %66, %cst_30 {dimension_numbers = #tpu.dot_dimension_numbers<[1], [0], [0], [1], [0, 0, 1, 1], [], []>} : vector<8x8xf32>, vector<8x8xf32>, vector<8x8xf32> -> vector<8x8xf32>
    %68 = vector.extract_strided_slice %26 {offsets = [8, 0], sizes = [8, 32], strides = [1, 1]} : vector<32x32xf32> to vector<8x32xf32>
    %cst_31 = arith.constant dense<0.000000e+00> : vector<8x32xf32>
    %69 = tpu.matmul %67, %68, %cst_31 {dimension_numbers = #tpu.dot_dimension_numbers<[1], [0], [0], [1], [0, 0, 1, 1], [], []>} : vector<8x8xf32>, vector<8x32xf32>, vector<8x32xf32> -> vector<8x32xf32>
    %70 = arith.addf %49, %69 : vector<8x32xf32>
    %71 = vector.extract_strided_slice %22 {offsets = [0, 16], sizes = [8, 8], strides = [1, 1]} : vector<8x32xf32> to vector<8x8xf32>
    %72 = vector.extract_strided_slice %23 {offsets = [0, 16], sizes = [8, 8], strides = [1, 1]} : vector<8x32xf32> to vector<8x8xf32>
    "tpu.trace_start"() <{level = 10 : i32, message = "qd,kd->qk"}> : () -> ()
    %cst_32 = arith.constant dense<0.000000e+00> : vector<8x8xf32>
    %73 = tpu.matmul %71, %72, %cst_32 {dimension_numbers = #tpu.dot_dimension_numbers<[1], [1], [0], [0], [0, 0, 1, 0], [], []>} : vector<8x8xf32>, vector<8x8xf32>, vector<8x8xf32> -> vector<8x8xf32>
    "tpu.trace_stop"() : () -> ()
    %cst_33 = arith.constant 0.353553385 : f32
    %74 = vector.broadcast %cst_33 : f32 to vector<8x8xf32>
    %75 = arith.mulf %73, %74 : vector<8x8xf32>
    %76 = arith.addf %75, %15 : vector<8x8xf32>
    %cst_34 = arith.constant dense<0xFF800000> : vector<8xf32>
    %77 = vector.multi_reduction <maximumf>, %76, %cst_34 [1] : vector<8x8xf32> to vector<8xf32>
    %78 = vector.shape_cast %77 : vector<8xf32> to vector<8x1xf32>
    %79 = vector.broadcast %78 : vector<8x1xf32> to vector<8x8xf32>
    %80 = arith.subf %76, %79 : vector<8x8xf32>
    %81 = math.exp %80 : vector<8x8xf32>
    %cst_35 = arith.constant dense<0.000000e+00> : vector<8xf32>
    %82 = vector.multi_reduction <add>, %81, %cst_35 [1] : vector<8x8xf32> to vector<8xf32>
    %83 = vector.shape_cast %82 : vector<8xf32> to vector<8x1xf32>
    %84 = tpu.reciprocal %83 {approx = true} : vector<8x1xf32> -> vector<8x1xf32>
    %85 = vector.broadcast %84 : vector<8x1xf32> to vector<8x8xf32>
    %86 = arith.mulf %81, %85 : vector<8x8xf32>
    %87 = vector.extract_strided_slice %24 {offsets = [0, 16], sizes = [8, 8], strides = [1, 1]} : vector<8x32xf32> to vector<8x8xf32>
    %cst_36 = arith.constant dense<0.000000e+00> : vector<8x8xf32>
    %88 = tpu.matmul %86, %87, %cst_36 {dimension_numbers = #tpu.dot_dimension_numbers<[1], [0], [0], [1], [0, 0, 1, 1], [], []>} : vector<8x8xf32>, vector<8x8xf32>, vector<8x8xf32> -> vector<8x8xf32>
    %89 = vector.extract_strided_slice %26 {offsets = [16, 0], sizes = [8, 32], strides = [1, 1]} : vector<32x32xf32> to vector<8x32xf32>
    %cst_37 = arith.constant dense<0.000000e+00> : vector<8x32xf32>
    %90 = tpu.matmul %88, %89, %cst_37 {dimension_numbers = #tpu.dot_dimension_numbers<[1], [0], [0], [1], [0, 0, 1, 1], [], []>} : vector<8x8xf32>, vector<8x32xf32>, vector<8x32xf32> -> vector<8x32xf32>
    %91 = arith.addf %70, %90 : vector<8x32xf32>
    %92 = vector.extract_strided_slice %22 {offsets = [0, 24], sizes = [8, 8], strides = [1, 1]} : vector<8x32xf32> to vector<8x8xf32>
    %93 = vector.extract_strided_slice %23 {offsets = [0, 24], sizes = [8, 8], strides = [1, 1]} : vector<8x32xf32> to vector<8x8xf32>
    "tpu.trace_start"() <{level = 10 : i32, message = "qd,kd->qk"}> : () -> ()
    %cst_38 = arith.constant dense<0.000000e+00> : vector<8x8xf32>
    %94 = tpu.matmul %92, %93, %cst_38 {dimension_numbers = #tpu.dot_dimension_numbers<[1], [1], [0], [0], [0, 0, 1, 0], [], []>} : vector<8x8xf32>, vector<8x8xf32>, vector<8x8xf32> -> vector<8x8xf32>
    "tpu.trace_stop"() : () -> ()
    %cst_39 = arith.constant 0.353553385 : f32
    %95 = vector.broadcast %cst_39 : f32 to vector<8x8xf32>
    %96 = arith.mulf %94, %95 : vector<8x8xf32>
    %97 = arith.addf %96, %15 : vector<8x8xf32>
    %cst_40 = arith.constant dense<0xFF800000> : vector<8xf32>
    %98 = vector.multi_reduction <maximumf>, %97, %cst_40 [1] : vector<8x8xf32> to vector<8xf32>
    %99 = vector.shape_cast %98 : vector<8xf32> to vector<8x1xf32>
    %100 = vector.broadcast %99 : vector<8x1xf32> to vector<8x8xf32>
    %101 = arith.subf %97, %100 : vector<8x8xf32>
    %102 = math.exp %101 : vector<8x8xf32>
    %cst_41 = arith.constant dense<0.000000e+00> : vector<8xf32>
    %103 = vector.multi_reduction <add>, %102, %cst_41 [1] : vector<8x8xf32> to vector<8xf32>
    %104 = vector.shape_cast %103 : vector<8xf32> to vector<8x1xf32>
    %105 = tpu.reciprocal %104 {approx = true} : vector<8x1xf32> -> vector<8x1xf32>
    %106 = vector.broadcast %105 : vector<8x1xf32> to vector<8x8xf32>
    %107 = arith.mulf %102, %106 : vector<8x8xf32>
    %108 = vector.extract_strided_slice %24 {offsets = [0, 24], sizes = [8, 8], strides = [1, 1]} : vector<8x32xf32> to vector<8x8xf32>
    %cst_42 = arith.constant dense<0.000000e+00> : vector<8x8xf32>
    %109 = tpu.matmul %107, %108, %cst_42 {dimension_numbers = #tpu.dot_dimension_numbers<[1], [0], [0], [1], [0, 0, 1, 1], [], []>} : vector<8x8xf32>, vector<8x8xf32>, vector<8x8xf32> -> vector<8x8xf32>
    %110 = vector.extract_strided_slice %26 {offsets = [24, 0], sizes = [8, 32], strides = [1, 1]} : vector<32x32xf32> to vector<8x32xf32>
    %cst_43 = arith.constant dense<0.000000e+00> : vector<8x32xf32>
    %111 = tpu.matmul %109, %110, %cst_43 {dimension_numbers = #tpu.dot_dimension_numbers<[1], [0], [0], [1], [0, 0, 1, 1], [], []>} : vector<8x8xf32>, vector<8x32xf32>, vector<8x32xf32> -> vector<8x32xf32>
    %112 = arith.addf %91, %111 : vector<8x32xf32>
    %113 = vector.broadcast %27 : vector<1x32xf32> to vector<8x32xf32>
    %114 = arith.addf %112, %113 : vector<8x32xf32>
    %115 = arith.addf %3, %114 : vector<8x32xf32>
    %116 = vector.extract_strided_slice %9 {offsets = [2, 0], sizes = [1, 32], strides = [1, 1]} : vector<16x96xf32> to vector<1x32xf32>
    %117 = vector.extract_strided_slice %9 {offsets = [3, 0], sizes = [1, 32], strides = [1, 1]} : vector<16x96xf32> to vector<1x32xf32>
    %cst_44 = arith.constant dense<0.000000e+00> : vector<8xf32>
    %118 = vector.multi_reduction <add>, %115, %cst_44 [1] : vector<8x32xf32> to vector<8xf32>
    %119 = vector.shape_cast %118 : vector<8xf32> to vector<8x1xf32>
    %cst_45 = arith.constant 3.200000e+01 : f32
    %120 = vector.broadcast %cst_45 : f32 to vector<8x1xf32>
    %121 = arith.divf %119, %120 : vector<8x1xf32>
    %122 = vector.broadcast %121 : vector<8x1xf32> to vector<8x32xf32>
    %123 = arith.subf %115, %122 : vector<8x32xf32>
    %124 = arith.mulf %123, %123 : vector<8x32xf32>
    %cst_46 = arith.constant dense<0.000000e+00> : vector<8xf32>
    %125 = vector.multi_reduction <add>, %124, %cst_46 [1] : vector<8x32xf32> to vector<8xf32>
    %126 = vector.shape_cast %125 : vector<8xf32> to vector<8x1xf32>
    %cst_47 = arith.constant 3.200000e+01 : f32
    %127 = vector.broadcast %cst_47 : f32 to vector<8x1xf32>
    %128 = arith.divf %126, %127 : vector<8x1xf32>
    %cst_48 = arith.constant 9.99999974E-6 : f32
    %129 = vector.broadcast %cst_48 : f32 to vector<8x1xf32>
    %130 = arith.addf %128, %129 : vector<8x1xf32>
    %131 = math.rsqrt %130 : vector<8x1xf32>
    %132 = vector.broadcast %131 : vector<8x1xf32> to vector<8x32xf32>
    %133 = arith.mulf %123, %132 : vector<8x32xf32>
    %134 = vector.broadcast %116 : vector<1x32xf32> to vector<8x32xf32>
    %135 = arith.mulf %133, %134 : vector<8x32xf32>
    %136 = vector.broadcast %117 : vector<1x32xf32> to vector<8x32xf32>
    %137 = arith.addf %135, %136 : vector<8x32xf32>
    %c0_49 = arith.constant 0 : index
    %c0_50 = arith.constant 0 : index
    %c0_51 = arith.constant 0 : index
    %138 = vector.load %arg7[%c0_49, %c0_50, %c0_51] : memref<1x32x32xf32, #tpu.memory_space<vmem>>, vector<1x32x32xf32>
    %139 = vector.shape_cast %138 : vector<1x32x32xf32> to vector<32x32xf32>
    %cst_52 = arith.constant dense<0.000000e+00> : vector<8x32xf32>
    %140 = tpu.matmul %137, %139, %cst_52 {dimension_numbers = #tpu.dot_dimension_numbers<[1], [0], [0], [1], [0, 0, 1, 1], [], []>} : vector<8x32xf32>, vector<32x32xf32>, vector<8x32xf32> -> vector<8x32xf32>
    %141 = vector.extract_strided_slice %9 {offsets = [4, 0], sizes = [1, 32], strides = [1, 1]} : vector<16x96xf32> to vector<1x32xf32>
    %142 = vector.broadcast %141 : vector<1x32xf32> to vector<8x32xf32>
    %143 = arith.addf %140, %142 : vector<8x32xf32>
    %c0_53 = arith.constant 0 : index
    %c0_54 = arith.constant 0 : index
    %c0_55 = arith.constant 0 : index
    %144 = vector.load %arg8[%c0_53, %c0_54, %c0_55] : memref<1x32x64xf32, #tpu.memory_space<vmem>>, vector<1x32x64xf32>
    %145 = vector.shape_cast %144 : vector<1x32x64xf32> to vector<32x64xf32>
    %cst_56 = arith.constant dense<0.000000e+00> : vector<12x64xf32>
    %146 = tpu.matmul %5, %145, %cst_56 {dimension_numbers = #tpu.dot_dimension_numbers<[1], [0], [0], [1], [0, 0, 1, 1], [], []>} : vector<12x32xf32>, vector<32x64xf32>, vector<12x64xf32> -> vector<12x64xf32>
    %147 = vector.extract_strided_slice %9 {offsets = [5, 0], sizes = [1, 64], strides = [1, 1]} : vector<16x96xf32> to vector<1x64xf32>
    %148 = vector.broadcast %147 : vector<1x64xf32> to vector<12x64xf32>
    %149 = arith.addf %146, %148 : vector<12x64xf32>
    %150 = vector.extract_strided_slice %149 {offsets = [0, 0], sizes = [12, 32], strides = [1, 1]} : vector<12x64xf32> to vector<12x32xf32>
    %151 = vector.extract_strided_slice %149 {offsets = [0, 32], sizes = [12, 32], strides = [1, 1]} : vector<12x64xf32> to vector<12x32xf32>
    %c0_57 = arith.constant 0 : index
    %c0_58 = arith.constant 0 : index
    %c0_59 = arith.constant 0 : index
    %152 = vector.load %arg9[%c0_57, %c0_58, %c0_59] : memref<1x32x32xf32, #tpu.memory_space<vmem>>, vector<1x32x32xf32>
    %153 = vector.shape_cast %152 : vector<1x32x32xf32> to vector<32x32xf32>
    %154 = vector.extract_strided_slice %9 {offsets = [6, 0], sizes = [1, 32], strides = [1, 1]} : vector<16x96xf32> to vector<1x32xf32>
    %cst_60 = arith.constant 0.000000e+00 : f32
    %155 = vector.broadcast %cst_60 : f32 to vector<8x32xf32>
    %156 = vector.extract_strided_slice %143 {offsets = [0, 0], sizes = [8, 8], strides = [1, 1]} : vector<8x32xf32> to vector<8x8xf32>
    %157 = vector.extract_strided_slice %150 {offsets = [0, 0], sizes = [12, 8], strides = [1, 1]} : vector<12x32xf32> to vector<12x8xf32>
    "tpu.trace_start"() <{level = 10 : i32, message = "qd,kd->qk"}> : () -> ()
    %cst_61 = arith.constant dense<0.000000e+00> : vector<8x12xf32>
    %158 = tpu.matmul %156, %157, %cst_61 {dimension_numbers = #tpu.dot_dimension_numbers<[1], [1], [0], [0], [0, 0, 1, 0], [], []>} : vector<8x8xf32>, vector<12x8xf32>, vector<8x12xf32> -> vector<8x12xf32>
    "tpu.trace_stop"() : () -> ()
    %cst_62 = arith.constant 0.353553385 : f32
    %159 = vector.broadcast %cst_62 : f32 to vector<8x12xf32>
    %160 = arith.mulf %158, %159 : vector<8x12xf32>
    %161 = vector.broadcast %7 : vector<1x12xf32> to vector<8x12xf32>
    %162 = arith.addf %160, %161 : vector<8x12xf32>
    %cst_63 = arith.constant dense<0xFF800000> : vector<8xf32>
    %163 = vector.multi_reduction <maximumf>, %162, %cst_63 [1] : vector<8x12xf32> to vector<8xf32>
    %164 = vector.shape_cast %163 : vector<8xf32> to vector<8x1xf32>
    %165 = vector.broadcast %164 : vector<8x1xf32> to vector<8x12xf32>
    %166 = arith.subf %162, %165 : vector<8x12xf32>
    %167 = math.exp %166 : vector<8x12xf32>
    %cst_64 = arith.constant dense<0.000000e+00> : vector<8xf32>
    %168 = vector.multi_reduction <add>, %167, %cst_64 [1] : vector<8x12xf32> to vector<8xf32>
    %169 = vector.shape_cast %168 : vector<8xf32> to vector<8x1xf32>
    %170 = vector.broadcast %169 : vector<8x1xf32> to vector<8x12xf32>
    %171 = arith.divf %167, %170 : vector<8x12xf32>
    %172 = vector.extract_strided_slice %151 {offsets = [0, 0], sizes = [12, 8], strides = [1, 1]} : vector<12x32xf32> to vector<12x8xf32>
    %cst_65 = arith.constant dense<0.000000e+00> : vector<8x8xf32>
    %173 = tpu.matmul %171, %172, %cst_65 {dimension_numbers = #tpu.dot_dimension_numbers<[1], [0], [0], [1], [0, 0, 1, 1], [], []>} : vector<8x12xf32>, vector<12x8xf32>, vector<8x8xf32> -> vector<8x8xf32>
    %174 = vector.extract_strided_slice %153 {offsets = [0, 0], sizes = [8, 32], strides = [1, 1]} : vector<32x32xf32> to vector<8x32xf32>
    %cst_66 = arith.constant dense<0.000000e+00> : vector<8x32xf32>
    %175 = tpu.matmul %173, %174, %cst_66 {dimension_numbers = #tpu.dot_dimension_numbers<[1], [0], [0], [1], [0, 0, 1, 1], [], []>} : vector<8x8xf32>, vector<8x32xf32>, vector<8x32xf32> -> vector<8x32xf32>
    %176 = arith.addf %155, %175 : vector<8x32xf32>
    %177 = vector.extract_strided_slice %143 {offsets = [0, 8], sizes = [8, 8], strides = [1, 1]} : vector<8x32xf32> to vector<8x8xf32>
    %178 = vector.extract_strided_slice %150 {offsets = [0, 8], sizes = [12, 8], strides = [1, 1]} : vector<12x32xf32> to vector<12x8xf32>
    "tpu.trace_start"() <{level = 10 : i32, message = "qd,kd->qk"}> : () -> ()
    %cst_67 = arith.constant dense<0.000000e+00> : vector<8x12xf32>
    %179 = tpu.matmul %177, %178, %cst_67 {dimension_numbers = #tpu.dot_dimension_numbers<[1], [1], [0], [0], [0, 0, 1, 0], [], []>} : vector<8x8xf32>, vector<12x8xf32>, vector<8x12xf32> -> vector<8x12xf32>
    "tpu.trace_stop"() : () -> ()
    %cst_68 = arith.constant 0.353553385 : f32
    %180 = vector.broadcast %cst_68 : f32 to vector<8x12xf32>
    %181 = arith.mulf %179, %180 : vector<8x12xf32>
    %182 = vector.broadcast %7 : vector<1x12xf32> to vector<8x12xf32>
    %183 = arith.addf %181, %182 : vector<8x12xf32>
    %cst_69 = arith.constant dense<0xFF800000> : vector<8xf32>
    %184 = vector.multi_reduction <maximumf>, %183, %cst_69 [1] : vector<8x12xf32> to vector<8xf32>
    %185 = vector.shape_cast %184 : vector<8xf32> to vector<8x1xf32>
    %186 = vector.broadcast %185 : vector<8x1xf32> to vector<8x12xf32>
    %187 = arith.subf %183, %186 : vector<8x12xf32>
    %188 = math.exp %187 : vector<8x12xf32>
    %cst_70 = arith.constant dense<0.000000e+00> : vector<8xf32>
    %189 = vector.multi_reduction <add>, %188, %cst_70 [1] : vector<8x12xf32> to vector<8xf32>
    %190 = vector.shape_cast %189 : vector<8xf32> to vector<8x1xf32>
    %191 = vector.broadcast %190 : vector<8x1xf32> to vector<8x12xf32>
    %192 = arith.divf %188, %191 : vector<8x12xf32>
    %193 = vector.extract_strided_slice %151 {offsets = [0, 8], sizes = [12, 8], strides = [1, 1]} : vector<12x32xf32> to vector<12x8xf32>
    %cst_71 = arith.constant dense<0.000000e+00> : vector<8x8xf32>
    %194 = tpu.matmul %192, %193, %cst_71 {dimension_numbers = #tpu.dot_dimension_numbers<[1], [0], [0], [1], [0, 0, 1, 1], [], []>} : vector<8x12xf32>, vector<12x8xf32>, vector<8x8xf32> -> vector<8x8xf32>
    %195 = vector.extract_strided_slice %153 {offsets = [8, 0], sizes = [8, 32], strides = [1, 1]} : vector<32x32xf32> to vector<8x32xf32>
    %cst_72 = arith.constant dense<0.000000e+00> : vector<8x32xf32>
    %196 = tpu.matmul %194, %195, %cst_72 {dimension_numbers = #tpu.dot_dimension_numbers<[1], [0], [0], [1], [0, 0, 1, 1], [], []>} : vector<8x8xf32>, vector<8x32xf32>, vector<8x32xf32> -> vector<8x32xf32>
    %197 = arith.addf %176, %196 : vector<8x32xf32>
    %198 = arith.addf %171, %192 : vector<8x12xf32>
    %199 = vector.extract_strided_slice %143 {offsets = [0, 16], sizes = [8, 8], strides = [1, 1]} : vector<8x32xf32> to vector<8x8xf32>
    %200 = vector.extract_strided_slice %150 {offsets = [0, 16], sizes = [12, 8], strides = [1, 1]} : vector<12x32xf32> to vector<12x8xf32>
    "tpu.trace_start"() <{level = 10 : i32, message = "qd,kd->qk"}> : () -> ()
    %cst_73 = arith.constant dense<0.000000e+00> : vector<8x12xf32>
    %201 = tpu.matmul %199, %200, %cst_73 {dimension_numbers = #tpu.dot_dimension_numbers<[1], [1], [0], [0], [0, 0, 1, 0], [], []>} : vector<8x8xf32>, vector<12x8xf32>, vector<8x12xf32> -> vector<8x12xf32>
    "tpu.trace_stop"() : () -> ()
    %cst_74 = arith.constant 0.353553385 : f32
    %202 = vector.broadcast %cst_74 : f32 to vector<8x12xf32>
    %203 = arith.mulf %201, %202 : vector<8x12xf32>
    %204 = vector.broadcast %7 : vector<1x12xf32> to vector<8x12xf32>
    %205 = arith.addf %203, %204 : vector<8x12xf32>
    %cst_75 = arith.constant dense<0xFF800000> : vector<8xf32>
    %206 = vector.multi_reduction <maximumf>, %205, %cst_75 [1] : vector<8x12xf32> to vector<8xf32>
    %207 = vector.shape_cast %206 : vector<8xf32> to vector<8x1xf32>
    %208 = vector.broadcast %207 : vector<8x1xf32> to vector<8x12xf32>
    %209 = arith.subf %205, %208 : vector<8x12xf32>
    %210 = math.exp %209 : vector<8x12xf32>
    %cst_76 = arith.constant dense<0.000000e+00> : vector<8xf32>
    %211 = vector.multi_reduction <add>, %210, %cst_76 [1] : vector<8x12xf32> to vector<8xf32>
    %212 = vector.shape_cast %211 : vector<8xf32> to vector<8x1xf32>
    %213 = vector.broadcast %212 : vector<8x1xf32> to vector<8x12xf32>
    %214 = arith.divf %210, %213 : vector<8x12xf32>
    %215 = vector.extract_strided_slice %151 {offsets = [0, 16], sizes = [12, 8], strides = [1, 1]} : vector<12x32xf32> to vector<12x8xf32>
    %cst_77 = arith.constant dense<0.000000e+00> : vector<8x8xf32>
    %216 = tpu.matmul %214, %215, %cst_77 {dimension_numbers = #tpu.dot_dimension_numbers<[1], [0], [0], [1], [0, 0, 1, 1], [], []>} : vector<8x12xf32>, vector<12x8xf32>, vector<8x8xf32> -> vector<8x8xf32>
    %217 = vector.extract_strided_slice %153 {offsets = [16, 0], sizes = [8, 32], strides = [1, 1]} : vector<32x32xf32> to vector<8x32xf32>
    %cst_78 = arith.constant dense<0.000000e+00> : vector<8x32xf32>
    %218 = tpu.matmul %216, %217, %cst_78 {dimension_numbers = #tpu.dot_dimension_numbers<[1], [0], [0], [1], [0, 0, 1, 1], [], []>} : vector<8x8xf32>, vector<8x32xf32>, vector<8x32xf32> -> vector<8x32xf32>
    %219 = arith.addf %197, %218 : vector<8x32xf32>
    %220 = arith.addf %198, %214 : vector<8x12xf32>
    %221 = vector.extract_strided_slice %143 {offsets = [0, 24], sizes = [8, 8], strides = [1, 1]} : vector<8x32xf32> to vector<8x8xf32>
    %222 = vector.extract_strided_slice %150 {offsets = [0, 24], sizes = [12, 8], strides = [1, 1]} : vector<12x32xf32> to vector<12x8xf32>
    "tpu.trace_start"() <{level = 10 : i32, message = "qd,kd->qk"}> : () -> ()
    %cst_79 = arith.constant dense<0.000000e+00> : vector<8x12xf32>
    %223 = tpu.matmul %221, %222, %cst_79 {dimension_numbers = #tpu.dot_dimension_numbers<[1], [1], [0], [0], [0, 0, 1, 0], [], []>} : vector<8x8xf32>, vector<12x8xf32>, vector<8x12xf32> -> vector<8x12xf32>
    "tpu.trace_stop"() : () -> ()
    %cst_80 = arith.constant 0.353553385 : f32
    %224 = vector.broadcast %cst_80 : f32 to vector<8x12xf32>
    %225 = arith.mulf %223, %224 : vector<8x12xf32>
    %226 = vector.broadcast %7 : vector<1x12xf32> to vector<8x12xf32>
    %227 = arith.addf %225, %226 : vector<8x12xf32>
    %cst_81 = arith.constant dense<0xFF800000> : vector<8xf32>
    %228 = vector.multi_reduction <maximumf>, %227, %cst_81 [1] : vector<8x12xf32> to vector<8xf32>
    %229 = vector.shape_cast %228 : vector<8xf32> to vector<8x1xf32>
    %230 = vector.broadcast %229 : vector<8x1xf32> to vector<8x12xf32>
    %231 = arith.subf %227, %230 : vector<8x12xf32>
    %232 = math.exp %231 : vector<8x12xf32>
    %cst_82 = arith.constant dense<0.000000e+00> : vector<8xf32>
    %233 = vector.multi_reduction <add>, %232, %cst_82 [1] : vector<8x12xf32> to vector<8xf32>
    %234 = vector.shape_cast %233 : vector<8xf32> to vector<8x1xf32>
    %235 = vector.broadcast %234 : vector<8x1xf32> to vector<8x12xf32>
    %236 = arith.divf %232, %235 : vector<8x12xf32>
    %237 = vector.extract_strided_slice %151 {offsets = [0, 24], sizes = [12, 8], strides = [1, 1]} : vector<12x32xf32> to vector<12x8xf32>
    %cst_83 = arith.constant dense<0.000000e+00> : vector<8x8xf32>
    %238 = tpu.matmul %236, %237, %cst_83 {dimension_numbers = #tpu.dot_dimension_numbers<[1], [0], [0], [1], [0, 0, 1, 1], [], []>} : vector<8x12xf32>, vector<12x8xf32>, vector<8x8xf32> -> vector<8x8xf32>
    %239 = vector.extract_strided_slice %153 {offsets = [24, 0], sizes = [8, 32], strides = [1, 1]} : vector<32x32xf32> to vector<8x32xf32>
    %cst_84 = arith.constant dense<0.000000e+00> : vector<8x32xf32>
    %240 = tpu.matmul %238, %239, %cst_84 {dimension_numbers = #tpu.dot_dimension_numbers<[1], [0], [0], [1], [0, 0, 1, 1], [], []>} : vector<8x8xf32>, vector<8x32xf32>, vector<8x32xf32> -> vector<8x32xf32>
    %241 = arith.addf %219, %240 : vector<8x32xf32>
    %242 = arith.addf %220, %236 : vector<8x12xf32>
    %243 = vector.broadcast %154 : vector<1x32xf32> to vector<8x32xf32>
    %244 = arith.addf %241, %243 : vector<8x32xf32>
    %245 = arith.addf %137, %244 : vector<8x32xf32>
    %246 = vector.extract_strided_slice %9 {offsets = [7, 0], sizes = [1, 32], strides = [1, 1]} : vector<16x96xf32> to vector<1x32xf32>
    %247 = vector.extract_strided_slice %9 {offsets = [8, 0], sizes = [1, 32], strides = [1, 1]} : vector<16x96xf32> to vector<1x32xf32>
    %cst_85 = arith.constant dense<0.000000e+00> : vector<8xf32>
    %248 = vector.multi_reduction <add>, %245, %cst_85 [1] : vector<8x32xf32> to vector<8xf32>
    %249 = vector.shape_cast %248 : vector<8xf32> to vector<8x1xf32>
    %cst_86 = arith.constant 3.200000e+01 : f32
    %250 = vector.broadcast %cst_86 : f32 to vector<8x1xf32>
    %251 = arith.divf %249, %250 : vector<8x1xf32>
    %252 = vector.broadcast %251 : vector<8x1xf32> to vector<8x32xf32>
    %253 = arith.subf %245, %252 : vector<8x32xf32>
    %254 = arith.mulf %253, %253 : vector<8x32xf32>
    %cst_87 = arith.constant dense<0.000000e+00> : vector<8xf32>
    %255 = vector.multi_reduction <add>, %254, %cst_87 [1] : vector<8x32xf32> to vector<8xf32>
    %256 = vector.shape_cast %255 : vector<8xf32> to vector<8x1xf32>
    %cst_88 = arith.constant 3.200000e+01 : f32
    %257 = vector.broadcast %cst_88 : f32 to vector<8x1xf32>
    %258 = arith.divf %256, %257 : vector<8x1xf32>
    %cst_89 = arith.constant 9.99999974E-6 : f32
    %259 = vector.broadcast %cst_89 : f32 to vector<8x1xf32>
    %260 = arith.addf %258, %259 : vector<8x1xf32>
    %261 = math.rsqrt %260 : vector<8x1xf32>
    %262 = vector.broadcast %261 : vector<8x1xf32> to vector<8x32xf32>
    %263 = arith.mulf %253, %262 : vector<8x32xf32>
    %264 = vector.broadcast %246 : vector<1x32xf32> to vector<8x32xf32>
    %265 = arith.mulf %263, %264 : vector<8x32xf32>
    %266 = vector.broadcast %247 : vector<1x32xf32> to vector<8x32xf32>
    %267 = arith.addf %265, %266 : vector<8x32xf32>
    %c0_90 = arith.constant 0 : index
    %c0_91 = arith.constant 0 : index
    %c0_92 = arith.constant 0 : index
    %268 = vector.load %arg10[%c0_90, %c0_91, %c0_92] : memref<1x32x64xf32, #tpu.memory_space<vmem>>, vector<1x32x64xf32>
    %269 = vector.shape_cast %268 : vector<1x32x64xf32> to vector<32x64xf32>
    %cst_93 = arith.constant dense<0.000000e+00> : vector<8x64xf32>
    %270 = tpu.matmul %267, %269, %cst_93 {dimension_numbers = #tpu.dot_dimension_numbers<[1], [0], [0], [1], [0, 0, 1, 1], [], []>} : vector<8x32xf32>, vector<32x64xf32>, vector<8x64xf32> -> vector<8x64xf32>
    %271 = vector.extract_strided_slice %9 {offsets = [9, 0], sizes = [1, 64], strides = [1, 1]} : vector<16x96xf32> to vector<1x64xf32>
    %272 = vector.broadcast %271 : vector<1x64xf32> to vector<8x64xf32>
    %273 = arith.addf %270, %272 : vector<8x64xf32>
    %cst_94 = arith.constant 0.000000e+00 : f32
    %274 = vector.broadcast %cst_94 : f32 to vector<8x64xf32>
    %275 = arith.maximumf %273, %274 : vector<8x64xf32>
    %c0_95 = arith.constant 0 : index
    %c0_96 = arith.constant 0 : index
    %c0_97 = arith.constant 0 : index
    %276 = vector.load %arg11[%c0_95, %c0_96, %c0_97] : memref<1x64x32xf32, #tpu.memory_space<vmem>>, vector<1x64x32xf32>
    %277 = vector.shape_cast %276 : vector<1x64x32xf32> to vector<64x32xf32>
    %cst_98 = arith.constant dense<0.000000e+00> : vector<8x32xf32>
    %278 = tpu.matmul %275, %277, %cst_98 {dimension_numbers = #tpu.dot_dimension_numbers<[1], [0], [0], [1], [0, 0, 1, 1], [], []>} : vector<8x64xf32>, vector<64x32xf32>, vector<8x32xf32> -> vector<8x32xf32>
    %279 = vector.extract_strided_slice %9 {offsets = [10, 0], sizes = [1, 32], strides = [1, 1]} : vector<16x96xf32> to vector<1x32xf32>
    %280 = vector.broadcast %279 : vector<1x32xf32> to vector<8x32xf32>
    %281 = arith.addf %278, %280 : vector<8x32xf32>
    %282 = arith.addf %267, %281 : vector<8x32xf32>
    %283 = vector.extract_strided_slice %9 {offsets = [11, 0], sizes = [1, 32], strides = [1, 1]} : vector<16x96xf32> to vector<1x32xf32>
    %284 = vector.extract_strided_slice %9 {offsets = [12, 0], sizes = [1, 32], strides = [1, 1]} : vector<16x96xf32> to vector<1x32xf32>
    %cst_99 = arith.constant dense<0.000000e+00> : vector<8xf32>
    %285 = vector.multi_reduction <add>, %282, %cst_99 [1] : vector<8x32xf32> to vector<8xf32>
    %286 = vector.shape_cast %285 : vector<8xf32> to vector<8x1xf32>
    %cst_100 = arith.constant 3.200000e+01 : f32
    %287 = vector.broadcast %cst_100 : f32 to vector<8x1xf32>
    %288 = arith.divf %286, %287 : vector<8x1xf32>
    %289 = vector.broadcast %288 : vector<8x1xf32> to vector<8x32xf32>
    %290 = arith.subf %282, %289 : vector<8x32xf32>
    %291 = arith.mulf %290, %290 : vector<8x32xf32>
    %cst_101 = arith.constant dense<0.000000e+00> : vector<8xf32>
    %292 = vector.multi_reduction <add>, %291, %cst_101 [1] : vector<8x32xf32> to vector<8xf32>
    %293 = vector.shape_cast %292 : vector<8xf32> to vector<8x1xf32>
    %cst_102 = arith.constant 3.200000e+01 : f32
    %294 = vector.broadcast %cst_102 : f32 to vector<8x1xf32>
    %295 = arith.divf %293, %294 : vector<8x1xf32>
    %cst_103 = arith.constant 9.99999974E-6 : f32
    %296 = vector.broadcast %cst_103 : f32 to vector<8x1xf32>
    %297 = arith.addf %295, %296 : vector<8x1xf32>
    %298 = math.rsqrt %297 : vector<8x1xf32>
    %299 = vector.broadcast %298 : vector<8x1xf32> to vector<8x32xf32>
    %300 = arith.mulf %290, %299 : vector<8x32xf32>
    %301 = vector.broadcast %283 : vector<1x32xf32> to vector<8x32xf32>
    %302 = arith.mulf %300, %301 : vector<8x32xf32>
    %303 = vector.broadcast %284 : vector<1x32xf32> to vector<8x32xf32>
    %304 = arith.addf %302, %303 : vector<8x32xf32>
    %c0_104 = arith.constant 0 : index
    %c0_105 = arith.constant 0 : index
    %305 = vector.load %arg17[%c0_104, %c0_105] : memref<8x32xf32, #tpu.memory_space<vmem>>, vector<8x32xf32>
    tpu.vector_store %arg17[%c0_104, %c0_105], %304 {strides = array<i32>} : memref<8x32xf32, #tpu.memory_space<vmem>>, vector<8x32xf32>,
    %c1_i32 = arith.constant 1 : i32
    %306 = arith.cmpi eq, %arg1, %c1_i32 : i32
    %307 = arith.extui %306 : i1 to i32
    %c0_i32_106 = arith.constant 0 : i32
    %308 = arith.cmpi ne, %307, %c0_i32_106 : i32
    scf.if %308 {
      %cst_107 = arith.constant 2.500000e-01 : f32
      %309 = vector.broadcast %cst_107 : f32 to vector<8x12xf32>
      %310 = arith.mulf %242, %309 : vector<8x12xf32>
      %cst_108 = arith.constant 1.000000e-07 : f32
      %cst_109 = arith.constant 0.99999988 : f32
      %311 = vector.broadcast %cst_108 : f32 to vector<8x12xf32>
      %312 = arith.maximumf %311, %310 : vector<8x12xf32>
      %313 = vector.broadcast %cst_109 : f32 to vector<8x12xf32>
      %314 = arith.minimumf %313, %312 : vector<8x12xf32>
      %315 = math.log %314 : vector<8x12xf32>
      %316 = vector.extract_strided_slice %315 {offsets = [0, 4], sizes = [8, 8], strides = [1, 1]} : vector<8x12xf32> to vector<8x8xf32>
      %cst_110 = arith.constant dense<0xFF800000> : vector<8xf32>
      %317 = vector.multi_reduction <maximumf>, %316, %cst_110 [1] : vector<8x8xf32> to vector<8xf32>
      %318 = vector.shape_cast %317 : vector<8xf32> to vector<8x1xf32>
      %319 = vector.broadcast %318 : vector<8x1xf32> to vector<8x8xf32>
      %320 = arith.subf %316, %319 : vector<8x8xf32>
      %321 = math.exp %320 : vector<8x8xf32>
      %cst_111 = arith.constant dense<0.000000e+00> : vector<8xf32>
      %322 = vector.multi_reduction <add>, %321, %cst_111 [1] : vector<8x8xf32> to vector<8xf32>
      %323 = vector.shape_cast %322 : vector<8xf32> to vector<8x1xf32>
      %324 = math.log %323 : vector<8x1xf32>
      %325 = vector.broadcast %324 : vector<8x1xf32> to vector<8x8xf32>
      %326 = arith.subf %320, %325 : vector<8x8xf32>
      %c0_112 = arith.constant 0 : index
      %c0_113 = arith.constant 0 : index
      %c0_114 = arith.constant 0 : index
      %327 = vector.load %arg16[%c0_112, %c0_113, %c0_114] : memref<1x8x8xf32, #tpu.memory_space<vmem>>, vector<1x8x8xf32>
      %328 = vector.shape_cast %327 : vector<1x8x8xf32> to vector<8x8xf32>
      %329 = vector.shape_cast %326 : vector<8x8xf32> to vector<1x8x8xf32>
      tpu.vector_store %arg16[%c0_112, %c0_113, %c0_114], %329 {strides = array<i32>} : memref<1x8x8xf32, #tpu.memory_space<vmem>>, vector<1x8x8xf32>,
      %c0_115 = arith.constant 0 : index
      %c0_116 = arith.constant 0 : index
      %330 = vector.load %arg13[%c0_115, %c0_116] : memref<32x19xf32, #tpu.memory_space<vmem>>, vector<32x19xf32>
      %cst_117 = arith.constant dense<0.000000e+00> : vector<8x19xf32>
      %331 = tpu.matmul %304, %330, %cst_117 {dimension_numbers = #tpu.dot_dimension_numbers<[1], [0], [0], [1], [0, 0, 1, 1], [], []>} : vector<8x32xf32>, vector<32x19xf32>, vector<8x19xf32> -> vector<8x19xf32>
      %c0_118 = arith.constant 0 : index
      %c0_119 = arith.constant 0 : index
      %332 = vector.load %arg14[%c0_118, %c0_119] : memref<1x19xf32, #tpu.memory_space<vmem>>, vector<1x19xf32>
      %333 = vector.broadcast %332 : vector<1x19xf32> to vector<8x19xf32>
      %334 = arith.addf %331, %333 : vector<8x19xf32>
      %335 = vector.extract_strided_slice %334 {offsets = [0, 0], sizes = [8, 3], strides = [1, 1]} : vector<8x19xf32> to vector<8x3xf32>
      %cst_120 = arith.constant dense<0xFF800000> : vector<8xf32>
      %336 = vector.multi_reduction <maximumf>, %335, %cst_120 [1] : vector<8x3xf32> to vector<8xf32>
      %337 = vector.shape_cast %336 : vector<8xf32> to vector<8x1xf32>
      %338 = vector.broadcast %337 : vector<8x1xf32> to vector<8x3xf32>
      %339 = arith.subf %335, %338 : vector<8x3xf32>
      %340 = math.exp %339 : vector<8x3xf32>
      %cst_121 = arith.constant dense<0.000000e+00> : vector<8xf32>
      %341 = vector.multi_reduction <add>, %340, %cst_121 [1] : vector<8x3xf32> to vector<8xf32>
      %342 = vector.shape_cast %341 : vector<8xf32> to vector<8x1xf32>
      %343 = math.log %342 : vector<8x1xf32>
      %344 = vector.broadcast %343 : vector<8x1xf32> to vector<8x3xf32>
      %345 = arith.subf %339, %344 : vector<8x3xf32>
      %346 = vector.extract_strided_slice %334 {offsets = [0, 3], sizes = [8, 16], strides = [1, 1]} : vector<8x19xf32> to vector<8x16xf32>
      %cst_122 = arith.constant dense<0xFF800000> : vector<8xf32>
      %347 = vector.multi_reduction <maximumf>, %346, %cst_122 [1] : vector<8x16xf32> to vector<8xf32>
      %348 = vector.shape_cast %347 : vector<8xf32> to vector<8x1xf32>
      %349 = vector.broadcast %348 : vector<8x1xf32> to vector<8x16xf32>
      %350 = arith.subf %346, %349 : vector<8x16xf32>
      %351 = math.exp %350 : vector<8x16xf32>
      %cst_123 = arith.constant dense<0.000000e+00> : vector<8xf32>
      %352 = vector.multi_reduction <add>, %351, %cst_123 [1] : vector<8x16xf32> to vector<8xf32>
      %353 = vector.shape_cast %352 : vector<8xf32> to vector<8x1xf32>
      %354 = math.log %353 : vector<8x1xf32>
      %355 = vector.broadcast %354 : vector<8x1xf32> to vector<8x16xf32>
      %356 = arith.subf %350, %355 : vector<8x16xf32>
      %357 = tpu.concatenate %345, %356 in 1 : vector<8x3xf32>, vector<8x16xf32> -> vector<8x19xf32>
      %c0_124 = arith.constant 0 : index
      %c0_125 = arith.constant 0 : index
      %c0_126 = arith.constant 0 : index
      %358 = vector.load %arg15[%c0_124, %c0_125, %c0_126] : memref<1x8x19xf32, #tpu.memory_space<vmem>>, vector<1x8x19xf32>
      %359 = vector.shape_cast %358 : vector<1x8x19xf32> to vector<8x19xf32>
      %360 = vector.shape_cast %357 : vector<8x19xf32> to vector<1x8x19xf32>
      tpu.vector_store %arg15[%c0_124, %c0_125, %c0_126], %360 {strides = array<i32>} : memref<1x8x19xf32, #tpu.memory_space<vmem>>, vector<1x8x19xf32>,
    } else {
    }
    return
  }
  func.func @transform_0(%arg0: i32, %arg1: i32) -> (i32, i32, i32) {
    %c0_i32 = arith.constant 0 : i32
    %c0_i32_0 = arith.constant 0 : i32
    %c0_i32_1 = arith.constant 0 : i32
    return %arg0, %c0_i32, %c0_i32_0 : i32, i32, i32
  }
  func.func @transform_1(%arg0: i32, %arg1: i32) -> (i32, i32, i32) {
    %c0_i32 = arith.constant 0 : i32
    %c0_i32_0 = arith.constant 0 : i32
    %c0_i32_1 = arith.constant 0 : i32
    return %arg0, %c0_i32, %c0_i32_0 : i32, i32, i32
  }
  func.func @transform_2(%arg0: i32, %arg1: i32) -> (i32, i32, i32) {
    %c0_i32 = arith.constant 0 : i32
    %c0_i32_0 = arith.constant 0 : i32
    %c0_i32_1 = arith.constant 0 : i32
    return %arg0, %c0_i32, %c0_i32_0 : i32, i32, i32
  }
  func.func @transform_3(%arg0: i32, %arg1: i32) -> (i32, i32, i32) {
    %c0_i32 = arith.constant 0 : i32
    %c0_i32_0 = arith.constant 0 : i32
    %c0_i32_1 = arith.constant 0 : i32
    return %arg1, %c0_i32, %c0_i32_0 : i32, i32, i32
  }
  func.func @transform_4(%arg0: i32, %arg1: i32) -> (i32, i32, i32) {
    %c0_i32 = arith.constant 0 : i32
    %c0_i32_0 = arith.constant 0 : i32
    %c0_i32_1 = arith.constant 0 : i32
    return %arg1, %c0_i32, %c0_i32_0 : i32, i32, i32
  }
  func.func @transform_5(%arg0: i32, %arg1: i32) -> (i32, i32, i32) {
    %c0_i32 = arith.constant 0 : i32
    %c0_i32_0 = arith.constant 0 : i32
    %c0_i32_1 = arith.constant 0 : i32
    return %arg1, %c0_i32, %c0_i32_0 : i32, i32, i32
  }
  func.func @transform_6(%arg0: i32, %arg1: i32) -> (i32, i32, i32) {
    %c0_i32 = arith.constant 0 : i32
    %c0_i32_0 = arith.constant 0 : i32
    %c0_i32_1 = arith.constant 0 : i32
    return %arg1, %c0_i32, %c0_i32_0 : i32, i32, i32
  }
  func.func @transform_7(%arg0: i32, %arg1: i32) -> (i32, i32, i32) {
    %c0_i32 = arith.constant 0 : i32
    %c0_i32_0 = arith.constant 0 : i32
    %c0_i32_1 = arith.constant 0 : i32
    return %arg1, %c0_i32, %c0_i32_0 : i32, i32, i32
  }
  func.func @transform_8(%arg0: i32, %arg1: i32) -> (i32, i32, i32) {
    %c0_i32 = arith.constant 0 : i32
    %c0_i32_0 = arith.constant 0 : i32
    %c0_i32_1 = arith.constant 0 : i32
    return %arg1, %c0_i32, %c0_i32_0 : i32, i32, i32
  }
  func.func @transform_9(%arg0: i32, %arg1: i32) -> (i32, i32, i32) {
    %c0_i32 = arith.constant 0 : i32
    %c0_i32_0 = arith.constant 0 : i32
    %c0_i32_1 = arith.constant 0 : i32
    return %arg1, %c0_i32, %c0_i32_0 : i32, i32, i32
  }
  func.func @transform_10(%arg0: i32, %arg1: i32) -> (i32, i32, i32) {
    %c0_i32 = arith.constant 0 : i32
    %c0_i32_0 = arith.constant 0 : i32
    %c0_i32_1 = arith.constant 0 : i32
    return %arg1, %c0_i32, %c0_i32_0 : i32, i32, i32
  }
  func.func @transform_11(%arg0: i32, %arg1: i32) -> (i32, i32) {
    %c0_i32 = arith.constant 0 : i32
    %c0_i32_0 = arith.constant 0 : i32
    %c0_i32_1 = arith.constant 0 : i32
    return %c0_i32, %c0_i32_0 : i32, i32
  }
  func.func @transform_12(%arg0: i32, %arg1: i32) -> (i32, i32) {
    %c0_i32 = arith.constant 0 : i32
    %c0_i32_0 = arith.constant 0 : i32
    %c0_i32_1 = arith.constant 0 : i32
    return %c0_i32, %c0_i32_0 : i32, i32
  }
  func.func @transform_13(%arg0: i32, %arg1: i32) -> (i32, i32, i32) {
    %c0_i32 = arith.constant 0 : i32
    %c0_i32_0 = arith.constant 0 : i32
    %c0_i32_1 = arith.constant 0 : i32
    return %arg0, %c0_i32, %c0_i32_0 : i32, i32, i32
  }
  func.func @transform_14(%arg0: i32, %arg1: i32) -> (i32, i32, i32) {
    %c0_i32 = arith.constant 0 : i32
    %c0_i32_0 = arith.constant 0 : i32
    %c0_i32_1 = arith.constant 0 : i32
    return %arg0, %c0_i32, %c0_i32_0 : i32, i32, i32
  }
}

</mosaic_0001>

<llo_original>
// kernel: _lambda_.3
$region0: #{_lambda_.3}
  #allocation0 [shape = 'u32[]', space=smem, size = 0x4, offset = 0x4, fixed_abs, tag = 'smem constant byte address 0x4 - core index']
  #allocation1 [shape = 'u32[144,128]{1,0:T(1,128)}', space=vmem, size = 0x12000, scoped, tag = 'internal scratch']
  %s0 = inlined_call_operand.vmem [shape: f32[2,256], index: 0, kind: input, shape index: {}]
  %s1 = inlined_call_operand.hbm [shape: f32[256,1024], index: 1, kind: input, shape index: {}]
  %s2 = inlined_call_operand.vmem [shape: f32[1,1024], index: 2, kind: input, shape index: {}]
  %s3 = inlined_call_operand.hbm [shape: f32[1024,128], index: 3, kind: input, shape index: {}]
  %s4 = inlined_call_operand.vmem [shape: f32[1,128], index: 4, kind: input, shape index: {}]
  %s5 = inlined_call_operand.vmem [shape: f32[2,128], index: 5, kind: output, shape index: {}]
  %s6 = sld [smem:[#allocation0]]
  $region38: #{_lambda_.3} parent=0
    _
  %s8 = ssub.s32 1, %s6
  %s9 = scalar_select 0, %s8, %s6
  $region1: #{_lambda_.3} parent=0
    #allocation2 [shape = 'u8[1048576]{0}', space=vmem, size = 0x100000, scoped, tag = 'input window, operand 1, single buffered']
    #allocation3 [shape = 's32[1]{0}', space=sflag, size = 0x4, scoped, tag = 'scoped memory for _lambda_.3']
    #allocation4 [shape = 'u8[524288]{0}', space=vmem, size = 0x80000, scoped, tag = 'input window, operand 3, single buffered']
    #allocation5 [shape = 's32[1]{0}', space=sflag, size = 0x4, scoped, tag = 'scoped memory for _lambda_.3']
    %10 = vsyncpa [#allocation3], 0
    %11 = vsyncpa [#allocation5], 0
    // Predicated region
    $region2: #{_lambda_.3} parent=1 // pred_check
      _
    $region3: #{_lambda_.3} parent=1 // pred_check_branch
      %13 = sbr.rel (0) target = $region5
    $region4: #{_lambda_.3} parent=1 // pred_region
      _
    $region5: #{_lambda_.3} parent=1 // pred_fallthru
      _
    // Predicated region
    $region6: #{_lambda_.3} parent=1 // pred_check
      _
    $region7: #{_lambda_.3} parent=1 // pred_check_branch
      %15 = sbr.rel (0) target = $region9
    $region8: #{_lambda_.3} parent=1 // pred_region
      %s17 = ssub.s32 32768, 32768
      %18 = vsyncadd [#allocation3], %s17
      %s19 = sshll.u32 [#allocation2], 4
      %s20 = int_to_ptr.vmem [resolvable:$true] %s19
      %25 = dma.hbm_to_vmem [thread:$0]  %s1, 32768, %s20, [#allocation3], 1024, 1024, 64
    $region9: #{_lambda_.3} parent=1 // pred_fallthru
      _
    // Predicated region
    $region10: #{_lambda_.3} parent=1 // pred_check
      _
    $region11: #{_lambda_.3} parent=1 // pred_check_branch
      %27 = sbr.rel (0) target = $region13
    $region12: #{_lambda_.3} parent=1 // pred_region
      _
    $region13: #{_lambda_.3} parent=1 // pred_fallthru
      _
    // Predicated region
    $region14: #{_lambda_.3} parent=1 // pred_check
      _
    $region15: #{_lambda_.3} parent=1 // pred_check_branch
      %29 = sbr.rel (0) target = $region17
    $region16: #{_lambda_.3} parent=1 // pred_region
      %s31 = ssub.s32 16384, 16384
      %32 = vsyncadd [#allocation5], %s31
      %s33 = sshll.u32 [#allocation4], 4
      %s34 = int_to_ptr.vmem [resolvable:$true] %s33
      %39 = dma.hbm_to_vmem [thread:$0]  %s3, 16384, %s34, [#allocation5], 128, 128, 8
    $region17: #{_lambda_.3} parent=1 // pred_fallthru
      _
    // Predicated region
    $region18: #{_lambda_.3} parent=1 // pred_check
      _
    $region19: #{_lambda_.3} parent=1 // pred_check_branch
      %41 = sbr.rel (0) target = $region21
    $region20: #{_lambda_.3} parent=1 // pred_region
      _
    $region21: #{_lambda_.3} parent=1 // pred_fallthru
      _
    // Predicated region
    $region22: #{_lambda_.3} parent=1 // pred_check
      _
    $region23: #{_lambda_.3} parent=1 // pred_check_branch
      %43 = sbr.rel (0) target = $region25
    $region24: #{_lambda_.3} parent=1 // pred_region
      %44 = dma.done [#allocation3], 32768
    $region25: #{_lambda_.3} parent=1 // pred_fallthru
      _
    // Predicated region
    $region26: #{_lambda_.3} parent=1 // pred_check
      _
    $region27: #{_lambda_.3} parent=1 // pred_check_branch
      %46 = sbr.rel (0) target = $region29
    $region28: #{_lambda_.3} parent=1 // pred_region
      %47 = dma.done [#allocation5], 16384
    $region29: #{_lambda_.3} parent=1 // pred_fallthru
      _
    %v48 = vld [vmem:[%s0] sm:$0xf]
    %v49 = vld [vmem:[#allocation2] sm:$0xff]
    %v50 = vld [vmem:[#allocation2 + $0x8] sm:$0xff]
    %v51 = vld [vmem:[#allocation2 + $0x10] sm:$0xff]
    %v52 = vld [vmem:[#allocation2 + $0x18] sm:$0xff]
    %v53 = vld [vmem:[#allocation2 + $0x20] sm:$0xff]
    %v54 = vld [vmem:[#allocation2 + $0x28] sm:$0xff]
    %v55 = vld [vmem:[#allocation2 + $0x30] sm:$0xff]
    %v56 = vld [vmem:[#allocation2 + $0x38] sm:$0xff]
    %v57 = vld [vmem:[#allocation2 + $0x40] sm:$0xff]
    %v58 = vld [vmem:[#allocation2 + $0x48] sm:$0xff]
    %v59 = vld [vmem:[#allocation2 + $0x50] sm:$0xff]
    %v60 = vld [vmem:[#allocation2 + $0x58] sm:$0xff]
    %v61 = vld [vmem:[#allocation2 + $0x60] sm:$0xff]
    %v62 = vld [vmem:[#allocation2 + $0x68] sm:$0xff]
    %v63 = vld [vmem:[#allocation2 + $0x70] sm:$0xff]
    %v64 = vld [vmem:[#allocation2 + $0x78] sm:$0xff]
    %v65 = vld [vmem:[#allocation2 + $0x80] sm:$0xff]
    %v66 = vld [vmem:[#allocation2 + $0x88] sm:$0xff]
    %v67 = vld [vmem:[#allocation2 + $0x90] sm:$0xff]
    %v68 = vld [vmem:[#allocation2 + $0x98] sm:$0xff]
    %v69 = vld [vmem:[#allocation2 + $0xa0] sm:$0xff]
    %v70 = vld [vmem:[#allocation2 + $0xa8] sm:$0xff]
    %v71 = vld [vmem:[#allocation2 + $0xb0] sm:$0xff]
    %v72 = vld [vmem:[#allocation2 + $0xb8] sm:$0xff]
    %v73 = vld [vmem:[#allocation2 + $0xc0] sm:$0xff]
    %v74 = vld [vmem:[#allocation2 + $0xc8] sm:$0xff]
    %v75 = vld [vmem:[#allocation2 + $0xd0] sm:$0xff]
    %v76 = vld [vmem:[#allocation2 + $0xd8] sm:$0xff]
    %v77 = vld [vmem:[#allocation2 + $0xe0] sm:$0xff]
    %v78 = vld [vmem:[#allocation2 + $0xe8] sm:$0xff]
    %v79 = vld [vmem:[#allocation2 + $0xf0] sm:$0xff]
    %v80 = vld [vmem:[#allocation2 + $0xf8] sm:$0xff]
    %v81 = vld [vmem:[#allocation2 + $0x100] sm:$0xff]
    %v82 = vld [vmem:[#allocation2 + $0x108] sm:$0xff]
    %v83 = vld [vmem:[#allocation2 + $0x110] sm:$0xff]
    %v84 = vld [vmem:[#allocation2 + $0x118] sm:$0xff]
    %v85 = vld [vmem:[#allocation2 + $0x120] sm:$0xff]
    %v86 = vld [vmem:[#allocation2 + $0x128] sm:$0xff]
    %v87 = vld [vmem:[#allocation2 + $0x130] sm:$0xff]
    %v88 = vld [vmem:[#allocation2 + $0x138] sm:$0xff]
    %v89 = vld [vmem:[#allocation2 + $0x140] sm:$0xff]
    %v90 = vld [vmem:[#allocation2 + $0x148] sm:$0xff]
    %v91 = vld [vmem:[#allocation2 + $0x150] sm:$0xff]
    %v92 = vld [vmem:[#allocation2 + $0x158] sm:$0xff]
    %v93 = vld [vmem:[#allocation2 + $0x160] sm:$0xff]
    %v94 = vld [vmem:[#allocation2 + $0x168] sm:$0xff]
    %v95 = vld [vmem:[#allocation2 + $0x170] sm:$0xff]
    %v96 = vld [vmem:[#allocation2 + $0x178] sm:$0xff]
    %v97 = vld [vmem:[#allocation2 + $0x180] sm:$0xff]
    %v98 = vld [vmem:[#allocation2 + $0x188] sm:$0xff]
    %v99 = vld [vmem:[#allocation2 + $0x190] sm:$0xff]
    %v100 = vld [vmem:[#allocation2 + $0x198] sm:$0xff]
    %v101 = vld [vmem:[#allocation2 + $0x1a0] sm:$0xff]
    %v102 = vld [vmem:[#allocation2 + $0x1a8] sm:$0xff]
    %v103 = vld [vmem:[#allocation2 + $0x1b0] sm:$0xff]
    %v104 = vld [vmem:[#allocation2 + $0x1b8] sm:$0xff]
    %v105 = vld [vmem:[#allocation2 + $0x1c0] sm:$0xff]
    %v106 = vld [vmem:[#allocation2 + $0x1c8] sm:$0xff]
    %v107 = vld [vmem:[#allocation2 + $0x1d0] sm:$0xff]
    %v108 = vld [vmem:[#allocation2 + $0x1d8] sm:$0xff]
    %v109 = vld [vmem:[#allocation2 + $0x1e0] sm:$0xff]
    %v110 = vld [vmem:[#allocation2 + $0x1e8] sm:$0xff]
    %v111 = vld [vmem:[#allocation2 + $0x1f0] sm:$0xff]
    %v112 = vld [vmem:[#allocation2 + $0x1f8] sm:$0xff]
    %v113 = vld [vmem:[#allocation2 + $0x200] sm:$0xff]
    %v114 = vld [vmem:[#allocation2 + $0x208] sm:$0xff]
    %v115 = vld [vmem:[#allocation2 + $0x210] sm:$0xff]
    %v116 = vld [vmem:[#allocation2 + $0x218] sm:$0xff]
    %v117 = vld [vmem:[#allocation2 + $0x220] sm:$0xff]
    %v118 = vld [vmem:[#allocation2 + $0x228] sm:$0xff]
    %v119 = vld [vmem:[#allocation2 + $0x230] sm:$0xff]
    %v120 = vld [vmem:[#allocation2 + $0x238] sm:$0xff]
    %v121 = vld [vmem:[#allocation2 + $0x240] sm:$0xff]
    %v122 = vld [vmem:[#allocation2 + $0x248] sm:$0xff]
    %v123 = vld [vmem:[#allocation2 + $0x250] sm:$0xff]
    %v124 = vld [vmem:[#allocation2 + $0x258] sm:$0xff]
    %v125 = vld [vmem:[#allocation2 + $0x260] sm:$0xff]
    %v126 = vld [vmem:[#allocation2 + $0x268] sm:$0xff]
    %v127 = vld [vmem:[#allocation2 + $0x270] sm:$0xff]
    %v128 = vld [vmem:[#allocation2 + $0x278] sm:$0xff]
    %v129 = vld [vmem:[#allocation2 + $0x280] sm:$0xff]
    %v130 = vld [vmem:[#allocation2 + $0x288] sm:$0xff]
    %v131 = vld [vmem:[#allocation2 + $0x290] sm:$0xff]
    %v132 = vld [vmem:[#allocation2 + $0x298] sm:$0xff]
    %v133 = vld [vmem:[#allocation2 + $0x2a0] sm:$0xff]
    %v134 = vld [vmem:[#allocation2 + $0x2a8] sm:$0xff]
    %v135 = vld [vmem:[#allocation2 + $0x2b0] sm:$0xff]
    %v136 = vld [vmem:[#allocation2 + $0x2b8] sm:$0xff]
    %v137 = vld [vmem:[#allocation2 + $0x2c0] sm:$0xff]
    %v138 = vld [vmem:[#allocation2 + $0x2c8] sm:$0xff]
    %v139 = vld [vmem:[#allocation2 + $0x2d0] sm:$0xff]
    %v140 = vld [vmem:[#allocation2 + $0x2d8] sm:$0xff]
    %v141 = vld [vmem:[#allocation2 + $0x2e0] sm:$0xff]
    %v142 = vld [vmem:[#allocation2 + $0x2e8] sm:$0xff]
    %v143 = vld [vmem:[#allocation2 + $0x2f0] sm:$0xff]
    %v144 = vld [vmem:[#allocation2 + $0x2f8] sm:$0xff]
    %v145 = vld [vmem:[#allocation2 + $0x300] sm:$0xff]
    %v146 = vld [vmem:[#allocation2 + $0x308] sm:$0xff]
    %v147 = vld [vmem:[#allocation2 + $0x310] sm:$0xff]
    %v148 = vld [vmem:[#allocation2 + $0x318] sm:$0xff]
    %v149 = vld [vmem:[#allocation2 + $0x320] sm:$0xff]
    %v150 = vld [vmem:[#allocation2 + $0x328] sm:$0xff]
    %v151 = vld [vmem:[#allocation2 + $0x330] sm:$0xff]
    %v152 = vld [vmem:[#allocation2 + $0x338] sm:$0xff]
    %v153 = vld [vmem:[#allocation2 + $0x340] sm:$0xff]
    %v154 = vld [vmem:[#allocation2 + $0x348] sm:$0xff]
    %v155 = vld [vmem:[#allocation2 + $0x350] sm:$0xff]
    %v156 = vld [vmem:[#allocation2 + $0x358] sm:$0xff]
    %v157 = vld [vmem:[#allocation2 + $0x360] sm:$0xff]
    %v158 = vld [vmem:[#allocation2 + $0x368] sm:$0xff]
    %v159 = vld [vmem:[#allocation2 + $0x370] sm:$0xff]
    %v160 = vld [vmem:[#allocation2 + $0x378] sm:$0xff]
    %v161 = vld [vmem:[#allocation2 + $0x380] sm:$0xff]
    %v162 = vld [vmem:[#allocation2 + $0x388] sm:$0xff]
    %v163 = vld [vmem:[#allocation2 + $0x390] sm:$0xff]
    %v164 = vld [vmem:[#allocation2 + $0x398] sm:$0xff]
    %v165 = vld [vmem:[#allocation2 + $0x3a0] sm:$0xff]
    %v166 = vld [vmem:[#allocation2 + $0x3a8] sm:$0xff]
    %v167 = vld [vmem:[#allocation2 + $0x3b0] sm:$0xff]
    %v168 = vld [vmem:[#allocation2 + $0x3b8] sm:$0xff]
    %v169 = vld [vmem:[#allocation2 + $0x3c0] sm:$0xff]
    %v170 = vld [vmem:[#allocation2 + $0x3c8] sm:$0xff]
    %v171 = vld [vmem:[#allocation2 + $0x3d0] sm:$0xff]
    %v172 = vld [vmem:[#allocation2 + $0x3d8] sm:$0xff]
    %v173 = vld [vmem:[#allocation2 + $0x3e0] sm:$0xff]
    %v174 = vld [vmem:[#allocation2 + $0x3e8] sm:$0xff]
    %v175 = vld [vmem:[#allocation2 + $0x3f0] sm:$0xff]
    %v176 = vld [vmem:[#allocation2 + $0x3f8] sm:$0xff]
    %v177 = vld [vmem:[#allocation2 + $0x400] sm:$0xff]
    %v178 = vld [vmem:[#allocation2 + $0x408] sm:$0xff]
    %v179 = vld [vmem:[#allocation2 + $0x410] sm:$0xff]
    %v180 = vld [vmem:[#allocation2 + $0x418] sm:$0xff]
    %v181 = vld [vmem:[#allocation2 + $0x420] sm:$0xff]
    %v182 = vld [vmem:[#allocation2 + $0x428] sm:$0xff]
    %v183 = vld [vmem:[#allocation2 + $0x430] sm:$0xff]
    %v184 = vld [vmem:[#allocation2 + $0x438] sm:$0xff]
    %v185 = vld [vmem:[#allocation2 + $0x440] sm:$0xff]
    %v186 = vld [vmem:[#allocation2 + $0x448] sm:$0xff]
    %v187 = vld [vmem:[#allocation2 + $0x450] sm:$0xff]
    %v188 = vld [vmem:[#allocation2 + $0x458] sm:$0xff]
    %v189 = vld [vmem:[#allocation2 + $0x460] sm:$0xff]
    %v190 = vld [vmem:[#allocation2 + $0x468] sm:$0xff]
    %v191 = vld [vmem:[#allocation2 + $0x470] sm:$0xff]
    %v192 = vld [vmem:[#allocation2 + $0x478] sm:$0xff]
    %v193 = vld [vmem:[#allocation2 + $0x480] sm:$0xff]
    %v194 = vld [vmem:[#allocation2 + $0x488] sm:$0xff]
    %v195 = vld [vmem:[#allocation2 + $0x490] sm:$0xff]
    %v196 = vld [vmem:[#allocation2 + $0x498] sm:$0xff]
    %v197 = vld [vmem:[#allocation2 + $0x4a0] sm:$0xff]
    %v198 = vld [vmem:[#allocation2 + $0x4a8] sm:$0xff]
    %v199 = vld [vmem:[#allocation2 + $0x4b0] sm:$0xff]
    %v200 = vld [vmem:[#allocation2 + $0x4b8] sm:$0xff]
    %v201 = vld [vmem:[#allocation2 + $0x4c0] sm:$0xff]
    %v202 = vld [vmem:[#allocation2 + $0x4c8] sm:$0xff]
    %v203 = vld [vmem:[#allocation2 + $0x4d0] sm:$0xff]
    %v204 = vld [vmem:[#allocation2 + $0x4d8] sm:$0xff]
    %v205 = vld [vmem:[#allocation2 + $0x4e0] sm:$0xff]
    %v206 = vld [vmem:[#allocation2 + $0x4e8] sm:$0xff]
    %v207 = vld [vmem:[#allocation2 + $0x4f0] sm:$0xff]
    %v208 = vld [vmem:[#allocation2 + $0x4f8] sm:$0xff]
    %v209 = vld [vmem:[#allocation2 + $0x500] sm:$0xff]
    %v210 = vld [vmem:[#allocation2 + $0x508] sm:$0xff]
    %v211 = vld [vmem:[#allocation2 + $0x510] sm:$0xff]
    %v212 = vld [vmem:[#allocation2 + $0x518] sm:$0xff]
    %v213 = vld [vmem:[#allocation2 + $0x520] sm:$0xff]
    %v214 = vld [vmem:[#allocation2 + $0x528] sm:$0xff]
    %v215 = vld [vmem:[#allocation2 + $0x530] sm:$0xff]
    %v216 = vld [vmem:[#allocation2 + $0x538] sm:$0xff]
    %v217 = vld [vmem:[#allocation2 + $0x540] sm:$0xff]
    %v218 = vld [vmem:[#allocation2 + $0x548] sm:$0xff]
    %v219 = vld [vmem:[#allocation2 + $0x550] sm:$0xff]
    %v220 = vld [vmem:[#allocation2 + $0x558] sm:$0xff]
    %v221 = vld [vmem:[#allocation2 + $0x560] sm:$0xff]
    %v222 = vld [vmem:[#allocation2 + $0x568] sm:$0xff]
    %v223 = vld [vmem:[#allocation2 + $0x570] sm:$0xff]
    %v224 = vld [vmem:[#allocation2 + $0x578] sm:$0xff]
    %v225 = vld [vmem:[#allocation2 + $0x580] sm:$0xff]
    %v226 = vld [vmem:[#allocation2 + $0x588] sm:$0xff]
    %v227 = vld [vmem:[#allocation2 + $0x590] sm:$0xff]
    %v228 = vld [vmem:[#allocation2 + $0x598] sm:$0xff]
    %v229 = vld [vmem:[#allocation2 + $0x5a0] sm:$0xff]
    %v230 = vld [vmem:[#allocation2 + $0x5a8] sm:$0xff]
    %v231 = vld [vmem:[#allocation2 + $0x5b0] sm:$0xff]
    %v232 = vld [vmem:[#allocation2 + $0x5b8] sm:$0xff]
    %v233 = vld [vmem:[#allocation2 + $0x5c0] sm:$0xff]
    %v234 = vld [vmem:[#allocation2 + $0x5c8] sm:$0xff]
    %v235 = vld [vmem:[#allocation2 + $0x5d0] sm:$0xff]
    %v236 = vld [vmem:[#allocation2 + $0x5d8] sm:$0xff]
    %v237 = vld [vmem:[#allocation2 + $0x5e0] sm:$0xff]
    %v238 = vld [vmem:[#allocation2 + $0x5e8] sm:$0xff]
    %v239 = vld [vmem:[#allocation2 + $0x5f0] sm:$0xff]
    %v240 = vld [vmem:[#allocation2 + $0x5f8] sm:$0xff]
    %v241 = vld [vmem:[#allocation2 + $0x600] sm:$0xff]
    %v242 = vld [vmem:[#allocation2 + $0x608] sm:$0xff]
    %v243 = vld [vmem:[#allocation2 + $0x610] sm:$0xff]
    %v244 = vld [vmem:[#allocation2 + $0x618] sm:$0xff]
    %v245 = vld [vmem:[#allocation2 + $0x620] sm:$0xff]
    %v246 = vld [vmem:[#allocation2 + $0x628] sm:$0xff]
    %v247 = vld [vmem:[#allocation2 + $0x630] sm:$0xff]
    %v248 = vld [vmem:[#allocation2 + $0x638] sm:$0xff]
    %v249 = vld [vmem:[#allocation2 + $0x640] sm:$0xff]
    %v250 = vld [vmem:[#allocation2 + $0x648] sm:$0xff]
    %v251 = vld [vmem:[#allocation2 + $0x650] sm:$0xff]
    %v252 = vld [vmem:[#allocation2 + $0x658] sm:$0xff]
    %v253 = vld [vmem:[#allocation2 + $0x660] sm:$0xff]
    %v254 = vld [vmem:[#allocation2 + $0x668] sm:$0xff]
    %v255 = vld [vmem:[#allocation2 + $0x670] sm:$0xff]
    %v256 = vld [vmem:[#allocation2 + $0x678] sm:$0xff]
    %v257 = vld [vmem:[#allocation2 + $0x680] sm:$0xff]
    %v258 = vld [vmem:[#allocation2 + $0x688] sm:$0xff]
    %v259 = vld [vmem:[#allocation2 + $0x690] sm:$0xff]
    %v260 = vld [vmem:[#allocation2 + $0x698] sm:$0xff]
    %v261 = vld [vmem:[#allocation2 + $0x6a0] sm:$0xff]
    %v262 = vld [vmem:[#allocation2 + $0x6a8] sm:$0xff]
    %v263 = vld [vmem:[#allocation2 + $0x6b0] sm:$0xff]
    %v264 = vld [vmem:[#allocation2 + $0x6b8] sm:$0xff]
    %v265 = vld [vmem:[#allocation2 + $0x6c0] sm:$0xff]
    %v266 = vld [vmem:[#allocation2 + $0x6c8] sm:$0xff]
    %v267 = vld [vmem:[#allocation2 + $0x6d0] sm:$0xff]
    %v268 = vld [vmem:[#allocation2 + $0x6d8] sm:$0xff]
    %v269 = vld [vmem:[#allocation2 + $0x6e0] sm:$0xff]
    %v270 = vld [vmem:[#allocation2 + $0x6e8] sm:$0xff]
    %v271 = vld [vmem:[#allocation2 + $0x6f0] sm:$0xff]
    %v272 = vld [vmem:[#allocation2 + $0x6f8] sm:$0xff]
    %v273 = vld [vmem:[#allocation2 + $0x700] sm:$0xff]
    %v274 = vld [vmem:[#allocation2 + $0x708] sm:$0xff]
    %v275 = vld [vmem:[#allocation2 + $0x710] sm:$0xff]
    %v276 = vld [vmem:[#allocation2 + $0x718] sm:$0xff]
    %v277 = vld [vmem:[#allocation2 + $0x720] sm:$0xff]
    %v278 = vld [vmem:[#allocation2 + $0x728] sm:$0xff]
    %v279 = vld [vmem:[#allocation2 + $0x730] sm:$0xff]
    %v280 = vld [vmem:[#allocation2 + $0x738] sm:$0xff]
    %v281 = vld [vmem:[#allocation2 + $0x740] sm:$0xff]
    %v282 = vld [vmem:[#allocation2 + $0x748] sm:$0xff]
    %v283 = vld [vmem:[#allocation2 + $0x750] sm:$0xff]
    %v284 = vld [vmem:[#allocation2 + $0x758] sm:$0xff]
    %v285 = vld [vmem:[#allocation2 + $0x760] sm:$0xff]
    %v286 = vld [vmem:[#allocation2 + $0x768] sm:$0xff]
    %v287 = vld [vmem:[#allocation2 + $0x770] sm:$0xff]
    %v288 = vld [vmem:[#allocation2 + $0x778] sm:$0xff]
    %v289 = vld [vmem:[#allocation2 + $0x780] sm:$0xff]
    %v290 = vld [vmem:[#allocation2 + $0x788] sm:$0xff]
    %v291 = vld [vmem:[#allocation2 + $0x790] sm:$0xff]
    %v292 = vld [vmem:[#allocation2 + $0x798] sm:$0xff]
    %v293 = vld [vmem:[#allocation2 + $0x7a0] sm:$0xff]
    %v294 = vld [vmem:[#allocation2 + $0x7a8] sm:$0xff]
    %v295 = vld [vmem:[#allocation2 + $0x7b0] sm:$0xff]
    %v296 = vld [vmem:[#allocation2 + $0x7b8] sm:$0xff]
    %v297 = vld [vmem:[#allocation2 + $0x7c0] sm:$0xff]
    %v298 = vld [vmem:[#allocation2 + $0x7c8] sm:$0xff]
    %v299 = vld [vmem:[#allocation2 + $0x7d0] sm:$0xff]
    %v300 = vld [vmem:[#allocation2 + $0x7d8] sm:$0xff]
    %v301 = vld [vmem:[#allocation2 + $0x7e0] sm:$0xff]
    %v302 = vld [vmem:[#allocation2 + $0x7e8] sm:$0xff]
    %v303 = vld [vmem:[#allocation2 + $0x7f0] sm:$0xff]
    %v304 = vld [vmem:[#allocation2 + $0x7f8] sm:$0xff]
    %v305 = vld [vmem:[%s2] sm:$0xff]
    %v307 = vlaneseq
    %v308 = vshrl.u32 %v307, 7
    %v309 = vsub.s32 0, %v308
    %v310 = vrot.slane %v305, %v309
    %v311 = vlaneseq
    %v312 = vshrl.u32 %v311, 7
    %v313 = vsub.s32 1, %v312
    %v314 = vrot.slane %v305, %v313
    %v315 = vlaneseq
    %v316 = vshrl.u32 %v315, 7
    %v317 = vsub.s32 2, %v316
    %v318 = vrot.slane %v305, %v317
    %v319 = vlaneseq
    %v320 = vshrl.u32 %v319, 7
    %v321 = vsub.s32 3, %v320
    %v322 = vrot.slane %v305, %v321
    %v323 = vlaneseq
    %v324 = vshrl.u32 %v323, 7
    %v325 = vsub.s32 4, %v324
    %v326 = vrot.slane %v305, %v325
    %v327 = vlaneseq
    %v328 = vshrl.u32 %v327, 7
    %v329 = vsub.s32 5, %v328
    %v330 = vrot.slane %v305, %v329
    %v331 = vlaneseq
    %v332 = vshrl.u32 %v331, 7
    %v333 = vsub.s32 6, %v332
    %v334 = vrot.slane %v305, %v333
    %v335 = vlaneseq
    %v336 = vshrl.u32 %v335, 7
    %v337 = vsub.s32 7, %v336
    %v338 = vrot.slane %v305, %v337
    %v349 = vunpack.c.l.s4 1983009808
    %v350 = vunpack.c.0.s8 %v349
    %v351 = vlaneseq
    %v352 = vshrl.u32 %v351, 7
    %v353 = vsub.s32 %v350, %v352
    %v354 = vrot.slane %v48, %v353
    %v355 = vcombine.high %v354, %v354
    %358 = vmatprep.subr.mxu0 %v170
    %359 = vmatpush1.msra.mxu0 %v169
    %360 = vmatprep.subr.mxu0 %v162
    %361 = vmatpush1.msra.mxu0 %v161
    %362 = vmatprep.subr.mxu0 %v154
    %363 = vmatpush1.msra.mxu0 %v153
    %364 = vmatprep.subr.mxu0 %v146
    %365 = vmatpush1.msra.mxu0 %v145
    %366 = vmatprep.subr.mxu0 %v138
    %367 = vmatpush1.msra.mxu0 %v137
    %368 = vmatprep.subr.mxu0 %v130
    %369 = vmatpush1.msra.mxu0 %v129
    %370 = vmatprep.subr.mxu0 %v122
    %371 = vmatpush1.msra.mxu0 %v121
    %372 = vmatprep.subr.mxu0 %v114
    %373 = vmatpush1.msra.mxu0 %v113
    %374 = vmatprep.subr.mxu0 %v106
    %375 = vmatpush1.msra.mxu0 %v105
    %376 = vmatprep.subr.mxu0 %v98
    %377 = vmatpush1.msra.mxu0 %v97
    %378 = vmatprep.subr.mxu0 %v90
    %379 = vmatpush1.msra.mxu0 %v89
    %380 = vmatprep.subr.mxu0 %v82
    %381 = vmatpush1.msra.mxu0 %v81
    %382 = vmatprep.subr.mxu0 %v74
    %383 = vmatpush1.msra.mxu0 %v73
    %384 = vmatprep.subr.mxu0 %v66
    %385 = vmatpush1.msra.mxu0 %v65
    %386 = vmatprep.subr.mxu0 %v58
    %387 = vmatpush1.msra.mxu0 %v57
    %388 = vmatprep.subr.mxu0 %v50
    %389 = vmatpush1.msra.mxu0 %v49
    %390 = vmatprep.subr.mxu0 %v298
    %391 = vmatpush2.msra.mxu0 %v297
    %392 = vmatprep.subr.mxu0 %v290
    %393 = vmatpush2.msra.mxu0 %v289
    %394 = vmatprep.subr.mxu0 %v282
    %395 = vmatpush2.msra.mxu0 %v281
    %396 = vmatprep.subr.mxu0 %v274
    %397 = vmatpush2.msra.mxu0 %v273
    %398 = vmatprep.subr.mxu0 %v266
    %399 = vmatpush2.msra.mxu0 %v265
    %400 = vmatprep.subr.mxu0 %v258
    %401 = vmatpush2.msra.mxu0 %v257
    %402 = vmatprep.subr.mxu0 %v250
    %403 = vmatpush2.msra.mxu0 %v249
    %404 = vmatprep.subr.mxu0 %v242
    %405 = vmatpush2.msra.mxu0 %v241
    %406 = vmatprep.subr.mxu0 %v234
    %407 = vmatpush2.msra.mxu0 %v233
    %408 = vmatprep.subr.mxu0 %v226
    %409 = vmatpush2.msra.mxu0 %v225
    %410 = vmatprep.subr.mxu0 %v218
    %411 = vmatpush2.msra.mxu0 %v217
    %412 = vmatprep.subr.mxu0 %v210
    %413 = vmatpush2.msra.mxu0 %v209
    %414 = vmatprep.subr.mxu0 %v202
    %415 = vmatpush2.msra.mxu0 %v201
    %416 = vmatprep.subr.mxu0 %v194
    %417 = vmatpush2.msra.mxu0 %v193
    %418 = vmatprep.subr.mxu0 %v186
    %419 = vmatpush2.msra.mxu0 %v185
    %420 = vmatprep.subr.mxu0 %v178
    %421 = vmatpush2.msra.mxu0 %v177
    %422 = vmatprep.mubr.f32.mxu0 %v355
    %423 = vmatmul.mubr.f32.gmra.mxu0 %v354
    %v424 = vpop.f32.mrf.mxu0
    %v425 = vadd.f32 %v310, %v424
    %v426 = vpop.f32.mrf.mxu0
    %v427 = vadd.f32 %v314, %v426
    %428 = vdwg.mxu0
    %429 = vmatprep.subr.mxu0 %v172
    %430 = vmatpush1.msra.mxu0 %v171
    %431 = vmatprep.subr.mxu0 %v164
    %432 = vmatpush1.msra.mxu0 %v163
    %433 = vmatprep.subr.mxu0 %v156
    %434 = vmatpush1.msra.mxu0 %v155
    %435 = vmatprep.subr.mxu0 %v148
    %436 = vmatpush1.msra.mxu0 %v147
    %437 = vmatprep.subr.mxu0 %v140
    %438 = vmatpush1.msra.mxu0 %v139
    %439 = vmatprep.subr.mxu0 %v132
    %440 = vmatpush1.msra.mxu0 %v131
    %441 = vmatprep.subr.mxu0 %v124
    %442 = vmatpush1.msra.mxu0 %v123
    %443 = vmatprep.subr.mxu0 %v116
    %444 = vmatpush1.msra.mxu0 %v115
    %445 = vmatprep.subr.mxu0 %v108
    %446 = vmatpush1.msra.mxu0 %v107
    %447 = vmatprep.subr.mxu0 %v100
    %448 = vmatpush1.msra.mxu0 %v99
    %449 = vmatprep.subr.mxu0 %v92
    %450 = vmatpush1.msra.mxu0 %v91
    %451 = vmatprep.subr.mxu0 %v84
    %452 = vmatpush1.msra.mxu0 %v83
    %453 = vmatprep.subr.mxu0 %v76
    %454 = vmatpush1.msra.mxu0 %v75
    %455 = vmatprep.subr.mxu0 %v68
    %456 = vmatpush1.msra.mxu0 %v67
    %457 = vmatprep.subr.mxu0 %v60
    %458 = vmatpush1.msra.mxu0 %v59
    %459 = vmatprep.subr.mxu0 %v52
    %460 = vmatpush1.msra.mxu0 %v51
    %461 = vmatprep.subr.mxu0 %v300
    %462 = vmatpush2.msra.mxu0 %v299
    %463 = vmatprep.subr.mxu0 %v292
    %464 = vmatpush2.msra.mxu0 %v291
    %465 = vmatprep.subr.mxu0 %v284
    %466 = vmatpush2.msra.mxu0 %v283
    %467 = vmatprep.subr.mxu0 %v276
    %468 = vmatpush2.msra.mxu0 %v275
    %469 = vmatprep.subr.mxu0 %v268
    %470 = vmatpush2.msra.mxu0 %v267
    %471 = vmatprep.subr.mxu0 %v260
    %472 = vmatpush2.msra.mxu0 %v259
    %473 = vmatprep.subr.mxu0 %v252
    %474 = vmatpush2.msra.mxu0 %v251
    %475 = vmatprep.subr.mxu0 %v244
    %476 = vmatpush2.msra.mxu0 %v243
    %477 = vmatprep.subr.mxu0 %v236
    %478 = vmatpush2.msra.mxu0 %v235
    %479 = vmatprep.subr.mxu0 %v228
    %480 = vmatpush2.msra.mxu0 %v227
    %481 = vmatprep.subr.mxu0 %v220
    %482 = vmatpush2.msra.mxu0 %v219
    %483 = vmatprep.subr.mxu0 %v212
    %484 = vmatpush2.msra.mxu0 %v211
    %485 = vmatprep.subr.mxu0 %v204
    %486 = vmatpush2.msra.mxu0 %v203
    %487 = vmatprep.subr.mxu0 %v196
    %488 = vmatpush2.msra.mxu0 %v195
    %489 = vmatprep.subr.mxu0 %v188
    %490 = vmatpush2.msra.mxu0 %v187
    %491 = vmatprep.subr.mxu0 %v180
    %492 = vmatpush2.msra.mxu0 %v179
    %493 = vmatprep.mubr.f32.mxu0 %v355
    %494 = vmatmul.mubr.f32.gmra.mxu0 %v354
    %v495 = vpop.f32.mrf.mxu0
    %v496 = vadd.f32 %v318, %v495
    %v497 = vpop.f32.mrf.mxu0
    %v498 = vadd.f32 %v322, %v497
    %499 = vdwg.mxu0
    %500 = vmatprep.subr.mxu0 %v174
    %501 = vmatpush1.msra.mxu0 %v173
    %502 = vmatprep.subr.mxu0 %v166
    %503 = vmatpush1.msra.mxu0 %v165
    %504 = vmatprep.subr.mxu0 %v158
    %505 = vmatpush1.msra.mxu0 %v157
    %506 = vmatprep.subr.mxu0 %v150
    %507 = vmatpush1.msra.mxu0 %v149
    %508 = vmatprep.subr.mxu0 %v142
    %509 = vmatpush1.msra.mxu0 %v141
    %510 = vmatprep.subr.mxu0 %v134
    %511 = vmatpush1.msra.mxu0 %v133
    %512 = vmatprep.subr.mxu0 %v126
    %513 = vmatpush1.msra.mxu0 %v125
    %514 = vmatprep.subr.mxu0 %v118
    %515 = vmatpush1.msra.mxu0 %v117
    %516 = vmatprep.subr.mxu0 %v110
    %517 = vmatpush1.msra.mxu0 %v109
    %518 = vmatprep.subr.mxu0 %v102
    %519 = vmatpush1.msra.mxu0 %v101
    %520 = vmatprep.subr.mxu0 %v94
    %521 = vmatpush1.msra.mxu0 %v93
    %522 = vmatprep.subr.mxu0 %v86
    %523 = vmatpush1.msra.mxu0 %v85
    %524 = vmatprep.subr.mxu0 %v78
    %525 = vmatpush1.msra.mxu0 %v77
    %526 = vmatprep.subr.mxu0 %v70
    %527 = vmatpush1.msra.mxu0 %v69
    %528 = vmatprep.subr.mxu0 %v62
    %529 = vmatpush1.msra.mxu0 %v61
    %530 = vmatprep.subr.mxu0 %v54
    %531 = vmatpush1.msra.mxu0 %v53
    %532 = vmatprep.subr.mxu0 %v302
    %533 = vmatpush2.msra.mxu0 %v301
    %534 = vmatprep.subr.mxu0 %v294
    %535 = vmatpush2.msra.mxu0 %v293
    %536 = vmatprep.subr.mxu0 %v286
    %537 = vmatpush2.msra.mxu0 %v285
    %538 = vmatprep.subr.mxu0 %v278
    %539 = vmatpush2.msra.mxu0 %v277
    %540 = vmatprep.subr.mxu0 %v270
    %541 = vmatpush2.msra.mxu0 %v269
    %542 = vmatprep.subr.mxu0 %v262
    %543 = vmatpush2.msra.mxu0 %v261
    %544 = vmatprep.subr.mxu0 %v254
    %545 = vmatpush2.msra.mxu0 %v253
    %546 = vmatprep.subr.mxu0 %v246
    %547 = vmatpush2.msra.mxu0 %v245
    %548 = vmatprep.subr.mxu0 %v238
    %549 = vmatpush2.msra.mxu0 %v237
    %550 = vmatprep.subr.mxu0 %v230
    %551 = vmatpush2.msra.mxu0 %v229
    %552 = vmatprep.subr.mxu0 %v222
    %553 = vmatpush2.msra.mxu0 %v221
    %554 = vmatprep.subr.mxu0 %v214
    %555 = vmatpush2.msra.mxu0 %v213
    %556 = vmatprep.subr.mxu0 %v206
    %557 = vmatpush2.msra.mxu0 %v205
    %558 = vmatprep.subr.mxu0 %v198
    %559 = vmatpush2.msra.mxu0 %v197
    %560 = vmatprep.subr.mxu0 %v190
    %561 = vmatpush2.msra.mxu0 %v189
    %562 = vmatprep.subr.mxu0 %v182
    %563 = vmatpush2.msra.mxu0 %v181
    %564 = vmatprep.mubr.f32.mxu0 %v355
    %565 = vmatmul.mubr.f32.gmra.mxu0 %v354
    %v566 = vpop.f32.mrf.mxu0
    %v567 = vadd.f32 %v326, %v566
    %v568 = vpop.f32.mrf.mxu0
    %v569 = vadd.f32 %v330, %v568
    %570 = vdwg.mxu0
    %571 = vmatprep.subr.mxu0 %v176
    %572 = vmatpush1.msra.mxu0 %v175
    %573 = vmatprep.subr.mxu0 %v168
    %574 = vmatpush1.msra.mxu0 %v167
    %575 = vmatprep.subr.mxu0 %v160
    %576 = vmatpush1.msra.mxu0 %v159
    %577 = vmatprep.subr.mxu0 %v152
    %578 = vmatpush1.msra.mxu0 %v151
    %579 = vmatprep.subr.mxu0 %v144
    %580 = vmatpush1.msra.mxu0 %v143
    %581 = vmatprep.subr.mxu0 %v136
    %582 = vmatpush1.msra.mxu0 %v135
    %583 = vmatprep.subr.mxu0 %v128
    %584 = vmatpush1.msra.mxu0 %v127
    %585 = vmatprep.subr.mxu0 %v120
    %586 = vmatpush1.msra.mxu0 %v119
    %587 = vmatprep.subr.mxu0 %v112
    %588 = vmatpush1.msra.mxu0 %v111
    %589 = vmatprep.subr.mxu0 %v104
    %590 = vmatpush1.msra.mxu0 %v103
    %591 = vmatprep.subr.mxu0 %v96
    %592 = vmatpush1.msra.mxu0 %v95
    %593 = vmatprep.subr.mxu0 %v88
    %594 = vmatpush1.msra.mxu0 %v87
    %595 = vmatprep.subr.mxu0 %v80
    %596 = vmatpush1.msra.mxu0 %v79
    %597 = vmatprep.subr.mxu0 %v72
    %598 = vmatpush1.msra.mxu0 %v71
    %599 = vmatprep.subr.mxu0 %v64
    %600 = vmatpush1.msra.mxu0 %v63
    %601 = vmatprep.subr.mxu0 %v56
    %602 = vmatpush1.msra.mxu0 %v55
    %603 = vmatprep.subr.mxu0 %v304
    %604 = vmatpush2.msra.mxu0 %v303
    %605 = vmatprep.subr.mxu0 %v296
    %606 = vmatpush2.msra.mxu0 %v295
    %607 = vmatprep.subr.mxu0 %v288
    %608 = vmatpush2.msra.mxu0 %v287
    %609 = vmatprep.subr.mxu0 %v280
    %610 = vmatpush2.msra.mxu0 %v279
    %611 = vmatprep.subr.mxu0 %v272
    %612 = vmatpush2.msra.mxu0 %v271
    %613 = vmatprep.subr.mxu0 %v264
    %614 = vmatpush2.msra.mxu0 %v263
    %615 = vmatprep.subr.mxu0 %v256
    %616 = vmatpush2.msra.mxu0 %v255
    %617 = vmatprep.subr.mxu0 %v248
    %618 = vmatpush2.msra.mxu0 %v247
    %619 = vmatprep.subr.mxu0 %v240
    %620 = vmatpush2.msra.mxu0 %v239
    %621 = vmatprep.subr.mxu0 %v232
    %622 = vmatpush2.msra.mxu0 %v231
    %623 = vmatprep.subr.mxu0 %v224
    %624 = vmatpush2.msra.mxu0 %v223
    %625 = vmatprep.subr.mxu0 %v216
    %626 = vmatpush2.msra.mxu0 %v215
    %627 = vmatprep.subr.mxu0 %v208
    %628 = vmatpush2.msra.mxu0 %v207
    %629 = vmatprep.subr.mxu0 %v200
    %630 = vmatpush2.msra.mxu0 %v199
    %631 = vmatprep.subr.mxu0 %v192
    %632 = vmatpush2.msra.mxu0 %v191
    %633 = vmatprep.subr.mxu0 %v184
    %634 = vmatpush2.msra.mxu0 %v183
    %635 = vmatprep.mubr.f32.mxu0 %v355
    %636 = vmatmul.mubr.f32.gmra.mxu0 %v354
    %v637 = vpop.f32.mrf.mxu0
    %v638 = vadd.f32 %v334, %v637
    %v639 = vpop.f32.mrf.mxu0
    %v640 = vadd.f32 %v338, %v639
    %641 = vdwg.mxu0
    %v642 = vmax.f32 %v425, 0.0
    %v643 = vmax.f32 %v427, 0.0
    %v644 = vmax.f32 %v496, 0.0
    %v645 = vmax.f32 %v498, 0.0
    %v646 = vmax.f32 %v567, 0.0
    %v647 = vmax.f32 %v569, 0.0
    %v648 = vmax.f32 %v638, 0.0
    %v649 = vmax.f32 %v640, 0.0
    %v650 = vld [vmem:[#allocation4] sm:$0xff]
    %v651 = vld [vmem:[#allocation4 + $0x8] sm:$0xff]
    %v652 = vld [vmem:[#allocation4 + $0x10] sm:$0xff]
    %v653 = vld [vmem:[#allocation4 + $0x18] sm:$0xff]
    %v654 = vld [vmem:[#allocation4 + $0x20] sm:$0xff]
    %v655 = vld [vmem:[#allocation4 + $0x28] sm:$0xff]
    %v656 = vld [vmem:[#allocation4 + $0x30] sm:$0xff]
    %v657 = vld [vmem:[#allocation4 + $0x38] sm:$0xff]
    %v658 = vld [vmem:[#allocation4 + $0x40] sm:$0xff]
    %v659 = vld [vmem:[#allocation4 + $0x48] sm:$0xff]
    %v660 = vld [vmem:[#allocation4 + $0x50] sm:$0xff]
    %v661 = vld [vmem:[#allocation4 + $0x58] sm:$0xff]
    %v662 = vld [vmem:[#allocation4 + $0x60] sm:$0xff]
    %v663 = vld [vmem:[#allocation4 + $0x68] sm:$0xff]
    %v664 = vld [vmem:[#allocation4 + $0x70] sm:$0xff]
    %v665 = vld [vmem:[#allocation4 + $0x78] sm:$0xff]
    %v666 = vld [vmem:[#allocation4 + $0x80] sm:$0xff]
    %v667 = vld [vmem:[#allocation4 + $0x88] sm:$0xff]
    %v668 = vld [vmem:[#allocation4 + $0x90] sm:$0xff]
    %v669 = vld [vmem:[#allocation4 + $0x98] sm:$0xff]
    %v670 = vld [vmem:[#allocation4 + $0xa0] sm:$0xff]
    %v671 = vld [vmem:[#allocation4 + $0xa8] sm:$0xff]
    %v672 = vld [vmem:[#allocation4 + $0xb0] sm:$0xff]
    %v673 = vld [vmem:[#allocation4 + $0xb8] sm:$0xff]
    %v674 = vld [vmem:[#allocation4 + $0xc0] sm:$0xff]
    %v675 = vld [vmem:[#allocation4 + $0xc8] sm:$0xff]
    %v676 = vld [vmem:[#allocation4 + $0xd0] sm:$0xff]
    %v677 = vld [vmem:[#allocation4 + $0xd8] sm:$0xff]
    %v678 = vld [vmem:[#allocation4 + $0xe0] sm:$0xff]
    %v679 = vld [vmem:[#allocation4 + $0xe8] sm:$0xff]
    %v680 = vld [vmem:[#allocation4 + $0xf0] sm:$0xff]
    %v681 = vld [vmem:[#allocation4 + $0xf8] sm:$0xff]
    %v682 = vld [vmem:[#allocation4 + $0x100] sm:$0xff]
    %v683 = vld [vmem:[#allocation4 + $0x108] sm:$0xff]
    %v684 = vld [vmem:[#allocation4 + $0x110] sm:$0xff]
    %v685 = vld [vmem:[#allocation4 + $0x118] sm:$0xff]
    %v686 = vld [vmem:[#allocation4 + $0x120] sm:$0xff]
    %v687 = vld [vmem:[#allocation4 + $0x128] sm:$0xff]
    %v688 = vld [vmem:[#allocation4 + $0x130] sm:$0xff]
    %v689 = vld [vmem:[#allocation4 + $0x138] sm:$0xff]
    %v690 = vld [vmem:[#allocation4 + $0x140] sm:$0xff]
    %v691 = vld [vmem:[#allocation4 + $0x148] sm:$0xff]
    %v692 = vld [vmem:[#allocation4 + $0x150] sm:$0xff]
    %v693 = vld [vmem:[#allocation4 + $0x158] sm:$0xff]
    %v694 = vld [vmem:[#allocation4 + $0x160] sm:$0xff]
    %v695 = vld [vmem:[#allocation4 + $0x168] sm:$0xff]
    %v696 = vld [vmem:[#allocation4 + $0x170] sm:$0xff]
    %v697 = vld [vmem:[#allocation4 + $0x178] sm:$0xff]
    %v698 = vld [vmem:[#allocation4 + $0x180] sm:$0xff]
    %v699 = vld [vmem:[#allocation4 + $0x188] sm:$0xff]
    %v700 = vld [vmem:[#allocation4 + $0x190] sm:$0xff]
    %v701 = vld [vmem:[#allocation4 + $0x198] sm:$0xff]
    %v702 = vld [vmem:[#allocation4 + $0x1a0] sm:$0xff]
    %v703 = vld [vmem:[#allocation4 + $0x1a8] sm:$0xff]
    %v704 = vld [vmem:[#allocation4 + $0x1b0] sm:$0xff]
    %v705 = vld [vmem:[#allocation4 + $0x1b8] sm:$0xff]
    %v706 = vld [vmem:[#allocation4 + $0x1c0] sm:$0xff]
    %v707 = vld [vmem:[#allocation4 + $0x1c8] sm:$0xff]
    %v708 = vld [vmem:[#allocation4 + $0x1d0] sm:$0xff]
    %v709 = vld [vmem:[#allocation4 + $0x1d8] sm:$0xff]
    %v710 = vld [vmem:[#allocation4 + $0x1e0] sm:$0xff]
    %v711 = vld [vmem:[#allocation4 + $0x1e8] sm:$0xff]
    %v712 = vld [vmem:[#allocation4 + $0x1f0] sm:$0xff]
    %v713 = vld [vmem:[#allocation4 + $0x1f8] sm:$0xff]
    %v714 = vld [vmem:[#allocation4 + $0x200] sm:$0xff]
    %v715 = vld [vmem:[#allocation4 + $0x208] sm:$0xff]
    %v716 = vld [vmem:[#allocation4 + $0x210] sm:$0xff]
    %v717 = vld [vmem:[#allocation4 + $0x218] sm:$0xff]
    %v718 = vld [vmem:[#allocation4 + $0x220] sm:$0xff]
    %v719 = vld [vmem:[#allocation4 + $0x228] sm:$0xff]
    %v720 = vld [vmem:[#allocation4 + $0x230] sm:$0xff]
    %v721 = vld [vmem:[#allocation4 + $0x238] sm:$0xff]
    %v722 = vld [vmem:[#allocation4 + $0x240] sm:$0xff]
    %v723 = vld [vmem:[#allocation4 + $0x248] sm:$0xff]
    %v724 = vld [vmem:[#allocation4 + $0x250] sm:$0xff]
    %v725 = vld [vmem:[#allocation4 + $0x258] sm:$0xff]
    %v726 = vld [vmem:[#allocation4 + $0x260] sm:$0xff]
    %v727 = vld [vmem:[#allocation4 + $0x268] sm:$0xff]
    %v728 = vld [vmem:[#allocation4 + $0x270] sm:$0xff]
    %v729 = vld [vmem:[#allocation4 + $0x278] sm:$0xff]
    %v730 = vld [vmem:[#allocation4 + $0x280] sm:$0xff]
    %v731 = vld [vmem:[#allocation4 + $0x288] sm:$0xff]
    %v732 = vld [vmem:[#allocation4 + $0x290] sm:$0xff]
    %v733 = vld [vmem:[#allocation4 + $0x298] sm:$0xff]
    %v734 = vld [vmem:[#allocation4 + $0x2a0] sm:$0xff]
    %v735 = vld [vmem:[#allocation4 + $0x2a8] sm:$0xff]
    %v736 = vld [vmem:[#allocation4 + $0x2b0] sm:$0xff]
    %v737 = vld [vmem:[#allocation4 + $0x2b8] sm:$0xff]
    %v738 = vld [vmem:[#allocation4 + $0x2c0] sm:$0xff]
    %v739 = vld [vmem:[#allocation4 + $0x2c8] sm:$0xff]
    %v740 = vld [vmem:[#allocation4 + $0x2d0] sm:$0xff]
    %v741 = vld [vmem:[#allocation4 + $0x2d8] sm:$0xff]
    %v742 = vld [vmem:[#allocation4 + $0x2e0] sm:$0xff]
    %v743 = vld [vmem:[#allocation4 + $0x2e8] sm:$0xff]
    %v744 = vld [vmem:[#allocation4 + $0x2f0] sm:$0xff]
    %v745 = vld [vmem:[#allocation4 + $0x2f8] sm:$0xff]
    %v746 = vld [vmem:[#allocation4 + $0x300] sm:$0xff]
    %v747 = vld [vmem:[#allocation4 + $0x308] sm:$0xff]
    %v748 = vld [vmem:[#allocation4 + $0x310] sm:$0xff]
    %v749 = vld [vmem:[#allocation4 + $0x318] sm:$0xff]
    %v750 = vld [vmem:[#allocation4 + $0x320] sm:$0xff]
    %v751 = vld [vmem:[#allocation4 + $0x328] sm:$0xff]
    %v752 = vld [vmem:[#allocation4 + $0x330] sm:$0xff]
    %v753 = vld [vmem:[#allocation4 + $0x338] sm:$0xff]
    %v754 = vld [vmem:[#allocation4 + $0x340] sm:$0xff]
    %v755 = vld [vmem:[#allocation4 + $0x348] sm:$0xff]
    %v756 = vld [vmem:[#allocation4 + $0x350] sm:$0xff]
    %v757 = vld [vmem:[#allocation4 + $0x358] sm:$0xff]
    %v758 = vld [vmem:[#allocation4 + $0x360] sm:$0xff]
    %v759 = vld [vmem:[#allocation4 + $0x368] sm:$0xff]
    %v760 = vld [vmem:[#allocation4 + $0x370] sm:$0xff]
    %v761 = vld [vmem:[#allocation4 + $0x378] sm:$0xff]
    %v762 = vld [vmem:[#allocation4 + $0x380] sm:$0xff]
    %v763 = vld [vmem:[#allocation4 + $0x388] sm:$0xff]
    %v764 = vld [vmem:[#allocation4 + $0x390] sm:$0xff]
    %v765 = vld [vmem:[#allocation4 + $0x398] sm:$0xff]
    %v766 = vld [vmem:[#allocation4 + $0x3a0] sm:$0xff]
    %v767 = vld [vmem:[#allocation4 + $0x3a8] sm:$0xff]
    %v768 = vld [vmem:[#allocation4 + $0x3b0] sm:$0xff]
    %v769 = vld [vmem:[#allocation4 + $0x3b8] sm:$0xff]
    %v770 = vld [vmem:[#allocation4 + $0x3c0] sm:$0xff]
    %v771 = vld [vmem:[#allocation4 + $0x3c8] sm:$0xff]
    %v772 = vld [vmem:[#allocation4 + $0x3d0] sm:$0xff]
    %v773 = vld [vmem:[#allocation4 + $0x3d8] sm:$0xff]
    %v774 = vld [vmem:[#allocation4 + $0x3e0] sm:$0xff]
    %v775 = vld [vmem:[#allocation4 + $0x3e8] sm:$0xff]
    %v776 = vld [vmem:[#allocation4 + $0x3f0] sm:$0xff]
    %v777 = vld [vmem:[#allocation4 + $0x3f8] sm:$0xff]
    %v778 = vld [vmem:[%s4] sm:$0x1]
    %v780 = vlaneseq
    %v781 = vshrl.u32 %v780, 7
    %v782 = vsub.s32 0, %v781
    %v783 = vrot.slane %v778, %v782
    %785 = vmatprep.subr.mxu0 0.0
    %786 = vmatpush1.msra.mxu0 %v665
    %787 = vmatprep.subr.mxu0 0.0
    %788 = vmatpush1.msra.mxu0 %v664
    %789 = vmatprep.subr.mxu0 0.0
    %790 = vmatpush1.msra.mxu0 %v663
    %791 = vmatprep.subr.mxu0 0.0
    %792 = vmatpush1.msra.mxu0 %v662
    %793 = vmatprep.subr.mxu0 0.0
    %794 = vmatpush1.msra.mxu0 %v661
    %795 = vmatprep.subr.mxu0 0.0
    %796 = vmatpush1.msra.mxu0 %v660
    %797 = vmatprep.subr.mxu0 0.0
    %798 = vmatpush1.msra.mxu0 %v659
    %799 = vmatprep.subr.mxu0 0.0
    %800 = vmatpush1.msra.mxu0 %v658
    %801 = vmatprep.subr.mxu0 0.0
    %802 = vmatpush1.msra.mxu0 %v657
    %803 = vmatprep.subr.mxu0 0.0
    %804 = vmatpush1.msra.mxu0 %v656
    %805 = vmatprep.subr.mxu0 0.0
    %806 = vmatpush1.msra.mxu0 %v655
    %807 = vmatprep.subr.mxu0 0.0
    %808 = vmatpush1.msra.mxu0 %v654
    %809 = vmatprep.subr.mxu0 0.0
    %810 = vmatpush1.msra.mxu0 %v653
    %811 = vmatprep.subr.mxu0 0.0
    %812 = vmatpush1.msra.mxu0 %v652
    %813 = vmatprep.subr.mxu0 0.0
    %814 = vmatpush1.msra.mxu0 %v651
    %815 = vmatprep.subr.mxu0 0.0
    %816 = vmatpush1.msra.mxu0 %v650
    %817 = vmatprep.subr.mxu0 0.0
    %818 = vmatpush2.msra.mxu0 %v681
    %819 = vmatprep.subr.mxu0 0.0
    %820 = vmatpush2.msra.mxu0 %v680
    %821 = vmatprep.subr.mxu0 0.0
    %822 = vmatpush2.msra.mxu0 %v679
    %823 = vmatprep.subr.mxu0 0.0
    %824 = vmatpush2.msra.mxu0 %v678
    %825 = vmatprep.subr.mxu0 0.0
    %826 = vmatpush2.msra.mxu0 %v677
    %827 = vmatprep.subr.mxu0 0.0
    %828 = vmatpush2.msra.mxu0 %v676
    %829 = vmatprep.subr.mxu0 0.0
    %830 = vmatpush2.msra.mxu0 %v675
    %831 = vmatprep.subr.mxu0 0.0
    %832 = vmatpush2.msra.mxu0 %v674
    %833 = vmatprep.subr.mxu0 0.0
    %834 = vmatpush2.msra.mxu0 %v673
    %835 = vmatprep.subr.mxu0 0.0
    %836 = vmatpush2.msra.mxu0 %v672
    %837 = vmatprep.subr.mxu0 0.0
    %838 = vmatpush2.msra.mxu0 %v671
    %839 = vmatprep.subr.mxu0 0.0
    %840 = vmatpush2.msra.mxu0 %v670
    %841 = vmatprep.subr.mxu0 0.0
    %842 = vmatpush2.msra.mxu0 %v669
    %843 = vmatprep.subr.mxu0 0.0
    %844 = vmatpush2.msra.mxu0 %v668
    %845 = vmatprep.subr.mxu0 0.0
    %846 = vmatpush2.msra.mxu0 %v667
    %847 = vmatprep.subr.mxu0 0.0
    %848 = vmatpush2.msra.mxu0 %v666
    %849 = vmatprep.mubr.f32.mxu0 %v643
    %850 = vmatmul.mubr.f32.gmra.mxu0 %v642
    %v851 = vpop.f32.mrf.mxu0
    %v852 = vadd.f32 %v783, %v851
    %v853 = vpop.f32.mrf.mxu0
    %854 = vdwg.mxu0
    %855 = vmatprep.subr.mxu0 0.0
    %856 = vmatpush1.msra.mxu0 %v697
    %857 = vmatprep.subr.mxu0 0.0
    %858 = vmatpush1.msra.mxu0 %v696
    %859 = vmatprep.subr.mxu0 0.0
    %860 = vmatpush1.msra.mxu0 %v695
    %861 = vmatprep.subr.mxu0 0.0
    %862 = vmatpush1.msra.mxu0 %v694
    %863 = vmatprep.subr.mxu0 0.0
    %864 = vmatpush1.msra.mxu0 %v693
    %865 = vmatprep.subr.mxu0 0.0
    %866 = vmatpush1.msra.mxu0 %v692
    %867 = vmatprep.subr.mxu0 0.0
    %868 = vmatpush1.msra.mxu0 %v691
    %869 = vmatprep.subr.mxu0 0.0
    %870 = vmatpush1.msra.mxu0 %v690
    %871 = vmatprep.subr.mxu0 0.0
    %872 = vmatpush1.msra.mxu0 %v689
    %873 = vmatprep.subr.mxu0 0.0
    %874 = vmatpush1.msra.mxu0 %v688
    %875 = vmatprep.subr.mxu0 0.0
    %876 = vmatpush1.msra.mxu0 %v687
    %877 = vmatprep.subr.mxu0 0.0
    %878 = vmatpush1.msra.mxu0 %v686
    %879 = vmatprep.subr.mxu0 0.0
    %880 = vmatpush1.msra.mxu0 %v685
    %881 = vmatprep.subr.mxu0 0.0
    %882 = vmatpush1.msra.mxu0 %v684
    %883 = vmatprep.subr.mxu0 0.0
    %884 = vmatpush1.msra.mxu0 %v683
    %885 = vmatprep.subr.mxu0 0.0
    %886 = vmatpush1.msra.mxu0 %v682
    %887 = vmatprep.subr.mxu0 0.0
    %888 = vmatpush2.msra.mxu0 %v713
    %889 = vmatprep.subr.mxu0 0.0
    %890 = vmatpush2.msra.mxu0 %v712
    %891 = vmatprep.subr.mxu0 0.0
    %892 = vmatpush2.msra.mxu0 %v711
    %893 = vmatprep.subr.mxu0 0.0
    %894 = vmatpush2.msra.mxu0 %v710
    %895 = vmatprep.subr.mxu0 0.0
    %896 = vmatpush2.msra.mxu0 %v709
    %897 = vmatprep.subr.mxu0 0.0
    %898 = vmatpush2.msra.mxu0 %v708
    %899 = vmatprep.subr.mxu0 0.0
    %900 = vmatpush2.msra.mxu0 %v707
    %901 = vmatprep.subr.mxu0 0.0
    %902 = vmatpush2.msra.mxu0 %v706
    %903 = vmatprep.subr.mxu0 0.0
    %904 = vmatpush2.msra.mxu0 %v705
    %905 = vmatprep.subr.mxu0 0.0
    %906 = vmatpush2.msra.mxu0 %v704
    %907 = vmatprep.subr.mxu0 0.0
    %908 = vmatpush2.msra.mxu0 %v703
    %909 = vmatprep.subr.mxu0 0.0
    %910 = vmatpush2.msra.mxu0 %v702
    %911 = vmatprep.subr.mxu0 0.0
    %912 = vmatpush2.msra.mxu0 %v701
    %913 = vmatprep.subr.mxu0 0.0
    %914 = vmatpush2.msra.mxu0 %v700
    %915 = vmatprep.subr.mxu0 0.0
    %916 = vmatpush2.msra.mxu0 %v699
    %917 = vmatprep.subr.mxu0 0.0
    %918 = vmatpush2.msra.mxu0 %v698
    %919 = vmatprep.mubr.f32.mxu0 %v645
    %920 = vmatmul.mubr.f32.gmra.mxu0 %v644
    %v921 = vpop.f32.mrf.mxu0
    %v922 = vadd.f32 %v852, %v921
    %v923 = vpop.f32.mrf.mxu0
    %924 = vdwg.mxu0
    %925 = vmatprep.subr.mxu0 0.0
    %926 = vmatpush1.msra.mxu0 %v729
    %927 = vmatprep.subr.mxu0 0.0
    %928 = vmatpush1.msra.mxu0 %v728
    %929 = vmatprep.subr.mxu0 0.0
    %930 = vmatpush1.msra.mxu0 %v727
    %931 = vmatprep.subr.mxu0 0.0
    %932 = vmatpush1.msra.mxu0 %v726
    %933 = vmatprep.subr.mxu0 0.0
    %934 = vmatpush1.msra.mxu0 %v725
    %935 = vmatprep.subr.mxu0 0.0
    %936 = vmatpush1.msra.mxu0 %v724
    %937 = vmatprep.subr.mxu0 0.0
    %938 = vmatpush1.msra.mxu0 %v723
    %939 = vmatprep.subr.mxu0 0.0
    %940 = vmatpush1.msra.mxu0 %v722
    %941 = vmatprep.subr.mxu0 0.0
    %942 = vmatpush1.msra.mxu0 %v721
    %943 = vmatprep.subr.mxu0 0.0
    %944 = vmatpush1.msra.mxu0 %v720
    %945 = vmatprep.subr.mxu0 0.0
    %946 = vmatpush1.msra.mxu0 %v719
    %947 = vmatprep.subr.mxu0 0.0
    %948 = vmatpush1.msra.mxu0 %v718
    %949 = vmatprep.subr.mxu0 0.0
    %950 = vmatpush1.msra.mxu0 %v717
    %951 = vmatprep.subr.mxu0 0.0
    %952 = vmatpush1.msra.mxu0 %v716
    %953 = vmatprep.subr.mxu0 0.0
    %954 = vmatpush1.msra.mxu0 %v715
    %955 = vmatprep.subr.mxu0 0.0
    %956 = vmatpush1.msra.mxu0 %v714
    %957 = vmatprep.subr.mxu0 0.0
    %958 = vmatpush2.msra.mxu0 %v745
    %959 = vmatprep.subr.mxu0 0.0
    %960 = vmatpush2.msra.mxu0 %v744
    %961 = vmatprep.subr.mxu0 0.0
    %962 = vmatpush2.msra.mxu0 %v743
    %963 = vmatprep.subr.mxu0 0.0
    %964 = vmatpush2.msra.mxu0 %v742
    %965 = vmatprep.subr.mxu0 0.0
    %966 = vmatpush2.msra.mxu0 %v741
    %967 = vmatprep.subr.mxu0 0.0
    %968 = vmatpush2.msra.mxu0 %v740
    %969 = vmatprep.subr.mxu0 0.0
    %970 = vmatpush2.msra.mxu0 %v739
    %971 = vmatprep.subr.mxu0 0.0
    %972 = vmatpush2.msra.mxu0 %v738
    %973 = vmatprep.subr.mxu0 0.0
    %974 = vmatpush2.msra.mxu0 %v737
    %975 = vmatprep.subr.mxu0 0.0
    %976 = vmatpush2.msra.mxu0 %v736
    %977 = vmatprep.subr.mxu0 0.0
    %978 = vmatpush2.msra.mxu0 %v735
    %979 = vmatprep.subr.mxu0 0.0
    %980 = vmatpush2.msra.mxu0 %v734
    %981 = vmatprep.subr.mxu0 0.0
    %982 = vmatpush2.msra.mxu0 %v733
    %983 = vmatprep.subr.mxu0 0.0
    %984 = vmatpush2.msra.mxu0 %v732
    %985 = vmatprep.subr.mxu0 0.0
    %986 = vmatpush2.msra.mxu0 %v731
    %987 = vmatprep.subr.mxu0 0.0
    %988 = vmatpush2.msra.mxu0 %v730
    %989 = vmatprep.mubr.f32.mxu0 %v647
    %990 = vmatmul.mubr.f32.gmra.mxu0 %v646
    %v991 = vpop.f32.mrf.mxu0
    %v992 = vadd.f32 %v922, %v991
    %v993 = vpop.f32.mrf.mxu0
    %994 = vdwg.mxu0
    %995 = vmatprep.subr.mxu0 0.0
    %996 = vmatpush1.msra.mxu0 %v761
    %997 = vmatprep.subr.mxu0 0.0
    %998 = vmatpush1.msra.mxu0 %v760
    %999 = vmatprep.subr.mxu0 0.0
    %1000 = vmatpush1.msra.mxu0 %v759
    %1001 = vmatprep.subr.mxu0 0.0
    %1002 = vmatpush1.msra.mxu0 %v758
    %1003 = vmatprep.subr.mxu0 0.0
    %1004 = vmatpush1.msra.mxu0 %v757
    %1005 = vmatprep.subr.mxu0 0.0
    %1006 = vmatpush1.msra.mxu0 %v756
    %1007 = vmatprep.subr.mxu0 0.0
    %1008 = vmatpush1.msra.mxu0 %v755
    %1009 = vmatprep.subr.mxu0 0.0
    %1010 = vmatpush1.msra.mxu0 %v754
    %1011 = vmatprep.subr.mxu0 0.0
    %1012 = vmatpush1.msra.mxu0 %v753
    %1013 = vmatprep.subr.mxu0 0.0
    %1014 = vmatpush1.msra.mxu0 %v752
    %1015 = vmatprep.subr.mxu0 0.0
    %1016 = vmatpush1.msra.mxu0 %v751
    %1017 = vmatprep.subr.mxu0 0.0
    %1018 = vmatpush1.msra.mxu0 %v750
    %1019 = vmatprep.subr.mxu0 0.0
    %1020 = vmatpush1.msra.mxu0 %v749
    %1021 = vmatprep.subr.mxu0 0.0
    %1022 = vmatpush1.msra.mxu0 %v748
    %1023 = vmatprep.subr.mxu0 0.0
    %1024 = vmatpush1.msra.mxu0 %v747
    %1025 = vmatprep.subr.mxu0 0.0
    %1026 = vmatpush1.msra.mxu0 %v746
    %1027 = vmatprep.subr.mxu0 0.0
    %1028 = vmatpush2.msra.mxu0 %v777
    %1029 = vmatprep.subr.mxu0 0.0
    %1030 = vmatpush2.msra.mxu0 %v776
    %1031 = vmatprep.subr.mxu0 0.0
    %1032 = vmatpush2.msra.mxu0 %v775
    %1033 = vmatprep.subr.mxu0 0.0
    %1034 = vmatpush2.msra.mxu0 %v774
    %1035 = vmatprep.subr.mxu0 0.0
    %1036 = vmatpush2.msra.mxu0 %v773
    %1037 = vmatprep.subr.mxu0 0.0
    %1038 = vmatpush2.msra.mxu0 %v772
    %1039 = vmatprep.subr.mxu0 0.0
    %1040 = vmatpush2.msra.mxu0 %v771
    %1041 = vmatprep.subr.mxu0 0.0
    %1042 = vmatpush2.msra.mxu0 %v770
    %1043 = vmatprep.subr.mxu0 0.0
    %1044 = vmatpush2.msra.mxu0 %v769
    %1045 = vmatprep.subr.mxu0 0.0
    %1046 = vmatpush2.msra.mxu0 %v768
    %1047 = vmatprep.subr.mxu0 0.0
    %1048 = vmatpush2.msra.mxu0 %v767
    %1049 = vmatprep.subr.mxu0 0.0
    %1050 = vmatpush2.msra.mxu0 %v766
    %1051 = vmatprep.subr.mxu0 0.0
    %1052 = vmatpush2.msra.mxu0 %v765
    %1053 = vmatprep.subr.mxu0 0.0
    %1054 = vmatpush2.msra.mxu0 %v764
    %1055 = vmatprep.subr.mxu0 0.0
    %1056 = vmatpush2.msra.mxu0 %v763
    %1057 = vmatprep.subr.mxu0 0.0
    %1058 = vmatpush2.msra.mxu0 %v762
    %1059 = vmatprep.mubr.f32.mxu0 %v649
    %1060 = vmatmul.mubr.f32.gmra.mxu0 %v648
    %v1061 = vpop.f32.mrf.mxu0
    %v1062 = vadd.f32 %v992, %v1061
    %v1063 = vpop.f32.mrf.mxu0
    %1064 = vdwg.mxu0
    %1065 = vst [vmem:[%s5] sm:$0x3] %v1062
    // Predicated region
    $region30: #{_lambda_.3} parent=1 // pred_check
      _
    $region31: #{_lambda_.3} parent=1 // pred_check_branch
      %1067 = sbr.rel (0) target = $region33
    $region32: #{_lambda_.3} parent=1 // pred_region
      _
    $region33: #{_lambda_.3} parent=1 // pred_fallthru
      _
    // Predicated region
    $region34: #{_lambda_.3} parent=1 // pred_check
      _
    $region35: #{_lambda_.3} parent=1 // pred_check_branch
      %1069 = sbr.rel (0) target = $region37
    $region36: #{_lambda_.3} parent=1 // pred_region
      _
    $region37: #{_lambda_.3} parent=1 // pred_fallthru
      _
    %1070 = vsyncpa [#allocation3], 1
    %1071 = vsyncpa [#allocation5], 1

// kernel: _lambda_.4
$region0: #{_lambda_.4}
  #allocation0 [shape = 'u32[]', space=smem, size = 0x4, offset = 0x4, fixed_abs, tag = 'smem constant byte address 0x4 - core index']
  #allocation1 [shape = 'u32[144,128]{1,0:T(1,128)}', space=vmem, size = 0x12000, scoped, tag = 'internal scratch']
  %s0 = inlined_call_operand.vmem [shape: f32[2,12,32], index: 0, kind: input, shape index: {}]
  %s1 = inlined_call_operand.vmem [shape: f32[2,1,12], index: 1, kind: input, shape index: {}]
  %s2 = inlined_call_operand.vmem [shape: f32[2,32,96], index: 2, kind: input, shape index: {}]
  %s3 = inlined_call_operand.vmem [shape: f32[2,32,32], index: 3, kind: input, shape index: {}]
  %s4 = inlined_call_operand.vmem [shape: f32[2,32,64], index: 4, kind: input, shape index: {}]
  %s5 = inlined_call_operand.vmem [shape: f32[2,64,32], index: 5, kind: input, shape index: {}]
  %s6 = inlined_call_operand.vmem [shape: f32[2,8,96], index: 6, kind: input, shape index: {}]
  %s7 = inlined_call_operand.vmem [shape: f32[2,12,32], index: 7, kind: output, shape index: {}]
  %s8 = sld [smem:[#allocation0]]
  $region65: #{_lambda_.4} parent=0
    _
  %s10 = ssub.s32 1, %s8
  %s11 = scalar_select 0, %s10, %s8
  loop: start=0, step=1, limit=6
  $region2: #{_lambda_.4} parent=0 // loop_pre_header
    _
  $region3: #{_lambda_.4} parent=0 // loop_header
    %s13 = sphi 0, %s17
    %p14 = scmp.ge.s32.totalorder %s13, 6
    %s20 = sphi 0, %s32
    %s21 = sphi 0, %s28
    %s22 = sphi 0, %s20
    %s23 = sphi 0, %s21
    %s24 = sphi 0, %s22
    %s25 = sphi 0, %s23
    %s35 = sphi 0, %s37
    %s38 = sphi 0, %s35
    %s39 = sphi 0, %s38
    %s55 = sphi 0, %s39
    %s61 = sphi 0, %s63
    %s64 = sphi 0, %s61
    %s65 = sphi 0, %s64
    %s81 = sphi 0, %s65
    %s87 = sphi 0, %s89
    %s90 = sphi 0, %s87
    %s91 = sphi 0, %s90
    %s107 = sphi 0, %s91
    %s113 = sphi 0, %s115
    %s116 = sphi 0, %s113
    %s117 = sphi 0, %s116
    %s133 = sphi 0, %s117
    %s139 = sphi 0, %s141
    %s142 = sphi 0, %s139
    %s143 = sphi 0, %s142
    %s159 = sphi 0, %s143
    %s165 = sphi 0, %s167
    %s168 = sphi 0, %s165
    %s169 = sphi 0, %s168
    %s185 = sphi 0, %s169
    %s191 = sphi 0, %s193
    %s194 = sphi 0, %s191
    %s195 = sphi 0, %s194
    %s211 = sphi 0, %s195
    %s217 = sphi 0, %s219
    %s220 = sphi 0, %s217
    %s221 = sphi 0, %s220
    %s237 = sphi 0, %s221
  $region4: #{_lambda_.4} parent=0 // loop_header_branch
    %16 = sbr.rel (%p14) target = $region8
  $region5: #{_lambda_.4} parent=0 // loop_body
    %s18 = ssub.s32 %s13, 1
    %s19 = ssub.s32 %s13, 2
    %s26 = sadd.s32 1, %s21
    %p27 = scmp.ge.s32.totalorder %s26, 2
    %s28 = scalar_select %p27, 0, %s26
    %s29 = sadd.s32 1, %s20
    %s30 = scalar_select %p27, %s29, %s20
    %p31 = scmp.ge.s32.totalorder %s30, 2
    %s32 = scalar_select %p31, 0, %s30
    %s33 = ssub.s32 %s20, %s32
    %p34 = scmp.eq.s32.totalorder %s33, 0
    %s36 = sadd.s32 %s35, 1
    %s37 = scalar_select %p34, %s35, %s36
    %p40 = pneg %p34
    %p41 = scmp.eq.s32.totalorder %s13, 3
    %p42 = por %p40, %p41
    %p43 = scmp.ne.s32.totalorder %s35, %s38
    %p44 = scmp.eq.s32.totalorder %s13, 0
    %p45 = por %p43, %p44
    %p46 = scmp.ne.s32.totalorder %s35, %s38
    %p47 = scmp.eq.s32.totalorder %s18, 3
    %p48 = por %p46, %p47
    %p49 = scmp.ne.s32.totalorder %s38, %s39
    %p50 = scmp.eq.s32.totalorder %s18, 0
    %p51 = por %p49, %p50
    %p52 = scmp.ne.s32.totalorder %s38, %s39
    %p53 = scmp.eq.s32.totalorder %s19, 3
    %p54 = por %p52, %p53
    %p56 = scmp.ne.s32.totalorder %s39, %s55
    %p57 = scmp.eq.s32.totalorder %s19, 0
    %p58 = por %p56, %p57
    %s59 = ssub.s32 %s20, %s32
    %p60 = scmp.eq.s32.totalorder %s59, 0
    %s62 = sadd.s32 %s61, 1
    %s63 = scalar_select %p60, %s61, %s62
    %p66 = pneg %p60
    %p67 = scmp.eq.s32.totalorder %s13, 3
    %p68 = por %p66, %p67
    %p69 = scmp.ne.s32.totalorder %s61, %s64
    %p70 = scmp.eq.s32.totalorder %s13, 0
    %p71 = por %p69, %p70
    %p72 = scmp.ne.s32.totalorder %s61, %s64
    %p73 = scmp.eq.s32.totalorder %s18, 3
    %p74 = por %p72, %p73
    %p75 = scmp.ne.s32.totalorder %s64, %s65
    %p76 = scmp.eq.s32.totalorder %s18, 0
    %p77 = por %p75, %p76
    %p78 = scmp.ne.s32.totalorder %s64, %s65
    %p79 = scmp.eq.s32.totalorder %s19, 3
    %p80 = por %p78, %p79
    %p82 = scmp.ne.s32.totalorder %s65, %s81
    %p83 = scmp.eq.s32.totalorder %s19, 0
    %p84 = por %p82, %p83
    %s85 = ssub.s32 %s21, %s28
    %p86 = scmp.eq.s32.totalorder %s85, 0
    %s88 = sadd.s32 %s87, 1
    %s89 = scalar_select %p86, %s87, %s88
    %p92 = pneg %p86
    %p93 = scmp.eq.s32.totalorder %s13, 3
    %p94 = por %p92, %p93
    %p95 = scmp.ne.s32.totalorder %s87, %s90
    %p96 = scmp.eq.s32.totalorder %s13, 0
    %p97 = por %p95, %p96
    %p98 = scmp.ne.s32.totalorder %s87, %s90
    %p99 = scmp.eq.s32.totalorder %s18, 3
    %p100 = por %p98, %p99
    %p101 = scmp.ne.s32.totalorder %s90, %s91
    %p102 = scmp.eq.s32.totalorder %s18, 0
    %p103 = por %p101, %p102
    %p104 = scmp.ne.s32.totalorder %s90, %s91
    %p105 = scmp.eq.s32.totalorder %s19, 3
    %p106 = por %p104, %p105
    %p108 = scmp.ne.s32.totalorder %s91, %s107
    %p109 = scmp.eq.s32.totalorder %s19, 0
    %p110 = por %p108, %p109
    %s111 = ssub.s32 %s21, %s28
    %p112 = scmp.eq.s32.totalorder %s111, 0
    %s114 = sadd.s32 %s113, 1
    %s115 = scalar_select %p112, %s113, %s114
    %p118 = pneg %p112
    %p119 = scmp.eq.s32.totalorder %s13, 3
    %p120 = por %p118, %p119
    %p121 = scmp.ne.s32.totalorder %s113, %s116
    %p122 = scmp.eq.s32.totalorder %s13, 0
    %p123 = por %p121, %p122
    %p124 = scmp.ne.s32.totalorder %s113, %s116
    %p125 = scmp.eq.s32.totalorder %s18, 3
    %p126 = por %p124, %p125
    %p127 = scmp.ne.s32.totalorder %s116, %s117
    %p128 = scmp.eq.s32.totalorder %s18, 0
    %p129 = por %p127, %p128
    %p130 = scmp.ne.s32.totalorder %s116, %s117
    %p131 = scmp.eq.s32.totalorder %s19, 3
    %p132 = por %p130, %p131
    %p134 = scmp.ne.s32.totalorder %s117, %s133
    %p135 = scmp.eq.s32.totalorder %s19, 0
    %p136 = por %p134, %p135
    %s137 = ssub.s32 %s21, %s28
    %p138 = scmp.eq.s32.totalorder %s137, 0
    %s140 = sadd.s32 %s139, 1
    %s141 = scalar_select %p138, %s139, %s140
    %p144 = pneg %p138
    %p145 = scmp.eq.s32.totalorder %s13, 3
    %p146 = por %p144, %p145
    %p147 = scmp.ne.s32.totalorder %s139, %s142
    %p148 = scmp.eq.s32.totalorder %s13, 0
    %p149 = por %p147, %p148
    %p150 = scmp.ne.s32.totalorder %s139, %s142
    %p151 = scmp.eq.s32.totalorder %s18, 3
    %p152 = por %p150, %p151
    %p153 = scmp.ne.s32.totalorder %s142, %s143
    %p154 = scmp.eq.s32.totalorder %s18, 0
    %p155 = por %p153, %p154
    %p156 = scmp.ne.s32.totalorder %s142, %s143
    %p157 = scmp.eq.s32.totalorder %s19, 3
    %p158 = por %p156, %p157
    %p160 = scmp.ne.s32.totalorder %s143, %s159
    %p161 = scmp.eq.s32.totalorder %s19, 0
    %p162 = por %p160, %p161
    %s163 = ssub.s32 %s21, %s28
    %p164 = scmp.eq.s32.totalorder %s163, 0
    %s166 = sadd.s32 %s165, 1
    %s167 = scalar_select %p164, %s165, %s166
    %p170 = pneg %p164
    %p171 = scmp.eq.s32.totalorder %s13, 3
    %p172 = por %p170, %p171
    %p173 = scmp.ne.s32.totalorder %s165, %s168
    %p174 = scmp.eq.s32.totalorder %s13, 0
    %p175 = por %p173, %p174
    %p176 = scmp.ne.s32.totalorder %s165, %s168
    %p177 = scmp.eq.s32.totalorder %s18, 3
    %p178 = por %p176, %p177
    %p179 = scmp.ne.s32.totalorder %s168, %s169
    %p180 = scmp.eq.s32.totalorder %s18, 0
    %p181 = por %p179, %p180
    %p182 = scmp.ne.s32.totalorder %s168, %s169
    %p183 = scmp.eq.s32.totalorder %s19, 3
    %p184 = por %p182, %p183
    %p186 = scmp.ne.s32.totalorder %s169, %s185
    %p187 = scmp.eq.s32.totalorder %s19, 0
    %p188 = por %p186, %p187
    %s189 = ssub.s32 %s21, %s28
    %p190 = scmp.eq.s32.totalorder %s189, 0
    %s192 = sadd.s32 %s191, 1
    %s193 = scalar_select %p190, %s191, %s192
    %p196 = pneg %p190
    %p197 = scmp.eq.s32.totalorder %s13, 3
    %p198 = por %p196, %p197
    %p199 = scmp.ne.s32.totalorder %s191, %s194
    %p200 = scmp.eq.s32.totalorder %s13, 0
    %p201 = por %p199, %p200
    %p202 = scmp.ne.s32.totalorder %s191, %s194
    %p203 = scmp.eq.s32.totalorder %s18, 3
    %p204 = por %p202, %p203
    %p205 = scmp.ne.s32.totalorder %s194, %s195
    %p206 = scmp.eq.s32.totalorder %s18, 0
    %p207 = por %p205, %p206
    %p208 = scmp.ne.s32.totalorder %s194, %s195
    %p209 = scmp.eq.s32.totalorder %s19, 3
    %p210 = por %p208, %p209
    %p212 = scmp.ne.s32.totalorder %s195, %s211
    %p213 = scmp.eq.s32.totalorder %s19, 0
    %p214 = por %p212, %p213
    %s215 = ssub.s32 %s20, %s32
    %p216 = scmp.eq.s32.totalorder %s215, 0
    %s218 = sadd.s32 %s217, 1
    %s219 = scalar_select %p216, %s217, %s218
    %p222 = pneg %p216
    %p223 = scmp.eq.s32.totalorder %s13, 3
    %p224 = por %p222, %p223
    %p225 = scmp.ne.s32.totalorder %s217, %s220
    %p226 = scmp.eq.s32.totalorder %s13, 0
    %p227 = por %p225, %p226
    %p228 = scmp.ne.s32.totalorder %s217, %s220
    %p229 = scmp.eq.s32.totalorder %s18, 3
    %p230 = por %p228, %p229
    %p231 = scmp.ne.s32.totalorder %s220, %s221
    %p232 = scmp.eq.s32.totalorder %s18, 0
    %p233 = por %p231, %p232
    %p234 = scmp.ne.s32.totalorder %s220, %s221
    %p235 = scmp.eq.s32.totalorder %s19, 3
    %p236 = por %p234, %p235
    %p238 = scmp.ne.s32.totalorder %s221, %s237
    %p239 = scmp.eq.s32.totalorder %s19, 0
    %p240 = por %p238, %p239
    %p241 = scmp.le.s32.totalorder 1, %s13
    %p242 = scmp.lt.s32.totalorder %s13, 5
    %p243 = pnand %p241, %p242
    %p244 = pneg %p243
    // Predicated region
    $region9: #{_lambda_.4} parent=5 // pred_check
      _
    $region10: #{_lambda_.4} parent=5 // pred_check_branch
      %246 = sbr.rel (%p243) target = $region12
    $region11: #{_lambda_.4} parent=5 // pred_region
      %s247 = ssub.s32 %s13, 1
    $region12: #{_lambda_.4} parent=5 // pred_fallthru
      _
    %p248 = scmp.lt.s32.totalorder %s13, 4
    // Predicated region
    $region13: #{_lambda_.4} parent=5 // pred_check
      %p249 = pneg %p248
    $region14: #{_lambda_.4} parent=5 // pred_check_branch
      %251 = sbr.rel (%p249) target = $region16
    $region15: #{_lambda_.4} parent=5 // pred_region
      // Predicated region
      $region17: #{_lambda_.4} parent=15 // pred_check
        %p252 = pneg %p45
      $region18: #{_lambda_.4} parent=15 // pred_check_branch
        %254 = sbr.rel (%p252) target = $region20
      $region19: #{_lambda_.4} parent=15 // pred_region
        %p255 = scmp.lt.s32.totalorder %s20, 1
        %s256 = scalar_select %p255, %s20, 1
        %s257 = smul.addr %s256, 2
        %s258 = smul.addr %s257, 8
        %s259 = scalar_lea.vmem %s0, %s258
      $region20: #{_lambda_.4} parent=15 // pred_fallthru
        _
      // Predicated region
      $region21: #{_lambda_.4} parent=15 // pred_check
        %p260 = pneg %p71
      $region22: #{_lambda_.4} parent=15 // pred_check_branch
        %262 = sbr.rel (%p260) target = $region24
      $region23: #{_lambda_.4} parent=15 // pred_region
        %p263 = scmp.lt.s32.totalorder %s20, 1
        %s264 = scalar_select %p263, %s20, 1
        %s265 = scalar_lea.vmem %s1, %s264
      $region24: #{_lambda_.4} parent=15 // pred_fallthru
        _
      // Predicated region
      $region25: #{_lambda_.4} parent=15 // pred_check
        %p266 = pneg %p97
      $region26: #{_lambda_.4} parent=15 // pred_check_branch
        %268 = sbr.rel (%p266) target = $region28
      $region27: #{_lambda_.4} parent=15 // pred_region
        %p269 = scmp.lt.s32.totalorder %s21, 1
        %s270 = scalar_select %p269, %s21, 1
        %s271 = smul.addr %s270, 4
        %s272 = smul.addr %s271, 8
        %s273 = scalar_lea.vmem %s2, %s272
      $region28: #{_lambda_.4} parent=15 // pred_fallthru
        _
      // Predicated region
      $region29: #{_lambda_.4} parent=15 // pred_check
        %p274 = pneg %p123
      $region30: #{_lambda_.4} parent=15 // pred_check_branch
        %276 = sbr.rel (%p274) target = $region32
      $region31: #{_lambda_.4} parent=15 // pred_region
        %p277 = scmp.lt.s32.totalorder %s21, 1
        %s278 = scalar_select %p277, %s21, 1
        %s279 = smul.addr %s278, 4
        %s280 = smul.addr %s279, 8
        %s281 = scalar_lea.vmem %s3, %s280
      $region32: #{_lambda_.4} parent=15 // pred_fallthru
        _
      // Predicated region
      $region33: #{_lambda_.4} parent=15 // pred_check
        %p282 = pneg %p149
      $region34: #{_lambda_.4} parent=15 // pred_check_branch
        %284 = sbr.rel (%p282) target = $region36
      $region35: #{_lambda_.4} parent=15 // pred_region
        %p285 = scmp.lt.s32.totalorder %s21, 1
        %s286 = scalar_select %p285, %s21, 1
        %s287 = smul.addr %s286, 4
        %s288 = smul.addr %s287, 8
        %s289 = scalar_lea.vmem %s4, %s288
      $region36: #{_lambda_.4} parent=15 // pred_fallthru
        _
      // Predicated region
      $region37: #{_lambda_.4} parent=15 // pred_check
        %p290 = pneg %p175
      $region38: #{_lambda_.4} parent=15 // pred_check_branch
        %292 = sbr.rel (%p290) target = $region40
      $region39: #{_lambda_.4} parent=15 // pred_region
        %p293 = scmp.lt.s32.totalorder %s21, 1
        %s294 = scalar_select %p293, %s21, 1
        %s295 = smul.addr %s294, 8
        %s296 = smul.addr %s295, 8
        %s297 = scalar_lea.vmem %s5, %s296
      $region40: #{_lambda_.4} parent=15 // pred_fallthru
        _
      // Predicated region
      $region41: #{_lambda_.4} parent=15 // pred_check
        %p298 = pneg %p201
      $region42: #{_lambda_.4} parent=15 // pred_check_branch
        %300 = sbr.rel (%p298) target = $region44
      $region43: #{_lambda_.4} parent=15 // pred_region
        %p301 = scmp.lt.s32.totalorder %s21, 1
        %s302 = scalar_select %p301, %s21, 1
        %s303 = smul.addr %s302, 8
        %s304 = scalar_lea.vmem %s6, %s303
      $region44: #{_lambda_.4} parent=15 // pred_fallthru
        _
    $region16: #{_lambda_.4} parent=5 // pred_fallthru
      _
    %p305 = scmp.le.s32.totalorder 1, %s13
    %p306 = scmp.lt.s32.totalorder %s13, 5
    %p307 = pnand %p305, %p306
    %p308 = pneg %p307
    // Predicated region
    $region45: #{_lambda_.4} parent=5 // pred_check
      _
    $region46: #{_lambda_.4} parent=5 // pred_check_branch
      %310 = sbr.rel (%p307) target = $region48
    $region47: #{_lambda_.4} parent=5 // pred_region
      %s311 = ssub.s32 %s13, 1
      %p312 = scmp.lt.s32.totalorder %s22, 1
      %s313 = scalar_select %p312, %s22, 1
      %s314 = smul.addr %s313, 2
      %s315 = smul.addr %s314, 8
      %s316 = scalar_lea.vmem %s0, %s315
      %p317 = pneg %p51
      %p318 = pneg %p48
      %p319 = scmp.lt.s32.totalorder %s22, 1
      %s320 = scalar_select %p319, %s22, 1
      %s321 = scalar_lea.vmem %s1, %s320
      %p322 = pneg %p77
      %p323 = pneg %p74
      %p324 = scmp.lt.s32.totalorder %s23, 1
      %s325 = scalar_select %p324, %s23, 1
      %s326 = smul.addr %s325, 4
      %s327 = smul.addr %s326, 8
      %s328 = scalar_lea.vmem %s2, %s327
      %p329 = pneg %p103
      %p330 = pneg %p100
      %p331 = scmp.lt.s32.totalorder %s23, 1
      %s332 = scalar_select %p331, %s23, 1
      %s333 = smul.addr %s332, 4
      %s334 = smul.addr %s333, 8
      %s335 = scalar_lea.vmem %s3, %s334
      %p336 = pneg %p129
      %p337 = pneg %p126
      %p338 = scmp.lt.s32.totalorder %s23, 1
      %s339 = scalar_select %p338, %s23, 1
      %s340 = smul.addr %s339, 4
      %s341 = smul.addr %s340, 8
      %s342 = scalar_lea.vmem %s4, %s341
      %p343 = pneg %p155
      %p344 = pneg %p152
      %p345 = scmp.lt.s32.totalorder %s23, 1
      %s346 = scalar_select %p345, %s23, 1
      %s347 = smul.addr %s346, 8
      %s348 = smul.addr %s347, 8
      %s349 = scalar_lea.vmem %s5, %s348
      %p350 = pneg %p181
      %p351 = pneg %p178
      %p352 = scmp.lt.s32.totalorder %s23, 1
      %s353 = scalar_select %p352, %s23, 1
      %s354 = smul.addr %s353, 8
      %s355 = scalar_lea.vmem %s6, %s354
      %p356 = pneg %p207
      %p357 = pneg %p204
      %p358 = pneg %p233
      %p359 = pneg %p230
      %p360 = scmp.lt.s32.totalorder %s22, 1
      %s361 = scalar_select %p360, %s22, 1
      %s362 = smul.addr %s361, 2
      %s363 = smul.addr %s362, 8
      %s364 = scalar_lea.vmem %s7, %s363
      %p365 = scmp.lt.s32.totalorder %s22, 1
      %s366 = scalar_select %p365, %s22, 1
      %s367 = smul.addr %s366, 2
      %s368 = smul.addr %s367, 8
      %s369 = scalar_lea.vmem %s0, %s368
      %p370 = scmp.lt.s32.totalorder %s22, 1
      %s371 = scalar_select %p370, %s22, 1
      %s372 = scalar_lea.vmem %s1, %s371
      %p373 = scmp.lt.s32.totalorder %s23, 1
      %s374 = scalar_select %p373, %s23, 1
      %s375 = smul.addr %s374, 4
      %s376 = smul.addr %s375, 8
      %s377 = scalar_lea.vmem %s2, %s376
      %p378 = scmp.lt.s32.totalorder %s23, 1
      %s379 = scalar_select %p378, %s23, 1
      %s380 = smul.addr %s379, 4
      %s381 = smul.addr %s380, 8
      %s382 = scalar_lea.vmem %s3, %s381
      %p383 = scmp.lt.s32.totalorder %s23, 1
      %s384 = scalar_select %p383, %s23, 1
      %s385 = smul.addr %s384, 4
      %s386 = smul.addr %s385, 8
      %s387 = scalar_lea.vmem %s4, %s386
      %p388 = scmp.lt.s32.totalorder %s23, 1
      %s389 = scalar_select %p388, %s23, 1
      %s390 = smul.addr %s389, 8
      %s391 = smul.addr %s390, 8
      %s392 = scalar_lea.vmem %s5, %s391
      %p393 = scmp.lt.s32.totalorder %s23, 1
      %s394 = scalar_select %p393, %s23, 1
      %s395 = smul.addr %s394, 8
      %s396 = scalar_lea.vmem %s6, %s395
      %p397 = scmp.lt.s32.totalorder %s22, 1
      %s398 = scalar_select %p397, %s22, 1
      %s399 = smul.addr %s398, 2
      %s400 = smul.addr %s399, 8
      %s401 = scalar_lea.vmem %s7, %s400
      %p402 = scmp.eq.s32.totalorder %s23, 0
      // Predicated region
      $region49: #{_lambda_.4} parent=47 // pred_check
        %p403 = pneg %p402
      $region50: #{_lambda_.4} parent=47 // pred_check_branch
        %405 = sbr.rel (%p403) target = $region52
      $region51: #{_lambda_.4} parent=47 // pred_region
        %v406 = vld [vmem:[%s369] sm:$0xff]
        %v407 = vld [vmem:[%s369 + $0x8] sm:$0xf]
        %vm408 = vcmask 261120
        %409 = vst.msk [vmem:[%s401] sm:$0xff] %vm408, %v406
        %vm410 = vcmask 257024
        %411 = vst.msk [vmem:[%s401 + $0x8] sm:$0xf] %vm410, %v407
      $region52: #{_lambda_.4} parent=47 // pred_fallthru
        _
      %v412 = vld [vmem:[%s401] sm:$0xff]
      %v413 = vld [vmem:[%s401 + $0x8] sm:$0xf]
      %v414 = vld [vmem:[%s372] sm:$0x1]
      %v415 = vld [vmem:[%s396] sm:$0xff]
      %v416 = vld [vmem:[%s377] sm:$0xff]
      %v417 = vld [vmem:[%s377 + $0x8] sm:$0xff]
      %v418 = vld [vmem:[%s377 + $0x10] sm:$0xff]
      %v419 = vld [vmem:[%s377 + $0x18] sm:$0xff]
      %v420 = vlaneseq
      %v421 = vshrl.u32 %v420, 7
      %v422 = vsub.s32 0, %v421
      %v423 = vrot.slane %v415, %v422
      %vm424 = vcmask 261120
      %v426 = vsel %vm424, %v412, 0
      %v429 = vsel %vm424, %v413, 0
      %431 = vmatprep.subr.mxu0 0.0
      %432 = vmatpush1.msra.mxu0 0.0
      %433 = vmatprep.subr.mxu0 0.0
      %434 = vmatpush1.msra.mxu0 0.0
      %435 = vmatprep.subr.mxu0 0.0
      %436 = vmatpush1.msra.mxu0 0.0
      %437 = vmatprep.subr.mxu0 0.0
      %438 = vmatpush1.msra.mxu0 0.0
      %439 = vmatprep.subr.mxu0 0.0
      %440 = vmatpush1.msra.mxu0 0.0
      %441 = vmatprep.subr.mxu0 0.0
      %442 = vmatpush1.msra.mxu0 0.0
      %443 = vmatprep.subr.mxu0 0.0
      %444 = vmatpush1.msra.mxu0 0.0
      %445 = vmatprep.subr.mxu0 0.0
      %446 = vmatpush1.msra.mxu0 0.0
      %447 = vmatprep.subr.mxu0 0.0
      %448 = vmatpush1.msra.mxu0 0.0
      %449 = vmatprep.subr.mxu0 0.0
      %450 = vmatpush1.msra.mxu0 0.0
      %451 = vmatprep.subr.mxu0 0.0
      %452 = vmatpush1.msra.mxu0 0.0
      %453 = vmatprep.subr.mxu0 0.0
      %454 = vmatpush1.msra.mxu0 0.0
      %455 = vmatprep.subr.mxu0 0.0
      %456 = vmatpush1.msra.mxu0 %v419
      %457 = vmatprep.subr.mxu0 0.0
      %458 = vmatpush1.msra.mxu0 %v418
      %459 = vmatprep.subr.mxu0 0.0
      %460 = vmatpush1.msra.mxu0 %v417
      %461 = vmatprep.subr.mxu0 0.0
      %462 = vmatpush1.msra.mxu0 %v416
      %463 = vmatprep.subr.mxu0 0.0
      %464 = vmatpush2.msra.mxu0 0.0
      %465 = vmatprep.subr.mxu0 0.0
      %466 = vmatpush2.msra.mxu0 0.0
      %467 = vmatprep.subr.mxu0 0.0
      %468 = vmatpush2.msra.mxu0 0.0
      %469 = vmatprep.subr.mxu0 0.0
      %470 = vmatpush2.msra.mxu0 0.0
      %471 = vmatprep.subr.mxu0 0.0
      %472 = vmatpush2.msra.mxu0 0.0
      %473 = vmatprep.subr.mxu0 0.0
      %474 = vmatpush2.msra.mxu0 0.0
      %475 = vmatprep.subr.mxu0 0.0
      %476 = vmatpush2.msra.mxu0 0.0
      %477 = vmatprep.subr.mxu0 0.0
      %478 = vmatpush2.msra.mxu0 0.0
      %479 = vmatprep.subr.mxu0 0.0
      %480 = vmatpush2.msra.mxu0 0.0
      %481 = vmatprep.subr.mxu0 0.0
      %482 = vmatpush2.msra.mxu0 0.0
      %483 = vmatprep.subr.mxu0 0.0
      %484 = vmatpush2.msra.mxu0 0.0
      %485 = vmatprep.subr.mxu0 0.0
      %486 = vmatpush2.msra.mxu0 0.0
      %487 = vmatprep.subr.mxu0 0.0
      %488 = vmatpush2.msra.mxu0 0.0
      %489 = vmatprep.subr.mxu0 0.0
      %490 = vmatpush2.msra.mxu0 0.0
      %491 = vmatprep.subr.mxu0 0.0
      %492 = vmatpush2.msra.mxu0 0.0
      %493 = vmatprep.subr.mxu0 0.0
      %494 = vmatpush2.msra.mxu0 0.0
      %495 = vmatprep.mubr.f32.mxu0 0.0
      %496 = vmatmul.mubr.f32.gmra.mxu0 %v426
      %v497 = vpop.f32.mrf.mxu0
      %v498 = vadd.f32 %v423, %v497
      %v499 = vpop.f32.mrf.mxu0
      %500 = vmatprep.mubr.f32.mxu0 0.0
      %501 = vmatmul.mubr.f32.gmra.mxu0 %v429
      %v502 = vpop.f32.mrf.mxu0
      %v503 = vadd.f32 %v423, %v502
      %v504 = vpop.f32.mrf.mxu0
      %505 = vdwg.mxu0
      %v506 = vld [vmem:[%s382] sm:$0xff]
      %v507 = vld [vmem:[%s382 + $0x8] sm:$0xff]
      %v508 = vld [vmem:[%s382 + $0x10] sm:$0xff]
      %v509 = vld [vmem:[%s382 + $0x18] sm:$0xff]
      %512 = vrot.lane.b32.xlu0 %v498, 96
      %v513 = vpop.permute.xlu0 %512
      %514 = vrot.lane.b32.xlu0 %v503, 96
      %v515 = vpop.permute.xlu0 %514
      %vm516 = vcmask 64512
      %v517 = vsel %vm516, %v498, 0
      %v519 = vsel %vm516, %v503, 0
      %v521 = vsel %vm516, %v513, 0
      %v523 = vsel %vm516, %v515, 0
      %525 = vmatprep.subr.mxu0 0.0
      %526 = vmatpush1.xpose.msra.mxu0 0.0
      %527 = vmatprep.subr.mxu0 0.0
      %528 = vmatpush1.xpose.msra.mxu0 0.0
      %529 = vmatprep.subr.mxu0 0.0
      %530 = vmatpush1.xpose.msra.mxu0 0.0
      %531 = vmatprep.subr.mxu0 0.0
      %532 = vmatpush1.xpose.msra.mxu0 0.0
      %533 = vmatprep.subr.mxu0 0.0
      %534 = vmatpush1.xpose.msra.mxu0 0.0
      %535 = vmatprep.subr.mxu0 0.0
      %536 = vmatpush1.xpose.msra.mxu0 0.0
      %537 = vmatprep.subr.mxu0 0.0
      %538 = vmatpush1.xpose.msra.mxu0 0.0
      %539 = vmatprep.subr.mxu0 0.0
      %540 = vmatpush1.xpose.msra.mxu0 0.0
      %541 = vmatprep.subr.mxu0 0.0
      %542 = vmatpush1.xpose.msra.mxu0 0.0
      %543 = vmatprep.subr.mxu0 0.0
      %544 = vmatpush1.xpose.msra.mxu0 0.0
      %545 = vmatprep.subr.mxu0 0.0
      %546 = vmatpush1.xpose.msra.mxu0 0.0
      %547 = vmatprep.subr.mxu0 0.0
      %548 = vmatpush1.xpose.msra.mxu0 0.0
      %549 = vmatprep.subr.mxu0 0.0
      %550 = vmatpush1.xpose.msra.mxu0 0.0
      %551 = vmatprep.subr.mxu0 0.0
      %552 = vmatpush1.xpose.msra.mxu0 0.0
      %553 = vmatprep.subr.mxu0 0.0
      %554 = vmatpush1.xpose.msra.mxu0 %v523
      %555 = vmatprep.subr.mxu0 0.0
      %556 = vmatpush1.xpose.msra.mxu0 %v521
      %557 = vmatprep.subr.mxu0 0.0
      %558 = vmatpush2.xpose.msra.mxu0 0.0
      %559 = vmatprep.subr.mxu0 0.0
      %560 = vmatpush2.xpose.msra.mxu0 0.0
      %561 = vmatprep.subr.mxu0 0.0
      %562 = vmatpush2.xpose.msra.mxu0 0.0
      %563 = vmatprep.subr.mxu0 0.0
      %564 = vmatpush2.xpose.msra.mxu0 0.0
      %565 = vmatprep.subr.mxu0 0.0
      %566 = vmatpush2.xpose.msra.mxu0 0.0
      %567 = vmatprep.subr.mxu0 0.0
      %568 = vmatpush2.xpose.msra.mxu0 0.0
      %569 = vmatprep.subr.mxu0 0.0
      %570 = vmatpush2.xpose.msra.mxu0 0.0
      %571 = vmatprep.subr.mxu0 0.0
      %572 = vmatpush2.xpose.msra.mxu0 0.0
      %573 = vmatprep.subr.mxu0 0.0
      %574 = vmatpush2.xpose.msra.mxu0 0.0
      %575 = vmatprep.subr.mxu0 0.0
      %576 = vmatpush2.xpose.msra.mxu0 0.0
      %577 = vmatprep.subr.mxu0 0.0
      %578 = vmatpush2.xpose.msra.mxu0 0.0
      %579 = vmatprep.subr.mxu0 0.0
      %580 = vmatpush2.xpose.msra.mxu0 0.0
      %581 = vmatprep.subr.mxu0 0.0
      %582 = vmatpush2.xpose.msra.mxu0 0.0
      %583 = vmatprep.subr.mxu0 0.0
      %584 = vmatpush2.xpose.msra.mxu0 0.0
      %585 = vmatprep.subr.mxu0 0.0
      %586 = vmatpush2.xpose.msra.mxu0 0.0
      %587 = vmatprep.subr.mxu0 0.0
      %588 = vmatpush2.xpose.msra.mxu0 0.0
      %589 = vmatprep.mubr.f32.mxu0 0.0
      %590 = vmatmul.mubr.f32.gmra.mxu0 %v517
      %v591 = vpop.f32.mrf.mxu0
      %v592 = vadd.f32 0.0, %v591
      %v593 = vpop.f32.mrf.mxu0
      %594 = vmatprep.mubr.f32.mxu0 0.0
      %595 = vmatmul.mubr.f32.gmra.mxu0 %v519
      %v596 = vpop.f32.mrf.mxu0
      %v597 = vadd.f32 0.0, %v596
      %v598 = vpop.f32.mrf.mxu0
      %599 = vdwg.mxu0
      %v600 = vmul.f32 %v592, 0.35355338
      %v601 = vmul.f32 %v597, 0.35355338
      %v603 = vlaneseq
      %v604 = vshrl.u32 %v603, 7
      %v605 = vsub.s32 0, %v604
      %v606 = vrot.slane %v414, %v605
      %v608 = vadd.f32 %v600, %v606
      %v609 = vadd.f32 %v601, %v606
      %vm610 = vcmask 97280
      %v611 = vsel %vm610, %v608, -inf
      %612 = vmax.xlane.f32.xlu0 %v611
      %v613 = vpop.xlane.xlu0 %612
      %vm614 = vcmask 93184
      %v615 = vsel %vm614, %v609, -inf
      %616 = vmax.xlane.f32.xlu0 %v615
      %v617 = vpop.xlane.xlu0 %616
      %v618 = vsub.f32 %v608, %v613
      %v619 = vsub.f32 %v609, %v617
      %v620 = vmul.f32 %v618, 1.442695
      %v621 = vpow.pop %v620
      %v622 = vmul.f32 %v619, 1.442695
      %v623 = vpow.pop %v622
      %v624 = vsel %vm610, %v621, 0.0
      %625 = vadd.xlane.f32.xlu0 %v624
      %v626 = vpop.xlane.xlu0 %625
      %v627 = vsel %vm614, %v623, 0.0
      %628 = vadd.xlane.f32.xlu0 %v627
      %v629 = vpop.xlane.xlu0 %628
      %v630 = vrcp.pop %v626
      %v631 = vrcp.pop %v629
      %v632 = vmul.f32 %v621, %v630
      %v633 = vmul.f32 %v623, %v631
      %634 = vrot.lane.b32.xlu0 %v498, 64
      %v635 = vpop.permute.xlu0 %634
      %636 = vrot.lane.b32.xlu0 %v503, 64
      %v637 = vpop.permute.xlu0 %636
      %v640 = vsel %vm610, %v632, 0
      %v643 = vsel %vm610, %v633, 0
      %vm645 = vcmask 1043456
      %v646 = vsel %vm645, %v637, 0
      %648 = vmatprep.subr.mxu0 0.0
      %649 = vmatpush1.msra.mxu0 0.0
      %650 = vmatprep.subr.mxu0 0.0
      %651 = vmatpush1.msra.mxu0 0.0
      %652 = vmatprep.subr.mxu0 0.0
      %653 = vmatpush1.msra.mxu0 0.0
      %654 = vmatprep.subr.mxu0 0.0
      %655 = vmatpush1.msra.mxu0 0.0
      %656 = vmatprep.subr.mxu0 0.0
      %657 = vmatpush1.msra.mxu0 0.0
      %658 = vmatprep.subr.mxu0 0.0
      %659 = vmatpush1.msra.mxu0 0.0
      %660 = vmatprep.subr.mxu0 0.0
      %661 = vmatpush1.msra.mxu0 0.0
      %662 = vmatprep.subr.mxu0 0.0
      %663 = vmatpush1.msra.mxu0 0.0
      %664 = vmatprep.subr.mxu0 0.0
      %665 = vmatpush1.msra.mxu0 0.0
      %666 = vmatprep.subr.mxu0 0.0
      %667 = vmatpush1.msra.mxu0 0.0
      %668 = vmatprep.subr.mxu0 0.0
      %669 = vmatpush1.msra.mxu0 0.0
      %670 = vmatprep.subr.mxu0 0.0
      %671 = vmatpush1.msra.mxu0 0.0
      %672 = vmatprep.subr.mxu0 0.0
      %673 = vmatpush1.msra.mxu0 0.0
      %674 = vmatprep.subr.mxu0 0.0
      %675 = vmatpush1.msra.mxu0 0.0
      %676 = vmatprep.subr.mxu0 0.0
      %677 = vmatpush1.msra.mxu0 %v646
      %678 = vmatprep.subr.mxu0 0.0
      %679 = vmatpush1.msra.mxu0 %v635
      %680 = vmatprep.subr.mxu0 0.0
      %681 = vmatpush2.msra.mxu0 0.0
      %682 = vmatprep.subr.mxu0 0.0
      %683 = vmatpush2.msra.mxu0 0.0
      %684 = vmatprep.subr.mxu0 0.0
      %685 = vmatpush2.msra.mxu0 0.0
      %686 = vmatprep.subr.mxu0 0.0
      %687 = vmatpush2.msra.mxu0 0.0
      %688 = vmatprep.subr.mxu0 0.0
      %689 = vmatpush2.msra.mxu0 0.0
      %690 = vmatprep.subr.mxu0 0.0
      %691 = vmatpush2.msra.mxu0 0.0
      %692 = vmatprep.subr.mxu0 0.0
      %693 = vmatpush2.msra.mxu0 0.0
      %694 = vmatprep.subr.mxu0 0.0
      %695 = vmatpush2.msra.mxu0 0.0
      %696 = vmatprep.subr.mxu0 0.0
      %697 = vmatpush2.msra.mxu0 0.0
      %698 = vmatprep.subr.mxu0 0.0
      %699 = vmatpush2.msra.mxu0 0.0
      %700 = vmatprep.subr.mxu0 0.0
      %701 = vmatpush2.msra.mxu0 0.0
      %702 = vmatprep.subr.mxu0 0.0
      %703 = vmatpush2.msra.mxu0 0.0
      %704 = vmatprep.subr.mxu0 0.0
      %705 = vmatpush2.msra.mxu0 0.0
      %706 = vmatprep.subr.mxu0 0.0
      %707 = vmatpush2.msra.mxu0 0.0
      %708 = vmatprep.subr.mxu0 0.0
      %709 = vmatpush2.msra.mxu0 0.0
      %710 = vmatprep.subr.mxu0 0.0
      %711 = vmatpush2.msra.mxu0 0.0
      %712 = vmatprep.mubr.f32.mxu0 0.0
      %713 = vmatmul.mubr.f32.gmra.mxu0 %v640
      %v714 = vpop.f32.mrf.mxu0
      %v715 = vadd.f32 0.0, %v714
      %v716 = vpop.f32.mrf.mxu0
      %717 = vmatprep.mubr.f32.mxu0 0.0
      %718 = vmatmul.mubr.f32.gmra.mxu0 %v643
      %v719 = vpop.f32.mrf.mxu0
      %v720 = vadd.f32 0.0, %v719
      %v721 = vpop.f32.mrf.mxu0
      %722 = vdwg.mxu0
      %723 = vrot.lane.b32.xlu0 %v498, 120
      %v724 = vpop.permute.xlu0 %723
      %725 = vrot.lane.b32.xlu0 %v503, 120
      %v726 = vpop.permute.xlu0 %725
      %727 = vrot.lane.b32.xlu0 %v498, 88
      %v728 = vpop.permute.xlu0 %727
      %729 = vrot.lane.b32.xlu0 %v503, 88
      %v730 = vpop.permute.xlu0 %729
      %v731 = vsel %vm516, %v724, 0
      %v733 = vsel %vm516, %v726, 0
      %v735 = vsel %vm516, %v728, 0
      %v737 = vsel %vm516, %v730, 0
      %739 = vmatprep.subr.mxu0 0.0
      %740 = vmatpush1.xpose.msra.mxu0 0.0
      %741 = vmatprep.subr.mxu0 0.0
      %742 = vmatpush1.xpose.msra.mxu0 0.0
      %743 = vmatprep.subr.mxu0 0.0
      %744 = vmatpush1.xpose.msra.mxu0 0.0
      %745 = vmatprep.subr.mxu0 0.0
      %746 = vmatpush1.xpose.msra.mxu0 0.0
      %747 = vmatprep.subr.mxu0 0.0
      %748 = vmatpush1.xpose.msra.mxu0 0.0
      %749 = vmatprep.subr.mxu0 0.0
      %750 = vmatpush1.xpose.msra.mxu0 0.0
      %751 = vmatprep.subr.mxu0 0.0
      %752 = vmatpush1.xpose.msra.mxu0 0.0
      %753 = vmatprep.subr.mxu0 0.0
      %754 = vmatpush1.xpose.msra.mxu0 0.0
      %755 = vmatprep.subr.mxu0 0.0
      %756 = vmatpush1.xpose.msra.mxu0 0.0
      %757 = vmatprep.subr.mxu0 0.0
      %758 = vmatpush1.xpose.msra.mxu0 0.0
      %759 = vmatprep.subr.mxu0 0.0
      %760 = vmatpush1.xpose.msra.mxu0 0.0
      %761 = vmatprep.subr.mxu0 0.0
      %762 = vmatpush1.xpose.msra.mxu0 0.0
      %763 = vmatprep.subr.mxu0 0.0
      %764 = vmatpush1.xpose.msra.mxu0 0.0
      %765 = vmatprep.subr.mxu0 0.0
      %766 = vmatpush1.xpose.msra.mxu0 0.0
      %767 = vmatprep.subr.mxu0 0.0
      %768 = vmatpush1.xpose.msra.mxu0 %v737
      %769 = vmatprep.subr.mxu0 0.0
      %770 = vmatpush1.xpose.msra.mxu0 %v735
      %771 = vmatprep.subr.mxu0 0.0
      %772 = vmatpush2.xpose.msra.mxu0 0.0
      %773 = vmatprep.subr.mxu0 0.0
      %774 = vmatpush2.xpose.msra.mxu0 0.0
      %775 = vmatprep.subr.mxu0 0.0
      %776 = vmatpush2.xpose.msra.mxu0 0.0
      %777 = vmatprep.subr.mxu0 0.0
      %778 = vmatpush2.xpose.msra.mxu0 0.0
      %779 = vmatprep.subr.mxu0 0.0
      %780 = vmatpush2.xpose.msra.mxu0 0.0
      %781 = vmatprep.subr.mxu0 0.0
      %782 = vmatpush2.xpose.msra.mxu0 0.0
      %783 = vmatprep.subr.mxu0 0.0
      %784 = vmatpush2.xpose.msra.mxu0 0.0
      %785 = vmatprep.subr.mxu0 0.0
      %786 = vmatpush2.xpose.msra.mxu0 0.0
      %787 = vmatprep.subr.mxu0 0.0
      %788 = vmatpush2.xpose.msra.mxu0 0.0
      %789 = vmatprep.subr.mxu0 0.0
      %790 = vmatpush2.xpose.msra.mxu0 0.0
      %791 = vmatprep.subr.mxu0 0.0
      %792 = vmatpush2.xpose.msra.mxu0 0.0
      %793 = vmatprep.subr.mxu0 0.0
      %794 = vmatpush2.xpose.msra.mxu0 0.0
      %795 = vmatprep.subr.mxu0 0.0
      %796 = vmatpush2.xpose.msra.mxu0 0.0
      %797 = vmatprep.subr.mxu0 0.0
      %798 = vmatpush2.xpose.msra.mxu0 0.0
      %799 = vmatprep.subr.mxu0 0.0
      %800 = vmatpush2.xpose.msra.mxu0 0.0
      %801 = vmatprep.subr.mxu0 0.0
      %802 = vmatpush2.xpose.msra.mxu0 0.0
      %803 = vmatprep.mubr.f32.mxu0 0.0
      %804 = vmatmul.mubr.f32.gmra.mxu0 %v731
      %v805 = vpop.f32.mrf.mxu0
      %v806 = vadd.f32 0.0, %v805
      %v807 = vpop.f32.mrf.mxu0
      %808 = vmatprep.mubr.f32.mxu0 0.0
      %809 = vmatmul.mubr.f32.gmra.mxu0 %v733
      %v810 = vpop.f32.mrf.mxu0
      %v811 = vadd.f32 0.0, %v810
      %v812 = vpop.f32.mrf.mxu0
      %813 = vdwg.mxu0
      %v814 = vmul.f32 %v806, 0.35355338
      %v815 = vmul.f32 %v811, 0.35355338
      %v816 = vadd.f32 %v814, %v606
      %v817 = vadd.f32 %v815, %v606
      %v818 = vsel %vm610, %v816, -inf
      %819 = vmax.xlane.f32.xlu0 %v818
      %v820 = vpop.xlane.xlu0 %819
      %v821 = vsel %vm614, %v817, -inf
      %822 = vmax.xlane.f32.xlu0 %v821
      %v823 = vpop.xlane.xlu0 %822
      %v824 = vsub.f32 %v816, %v820
      %v825 = vsub.f32 %v817, %v823
      %v826 = vmul.f32 %v824, 1.442695
      %v827 = vpow.pop %v826
      %v828 = vmul.f32 %v825, 1.442695
      %v829 = vpow.pop %v828
      %v830 = vsel %vm610, %v827, 0.0
      %831 = vadd.xlane.f32.xlu0 %v830
      %v832 = vpop.xlane.xlu0 %831
      %v833 = vsel %vm614, %v829, 0.0
      %834 = vadd.xlane.f32.xlu0 %v833
      %v835 = vpop.xlane.xlu0 %834
      %v836 = vrcp.pop %v832
      %v837 = vrcp.pop %v835
      %v838 = vmul.f32 %v827, %v836
      %v839 = vmul.f32 %v829, %v837
      %840 = vrot.lane.b32.xlu0 %v498, 56
      %v841 = vpop.permute.xlu0 %840
      %842 = vrot.lane.b32.xlu0 %v503, 56
      %v843 = vpop.permute.xlu0 %842
      %v846 = vsel %vm610, %v838, 0
      %v849 = vsel %vm610, %v839, 0
      %v851 = vsel %vm645, %v843, 0
      %853 = vmatprep.subr.mxu0 0.0
      %854 = vmatpush1.msra.mxu0 0.0
      %855 = vmatprep.subr.mxu0 0.0
      %856 = vmatpush1.msra.mxu0 0.0
      %857 = vmatprep.subr.mxu0 0.0
      %858 = vmatpush1.msra.mxu0 0.0
      %859 = vmatprep.subr.mxu0 0.0
      %860 = vmatpush1.msra.mxu0 0.0
      %861 = vmatprep.subr.mxu0 0.0
      %862 = vmatpush1.msra.mxu0 0.0
      %863 = vmatprep.subr.mxu0 0.0
      %864 = vmatpush1.msra.mxu0 0.0
      %865 = vmatprep.subr.mxu0 0.0
      %866 = vmatpush1.msra.mxu0 0.0
      %867 = vmatprep.subr.mxu0 0.0
      %868 = vmatpush1.msra.mxu0 0.0
      %869 = vmatprep.subr.mxu0 0.0
      %870 = vmatpush1.msra.mxu0 0.0
      %871 = vmatprep.subr.mxu0 0.0
      %872 = vmatpush1.msra.mxu0 0.0
      %873 = vmatprep.subr.mxu0 0.0
      %874 = vmatpush1.msra.mxu0 0.0
      %875 = vmatprep.subr.mxu0 0.0
      %876 = vmatpush1.msra.mxu0 0.0
      %877 = vmatprep.subr.mxu0 0.0
      %878 = vmatpush1.msra.mxu0 0.0
      %879 = vmatprep.subr.mxu0 0.0
      %880 = vmatpush1.msra.mxu0 0.0
      %881 = vmatprep.subr.mxu0 0.0
      %882 = vmatpush1.msra.mxu0 %v851
      %883 = vmatprep.subr.mxu0 0.0
      %884 = vmatpush1.msra.mxu0 %v841
      %885 = vmatprep.subr.mxu0 0.0
      %886 = vmatpush2.msra.mxu0 0.0
      %887 = vmatprep.subr.mxu0 0.0
      %888 = vmatpush2.msra.mxu0 0.0
      %889 = vmatprep.subr.mxu0 0.0
      %890 = vmatpush2.msra.mxu0 0.0
      %891 = vmatprep.subr.mxu0 0.0
      %892 = vmatpush2.msra.mxu0 0.0
      %893 = vmatprep.subr.mxu0 0.0
      %894 = vmatpush2.msra.mxu0 0.0
      %895 = vmatprep.subr.mxu0 0.0
      %896 = vmatpush2.msra.mxu0 0.0
      %897 = vmatprep.subr.mxu0 0.0
      %898 = vmatpush2.msra.mxu0 0.0
      %899 = vmatprep.subr.mxu0 0.0
      %900 = vmatpush2.msra.mxu0 0.0
      %901 = vmatprep.subr.mxu0 0.0
      %902 = vmatpush2.msra.mxu0 0.0
      %903 = vmatprep.subr.mxu0 0.0
      %904 = vmatpush2.msra.mxu0 0.0
      %905 = vmatprep.subr.mxu0 0.0
      %906 = vmatpush2.msra.mxu0 0.0
      %907 = vmatprep.subr.mxu0 0.0
      %908 = vmatpush2.msra.mxu0 0.0
      %909 = vmatprep.subr.mxu0 0.0
      %910 = vmatpush2.msra.mxu0 0.0
      %911 = vmatprep.subr.mxu0 0.0
      %912 = vmatpush2.msra.mxu0 0.0
      %913 = vmatprep.subr.mxu0 0.0
      %914 = vmatpush2.msra.mxu0 0.0
      %915 = vmatprep.subr.mxu0 0.0
      %916 = vmatpush2.msra.mxu0 0.0
      %917 = vmatprep.mubr.f32.mxu0 0.0
      %918 = vmatmul.mubr.f32.gmra.mxu0 %v846
      %v919 = vpop.f32.mrf.mxu0
      %v920 = vadd.f32 0.0, %v919
      %v921 = vpop.f32.mrf.mxu0
      %922 = vmatprep.mubr.f32.mxu0 0.0
      %923 = vmatmul.mubr.f32.gmra.mxu0 %v849
      %v924 = vpop.f32.mrf.mxu0
      %v925 = vadd.f32 0.0, %v924
      %v926 = vpop.f32.mrf.mxu0
      %927 = vdwg.mxu0
      %v929 = vsel %vm516, %v920, 0
      %v932 = vsel %vm516, %v925, 0
      %934 = vmatprep.subr.mxu0 0.0
      %935 = vmatpush1.msra.mxu0 0.0
      %936 = vmatprep.subr.mxu0 0.0
      %937 = vmatpush1.msra.mxu0 0.0
      %938 = vmatprep.subr.mxu0 0.0
      %939 = vmatpush1.msra.mxu0 0.0
      %940 = vmatprep.subr.mxu0 0.0
      %941 = vmatpush1.msra.mxu0 0.0
      %942 = vmatprep.subr.mxu0 0.0
      %943 = vmatpush1.msra.mxu0 0.0
      %944 = vmatprep.subr.mxu0 0.0
      %945 = vmatpush1.msra.mxu0 0.0
      %946 = vmatprep.subr.mxu0 0.0
      %947 = vmatpush1.msra.mxu0 0.0
      %948 = vmatprep.subr.mxu0 0.0
      %949 = vmatpush1.msra.mxu0 0.0
      %950 = vmatprep.subr.mxu0 0.0
      %951 = vmatpush1.msra.mxu0 0.0
      %952 = vmatprep.subr.mxu0 0.0
      %953 = vmatpush1.msra.mxu0 0.0
      %954 = vmatprep.subr.mxu0 0.0
      %955 = vmatpush1.msra.mxu0 0.0
      %956 = vmatprep.subr.mxu0 0.0
      %957 = vmatpush1.msra.mxu0 0.0
      %958 = vmatprep.subr.mxu0 0.0
      %959 = vmatpush1.msra.mxu0 0.0
      %960 = vmatprep.subr.mxu0 0.0
      %961 = vmatpush1.msra.mxu0 0.0
      %962 = vmatprep.subr.mxu0 0.0
      %963 = vmatpush1.msra.mxu0 0.0
      %964 = vmatprep.subr.mxu0 0.0
      %965 = vmatpush1.msra.mxu0 %v507
      %966 = vmatprep.subr.mxu0 0.0
      %967 = vmatpush2.msra.mxu0 0.0
      %968 = vmatprep.subr.mxu0 0.0
      %969 = vmatpush2.msra.mxu0 0.0
      %970 = vmatprep.subr.mxu0 0.0
      %971 = vmatpush2.msra.mxu0 0.0
      %972 = vmatprep.subr.mxu0 0.0
      %973 = vmatpush2.msra.mxu0 0.0
      %974 = vmatprep.subr.mxu0 0.0
      %975 = vmatpush2.msra.mxu0 0.0
      %976 = vmatprep.subr.mxu0 0.0
      %977 = vmatpush2.msra.mxu0 0.0
      %978 = vmatprep.subr.mxu0 0.0
      %979 = vmatpush2.msra.mxu0 0.0
      %980 = vmatprep.subr.mxu0 0.0
      %981 = vmatpush2.msra.mxu0 0.0
      %982 = vmatprep.subr.mxu0 0.0
      %983 = vmatpush2.msra.mxu0 0.0
      %984 = vmatprep.subr.mxu0 0.0
      %985 = vmatpush2.msra.mxu0 0.0
      %986 = vmatprep.subr.mxu0 0.0
      %987 = vmatpush2.msra.mxu0 0.0
      %988 = vmatprep.subr.mxu0 0.0
      %989 = vmatpush2.msra.mxu0 0.0
      %990 = vmatprep.subr.mxu0 0.0
      %991 = vmatpush2.msra.mxu0 0.0
      %992 = vmatprep.subr.mxu0 0.0
      %993 = vmatpush2.msra.mxu0 0.0
      %994 = vmatprep.subr.mxu0 0.0
      %995 = vmatpush2.msra.mxu0 0.0
      %996 = vmatprep.subr.mxu0 0.0
      %997 = vmatpush2.msra.mxu0 0.0
      %998 = vmatprep.mubr.f32.mxu0 0.0
      %999 = vmatmul.mubr.f32.gmra.mxu0 %v929
      %v1000 = vpop.f32.mrf.mxu0
      %v1001 = vadd.f32 0.0, %v1000
      %v1002 = vpop.f32.mrf.mxu0
      %1003 = vmatprep.mubr.f32.mxu0 0.0
      %1004 = vmatmul.mubr.f32.gmra.mxu0 %v932
      %v1005 = vpop.f32.mrf.mxu0
      %v1006 = vadd.f32 0.0, %v1005
      %v1007 = vpop.f32.mrf.mxu0
      %1008 = vdwg.mxu0
      %v1010 = vsel %vm516, %v715, 0
      %v1013 = vsel %vm516, %v720, 0
      %1015 = vmatprep.subr.mxu0 0.0
      %1016 = vmatpush1.msra.mxu0 0.0
      %1017 = vmatprep.subr.mxu0 0.0
      %1018 = vmatpush1.msra.mxu0 0.0
      %1019 = vmatprep.subr.mxu0 0.0
      %1020 = vmatpush1.msra.mxu0 0.0
      %1021 = vmatprep.subr.mxu0 0.0
      %1022 = vmatpush1.msra.mxu0 0.0
      %1023 = vmatprep.subr.mxu0 0.0
      %1024 = vmatpush1.msra.mxu0 0.0
      %1025 = vmatprep.subr.mxu0 0.0
      %1026 = vmatpush1.msra.mxu0 0.0
      %1027 = vmatprep.subr.mxu0 0.0
      %1028 = vmatpush1.msra.mxu0 0.0
      %1029 = vmatprep.subr.mxu0 0.0
      %1030 = vmatpush1.msra.mxu0 0.0
      %1031 = vmatprep.subr.mxu0 0.0
      %1032 = vmatpush1.msra.mxu0 0.0
      %1033 = vmatprep.subr.mxu0 0.0
      %1034 = vmatpush1.msra.mxu0 0.0
      %1035 = vmatprep.subr.mxu0 0.0
      %1036 = vmatpush1.msra.mxu0 0.0
      %1037 = vmatprep.subr.mxu0 0.0
      %1038 = vmatpush1.msra.mxu0 0.0
      %1039 = vmatprep.subr.mxu0 0.0
      %1040 = vmatpush1.msra.mxu0 0.0
      %1041 = vmatprep.subr.mxu0 0.0
      %1042 = vmatpush1.msra.mxu0 0.0
      %1043 = vmatprep.subr.mxu0 0.0
      %1044 = vmatpush1.msra.mxu0 0.0
      %1045 = vmatprep.subr.mxu0 0.0
      %1046 = vmatpush1.msra.mxu0 %v506
      %1047 = vmatprep.subr.mxu0 0.0
      %1048 = vmatpush2.msra.mxu0 0.0
      %1049 = vmatprep.subr.mxu0 0.0
      %1050 = vmatpush2.msra.mxu0 0.0
      %1051 = vmatprep.subr.mxu0 0.0
      %1052 = vmatpush2.msra.mxu0 0.0
      %1053 = vmatprep.subr.mxu0 0.0
      %1054 = vmatpush2.msra.mxu0 0.0
      %1055 = vmatprep.subr.mxu0 0.0
      %1056 = vmatpush2.msra.mxu0 0.0
      %1057 = vmatprep.subr.mxu0 0.0
      %1058 = vmatpush2.msra.mxu0 0.0
      %1059 = vmatprep.subr.mxu0 0.0
      %1060 = vmatpush2.msra.mxu0 0.0
      %1061 = vmatprep.subr.mxu0 0.0
      %1062 = vmatpush2.msra.mxu0 0.0
      %1063 = vmatprep.subr.mxu0 0.0
      %1064 = vmatpush2.msra.mxu0 0.0
      %1065 = vmatprep.subr.mxu0 0.0
      %1066 = vmatpush2.msra.mxu0 0.0
      %1067 = vmatprep.subr.mxu0 0.0
      %1068 = vmatpush2.msra.mxu0 0.0
      %1069 = vmatprep.subr.mxu0 0.0
      %1070 = vmatpush2.msra.mxu0 0.0
      %1071 = vmatprep.subr.mxu0 0.0
      %1072 = vmatpush2.msra.mxu0 0.0
      %1073 = vmatprep.subr.mxu0 0.0
      %1074 = vmatpush2.msra.mxu0 0.0
      %1075 = vmatprep.subr.mxu0 0.0
      %1076 = vmatpush2.msra.mxu0 0.0
      %1077 = vmatprep.subr.mxu0 0.0
      %1078 = vmatpush2.msra.mxu0 0.0
      %1079 = vmatprep.mubr.f32.mxu0 0.0
      %1080 = vmatmul.mubr.f32.gmra.mxu0 %v1010
      %v1081 = vpop.f32.mrf.mxu0
      %v1082 = vadd.f32 %v1001, %v1081
      %v1083 = vpop.f32.mrf.mxu0
      %1084 = vmatprep.mubr.f32.mxu0 0.0
      %1085 = vmatmul.mubr.f32.gmra.mxu0 %v1013
      %v1086 = vpop.f32.mrf.mxu0
      %v1087 = vadd.f32 %v1006, %v1086
      %v1088 = vpop.f32.mrf.mxu0
      %1089 = vdwg.mxu0
      %1090 = vrot.lane.b32.xlu0 %v498, 112
      %v1091 = vpop.permute.xlu0 %1090
      %1092 = vrot.lane.b32.xlu0 %v503, 112
      %v1093 = vpop.permute.xlu0 %1092
      %1094 = vrot.lane.b32.xlu0 %v498, 80
      %v1095 = vpop.permute.xlu0 %1094
      %1096 = vrot.lane.b32.xlu0 %v503, 80
      %v1097 = vpop.permute.xlu0 %1096
      %v1098 = vsel %vm516, %v1091, 0
      %v1100 = vsel %vm516, %v1093, 0
      %v1102 = vsel %vm516, %v1095, 0
      %v1104 = vsel %vm516, %v1097, 0
      %1106 = vmatprep.subr.mxu0 0.0
      %1107 = vmatpush1.xpose.msra.mxu0 0.0
      %1108 = vmatprep.subr.mxu0 0.0
      %1109 = vmatpush1.xpose.msra.mxu0 0.0
      %1110 = vmatprep.subr.mxu0 0.0
      %1111 = vmatpush1.xpose.msra.mxu0 0.0
      %1112 = vmatprep.subr.mxu0 0.0
      %1113 = vmatpush1.xpose.msra.mxu0 0.0
      %1114 = vmatprep.subr.mxu0 0.0
      %1115 = vmatpush1.xpose.msra.mxu0 0.0
      %1116 = vmatprep.subr.mxu0 0.0
      %1117 = vmatpush1.xpose.msra.mxu0 0.0
      %1118 = vmatprep.subr.mxu0 0.0
      %1119 = vmatpush1.xpose.msra.mxu0 0.0
      %1120 = vmatprep.subr.mxu0 0.0
      %1121 = vmatpush1.xpose.msra.mxu0 0.0
      %1122 = vmatprep.subr.mxu0 0.0
      %1123 = vmatpush1.xpose.msra.mxu0 0.0
      %1124 = vmatprep.subr.mxu0 0.0
      %1125 = vmatpush1.xpose.msra.mxu0 0.0
      %1126 = vmatprep.subr.mxu0 0.0
      %1127 = vmatpush1.xpose.msra.mxu0 0.0
      %1128 = vmatprep.subr.mxu0 0.0
      %1129 = vmatpush1.xpose.msra.mxu0 0.0
      %1130 = vmatprep.subr.mxu0 0.0
      %1131 = vmatpush1.xpose.msra.mxu0 0.0
      %1132 = vmatprep.subr.mxu0 0.0
      %1133 = vmatpush1.xpose.msra.mxu0 0.0
      %1134 = vmatprep.subr.mxu0 0.0
      %1135 = vmatpush1.xpose.msra.mxu0 %v1104
      %1136 = vmatprep.subr.mxu0 0.0
      %1137 = vmatpush1.xpose.msra.mxu0 %v1102
      %1138 = vmatprep.subr.mxu0 0.0
      %1139 = vmatpush2.xpose.msra.mxu0 0.0
      %1140 = vmatprep.subr.mxu0 0.0
      %1141 = vmatpush2.xpose.msra.mxu0 0.0
      %1142 = vmatprep.subr.mxu0 0.0
      %1143 = vmatpush2.xpose.msra.mxu0 0.0
      %1144 = vmatprep.subr.mxu0 0.0
      %1145 = vmatpush2.xpose.msra.mxu0 0.0
      %1146 = vmatprep.subr.mxu0 0.0
      %1147 = vmatpush2.xpose.msra.mxu0 0.0
      %1148 = vmatprep.subr.mxu0 0.0
      %1149 = vmatpush2.xpose.msra.mxu0 0.0
      %1150 = vmatprep.subr.mxu0 0.0
      %1151 = vmatpush2.xpose.msra.mxu0 0.0
      %1152 = vmatprep.subr.mxu0 0.0
      %1153 = vmatpush2.xpose.msra.mxu0 0.0
      %1154 = vmatprep.subr.mxu0 0.0
      %1155 = vmatpush2.xpose.msra.mxu0 0.0
      %1156 = vmatprep.subr.mxu0 0.0
      %1157 = vmatpush2.xpose.msra.mxu0 0.0
      %1158 = vmatprep.subr.mxu0 0.0
      %1159 = vmatpush2.xpose.msra.mxu0 0.0
      %1160 = vmatprep.subr.mxu0 0.0
      %1161 = vmatpush2.xpose.msra.mxu0 0.0
      %1162 = vmatprep.subr.mxu0 0.0
      %1163 = vmatpush2.xpose.msra.mxu0 0.0
      %1164 = vmatprep.subr.mxu0 0.0
      %1165 = vmatpush2.xpose.msra.mxu0 0.0
      %1166 = vmatprep.subr.mxu0 0.0
      %1167 = vmatpush2.xpose.msra.mxu0 0.0
      %1168 = vmatprep.subr.mxu0 0.0
      %1169 = vmatpush2.xpose.msra.mxu0 0.0
      %1170 = vmatprep.mubr.f32.mxu0 0.0
      %1171 = vmatmul.mubr.f32.gmra.mxu0 %v1098
      %v1172 = vpop.f32.mrf.mxu0
      %v1173 = vadd.f32 0.0, %v1172
      %v1174 = vpop.f32.mrf.mxu0
      %1175 = vmatprep.mubr.f32.mxu0 0.0
      %1176 = vmatmul.mubr.f32.gmra.mxu0 %v1100
      %v1177 = vpop.f32.mrf.mxu0
      %v1178 = vadd.f32 0.0, %v1177
      %v1179 = vpop.f32.mrf.mxu0
      %1180 = vdwg.mxu0
      %v1181 = vmul.f32 %v1173, 0.35355338
      %v1182 = vmul.f32 %v1178, 0.35355338
      %v1183 = vadd.f32 %v1181, %v606
      %v1184 = vadd.f32 %v1182, %v606
      %v1185 = vsel %vm610, %v1183, -inf
      %1186 = vmax.xlane.f32.xlu0 %v1185
      %v1187 = vpop.xlane.xlu0 %1186
      %v1188 = vsel %vm614, %v1184, -inf
      %1189 = vmax.xlane.f32.xlu0 %v1188
      %v1190 = vpop.xlane.xlu0 %1189
      %v1191 = vsub.f32 %v1183, %v1187
      %v1192 = vsub.f32 %v1184, %v1190
      %v1193 = vmul.f32 %v1191, 1.442695
      %v1194 = vpow.pop %v1193
      %v1195 = vmul.f32 %v1192, 1.442695
      %v1196 = vpow.pop %v1195
      %v1197 = vsel %vm610, %v1194, 0.0
      %1198 = vadd.xlane.f32.xlu0 %v1197
      %v1199 = vpop.xlane.xlu0 %1198
      %v1200 = vsel %vm614, %v1196, 0.0
      %1201 = vadd.xlane.f32.xlu0 %v1200
      %v1202 = vpop.xlane.xlu0 %1201
      %v1203 = vrcp.pop %v1199
      %v1204 = vrcp.pop %v1202
      %v1205 = vmul.f32 %v1194, %v1203
      %v1206 = vmul.f32 %v1196, %v1204
      %1207 = vrot.lane.b32.xlu0 %v498, 48
      %v1208 = vpop.permute.xlu0 %1207
      %1209 = vrot.lane.b32.xlu0 %v503, 48
      %v1210 = vpop.permute.xlu0 %1209
      %v1213 = vsel %vm610, %v1205, 0
      %v1216 = vsel %vm610, %v1206, 0
      %v1218 = vsel %vm645, %v1210, 0
      %1220 = vmatprep.subr.mxu0 0.0
      %1221 = vmatpush1.msra.mxu0 0.0
      %1222 = vmatprep.subr.mxu0 0.0
      %1223 = vmatpush1.msra.mxu0 0.0
      %1224 = vmatprep.subr.mxu0 0.0
      %1225 = vmatpush1.msra.mxu0 0.0
      %1226 = vmatprep.subr.mxu0 0.0
      %1227 = vmatpush1.msra.mxu0 0.0
      %1228 = vmatprep.subr.mxu0 0.0
      %1229 = vmatpush1.msra.mxu0 0.0
      %1230 = vmatprep.subr.mxu0 0.0
      %1231 = vmatpush1.msra.mxu0 0.0
      %1232 = vmatprep.subr.mxu0 0.0
      %1233 = vmatpush1.msra.mxu0 0.0
      %1234 = vmatprep.subr.mxu0 0.0
      %1235 = vmatpush1.msra.mxu0 0.0
      %1236 = vmatprep.subr.mxu0 0.0
      %1237 = vmatpush1.msra.mxu0 0.0
      %1238 = vmatprep.subr.mxu0 0.0
      %1239 = vmatpush1.msra.mxu0 0.0
      %1240 = vmatprep.subr.mxu0 0.0
      %1241 = vmatpush1.msra.mxu0 0.0
      %1242 = vmatprep.subr.mxu0 0.0
      %1243 = vmatpush1.msra.mxu0 0.0
      %1244 = vmatprep.subr.mxu0 0.0
      %1245 = vmatpush1.msra.mxu0 0.0
      %1246 = vmatprep.subr.mxu0 0.0
      %1247 = vmatpush1.msra.mxu0 0.0
      %1248 = vmatprep.subr.mxu0 0.0
      %1249 = vmatpush1.msra.mxu0 %v1218
      %1250 = vmatprep.subr.mxu0 0.0
      %1251 = vmatpush1.msra.mxu0 %v1208
      %1252 = vmatprep.subr.mxu0 0.0
      %1253 = vmatpush2.msra.mxu0 0.0
      %1254 = vmatprep.subr.mxu0 0.0
      %1255 = vmatpush2.msra.mxu0 0.0
      %1256 = vmatprep.subr.mxu0 0.0
      %1257 = vmatpush2.msra.mxu0 0.0
      %1258 = vmatprep.subr.mxu0 0.0
      %1259 = vmatpush2.msra.mxu0 0.0
      %1260 = vmatprep.subr.mxu0 0.0
      %1261 = vmatpush2.msra.mxu0 0.0
      %1262 = vmatprep.subr.mxu0 0.0
      %1263 = vmatpush2.msra.mxu0 0.0
      %1264 = vmatprep.subr.mxu0 0.0
      %1265 = vmatpush2.msra.mxu0 0.0
      %1266 = vmatprep.subr.mxu0 0.0
      %1267 = vmatpush2.msra.mxu0 0.0
      %1268 = vmatprep.subr.mxu0 0.0
      %1269 = vmatpush2.msra.mxu0 0.0
      %1270 = vmatprep.subr.mxu0 0.0
      %1271 = vmatpush2.msra.mxu0 0.0
      %1272 = vmatprep.subr.mxu0 0.0
      %1273 = vmatpush2.msra.mxu0 0.0
      %1274 = vmatprep.subr.mxu0 0.0
      %1275 = vmatpush2.msra.mxu0 0.0
      %1276 = vmatprep.subr.mxu0 0.0
      %1277 = vmatpush2.msra.mxu0 0.0
      %1278 = vmatprep.subr.mxu0 0.0
      %1279 = vmatpush2.msra.mxu0 0.0
      %1280 = vmatprep.subr.mxu0 0.0
      %1281 = vmatpush2.msra.mxu0 0.0
      %1282 = vmatprep.subr.mxu0 0.0
      %1283 = vmatpush2.msra.mxu0 0.0
      %1284 = vmatprep.mubr.f32.mxu0 0.0
      %1285 = vmatmul.mubr.f32.gmra.mxu0 %v1213
      %v1286 = vpop.f32.mrf.mxu0
      %v1287 = vadd.f32 0.0, %v1286
      %v1288 = vpop.f32.mrf.mxu0
      %1289 = vmatprep.mubr.f32.mxu0 0.0
      %1290 = vmatmul.mubr.f32.gmra.mxu0 %v1216
      %v1291 = vpop.f32.mrf.mxu0
      %v1292 = vadd.f32 0.0, %v1291
      %v1293 = vpop.f32.mrf.mxu0
      %1294 = vdwg.mxu0
      %v1296 = vsel %vm516, %v1287, 0
      %v1299 = vsel %vm516, %v1292, 0
      %1301 = vmatprep.subr.mxu0 0.0
      %1302 = vmatpush1.msra.mxu0 0.0
      %1303 = vmatprep.subr.mxu0 0.0
      %1304 = vmatpush1.msra.mxu0 0.0
      %1305 = vmatprep.subr.mxu0 0.0
      %1306 = vmatpush1.msra.mxu0 0.0
      %1307 = vmatprep.subr.mxu0 0.0
      %1308 = vmatpush1.msra.mxu0 0.0
      %1309 = vmatprep.subr.mxu0 0.0
      %1310 = vmatpush1.msra.mxu0 0.0
      %1311 = vmatprep.subr.mxu0 0.0
      %1312 = vmatpush1.msra.mxu0 0.0
      %1313 = vmatprep.subr.mxu0 0.0
      %1314 = vmatpush1.msra.mxu0 0.0
      %1315 = vmatprep.subr.mxu0 0.0
      %1316 = vmatpush1.msra.mxu0 0.0
      %1317 = vmatprep.subr.mxu0 0.0
      %1318 = vmatpush1.msra.mxu0 0.0
      %1319 = vmatprep.subr.mxu0 0.0
      %1320 = vmatpush1.msra.mxu0 0.0
      %1321 = vmatprep.subr.mxu0 0.0
      %1322 = vmatpush1.msra.mxu0 0.0
      %1323 = vmatprep.subr.mxu0 0.0
      %1324 = vmatpush1.msra.mxu0 0.0
      %1325 = vmatprep.subr.mxu0 0.0
      %1326 = vmatpush1.msra.mxu0 0.0
      %1327 = vmatprep.subr.mxu0 0.0
      %1328 = vmatpush1.msra.mxu0 0.0
      %1329 = vmatprep.subr.mxu0 0.0
      %1330 = vmatpush1.msra.mxu0 0.0
      %1331 = vmatprep.subr.mxu0 0.0
      %1332 = vmatpush1.msra.mxu0 %v508
      %1333 = vmatprep.subr.mxu0 0.0
      %1334 = vmatpush2.msra.mxu0 0.0
      %1335 = vmatprep.subr.mxu0 0.0
      %1336 = vmatpush2.msra.mxu0 0.0
      %1337 = vmatprep.subr.mxu0 0.0
      %1338 = vmatpush2.msra.mxu0 0.0
      %1339 = vmatprep.subr.mxu0 0.0
      %1340 = vmatpush2.msra.mxu0 0.0
      %1341 = vmatprep.subr.mxu0 0.0
      %1342 = vmatpush2.msra.mxu0 0.0
      %1343 = vmatprep.subr.mxu0 0.0
      %1344 = vmatpush2.msra.mxu0 0.0
      %1345 = vmatprep.subr.mxu0 0.0
      %1346 = vmatpush2.msra.mxu0 0.0
      %1347 = vmatprep.subr.mxu0 0.0
      %1348 = vmatpush2.msra.mxu0 0.0
      %1349 = vmatprep.subr.mxu0 0.0
      %1350 = vmatpush2.msra.mxu0 0.0
      %1351 = vmatprep.subr.mxu0 0.0
      %1352 = vmatpush2.msra.mxu0 0.0
      %1353 = vmatprep.subr.mxu0 0.0
      %1354 = vmatpush2.msra.mxu0 0.0
      %1355 = vmatprep.subr.mxu0 0.0
      %1356 = vmatpush2.msra.mxu0 0.0
      %1357 = vmatprep.subr.mxu0 0.0
      %1358 = vmatpush2.msra.mxu0 0.0
      %1359 = vmatprep.subr.mxu0 0.0
      %1360 = vmatpush2.msra.mxu0 0.0
      %1361 = vmatprep.subr.mxu0 0.0
      %1362 = vmatpush2.msra.mxu0 0.0
      %1363 = vmatprep.subr.mxu0 0.0
      %1364 = vmatpush2.msra.mxu0 0.0
      %1365 = vmatprep.mubr.f32.mxu0 0.0
      %1366 = vmatmul.mubr.f32.gmra.mxu0 %v1296
      %v1367 = vpop.f32.mrf.mxu0
      %v1368 = vadd.f32 0.0, %v1367
      %v1369 = vpop.f32.mrf.mxu0
      %1370 = vmatprep.mubr.f32.mxu0 0.0
      %1371 = vmatmul.mubr.f32.gmra.mxu0 %v1299
      %v1372 = vpop.f32.mrf.mxu0
      %v1373 = vadd.f32 0.0, %v1372
      %v1374 = vpop.f32.mrf.mxu0
      %1375 = vdwg.mxu0
      %v1376 = vadd.f32 %v1082, %v1368
      %v1377 = vadd.f32 %v1087, %v1373
      %1378 = vrot.lane.b32.xlu0 %v498, 104
      %v1379 = vpop.permute.xlu0 %1378
      %1380 = vrot.lane.b32.xlu0 %v503, 104
      %v1381 = vpop.permute.xlu0 %1380
      %1382 = vrot.lane.b32.xlu0 %v498, 72
      %v1383 = vpop.permute.xlu0 %1382
      %1384 = vrot.lane.b32.xlu0 %v503, 72
      %v1385 = vpop.permute.xlu0 %1384
      %v1386 = vsel %vm516, %v1379, 0
      %v1388 = vsel %vm516, %v1381, 0
      %v1390 = vsel %vm516, %v1383, 0
      %v1392 = vsel %vm516, %v1385, 0
      %1394 = vmatprep.subr.mxu0 0.0
      %1395 = vmatpush1.xpose.msra.mxu0 0.0
      %1396 = vmatprep.subr.mxu0 0.0
      %1397 = vmatpush1.xpose.msra.mxu0 0.0
      %1398 = vmatprep.subr.mxu0 0.0
      %1399 = vmatpush1.xpose.msra.mxu0 0.0
      %1400 = vmatprep.subr.mxu0 0.0
      %1401 = vmatpush1.xpose.msra.mxu0 0.0
      %1402 = vmatprep.subr.mxu0 0.0
      %1403 = vmatpush1.xpose.msra.mxu0 0.0
      %1404 = vmatprep.subr.mxu0 0.0
      %1405 = vmatpush1.xpose.msra.mxu0 0.0
      %1406 = vmatprep.subr.mxu0 0.0
      %1407 = vmatpush1.xpose.msra.mxu0 0.0
      %1408 = vmatprep.subr.mxu0 0.0
      %1409 = vmatpush1.xpose.msra.mxu0 0.0
      %1410 = vmatprep.subr.mxu0 0.0
      %1411 = vmatpush1.xpose.msra.mxu0 0.0
      %1412 = vmatprep.subr.mxu0 0.0
      %1413 = vmatpush1.xpose.msra.mxu0 0.0
      %1414 = vmatprep.subr.mxu0 0.0
      %1415 = vmatpush1.xpose.msra.mxu0 0.0
      %1416 = vmatprep.subr.mxu0 0.0
      %1417 = vmatpush1.xpose.msra.mxu0 0.0
      %1418 = vmatprep.subr.mxu0 0.0
      %1419 = vmatpush1.xpose.msra.mxu0 0.0
      %1420 = vmatprep.subr.mxu0 0.0
      %1421 = vmatpush1.xpose.msra.mxu0 0.0
      %1422 = vmatprep.subr.mxu0 0.0
      %1423 = vmatpush1.xpose.msra.mxu0 %v1392
      %1424 = vmatprep.subr.mxu0 0.0
      %1425 = vmatpush1.xpose.msra.mxu0 %v1390
      %1426 = vmatprep.subr.mxu0 0.0
      %1427 = vmatpush2.xpose.msra.mxu0 0.0
      %1428 = vmatprep.subr.mxu0 0.0
      %1429 = vmatpush2.xpose.msra.mxu0 0.0
      %1430 = vmatprep.subr.mxu0 0.0
      %1431 = vmatpush2.xpose.msra.mxu0 0.0
      %1432 = vmatprep.subr.mxu0 0.0
      %1433 = vmatpush2.xpose.msra.mxu0 0.0
      %1434 = vmatprep.subr.mxu0 0.0
      %1435 = vmatpush2.xpose.msra.mxu0 0.0
      %1436 = vmatprep.subr.mxu0 0.0
      %1437 = vmatpush2.xpose.msra.mxu0 0.0
      %1438 = vmatprep.subr.mxu0 0.0
      %1439 = vmatpush2.xpose.msra.mxu0 0.0
      %1440 = vmatprep.subr.mxu0 0.0
      %1441 = vmatpush2.xpose.msra.mxu0 0.0
      %1442 = vmatprep.subr.mxu0 0.0
      %1443 = vmatpush2.xpose.msra.mxu0 0.0
      %1444 = vmatprep.subr.mxu0 0.0
      %1445 = vmatpush2.xpose.msra.mxu0 0.0
      %1446 = vmatprep.subr.mxu0 0.0
      %1447 = vmatpush2.xpose.msra.mxu0 0.0
      %1448 = vmatprep.subr.mxu0 0.0
      %1449 = vmatpush2.xpose.msra.mxu0 0.0
      %1450 = vmatprep.subr.mxu0 0.0
      %1451 = vmatpush2.xpose.msra.mxu0 0.0
      %1452 = vmatprep.subr.mxu0 0.0
      %1453 = vmatpush2.xpose.msra.mxu0 0.0
      %1454 = vmatprep.subr.mxu0 0.0
      %1455 = vmatpush2.xpose.msra.mxu0 0.0
      %1456 = vmatprep.subr.mxu0 0.0
      %1457 = vmatpush2.xpose.msra.mxu0 0.0
      %1458 = vmatprep.mubr.f32.mxu0 0.0
      %1459 = vmatmul.mubr.f32.gmra.mxu0 %v1386
      %v1460 = vpop.f32.mrf.mxu0
      %v1461 = vadd.f32 0.0, %v1460
      %v1462 = vpop.f32.mrf.mxu0
      %1463 = vmatprep.mubr.f32.mxu0 0.0
      %1464 = vmatmul.mubr.f32.gmra.mxu0 %v1388
      %v1465 = vpop.f32.mrf.mxu0
      %v1466 = vadd.f32 0.0, %v1465
      %v1467 = vpop.f32.mrf.mxu0
      %1468 = vdwg.mxu0
      %v1469 = vmul.f32 %v1461, 0.35355338
      %v1470 = vmul.f32 %v1466, 0.35355338
      %v1471 = vadd.f32 %v1469, %v606
      %v1472 = vadd.f32 %v1470, %v606
      %v1473 = vsel %vm610, %v1471, -inf
      %1474 = vmax.xlane.f32.xlu0 %v1473
      %v1475 = vpop.xlane.xlu0 %1474
      %v1476 = vsel %vm614, %v1472, -inf
      %1477 = vmax.xlane.f32.xlu0 %v1476
      %v1478 = vpop.xlane.xlu0 %1477
      %v1479 = vsub.f32 %v1471, %v1475
      %v1480 = vsub.f32 %v1472, %v1478
      %v1481 = vmul.f32 %v1479, 1.442695
      %v1482 = vpow.pop %v1481
      %v1483 = vmul.f32 %v1480, 1.442695
      %v1484 = vpow.pop %v1483
      %v1485 = vsel %vm610, %v1482, 0.0
      %1486 = vadd.xlane.f32.xlu0 %v1485
      %v1487 = vpop.xlane.xlu0 %1486
      %v1488 = vsel %vm614, %v1484, 0.0
      %1489 = vadd.xlane.f32.xlu0 %v1488
      %v1490 = vpop.xlane.xlu0 %1489
      %v1491 = vrcp.pop %v1487
      %v1492 = vrcp.pop %v1490
      %v1493 = vmul.f32 %v1482, %v1491
      %v1494 = vmul.f32 %v1484, %v1492
      %1495 = vrot.lane.b32.xlu0 %v498, 40
      %v1496 = vpop.permute.xlu0 %1495
      %1497 = vrot.lane.b32.xlu0 %v503, 40
      %v1498 = vpop.permute.xlu0 %1497
      %v1501 = vsel %vm610, %v1493, 0
      %v1504 = vsel %vm610, %v1494, 0
      %v1506 = vsel %vm645, %v1498, 0
      %1508 = vmatprep.subr.mxu0 0.0
      %1509 = vmatpush1.msra.mxu0 0.0
      %1510 = vmatprep.subr.mxu0 0.0
      %1511 = vmatpush1.msra.mxu0 0.0
      %1512 = vmatprep.subr.mxu0 0.0
      %1513 = vmatpush1.msra.mxu0 0.0
      %1514 = vmatprep.subr.mxu0 0.0
      %1515 = vmatpush1.msra.mxu0 0.0
      %1516 = vmatprep.subr.mxu0 0.0
      %1517 = vmatpush1.msra.mxu0 0.0
      %1518 = vmatprep.subr.mxu0 0.0
      %1519 = vmatpush1.msra.mxu0 0.0
      %1520 = vmatprep.subr.mxu0 0.0
      %1521 = vmatpush1.msra.mxu0 0.0
      %1522 = vmatprep.subr.mxu0 0.0
      %1523 = vmatpush1.msra.mxu0 0.0
      %1524 = vmatprep.subr.mxu0 0.0
      %1525 = vmatpush1.msra.mxu0 0.0
      %1526 = vmatprep.subr.mxu0 0.0
      %1527 = vmatpush1.msra.mxu0 0.0
      %1528 = vmatprep.subr.mxu0 0.0
      %1529 = vmatpush1.msra.mxu0 0.0
      %1530 = vmatprep.subr.mxu0 0.0
      %1531 = vmatpush1.msra.mxu0 0.0
      %1532 = vmatprep.subr.mxu0 0.0
      %1533 = vmatpush1.msra.mxu0 0.0
      %1534 = vmatprep.subr.mxu0 0.0
      %1535 = vmatpush1.msra.mxu0 0.0
      %1536 = vmatprep.subr.mxu0 0.0
      %1537 = vmatpush1.msra.mxu0 %v1506
      %1538 = vmatprep.subr.mxu0 0.0
      %1539 = vmatpush1.msra.mxu0 %v1496
      %1540 = vmatprep.subr.mxu0 0.0
      %1541 = vmatpush2.msra.mxu0 0.0
      %1542 = vmatprep.subr.mxu0 0.0
      %1543 = vmatpush2.msra.mxu0 0.0
      %1544 = vmatprep.subr.mxu0 0.0
      %1545 = vmatpush2.msra.mxu0 0.0
      %1546 = vmatprep.subr.mxu0 0.0
      %1547 = vmatpush2.msra.mxu0 0.0
      %1548 = vmatprep.subr.mxu0 0.0
      %1549 = vmatpush2.msra.mxu0 0.0
      %1550 = vmatprep.subr.mxu0 0.0
      %1551 = vmatpush2.msra.mxu0 0.0
      %1552 = vmatprep.subr.mxu0 0.0
      %1553 = vmatpush2.msra.mxu0 0.0
      %1554 = vmatprep.subr.mxu0 0.0
      %1555 = vmatpush2.msra.mxu0 0.0
      %1556 = vmatprep.subr.mxu0 0.0
      %1557 = vmatpush2.msra.mxu0 0.0
      %1558 = vmatprep.subr.mxu0 0.0
      %1559 = vmatpush2.msra.mxu0 0.0
      %1560 = vmatprep.subr.mxu0 0.0
      %1561 = vmatpush2.msra.mxu0 0.0
      %1562 = vmatprep.subr.mxu0 0.0
      %1563 = vmatpush2.msra.mxu0 0.0
      %1564 = vmatprep.subr.mxu0 0.0
      %1565 = vmatpush2.msra.mxu0 0.0
      %1566 = vmatprep.subr.mxu0 0.0
      %1567 = vmatpush2.msra.mxu0 0.0
      %1568 = vmatprep.subr.mxu0 0.0
      %1569 = vmatpush2.msra.mxu0 0.0
      %1570 = vmatprep.subr.mxu0 0.0
      %1571 = vmatpush2.msra.mxu0 0.0
      %1572 = vmatprep.mubr.f32.mxu0 0.0
      %1573 = vmatmul.mubr.f32.gmra.mxu0 %v1501
      %v1574 = vpop.f32.mrf.mxu0
      %v1575 = vadd.f32 0.0, %v1574
      %v1576 = vpop.f32.mrf.mxu0
      %1577 = vmatprep.mubr.f32.mxu0 0.0
      %1578 = vmatmul.mubr.f32.gmra.mxu0 %v1504
      %v1579 = vpop.f32.mrf.mxu0
      %v1580 = vadd.f32 0.0, %v1579
      %v1581 = vpop.f32.mrf.mxu0
      %1582 = vdwg.mxu0
      %v1584 = vsel %vm516, %v1575, 0
      %v1587 = vsel %vm516, %v1580, 0
      %1589 = vmatprep.subr.mxu0 0.0
      %1590 = vmatpush1.msra.mxu0 0.0
      %1591 = vmatprep.subr.mxu0 0.0
      %1592 = vmatpush1.msra.mxu0 0.0
      %1593 = vmatprep.subr.mxu0 0.0
      %1594 = vmatpush1.msra.mxu0 0.0
      %1595 = vmatprep.subr.mxu0 0.0
      %1596 = vmatpush1.msra.mxu0 0.0
      %1597 = vmatprep.subr.mxu0 0.0
      %1598 = vmatpush1.msra.mxu0 0.0
      %1599 = vmatprep.subr.mxu0 0.0
      %1600 = vmatpush1.msra.mxu0 0.0
      %1601 = vmatprep.subr.mxu0 0.0
      %1602 = vmatpush1.msra.mxu0 0.0
      %1603 = vmatprep.subr.mxu0 0.0
      %1604 = vmatpush1.msra.mxu0 0.0
      %1605 = vmatprep.subr.mxu0 0.0
      %1606 = vmatpush1.msra.mxu0 0.0
      %1607 = vmatprep.subr.mxu0 0.0
      %1608 = vmatpush1.msra.mxu0 0.0
      %1609 = vmatprep.subr.mxu0 0.0
      %1610 = vmatpush1.msra.mxu0 0.0
      %1611 = vmatprep.subr.mxu0 0.0
      %1612 = vmatpush1.msra.mxu0 0.0
      %1613 = vmatprep.subr.mxu0 0.0
      %1614 = vmatpush1.msra.mxu0 0.0
      %1615 = vmatprep.subr.mxu0 0.0
      %1616 = vmatpush1.msra.mxu0 0.0
      %1617 = vmatprep.subr.mxu0 0.0
      %1618 = vmatpush1.msra.mxu0 0.0
      %1619 = vmatprep.subr.mxu0 0.0
      %1620 = vmatpush1.msra.mxu0 %v509
      %1621 = vmatprep.subr.mxu0 0.0
      %1622 = vmatpush2.msra.mxu0 0.0
      %1623 = vmatprep.subr.mxu0 0.0
      %1624 = vmatpush2.msra.mxu0 0.0
      %1625 = vmatprep.subr.mxu0 0.0
      %1626 = vmatpush2.msra.mxu0 0.0
      %1627 = vmatprep.subr.mxu0 0.0
      %1628 = vmatpush2.msra.mxu0 0.0
      %1629 = vmatprep.subr.mxu0 0.0
      %1630 = vmatpush2.msra.mxu0 0.0
      %1631 = vmatprep.subr.mxu0 0.0
      %1632 = vmatpush2.msra.mxu0 0.0
      %1633 = vmatprep.subr.mxu0 0.0
      %1634 = vmatpush2.msra.mxu0 0.0
      %1635 = vmatprep.subr.mxu0 0.0
      %1636 = vmatpush2.msra.mxu0 0.0
      %1637 = vmatprep.subr.mxu0 0.0
      %1638 = vmatpush2.msra.mxu0 0.0
      %1639 = vmatprep.subr.mxu0 0.0
      %1640 = vmatpush2.msra.mxu0 0.0
      %1641 = vmatprep.subr.mxu0 0.0
      %1642 = vmatpush2.msra.mxu0 0.0
      %1643 = vmatprep.subr.mxu0 0.0
      %1644 = vmatpush2.msra.mxu0 0.0
      %1645 = vmatprep.subr.mxu0 0.0
      %1646 = vmatpush2.msra.mxu0 0.0
      %1647 = vmatprep.subr.mxu0 0.0
      %1648 = vmatpush2.msra.mxu0 0.0
      %1649 = vmatprep.subr.mxu0 0.0
      %1650 = vmatpush2.msra.mxu0 0.0
      %1651 = vmatprep.subr.mxu0 0.0
      %1652 = vmatpush2.msra.mxu0 0.0
      %1653 = vmatprep.mubr.f32.mxu0 0.0
      %1654 = vmatmul.mubr.f32.gmra.mxu0 %v1584
      %v1655 = vpop.f32.mrf.mxu0
      %v1656 = vadd.f32 0.0, %v1655
      %v1657 = vpop.f32.mrf.mxu0
      %1658 = vmatprep.mubr.f32.mxu0 0.0
      %1659 = vmatmul.mubr.f32.gmra.mxu0 %v1587
      %v1660 = vpop.f32.mrf.mxu0
      %v1661 = vadd.f32 0.0, %v1660
      %v1662 = vpop.f32.mrf.mxu0
      %1663 = vdwg.mxu0
      %v1664 = vadd.f32 %v1376, %v1656
      %v1665 = vadd.f32 %v1377, %v1661
      %v1666 = vlaneseq
      %v1667 = vshrl.u32 %v1666, 7
      %v1668 = vsub.s32 1, %v1667
      %v1669 = vrot.slane %v415, %v1668
      %v1670 = vadd.f32 %v1664, %v1669
      %v1671 = vadd.f32 %v1665, %v1669
      %v1672 = vadd.f32 %v412, %v1670
      %v1673 = vadd.f32 %v413, %v1671
      %v1674 = vsel %vm424, %v1672, 0.0
      %1675 = vadd.xlane.f32.xlu0 %v1674
      %v1676 = vpop.xlane.xlu0 %1675
      %vm1677 = vcmask 257024
      %v1678 = vsel %vm1677, %v1673, 0.0
      %1679 = vadd.xlane.f32.xlu0 %v1678
      %v1680 = vpop.xlane.xlu0 %1679
      %v1681 = vrcp.pop 32.0
      %v1682 = vmul.f32 %v1676, %v1681
      %v1683 = vmul.f32 %v1680, %v1681
      %v1684 = vsub.f32 %v1672, %v1682
      %v1685 = vsub.f32 %v1673, %v1683
      %v1686 = vmul.f32 %v1684, %v1684
      %v1687 = vmul.f32 %v1685, %v1685
      %v1688 = vsel %vm424, %v1686, 0.0
      %1689 = vadd.xlane.f32.xlu0 %v1688
      %v1690 = vpop.xlane.xlu0 %1689
      %v1691 = vsel %vm1677, %v1687, 0.0
      %1692 = vadd.xlane.f32.xlu0 %v1691
      %v1693 = vpop.xlane.xlu0 %1692
      %v1694 = vmul.f32 %v1690, %v1681
      %v1695 = vmul.f32 %v1693, %v1681
      %v1696 = vadd.f32 %v1694, 1e-05
      %v1697 = vadd.f32 %v1695, 1e-05
      %v1698 = vrsqrt.pop %v1696
      %v1699 = vrsqrt.pop %v1697
      %v1700 = vmul.f32 %v1684, %v1698
      %v1701 = vmul.f32 %v1685, %v1699
      %v1702 = vlaneseq
      %v1703 = vshrl.u32 %v1702, 7
      %v1704 = vsub.s32 2, %v1703
      %v1705 = vrot.slane %v415, %v1704
      %v1706 = vmul.f32 %v1700, %v1705
      %v1707 = vmul.f32 %v1701, %v1705
      %v1708 = vlaneseq
      %v1709 = vshrl.u32 %v1708, 7
      %v1710 = vsub.s32 3, %v1709
      %v1711 = vrot.slane %v415, %v1710
      %v1712 = vadd.f32 %v1706, %v1711
      %v1713 = vadd.f32 %v1707, %v1711
      %v1714 = vld [vmem:[%s387] sm:$0xff]
      %v1715 = vld [vmem:[%s387 + $0x8] sm:$0xff]
      %v1716 = vld [vmem:[%s387 + $0x10] sm:$0xff]
      %v1717 = vld [vmem:[%s387 + $0x18] sm:$0xff]
      %v1718 = vlaneseq
      %v1719 = vshrl.u32 %v1718, 7
      %v1720 = vsub.s32 4, %v1719
      %v1721 = vrot.slane %v415, %v1720
      %v1723 = vsel %vm424, %v1712, 0
      %v1726 = vsel %vm424, %v1713, 0
      %1728 = vmatprep.subr.mxu0 0.0
      %1729 = vmatpush1.msra.mxu0 0.0
      %1730 = vmatprep.subr.mxu0 0.0
      %1731 = vmatpush1.msra.mxu0 0.0
      %1732 = vmatprep.subr.mxu0 0.0
      %1733 = vmatpush1.msra.mxu0 0.0
      %1734 = vmatprep.subr.mxu0 0.0
      %1735 = vmatpush1.msra.mxu0 0.0
      %1736 = vmatprep.subr.mxu0 0.0
      %1737 = vmatpush1.msra.mxu0 0.0
      %1738 = vmatprep.subr.mxu0 0.0
      %1739 = vmatpush1.msra.mxu0 0.0
      %1740 = vmatprep.subr.mxu0 0.0
      %1741 = vmatpush1.msra.mxu0 0.0
      %1742 = vmatprep.subr.mxu0 0.0
      %1743 = vmatpush1.msra.mxu0 0.0
      %1744 = vmatprep.subr.mxu0 0.0
      %1745 = vmatpush1.msra.mxu0 0.0
      %1746 = vmatprep.subr.mxu0 0.0
      %1747 = vmatpush1.msra.mxu0 0.0
      %1748 = vmatprep.subr.mxu0 0.0
      %1749 = vmatpush1.msra.mxu0 0.0
      %1750 = vmatprep.subr.mxu0 0.0
      %1751 = vmatpush1.msra.mxu0 0.0
      %1752 = vmatprep.subr.mxu0 0.0
      %1753 = vmatpush1.msra.mxu0 %v1717
      %1754 = vmatprep.subr.mxu0 0.0
      %1755 = vmatpush1.msra.mxu0 %v1716
      %1756 = vmatprep.subr.mxu0 0.0
      %1757 = vmatpush1.msra.mxu0 %v1715
      %1758 = vmatprep.subr.mxu0 0.0
      %1759 = vmatpush1.msra.mxu0 %v1714
      %1760 = vmatprep.subr.mxu0 0.0
      %1761 = vmatpush2.msra.mxu0 0.0
      %1762 = vmatprep.subr.mxu0 0.0
      %1763 = vmatpush2.msra.mxu0 0.0
      %1764 = vmatprep.subr.mxu0 0.0
      %1765 = vmatpush2.msra.mxu0 0.0
      %1766 = vmatprep.subr.mxu0 0.0
      %1767 = vmatpush2.msra.mxu0 0.0
      %1768 = vmatprep.subr.mxu0 0.0
      %1769 = vmatpush2.msra.mxu0 0.0
      %1770 = vmatprep.subr.mxu0 0.0
      %1771 = vmatpush2.msra.mxu0 0.0
      %1772 = vmatprep.subr.mxu0 0.0
      %1773 = vmatpush2.msra.mxu0 0.0
      %1774 = vmatprep.subr.mxu0 0.0
      %1775 = vmatpush2.msra.mxu0 0.0
      %1776 = vmatprep.subr.mxu0 0.0
      %1777 = vmatpush2.msra.mxu0 0.0
      %1778 = vmatprep.subr.mxu0 0.0
      %1779 = vmatpush2.msra.mxu0 0.0
      %1780 = vmatprep.subr.mxu0 0.0
      %1781 = vmatpush2.msra.mxu0 0.0
      %1782 = vmatprep.subr.mxu0 0.0
      %1783 = vmatpush2.msra.mxu0 0.0
      %1784 = vmatprep.subr.mxu0 0.0
      %1785 = vmatpush2.msra.mxu0 0.0
      %1786 = vmatprep.subr.mxu0 0.0
      %1787 = vmatpush2.msra.mxu0 0.0
      %1788 = vmatprep.subr.mxu0 0.0
      %1789 = vmatpush2.msra.mxu0 0.0
      %1790 = vmatprep.subr.mxu0 0.0
      %1791 = vmatpush2.msra.mxu0 0.0
      %1792 = vmatprep.mubr.f32.mxu0 0.0
      %1793 = vmatmul.mubr.f32.gmra.mxu0 %v1723
      %v1794 = vpop.f32.mrf.mxu0
      %v1795 = vadd.f32 %v1721, %v1794
      %v1796 = vpop.f32.mrf.mxu0
      %1797 = vmatprep.mubr.f32.mxu0 0.0
      %1798 = vmatmul.mubr.f32.gmra.mxu0 %v1726
      %v1799 = vpop.f32.mrf.mxu0
      %v1800 = vadd.f32 %v1721, %v1799
      %v1801 = vpop.f32.mrf.mxu0
      %1802 = vdwg.mxu0
      %v1803 = vmax.f32 %v1795, 0.0
      %v1804 = vmax.f32 %v1800, 0.0
      %v1805 = vld [vmem:[%s392] sm:$0xff]
      %v1806 = vld [vmem:[%s392 + $0x8] sm:$0xff]
      %v1807 = vld [vmem:[%s392 + $0x10] sm:$0xff]
      %v1808 = vld [vmem:[%s392 + $0x18] sm:$0xff]
      %v1809 = vld [vmem:[%s392 + $0x20] sm:$0xff]
      %v1810 = vld [vmem:[%s392 + $0x28] sm:$0xff]
      %v1811 = vld [vmem:[%s392 + $0x30] sm:$0xff]
      %v1812 = vld [vmem:[%s392 + $0x38] sm:$0xff]
      %v1813 = vlaneseq
      %v1814 = vshrl.u32 %v1813, 7
      %v1815 = vsub.s32 5, %v1814
      %v1816 = vrot.slane %v415, %v1815
      %vm1817 = vcmask 523264
      %v1819 = vsel %vm1817, %v1803, 0
      %v1822 = vsel %vm1817, %v1804, 0
      %1824 = vmatprep.subr.mxu0 0.0
      %1825 = vmatpush1.msra.mxu0 0.0
      %1826 = vmatprep.subr.mxu0 0.0
      %1827 = vmatpush1.msra.mxu0 0.0
      %1828 = vmatprep.subr.mxu0 0.0
      %1829 = vmatpush1.msra.mxu0 0.0
      %1830 = vmatprep.subr.mxu0 0.0
      %1831 = vmatpush1.msra.mxu0 0.0
      %1832 = vmatprep.subr.mxu0 0.0
      %1833 = vmatpush1.msra.mxu0 0.0
      %1834 = vmatprep.subr.mxu0 0.0
      %1835 = vmatpush1.msra.mxu0 0.0
      %1836 = vmatprep.subr.mxu0 0.0
      %1837 = vmatpush1.msra.mxu0 0.0
      %1838 = vmatprep.subr.mxu0 0.0
      %1839 = vmatpush1.msra.mxu0 0.0
      %1840 = vmatprep.subr.mxu0 0.0
      %1841 = vmatpush1.msra.mxu0 %v1812
      %1842 = vmatprep.subr.mxu0 0.0
      %1843 = vmatpush1.msra.mxu0 %v1811
      %1844 = vmatprep.subr.mxu0 0.0
      %1845 = vmatpush1.msra.mxu0 %v1810
      %1846 = vmatprep.subr.mxu0 0.0
      %1847 = vmatpush1.msra.mxu0 %v1809
      %1848 = vmatprep.subr.mxu0 0.0
      %1849 = vmatpush1.msra.mxu0 %v1808
      %1850 = vmatprep.subr.mxu0 0.0
      %1851 = vmatpush1.msra.mxu0 %v1807
      %1852 = vmatprep.subr.mxu0 0.0
      %1853 = vmatpush1.msra.mxu0 %v1806
      %1854 = vmatprep.subr.mxu0 0.0
      %1855 = vmatpush1.msra.mxu0 %v1805
      %1856 = vmatprep.subr.mxu0 0.0
      %1857 = vmatpush2.msra.mxu0 0.0
      %1858 = vmatprep.subr.mxu0 0.0
      %1859 = vmatpush2.msra.mxu0 0.0
      %1860 = vmatprep.subr.mxu0 0.0
      %1861 = vmatpush2.msra.mxu0 0.0
      %1862 = vmatprep.subr.mxu0 0.0
      %1863 = vmatpush2.msra.mxu0 0.0
      %1864 = vmatprep.subr.mxu0 0.0
      %1865 = vmatpush2.msra.mxu0 0.0
      %1866 = vmatprep.subr.mxu0 0.0
      %1867 = vmatpush2.msra.mxu0 0.0
      %1868 = vmatprep.subr.mxu0 0.0
      %1869 = vmatpush2.msra.mxu0 0.0
      %1870 = vmatprep.subr.mxu0 0.0
      %1871 = vmatpush2.msra.mxu0 0.0
      %1872 = vmatprep.subr.mxu0 0.0
      %1873 = vmatpush2.msra.mxu0 0.0
      %1874 = vmatprep.subr.mxu0 0.0
      %1875 = vmatpush2.msra.mxu0 0.0
      %1876 = vmatprep.subr.mxu0 0.0
      %1877 = vmatpush2.msra.mxu0 0.0
      %1878 = vmatprep.subr.mxu0 0.0
      %1879 = vmatpush2.msra.mxu0 0.0
      %1880 = vmatprep.subr.mxu0 0.0
      %1881 = vmatpush2.msra.mxu0 0.0
      %1882 = vmatprep.subr.mxu0 0.0
      %1883 = vmatpush2.msra.mxu0 0.0
      %1884 = vmatprep.subr.mxu0 0.0
      %1885 = vmatpush2.msra.mxu0 0.0
      %1886 = vmatprep.subr.mxu0 0.0
      %1887 = vmatpush2.msra.mxu0 0.0
      %1888 = vmatprep.mubr.f32.mxu0 0.0
      %1889 = vmatmul.mubr.f32.gmra.mxu0 %v1819
      %v1890 = vpop.f32.mrf.mxu0
      %v1891 = vadd.f32 %v1816, %v1890
      %v1892 = vpop.f32.mrf.mxu0
      %1893 = vmatprep.mubr.f32.mxu0 0.0
      %1894 = vmatmul.mubr.f32.gmra.mxu0 %v1822
      %v1895 = vpop.f32.mrf.mxu0
      %v1896 = vadd.f32 %v1816, %v1895
      %v1897 = vpop.f32.mrf.mxu0
      %1898 = vdwg.mxu0
      %v1899 = vadd.f32 %v1712, %v1891
      %v1900 = vadd.f32 %v1713, %v1896
      %v1901 = vsel %vm424, %v1899, 0.0
      %1902 = vadd.xlane.f32.xlu0 %v1901
      %v1903 = vpop.xlane.xlu0 %1902
      %v1904 = vsel %vm1677, %v1900, 0.0
      %1905 = vadd.xlane.f32.xlu0 %v1904
      %v1906 = vpop.xlane.xlu0 %1905
      %v1907 = vmul.f32 %v1903, %v1681
      %v1908 = vmul.f32 %v1906, %v1681
      %v1909 = vsub.f32 %v1899, %v1907
      %v1910 = vsub.f32 %v1900, %v1908
      %v1911 = vmul.f32 %v1909, %v1909
      %v1912 = vmul.f32 %v1910, %v1910
      %v1913 = vsel %vm424, %v1911, 0.0
      %1914 = vadd.xlane.f32.xlu0 %v1913
      %v1915 = vpop.xlane.xlu0 %1914
      %v1916 = vsel %vm1677, %v1912, 0.0
      %1917 = vadd.xlane.f32.xlu0 %v1916
      %v1918 = vpop.xlane.xlu0 %1917
      %v1919 = vmul.f32 %v1915, %v1681
      %v1920 = vmul.f32 %v1918, %v1681
      %v1921 = vadd.f32 %v1919, 1e-05
      %v1922 = vadd.f32 %v1920, 1e-05
      %v1923 = vrsqrt.pop %v1921
      %v1924 = vrsqrt.pop %v1922
      %v1925 = vmul.f32 %v1909, %v1923
      %v1926 = vmul.f32 %v1910, %v1924
      %v1927 = vlaneseq
      %v1928 = vshrl.u32 %v1927, 7
      %v1929 = vsub.s32 6, %v1928
      %v1930 = vrot.slane %v415, %v1929
      %v1931 = vmul.f32 %v1925, %v1930
      %v1932 = vmul.f32 %v1926, %v1930
      %v1933 = vlaneseq
      %v1934 = vshrl.u32 %v1933, 7
      %v1935 = vsub.s32 7, %v1934
      %v1936 = vrot.slane %v415, %v1935
      %v1937 = vadd.f32 %v1931, %v1936
      %v1938 = vadd.f32 %v1932, %v1936
      %1939 = vst.msk [vmem:[%s401] sm:$0xff] %vm424, %v1937
      %1940 = vst.msk [vmem:[%s401 + $0x8] sm:$0xf] %vm1677, %v1938
      %p1941 = scmp.lt.s32.totalorder %s22, 1
      %s1942 = scalar_select %p1941, %s22, 1
      %s1943 = smul.addr %s1942, 2
      %s1944 = smul.addr %s1943, 8
      %s1945 = scalar_lea.vmem %s7, %s1944
      // Predicated region
      $region53: #{_lambda_.4} parent=47 // pred_check
        %p1946 = pneg %p230
      $region54: #{_lambda_.4} parent=47 // pred_check_branch
        %1948 = sbr.rel (%p1946) target = $region56
      $region55: #{_lambda_.4} parent=47 // pred_region
        _
      $region56: #{_lambda_.4} parent=47 // pred_fallthru
        _
    $region48: #{_lambda_.4} parent=5 // pred_fallthru
      _
    %p1949 = scmp.le.s32.totalorder 2, %s13
    // Predicated region
    $region57: #{_lambda_.4} parent=5 // pred_check
      %p1950 = pneg %p1949
    $region58: #{_lambda_.4} parent=5 // pred_check_branch
      %1952 = sbr.rel (%p1950) target = $region60
    $region59: #{_lambda_.4} parent=5 // pred_region
      %s1953 = ssub.s32 %s13, 2
      // Predicated region
      $region61: #{_lambda_.4} parent=59 // pred_check
        %p1954 = pneg %p236
      $region62: #{_lambda_.4} parent=59 // pred_check_branch
        %1956 = sbr.rel (%p1954) target = $region64
      $region63: #{_lambda_.4} parent=59 // pred_region
        %p1957 = scmp.lt.s32.totalorder %s24, 1
        %s1958 = scalar_select %p1957, %s24, 1
        %s1959 = smul.addr %s1958, 2
        %s1960 = smul.addr %s1959, 8
        %s1961 = scalar_lea.vmem %s7, %s1960
      $region64: #{_lambda_.4} parent=59 // pred_fallthru
        _
    $region60: #{_lambda_.4} parent=5 // pred_fallthru
      _
  $region6: #{_lambda_.4} parent=0 // loop_footer
    %s17 = sadd.s32 1, %s13
  $region7: #{_lambda_.4} parent=0 // loop_footer_branch
    %12 = sbr.rel target = $region3
  $region8: #{_lambda_.4} parent=0 // loop_exit
    _

// kernel: _lambda_.5
$region0: #{_lambda_.5}
  #allocation0 [shape = 'u32[]', space=smem, size = 0x4, offset = 0x4, fixed_abs, tag = 'smem constant byte address 0x4 - core index']
  #allocation1 [shape = 'u32[144,128]{1,0:T(1,128)}', space=vmem, size = 0x12000, scoped, tag = 'internal scratch']
  #allocation2 [shape = 'f32[8,32]{1,0:T(8,128)}', space=vmem, size = 0x1000, scoped, tag = 'scratch operand']
  %s0 = inlined_call_operand.vmem [shape: f32[2,8,32], index: 0, kind: input, shape index: {}]
  %s1 = inlined_call_operand.vmem [shape: f32[2,12,32], index: 1, kind: input, shape index: {}]
  %s2 = inlined_call_operand.vmem [shape: f32[2,1,12], index: 2, kind: input, shape index: {}]
  %s3 = inlined_call_operand.vmem [shape: f32[2,32,96], index: 3, kind: input, shape index: {}]
  %s4 = inlined_call_operand.vmem [shape: f32[2,32,32], index: 4, kind: input, shape index: {}]
  %s5 = inlined_call_operand.vmem [shape: f32[2,32,32], index: 5, kind: input, shape index: {}]
  %s6 = inlined_call_operand.vmem [shape: f32[2,32,64], index: 6, kind: input, shape index: {}]
  %s7 = inlined_call_operand.vmem [shape: f32[2,32,32], index: 7, kind: input, shape index: {}]
  %s8 = inlined_call_operand.vmem [shape: f32[2,32,64], index: 8, kind: input, shape index: {}]
  %s9 = inlined_call_operand.vmem [shape: f32[2,64,32], index: 9, kind: input, shape index: {}]
  %s10 = inlined_call_operand.vmem [shape: f32[2,16,96], index: 10, kind: input, shape index: {}]
  %s11 = inlined_call_operand.vmem [shape: f32[32,19], index: 11, kind: input, shape index: {}]
  %s12 = inlined_call_operand.vmem [shape: f32[1,19], index: 12, kind: input, shape index: {}]
  %s13 = inlined_call_operand.vmem [shape: f32[2,8,19], index: 13, kind: output, shape index: {0}]
  %s14 = inlined_call_operand.hbm [shape: f32[2,8,8], index: 14, kind: output, shape index: {1}]
  %15 = xla_tuple %s13, %s14
  %s16 = sld [smem:[#allocation0]]
  $region101: #{_lambda_.5} parent=0
    _
  %s18 = ssub.s32 1, %s16
  %s19 = scalar_select 0, %s18, %s16
  $region1: #{_lambda_.5} parent=0
    #allocation3 [shape = 'u8[8192]{0}', space=vmem, size = 0x2000, scoped, tag = 'output window, operand 1']
    #allocation4 [shape = 's32[2]{0}', space=sflag, size = 0x8, scoped, tag = 'scoped memory for _lambda_.5']
    %20 = vsyncpa [#allocation4], 0
    %s21 = scalar_lea.sflag [#allocation4], 1
    %22 = vsyncpa %s21, 0
    loop: start=0, step=1, limit=6
    $region2: #{_lambda_.5} parent=1 // loop_pre_header
      _
    $region3: #{_lambda_.5} parent=1 // loop_header
      %s24 = sphi 0, %s28
      %p25 = scmp.ge.s32.totalorder %s24, 6
      %s31 = sphi 0, %s43
      %s32 = sphi 0, %s39
      %s33 = sphi 0, %s31
      %s34 = sphi 0, %s32
      %s35 = sphi 0, %s33
      %s36 = sphi 0, %s34
      %s46 = sphi 0, %s48
      %s49 = sphi 0, %s46
      %s50 = sphi 0, %s49
      %s66 = sphi 0, %s50
      %s72 = sphi 0, %s74
      %s75 = sphi 0, %s72
      %s76 = sphi 0, %s75
      %s92 = sphi 0, %s76
      %s98 = sphi 0, %s100
      %s101 = sphi 0, %s98
      %s102 = sphi 0, %s101
      %s118 = sphi 0, %s102
      %s124 = sphi 0, %s126
      %s127 = sphi 0, %s124
      %s128 = sphi 0, %s127
      %s144 = sphi 0, %s128
      %s150 = sphi 0, %s152
      %s153 = sphi 0, %s150
      %s154 = sphi 0, %s153
      %s170 = sphi 0, %s154
      %s176 = sphi 0, %s178
      %s179 = sphi 0, %s176
      %s180 = sphi 0, %s179
      %s196 = sphi 0, %s180
      %s202 = sphi 0, %s204
      %s205 = sphi 0, %s202
      %s206 = sphi 0, %s205
      %s222 = sphi 0, %s206
      %s228 = sphi 0, %s230
      %s231 = sphi 0, %s228
      %s232 = sphi 0, %s231
      %s248 = sphi 0, %s232
      %s254 = sphi 0, %s256
      %s257 = sphi 0, %s254
      %s258 = sphi 0, %s257
      %s274 = sphi 0, %s258
      %s280 = sphi 0, %s282
      %s283 = sphi 0, %s280
      %s284 = sphi 0, %s283
      %s300 = sphi 0, %s284
      %s306 = sphi 0, %s308
      %s309 = sphi 0, %s306
      %s310 = sphi 0, %s309
      %s326 = sphi 0, %s310
      %s330 = sphi 0, %s330
      %s332 = sphi 0, %s330
      %s333 = sphi 0, %s332
      %s347 = sphi 0, %s333
      %s351 = sphi 0, %s351
      %s353 = sphi 0, %s351
      %s354 = sphi 0, %s353
      %s368 = sphi 0, %s354
      %s374 = sphi 0, %s376
      %s377 = sphi 0, %s374
      %s378 = sphi 0, %s377
      %s394 = sphi 0, %s378
      %s400 = sphi 0, %s402
      %s403 = sphi 0, %s400
      %s404 = sphi 0, %s403
      %s420 = sphi 0, %s404
    $region4: #{_lambda_.5} parent=1 // loop_header_branch
      %27 = sbr.rel (%p25) target = $region8
    $region5: #{_lambda_.5} parent=1 // loop_body
      %s29 = ssub.s32 %s24, 1
      %s30 = ssub.s32 %s24, 2
      %s37 = sadd.s32 1, %s32
      %p38 = scmp.ge.s32.totalorder %s37, 2
      %s39 = scalar_select %p38, 0, %s37
      %s40 = sadd.s32 1, %s31
      %s41 = scalar_select %p38, %s40, %s31
      %p42 = scmp.ge.s32.totalorder %s41, 2
      %s43 = scalar_select %p42, 0, %s41
      %s44 = ssub.s32 %s31, %s43
      %p45 = scmp.eq.s32.totalorder %s44, 0
      %s47 = sadd.s32 %s46, 1
      %s48 = scalar_select %p45, %s46, %s47
      %p51 = pneg %p45
      %p52 = scmp.eq.s32.totalorder %s24, 3
      %p53 = por %p51, %p52
      %p54 = scmp.ne.s32.totalorder %s46, %s49
      %p55 = scmp.eq.s32.totalorder %s24, 0
      %p56 = por %p54, %p55
      %p57 = scmp.ne.s32.totalorder %s46, %s49
      %p58 = scmp.eq.s32.totalorder %s29, 3
      %p59 = por %p57, %p58
      %p60 = scmp.ne.s32.totalorder %s49, %s50
      %p61 = scmp.eq.s32.totalorder %s29, 0
      %p62 = por %p60, %p61
      %p63 = scmp.ne.s32.totalorder %s49, %s50
      %p64 = scmp.eq.s32.totalorder %s30, 3
      %p65 = por %p63, %p64
      %p67 = scmp.ne.s32.totalorder %s50, %s66
      %p68 = scmp.eq.s32.totalorder %s30, 0
      %p69 = por %p67, %p68
      %s70 = ssub.s32 %s31, %s43
      %p71 = scmp.eq.s32.totalorder %s70, 0
      %s73 = sadd.s32 %s72, 1
      %s74 = scalar_select %p71, %s72, %s73
      %p77 = pneg %p71
      %p78 = scmp.eq.s32.totalorder %s24, 3
      %p79 = por %p77, %p78
      %p80 = scmp.ne.s32.totalorder %s72, %s75
      %p81 = scmp.eq.s32.totalorder %s24, 0
      %p82 = por %p80, %p81
      %p83 = scmp.ne.s32.totalorder %s72, %s75
      %p84 = scmp.eq.s32.totalorder %s29, 3
      %p85 = por %p83, %p84
      %p86 = scmp.ne.s32.totalorder %s75, %s76
      %p87 = scmp.eq.s32.totalorder %s29, 0
      %p88 = por %p86, %p87
      %p89 = scmp.ne.s32.totalorder %s75, %s76
      %p90 = scmp.eq.s32.totalorder %s30, 3
      %p91 = por %p89, %p90
      %p93 = scmp.ne.s32.totalorder %s76, %s92
      %p94 = scmp.eq.s32.totalorder %s30, 0
      %p95 = por %p93, %p94
      %s96 = ssub.s32 %s31, %s43
      %p97 = scmp.eq.s32.totalorder %s96, 0
      %s99 = sadd.s32 %s98, 1
      %s100 = scalar_select %p97, %s98, %s99
      %p103 = pneg %p97
      %p104 = scmp.eq.s32.totalorder %s24, 3
      %p105 = por %p103, %p104
      %p106 = scmp.ne.s32.totalorder %s98, %s101
      %p107 = scmp.eq.s32.totalorder %s24, 0
      %p108 = por %p106, %p107
      %p109 = scmp.ne.s32.totalorder %s98, %s101
      %p110 = scmp.eq.s32.totalorder %s29, 3
      %p111 = por %p109, %p110
      %p112 = scmp.ne.s32.totalorder %s101, %s102
      %p113 = scmp.eq.s32.totalorder %s29, 0
      %p114 = por %p112, %p113
      %p115 = scmp.ne.s32.totalorder %s101, %s102
      %p116 = scmp.eq.s32.totalorder %s30, 3
      %p117 = por %p115, %p116
      %p119 = scmp.ne.s32.totalorder %s102, %s118
      %p120 = scmp.eq.s32.totalorder %s30, 0
      %p121 = por %p119, %p120
      %s122 = ssub.s32 %s32, %s39
      %p123 = scmp.eq.s32.totalorder %s122, 0
      %s125 = sadd.s32 %s124, 1
      %s126 = scalar_select %p123, %s124, %s125
      %p129 = pneg %p123
      %p130 = scmp.eq.s32.totalorder %s24, 3
      %p131 = por %p129, %p130
      %p132 = scmp.ne.s32.totalorder %s124, %s127
      %p133 = scmp.eq.s32.totalorder %s24, 0
      %p134 = por %p132, %p133
      %p135 = scmp.ne.s32.totalorder %s124, %s127
      %p136 = scmp.eq.s32.totalorder %s29, 3
      %p137 = por %p135, %p136
      %p138 = scmp.ne.s32.totalorder %s127, %s128
      %p139 = scmp.eq.s32.totalorder %s29, 0
      %p140 = por %p138, %p139
      %p141 = scmp.ne.s32.totalorder %s127, %s128
      %p142 = scmp.eq.s32.totalorder %s30, 3
      %p143 = por %p141, %p142
      %p145 = scmp.ne.s32.totalorder %s128, %s144
      %p146 = scmp.eq.s32.totalorder %s30, 0
      %p147 = por %p145, %p146
      %s148 = ssub.s32 %s32, %s39
      %p149 = scmp.eq.s32.totalorder %s148, 0
      %s151 = sadd.s32 %s150, 1
      %s152 = scalar_select %p149, %s150, %s151
      %p155 = pneg %p149
      %p156 = scmp.eq.s32.totalorder %s24, 3
      %p157 = por %p155, %p156
      %p158 = scmp.ne.s32.totalorder %s150, %s153
      %p159 = scmp.eq.s32.totalorder %s24, 0
      %p160 = por %p158, %p159
      %p161 = scmp.ne.s32.totalorder %s150, %s153
      %p162 = scmp.eq.s32.totalorder %s29, 3
      %p163 = por %p161, %p162
      %p164 = scmp.ne.s32.totalorder %s153, %s154
      %p165 = scmp.eq.s32.totalorder %s29, 0
      %p166 = por %p164, %p165
      %p167 = scmp.ne.s32.totalorder %s153, %s154
      %p168 = scmp.eq.s32.totalorder %s30, 3
      %p169 = por %p167, %p168
      %p171 = scmp.ne.s32.totalorder %s154, %s170
      %p172 = scmp.eq.s32.totalorder %s30, 0
      %p173 = por %p171, %p172
      %s174 = ssub.s32 %s32, %s39
      %p175 = scmp.eq.s32.totalorder %s174, 0
      %s177 = sadd.s32 %s176, 1
      %s178 = scalar_select %p175, %s176, %s177
      %p181 = pneg %p175
      %p182 = scmp.eq.s32.totalorder %s24, 3
      %p183 = por %p181, %p182
      %p184 = scmp.ne.s32.totalorder %s176, %s179
      %p185 = scmp.eq.s32.totalorder %s24, 0
      %p186 = por %p184, %p185
      %p187 = scmp.ne.s32.totalorder %s176, %s179
      %p188 = scmp.eq.s32.totalorder %s29, 3
      %p189 = por %p187, %p188
      %p190 = scmp.ne.s32.totalorder %s179, %s180
      %p191 = scmp.eq.s32.totalorder %s29, 0
      %p192 = por %p190, %p191
      %p193 = scmp.ne.s32.totalorder %s179, %s180
      %p194 = scmp.eq.s32.totalorder %s30, 3
      %p195 = por %p193, %p194
      %p197 = scmp.ne.s32.totalorder %s180, %s196
      %p198 = scmp.eq.s32.totalorder %s30, 0
      %p199 = por %p197, %p198
      %s200 = ssub.s32 %s32, %s39
      %p201 = scmp.eq.s32.totalorder %s200, 0
      %s203 = sadd.s32 %s202, 1
      %s204 = scalar_select %p201, %s202, %s203
      %p207 = pneg %p201
      %p208 = scmp.eq.s32.totalorder %s24, 3
      %p209 = por %p207, %p208
      %p210 = scmp.ne.s32.totalorder %s202, %s205
      %p211 = scmp.eq.s32.totalorder %s24, 0
      %p212 = por %p210, %p211
      %p213 = scmp.ne.s32.totalorder %s202, %s205
      %p214 = scmp.eq.s32.totalorder %s29, 3
      %p215 = por %p213, %p214
      %p216 = scmp.ne.s32.totalorder %s205, %s206
      %p217 = scmp.eq.s32.totalorder %s29, 0
      %p218 = por %p216, %p217
      %p219 = scmp.ne.s32.totalorder %s205, %s206
      %p220 = scmp.eq.s32.totalorder %s30, 3
      %p221 = por %p219, %p220
      %p223 = scmp.ne.s32.totalorder %s206, %s222
      %p224 = scmp.eq.s32.totalorder %s30, 0
      %p225 = por %p223, %p224
      %s226 = ssub.s32 %s32, %s39
      %p227 = scmp.eq.s32.totalorder %s226, 0
      %s229 = sadd.s32 %s228, 1
      %s230 = scalar_select %p227, %s228, %s229
      %p233 = pneg %p227
      %p234 = scmp.eq.s32.totalorder %s24, 3
      %p235 = por %p233, %p234
      %p236 = scmp.ne.s32.totalorder %s228, %s231
      %p237 = scmp.eq.s32.totalorder %s24, 0
      %p238 = por %p236, %p237
      %p239 = scmp.ne.s32.totalorder %s228, %s231
      %p240 = scmp.eq.s32.totalorder %s29, 3
      %p241 = por %p239, %p240
      %p242 = scmp.ne.s32.totalorder %s231, %s232
      %p243 = scmp.eq.s32.totalorder %s29, 0
      %p244 = por %p242, %p243
      %p245 = scmp.ne.s32.totalorder %s231, %s232
      %p246 = scmp.eq.s32.totalorder %s30, 3
      %p247 = por %p245, %p246
      %p249 = scmp.ne.s32.totalorder %s232, %s248
      %p250 = scmp.eq.s32.totalorder %s30, 0
      %p251 = por %p249, %p250
      %s252 = ssub.s32 %s32, %s39
      %p253 = scmp.eq.s32.totalorder %s252, 0
      %s255 = sadd.s32 %s254, 1
      %s256 = scalar_select %p253, %s254, %s255
      %p259 = pneg %p253
      %p260 = scmp.eq.s32.totalorder %s24, 3
      %p261 = por %p259, %p260
      %p262 = scmp.ne.s32.totalorder %s254, %s257
      %p263 = scmp.eq.s32.totalorder %s24, 0
      %p264 = por %p262, %p263
      %p265 = scmp.ne.s32.totalorder %s254, %s257
      %p266 = scmp.eq.s32.totalorder %s29, 3
      %p267 = por %p265, %p266
      %p268 = scmp.ne.s32.totalorder %s257, %s258
      %p269 = scmp.eq.s32.totalorder %s29, 0
      %p270 = por %p268, %p269
      %p271 = scmp.ne.s32.totalorder %s257, %s258
      %p272 = scmp.eq.s32.totalorder %s30, 3
      %p273 = por %p271, %p272
      %p275 = scmp.ne.s32.totalorder %s258, %s274
      %p276 = scmp.eq.s32.totalorder %s30, 0
      %p277 = por %p275, %p276
      %s278 = ssub.s32 %s32, %s39
      %p279 = scmp.eq.s32.totalorder %s278, 0
      %s281 = sadd.s32 %s280, 1
      %s282 = scalar_select %p279, %s280, %s281
      %p285 = pneg %p279
      %p286 = scmp.eq.s32.totalorder %s24, 3
      %p287 = por %p285, %p286
      %p288 = scmp.ne.s32.totalorder %s280, %s283
      %p289 = scmp.eq.s32.totalorder %s24, 0
      %p290 = por %p288, %p289
      %p291 = scmp.ne.s32.totalorder %s280, %s283
      %p292 = scmp.eq.s32.totalorder %s29, 3
      %p293 = por %p291, %p292
      %p294 = scmp.ne.s32.totalorder %s283, %s284
      %p295 = scmp.eq.s32.totalorder %s29, 0
      %p296 = por %p294, %p295
      %p297 = scmp.ne.s32.totalorder %s283, %s284
      %p298 = scmp.eq.s32.totalorder %s30, 3
      %p299 = por %p297, %p298
      %p301 = scmp.ne.s32.totalorder %s284, %s300
      %p302 = scmp.eq.s32.totalorder %s30, 0
      %p303 = por %p301, %p302
      %s304 = ssub.s32 %s32, %s39
      %p305 = scmp.eq.s32.totalorder %s304, 0
      %s307 = sadd.s32 %s306, 1
      %s308 = scalar_select %p305, %s306, %s307
      %p311 = pneg %p305
      %p312 = scmp.eq.s32.totalorder %s24, 3
      %p313 = por %p311, %p312
      %p314 = scmp.ne.s32.totalorder %s306, %s309
      %p315 = scmp.eq.s32.totalorder %s24, 0
      %p316 = por %p314, %p315
      %p317 = scmp.ne.s32.totalorder %s306, %s309
      %p318 = scmp.eq.s32.totalorder %s29, 3
      %p319 = por %p317, %p318
      %p320 = scmp.ne.s32.totalorder %s309, %s310
      %p321 = scmp.eq.s32.totalorder %s29, 0
      %p322 = por %p320, %p321
      %p323 = scmp.ne.s32.totalorder %s309, %s310
      %p324 = scmp.eq.s32.totalorder %s30, 3
      %p325 = por %p323, %p324
      %p327 = scmp.ne.s32.totalorder %s310, %s326
      %p328 = scmp.eq.s32.totalorder %s30, 0
      %p329 = por %p327, %p328
      %s331 = sadd.s32 %s330, 1
      %p334 = scmp.eq.s32.totalorder %s24, 3
      %p335 = scmp.ne.s32.totalorder %s330, %s332
      %p336 = scmp.eq.s32.totalorder %s24, 0
      %p337 = por %p335, %p336
      %p338 = scmp.ne.s32.totalorder %s330, %s332
      %p339 = scmp.eq.s32.totalorder %s29, 3
      %p340 = por %p338, %p339
      %p341 = scmp.ne.s32.totalorder %s332, %s333
      %p342 = scmp.eq.s32.totalorder %s29, 0
      %p343 = por %p341, %p342
      %p344 = scmp.ne.s32.totalorder %s332, %s333
      %p345 = scmp.eq.s32.totalorder %s30, 3
      %p346 = por %p344, %p345
      %p348 = scmp.ne.s32.totalorder %s333, %s347
      %p349 = scmp.eq.s32.totalorder %s30, 0
      %p350 = por %p348, %p349
      %s352 = sadd.s32 %s351, 1
      %p355 = scmp.eq.s32.totalorder %s24, 3
      %p356 = scmp.ne.s32.totalorder %s351, %s353
      %p357 = scmp.eq.s32.totalorder %s24, 0
      %p358 = por %p356, %p357
      %p359 = scmp.ne.s32.totalorder %s351, %s353
      %p360 = scmp.eq.s32.totalorder %s29, 3
      %p361 = por %p359, %p360
      %p362 = scmp.ne.s32.totalorder %s353, %s354
      %p363 = scmp.eq.s32.totalorder %s29, 0
      %p364 = por %p362, %p363
      %p365 = scmp.ne.s32.totalorder %s353, %s354
      %p366 = scmp.eq.s32.totalorder %s30, 3
      %p367 = por %p365, %p366
      %p369 = scmp.ne.s32.totalorder %s354, %s368
      %p370 = scmp.eq.s32.totalorder %s30, 0
      %p371 = por %p369, %p370
      %s372 = ssub.s32 %s31, %s43
      %p373 = scmp.eq.s32.totalorder %s372, 0
      %s375 = sadd.s32 %s374, 1
      %s376 = scalar_select %p373, %s374, %s375
      %p379 = pneg %p373
      %p380 = scmp.eq.s32.totalorder %s24, 3
      %p381 = por %p379, %p380
      %p382 = scmp.ne.s32.totalorder %s374, %s377
      %p383 = scmp.eq.s32.totalorder %s24, 0
      %p384 = por %p382, %p383
      %p385 = scmp.ne.s32.totalorder %s374, %s377
      %p386 = scmp.eq.s32.totalorder %s29, 3
      %p387 = por %p385, %p386
      %p388 = scmp.ne.s32.totalorder %s377, %s378
      %p389 = scmp.eq.s32.totalorder %s29, 0
      %p390 = por %p388, %p389
      %p391 = scmp.ne.s32.totalorder %s377, %s378
      %p392 = scmp.eq.s32.totalorder %s30, 3
      %p393 = por %p391, %p392
      %p395 = scmp.ne.s32.totalorder %s378, %s394
      %p396 = scmp.eq.s32.totalorder %s30, 0
      %p397 = por %p395, %p396
      %s398 = ssub.s32 %s31, %s43
      %p399 = scmp.eq.s32.totalorder %s398, 0
      %s401 = sadd.s32 %s400, 1
      %s402 = scalar_select %p399, %s400, %s401
      %p405 = pneg %p399
      %p406 = scmp.eq.s32.totalorder %s24, 3
      %p407 = por %p405, %p406
      %p408 = scmp.ne.s32.totalorder %s400, %s403
      %p409 = scmp.eq.s32.totalorder %s24, 0
      %p410 = por %p408, %p409
      %p411 = scmp.ne.s32.totalorder %s400, %s403
      %p412 = scmp.eq.s32.totalorder %s29, 3
      %p413 = por %p411, %p412
      %p414 = scmp.ne.s32.totalorder %s403, %s404
      %p415 = scmp.eq.s32.totalorder %s29, 0
      %p416 = por %p414, %p415
      %p417 = scmp.ne.s32.totalorder %s403, %s404
      %p418 = scmp.eq.s32.totalorder %s30, 3
      %p419 = por %p417, %p418
      %p421 = scmp.ne.s32.totalorder %s404, %s420
      %p422 = scmp.eq.s32.totalorder %s30, 0
      %p423 = por %p421, %p422
      %p424 = scmp.le.s32.totalorder 1, %s24
      %p425 = scmp.lt.s32.totalorder %s24, 5
      %p426 = pnand %p424, %p425
      %p427 = pneg %p426
      // Predicated region
      $region9: #{_lambda_.5} parent=5 // pred_check
        _
      $region10: #{_lambda_.5} parent=5 // pred_check_branch
        %429 = sbr.rel (%p426) target = $region12
      $region11: #{_lambda_.5} parent=5 // pred_region
        %s430 = ssub.s32 %s24, 1
        // Predicated region
        $region13: #{_lambda_.5} parent=11 // pred_check
          %p431 = pneg %p343
        $region14: #{_lambda_.5} parent=11 // pred_check_branch
          %433 = sbr.rel (%p431) target = $region16
        $region15: #{_lambda_.5} parent=11 // pred_region
          _
        $region16: #{_lambda_.5} parent=11 // pred_fallthru
          _
        // Predicated region
        $region17: #{_lambda_.5} parent=11 // pred_check
          %p434 = pneg %p364
        $region18: #{_lambda_.5} parent=11 // pred_check_branch
          %436 = sbr.rel (%p434) target = $region20
        $region19: #{_lambda_.5} parent=11 // pred_region
          _
        $region20: #{_lambda_.5} parent=11 // pred_fallthru
          _
      $region12: #{_lambda_.5} parent=5 // pred_fallthru
        _
      %p437 = scmp.lt.s32.totalorder %s24, 4
      // Predicated region
      $region21: #{_lambda_.5} parent=5 // pred_check
        %p438 = pneg %p437
      $region22: #{_lambda_.5} parent=5 // pred_check_branch
        %440 = sbr.rel (%p438) target = $region24
      $region23: #{_lambda_.5} parent=5 // pred_region
        // Predicated region
        $region25: #{_lambda_.5} parent=23 // pred_check
          %p441 = pneg %p56
        $region26: #{_lambda_.5} parent=23 // pred_check_branch
          %443 = sbr.rel (%p441) target = $region28
        $region27: #{_lambda_.5} parent=23 // pred_region
          %p444 = scmp.lt.s32.totalorder %s31, 1
          %s445 = scalar_select %p444, %s31, 1
          %s446 = smul.addr %s445, 8
          %s447 = scalar_lea.vmem %s0, %s446
        $region28: #{_lambda_.5} parent=23 // pred_fallthru
          _
        // Predicated region
        $region29: #{_lambda_.5} parent=23 // pred_check
          %p448 = pneg %p82
        $region30: #{_lambda_.5} parent=23 // pred_check_branch
          %450 = sbr.rel (%p448) target = $region32
        $region31: #{_lambda_.5} parent=23 // pred_region
          %p451 = scmp.lt.s32.totalorder %s31, 1
          %s452 = scalar_select %p451, %s31, 1
          %s453 = smul.addr %s452, 2
          %s454 = smul.addr %s453, 8
          %s455 = scalar_lea.vmem %s1, %s454
        $region32: #{_lambda_.5} parent=23 // pred_fallthru
          _
        // Predicated region
        $region33: #{_lambda_.5} parent=23 // pred_check
          %p456 = pneg %p108
        $region34: #{_lambda_.5} parent=23 // pred_check_branch
          %458 = sbr.rel (%p456) target = $region36
        $region35: #{_lambda_.5} parent=23 // pred_region
          %p459 = scmp.lt.s32.totalorder %s31, 1
          %s460 = scalar_select %p459, %s31, 1
          %s461 = scalar_lea.vmem %s2, %s460
        $region36: #{_lambda_.5} parent=23 // pred_fallthru
          _
        // Predicated region
        $region37: #{_lambda_.5} parent=23 // pred_check
          %p462 = pneg %p134
        $region38: #{_lambda_.5} parent=23 // pred_check_branch
          %464 = sbr.rel (%p462) target = $region40
        $region39: #{_lambda_.5} parent=23 // pred_region
          %p465 = scmp.lt.s32.totalorder %s32, 1
          %s466 = scalar_select %p465, %s32, 1
          %s467 = smul.addr %s466, 4
          %s468 = smul.addr %s467, 8
          %s469 = scalar_lea.vmem %s3, %s468
        $region40: #{_lambda_.5} parent=23 // pred_fallthru
          _
        // Predicated region
        $region41: #{_lambda_.5} parent=23 // pred_check
          %p470 = pneg %p160
        $region42: #{_lambda_.5} parent=23 // pred_check_branch
          %472 = sbr.rel (%p470) target = $region44
        $region43: #{_lambda_.5} parent=23 // pred_region
          %p473 = scmp.lt.s32.totalorder %s32, 1
          %s474 = scalar_select %p473, %s32, 1
          %s475 = smul.addr %s474, 4
          %s476 = smul.addr %s475, 8
          %s477 = scalar_lea.vmem %s4, %s476
        $region44: #{_lambda_.5} parent=23 // pred_fallthru
          _
        // Predicated region
        $region45: #{_lambda_.5} parent=23 // pred_check
          %p478 = pneg %p186
        $region46: #{_lambda_.5} parent=23 // pred_check_branch
          %480 = sbr.rel (%p478) target = $region48
        $region47: #{_lambda_.5} parent=23 // pred_region
          %p481 = scmp.lt.s32.totalorder %s32, 1
          %s482 = scalar_select %p481, %s32, 1
          %s483 = smul.addr %s482, 4
          %s484 = smul.addr %s483, 8
          %s485 = scalar_lea.vmem %s5, %s484
        $region48: #{_lambda_.5} parent=23 // pred_fallthru
          _
        // Predicated region
        $region49: #{_lambda_.5} parent=23 // pred_check
          %p486 = pneg %p212
        $region50: #{_lambda_.5} parent=23 // pred_check_branch
          %488 = sbr.rel (%p486) target = $region52
        $region51: #{_lambda_.5} parent=23 // pred_region
          %p489 = scmp.lt.s32.totalorder %s32, 1
          %s490 = scalar_select %p489, %s32, 1
          %s491 = smul.addr %s490, 4
          %s492 = smul.addr %s491, 8
          %s493 = scalar_lea.vmem %s6, %s492
        $region52: #{_lambda_.5} parent=23 // pred_fallthru
          _
        // Predicated region
        $region53: #{_lambda_.5} parent=23 // pred_check
          %p494 = pneg %p238
        $region54: #{_lambda_.5} parent=23 // pred_check_branch
          %496 = sbr.rel (%p494) target = $region56
        $region55: #{_lambda_.5} parent=23 // pred_region
          %p497 = scmp.lt.s32.totalorder %s32, 1
          %s498 = scalar_select %p497, %s32, 1
          %s499 = smul.addr %s498, 4
          %s500 = smul.addr %s499, 8
          %s501 = scalar_lea.vmem %s7, %s500
        $region56: #{_lambda_.5} parent=23 // pred_fallthru
          _
        // Predicated region
        $region57: #{_lambda_.5} parent=23 // pred_check
          %p502 = pneg %p264
        $region58: #{_lambda_.5} parent=23 // pred_check_branch
          %504 = sbr.rel (%p502) target = $region60
        $region59: #{_lambda_.5} parent=23 // pred_region
          %p505 = scmp.lt.s32.totalorder %s32, 1
          %s506 = scalar_select %p505, %s32, 1
          %s507 = smul.addr %s506, 4
          %s508 = smul.addr %s507, 8
          %s509 = scalar_lea.vmem %s8, %s508
        $region60: #{_lambda_.5} parent=23 // pred_fallthru
          _
        // Predicated region
        $region61: #{_lambda_.5} parent=23 // pred_check
          %p510 = pneg %p290
        $region62: #{_lambda_.5} parent=23 // pred_check_branch
          %512 = sbr.rel (%p510) target = $region64
        $region63: #{_lambda_.5} parent=23 // pred_region
          %p513 = scmp.lt.s32.totalorder %s32, 1
          %s514 = scalar_select %p513, %s32, 1
          %s515 = smul.addr %s514, 8
          %s516 = smul.addr %s515, 8
          %s517 = scalar_lea.vmem %s9, %s516
        $region64: #{_lambda_.5} parent=23 // pred_fallthru
          _
        // Predicated region
        $region65: #{_lambda_.5} parent=23 // pred_check
          %p518 = pneg %p316
        $region66: #{_lambda_.5} parent=23 // pred_check_branch
          %520 = sbr.rel (%p518) target = $region68
        $region67: #{_lambda_.5} parent=23 // pred_region
          %p521 = scmp.lt.s32.totalorder %s32, 1
          %s522 = scalar_select %p521, %s32, 1
          %s523 = smul.addr %s522, 2
          %s524 = smul.addr %s523, 8
          %s525 = scalar_lea.vmem %s10, %s524
        $region68: #{_lambda_.5} parent=23 // pred_fallthru
          _
      $region24: #{_lambda_.5} parent=5 // pred_fallthru
        _
      %p526 = scmp.le.s32.totalorder 1, %s24
      %p527 = scmp.lt.s32.totalorder %s24, 5
      %p528 = pnand %p526, %p527
      %p529 = pneg %p528
      // Predicated region
      $region69: #{_lambda_.5} parent=5 // pred_check
        _
      $region70: #{_lambda_.5} parent=5 // pred_check_branch
        %531 = sbr.rel (%p528) target = $region72
      $region71: #{_lambda_.5} parent=5 // pred_region
        %s532 = ssub.s32 %s24, 1
        %p533 = scmp.lt.s32.totalorder %s33, 1
        %s534 = scalar_select %p533, %s33, 1
        %s535 = smul.addr %s534, 8
        %s536 = scalar_lea.vmem %s0, %s535
        %p537 = pneg %p62
        %p538 = pneg %p59
        %p539 = scmp.lt.s32.totalorder %s33, 1
        %s540 = scalar_select %p539, %s33, 1
        %s541 = smul.addr %s540, 2
        %s542 = smul.addr %s541, 8
        %s543 = scalar_lea.vmem %s1, %s542
        %p544 = pneg %p88
        %p545 = pneg %p85
        %p546 = scmp.lt.s32.totalorder %s33, 1
        %s547 = scalar_select %p546, %s33, 1
        %s548 = scalar_lea.vmem %s2, %s547
        %p549 = pneg %p114
        %p550 = pneg %p111
        %p551 = scmp.lt.s32.totalorder %s34, 1
        %s552 = scalar_select %p551, %s34, 1
        %s553 = smul.addr %s552, 4
        %s554 = smul.addr %s553, 8
        %s555 = scalar_lea.vmem %s3, %s554
        %p556 = pneg %p140
        %p557 = pneg %p137
        %p558 = scmp.lt.s32.totalorder %s34, 1
        %s559 = scalar_select %p558, %s34, 1
        %s560 = smul.addr %s559, 4
        %s561 = smul.addr %s560, 8
        %s562 = scalar_lea.vmem %s4, %s561
        %p563 = pneg %p166
        %p564 = pneg %p163
        %p565 = scmp.lt.s32.totalorder %s34, 1
        %s566 = scalar_select %p565, %s34, 1
        %s567 = smul.addr %s566, 4
        %s568 = smul.addr %s567, 8
        %s569 = scalar_lea.vmem %s5, %s568
        %p570 = pneg %p192
        %p571 = pneg %p189
        %p572 = scmp.lt.s32.totalorder %s34, 1
        %s573 = scalar_select %p572, %s34, 1
        %s574 = smul.addr %s573, 4
        %s575 = smul.addr %s574, 8
        %s576 = scalar_lea.vmem %s6, %s575
        %p577 = pneg %p218
        %p578 = pneg %p215
        %p579 = scmp.lt.s32.totalorder %s34, 1
        %s580 = scalar_select %p579, %s34, 1
        %s581 = smul.addr %s580, 4
        %s582 = smul.addr %s581, 8
        %s583 = scalar_lea.vmem %s7, %s582
        %p584 = pneg %p244
        %p585 = pneg %p241
        %p586 = scmp.lt.s32.totalorder %s34, 1
        %s587 = scalar_select %p586, %s34, 1
        %s588 = smul.addr %s587, 4
        %s589 = smul.addr %s588, 8
        %s590 = scalar_lea.vmem %s8, %s589
        %p591 = pneg %p270
        %p592 = pneg %p267
        %p593 = scmp.lt.s32.totalorder %s34, 1
        %s594 = scalar_select %p593, %s34, 1
        %s595 = smul.addr %s594, 8
        %s596 = smul.addr %s595, 8
        %s597 = scalar_lea.vmem %s9, %s596
        %p598 = pneg %p296
        %p599 = pneg %p293
        %p600 = scmp.lt.s32.totalorder %s34, 1
        %s601 = scalar_select %p600, %s34, 1
        %s602 = smul.addr %s601, 2
        %s603 = smul.addr %s602, 8
        %s604 = scalar_lea.vmem %s10, %s603
        %p605 = pneg %p322
        %p606 = pneg %p319
        %p607 = pneg %p343
        %p608 = pneg %p340
        %p609 = pneg %p364
        %p610 = pneg %p361
        %p611 = pneg %p390
        %p612 = pneg %p387
        %p613 = scmp.lt.s32.totalorder %s33, 1
        %s614 = scalar_select %p613, %s33, 1
        %s615 = smul.addr %s614, 8
        %s616 = scalar_lea.vmem %s13, %s615
        %p617 = pneg %p416
        %p618 = pneg %p413
        %s619 = sand.u32 %s403, 1
        %s620 = scalar_lea.sflag [#allocation4], %s619
        %s621 = sand.u32 %s403, 1
        %s622 = smul.addr %s621, 8
        %s623 = scalar_lea.vmem [#allocation3], %s622
        %p624 = scmp.lt.s32.totalorder %s33, 1
        %s625 = scalar_select %p624, %s33, 1
        %s626 = smul.addr %s625, 8
        %s627 = scalar_lea.vmem %s0, %s626
        %p628 = scmp.lt.s32.totalorder %s33, 1
        %s629 = scalar_select %p628, %s33, 1
        %s630 = smul.addr %s629, 2
        %s631 = smul.addr %s630, 8
        %s632 = scalar_lea.vmem %s1, %s631
        %p633 = scmp.lt.s32.totalorder %s33, 1
        %s634 = scalar_select %p633, %s33, 1
        %s635 = scalar_lea.vmem %s2, %s634
        %p636 = scmp.lt.s32.totalorder %s34, 1
        %s637 = scalar_select %p636, %s34, 1
        %s638 = smul.addr %s637, 4
        %s639 = smul.addr %s638, 8
        %s640 = scalar_lea.vmem %s3, %s639
        %p641 = scmp.lt.s32.totalorder %s34, 1
        %s642 = scalar_select %p641, %s34, 1
        %s643 = smul.addr %s642, 4
        %s644 = smul.addr %s643, 8
        %s645 = scalar_lea.vmem %s4, %s644
        %p646 = scmp.lt.s32.totalorder %s34, 1
        %s647 = scalar_select %p646, %s34, 1
        %s648 = smul.addr %s647, 4
        %s649 = smul.addr %s648, 8
        %s650 = scalar_lea.vmem %s5, %s649
        %p651 = scmp.lt.s32.totalorder %s34, 1
        %s652 = scalar_select %p651, %s34, 1
        %s653 = smul.addr %s652, 4
        %s654 = smul.addr %s653, 8
        %s655 = scalar_lea.vmem %s6, %s654
        %p656 = scmp.lt.s32.totalorder %s34, 1
        %s657 = scalar_select %p656, %s34, 1
        %s658 = smul.addr %s657, 4
        %s659 = smul.addr %s658, 8
        %s660 = scalar_lea.vmem %s7, %s659
        %p661 = scmp.lt.s32.totalorder %s34, 1
        %s662 = scalar_select %p661, %s34, 1
        %s663 = smul.addr %s662, 4
        %s664 = smul.addr %s663, 8
        %s665 = scalar_lea.vmem %s8, %s664
        %p666 = scmp.lt.s32.totalorder %s34, 1
        %s667 = scalar_select %p666, %s34, 1
        %s668 = smul.addr %s667, 8
        %s669 = smul.addr %s668, 8
        %s670 = scalar_lea.vmem %s9, %s669
        %p671 = scmp.lt.s32.totalorder %s34, 1
        %s672 = scalar_select %p671, %s34, 1
        %s673 = smul.addr %s672, 2
        %s674 = smul.addr %s673, 8
        %s675 = scalar_lea.vmem %s10, %s674
        %p676 = scmp.lt.s32.totalorder %s33, 1
        %s677 = scalar_select %p676, %s33, 1
        %s678 = smul.addr %s677, 8
        %s679 = scalar_lea.vmem %s13, %s678
        %p680 = scmp.eq.s32.totalorder %s34, 0
        // Predicated region
        $region73: #{_lambda_.5} parent=71 // pred_check
          %p681 = pneg %p680
        $region74: #{_lambda_.5} parent=71 // pred_check_branch
          %683 = sbr.rel (%p681) target = $region76
        $region75: #{_lambda_.5} parent=71 // pred_region
          %v684 = vld [vmem:[%s627] sm:$0xff]
          %vm685 = vcmask 261120
          %686 = vst.msk [vmem:[#allocation2] sm:$0xff] %vm685, %v684
        $region76: #{_lambda_.5} parent=71 // pred_fallthru
          _
        %v687 = vld [vmem:[#allocation2] sm:$0xff]
        %v688 = vld [vmem:[%s632] sm:$0xff]
        %v689 = vld [vmem:[%s632 + $0x8] sm:$0xf]
        %v690 = vld [vmem:[%s635] sm:$0x1]
        %v691 = vld [vmem:[%s675] sm:$0xff]
        %v692 = vld [vmem:[%s675 + $0x8] sm:$0xff]
        %v693 = vlaneseq
        %v694 = vshrl.u32 %v693, 7
        %v695 = vlaneseq
        %v696 = vand.u32 %v695, 127
        %vm697 = vcmp.gt.s32.totalorder %v696, %v694
        %v698 = vsel %vm697, -1e+09, 0.0
        %v699 = vld [vmem:[%s640] sm:$0xff]
        %v700 = vld [vmem:[%s640 + $0x8] sm:$0xff]
        %v701 = vld [vmem:[%s640 + $0x10] sm:$0xff]
        %v702 = vld [vmem:[%s640 + $0x18] sm:$0xff]
        %v703 = vlaneseq
        %v704 = vshrl.u32 %v703, 7
        %v705 = vsub.s32 0, %v704
        %v706 = vrot.slane %v691, %v705
        %vm707 = vcmask 261120
        %v709 = vsel %vm707, %v687, 0
        %711 = vmatprep.subr.mxu0 0.0
        %712 = vmatpush1.msra.mxu0 0.0
        %713 = vmatprep.subr.mxu0 0.0
        %714 = vmatpush1.msra.mxu0 0.0
        %715 = vmatprep.subr.mxu0 0.0
        %716 = vmatpush1.msra.mxu0 0.0
        %717 = vmatprep.subr.mxu0 0.0
        %718 = vmatpush1.msra.mxu0 0.0
        %719 = vmatprep.subr.mxu0 0.0
        %720 = vmatpush1.msra.mxu0 0.0
        %721 = vmatprep.subr.mxu0 0.0
        %722 = vmatpush1.msra.mxu0 0.0
        %723 = vmatprep.subr.mxu0 0.0
        %724 = vmatpush1.msra.mxu0 0.0
        %725 = vmatprep.subr.mxu0 0.0
        %726 = vmatpush1.msra.mxu0 0.0
        %727 = vmatprep.subr.mxu0 0.0
        %728 = vmatpush1.msra.mxu0 0.0
        %729 = vmatprep.subr.mxu0 0.0
        %730 = vmatpush1.msra.mxu0 0.0
        %731 = vmatprep.subr.mxu0 0.0
        %732 = vmatpush1.msra.mxu0 0.0
        %733 = vmatprep.subr.mxu0 0.0
        %734 = vmatpush1.msra.mxu0 0.0
        %735 = vmatprep.subr.mxu0 0.0
        %736 = vmatpush1.msra.mxu0 %v702
        %737 = vmatprep.subr.mxu0 0.0
        %738 = vmatpush1.msra.mxu0 %v701
        %739 = vmatprep.subr.mxu0 0.0
        %740 = vmatpush1.msra.mxu0 %v700
        %741 = vmatprep.subr.mxu0 0.0
        %742 = vmatpush1.msra.mxu0 %v699
        %743 = vmatprep.subr.mxu0 0.0
        %744 = vmatpush2.msra.mxu0 0.0
        %745 = vmatprep.subr.mxu0 0.0
        %746 = vmatpush2.msra.mxu0 0.0
        %747 = vmatprep.subr.mxu0 0.0
        %748 = vmatpush2.msra.mxu0 0.0
        %749 = vmatprep.subr.mxu0 0.0
        %750 = vmatpush2.msra.mxu0 0.0
        %751 = vmatprep.subr.mxu0 0.0
        %752 = vmatpush2.msra.mxu0 0.0
        %753 = vmatprep.subr.mxu0 0.0
        %754 = vmatpush2.msra.mxu0 0.0
        %755 = vmatprep.subr.mxu0 0.0
        %756 = vmatpush2.msra.mxu0 0.0
        %757 = vmatprep.subr.mxu0 0.0
        %758 = vmatpush2.msra.mxu0 0.0
        %759 = vmatprep.subr.mxu0 0.0
        %760 = vmatpush2.msra.mxu0 0.0
        %761 = vmatprep.subr.mxu0 0.0
        %762 = vmatpush2.msra.mxu0 0.0
        %763 = vmatprep.subr.mxu0 0.0
        %764 = vmatpush2.msra.mxu0 0.0
        %765 = vmatprep.subr.mxu0 0.0
        %766 = vmatpush2.msra.mxu0 0.0
        %767 = vmatprep.subr.mxu0 0.0
        %768 = vmatpush2.msra.mxu0 0.0
        %769 = vmatprep.subr.mxu0 0.0
        %770 = vmatpush2.msra.mxu0 0.0
        %771 = vmatprep.subr.mxu0 0.0
        %772 = vmatpush2.msra.mxu0 0.0
        %773 = vmatprep.subr.mxu0 0.0
        %774 = vmatpush2.msra.mxu0 0.0
        %775 = vmatprep.mubr.f32.mxu0 0.0
        %776 = vmatmul.mubr.f32.gmra.mxu0 %v709
        %v777 = vpop.f32.mrf.mxu0
        %v778 = vadd.f32 %v706, %v777
        %v779 = vpop.f32.mrf.mxu0
        %780 = vdwg.mxu0
        %v781 = vld [vmem:[%s645] sm:$0xff]
        %v782 = vld [vmem:[%s645 + $0x8] sm:$0xff]
        %v783 = vld [vmem:[%s645 + $0x10] sm:$0xff]
        %v784 = vld [vmem:[%s645 + $0x18] sm:$0xff]
        %786 = vrot.lane.b32.xlu0 %v778, 96
        %v787 = vpop.permute.xlu0 %786
        %vm788 = vcmask 64512
        %v789 = vsel %vm788, %v778, 0
        %v791 = vsel %vm788, %v787, 0
        %793 = vmatprep.subr.mxu0 0.0
        %794 = vmatpush1.xpose.msra.mxu0 0.0
        %795 = vmatprep.subr.mxu0 0.0
        %796 = vmatpush1.xpose.msra.mxu0 0.0
        %797 = vmatprep.subr.mxu0 0.0
        %798 = vmatpush1.xpose.msra.mxu0 0.0
        %799 = vmatprep.subr.mxu0 0.0
        %800 = vmatpush1.xpose.msra.mxu0 0.0
        %801 = vmatprep.subr.mxu0 0.0
        %802 = vmatpush1.xpose.msra.mxu0 0.0
        %803 = vmatprep.subr.mxu0 0.0
        %804 = vmatpush1.xpose.msra.mxu0 0.0
        %805 = vmatprep.subr.mxu0 0.0
        %806 = vmatpush1.xpose.msra.mxu0 0.0
        %807 = vmatprep.subr.mxu0 0.0
        %808 = vmatpush1.xpose.msra.mxu0 0.0
        %809 = vmatprep.subr.mxu0 0.0
        %810 = vmatpush1.xpose.msra.mxu0 0.0
        %811 = vmatprep.subr.mxu0 0.0
        %812 = vmatpush1.xpose.msra.mxu0 0.0
        %813 = vmatprep.subr.mxu0 0.0
        %814 = vmatpush1.xpose.msra.mxu0 0.0
        %815 = vmatprep.subr.mxu0 0.0
        %816 = vmatpush1.xpose.msra.mxu0 0.0
        %817 = vmatprep.subr.mxu0 0.0
        %818 = vmatpush1.xpose.msra.mxu0 0.0
        %819 = vmatprep.subr.mxu0 0.0
        %820 = vmatpush1.xpose.msra.mxu0 0.0
        %821 = vmatprep.subr.mxu0 0.0
        %822 = vmatpush1.xpose.msra.mxu0 0.0
        %823 = vmatprep.subr.mxu0 0.0
        %824 = vmatpush1.xpose.msra.mxu0 %v791
        %825 = vmatprep.subr.mxu0 0.0
        %826 = vmatpush2.xpose.msra.mxu0 0.0
        %827 = vmatprep.subr.mxu0 0.0
        %828 = vmatpush2.xpose.msra.mxu0 0.0
        %829 = vmatprep.subr.mxu0 0.0
        %830 = vmatpush2.xpose.msra.mxu0 0.0
        %831 = vmatprep.subr.mxu0 0.0
        %832 = vmatpush2.xpose.msra.mxu0 0.0
        %833 = vmatprep.subr.mxu0 0.0
        %834 = vmatpush2.xpose.msra.mxu0 0.0
        %835 = vmatprep.subr.mxu0 0.0
        %836 = vmatpush2.xpose.msra.mxu0 0.0
        %837 = vmatprep.subr.mxu0 0.0
        %838 = vmatpush2.xpose.msra.mxu0 0.0
        %839 = vmatprep.subr.mxu0 0.0
        %840 = vmatpush2.xpose.msra.mxu0 0.0
        %841 = vmatprep.subr.mxu0 0.0
        %842 = vmatpush2.xpose.msra.mxu0 0.0
        %843 = vmatprep.subr.mxu0 0.0
        %844 = vmatpush2.xpose.msra.mxu0 0.0
        %845 = vmatprep.subr.mxu0 0.0
        %846 = vmatpush2.xpose.msra.mxu0 0.0
        %847 = vmatprep.subr.mxu0 0.0
        %848 = vmatpush2.xpose.msra.mxu0 0.0
        %849 = vmatprep.subr.mxu0 0.0
        %850 = vmatpush2.xpose.msra.mxu0 0.0
        %851 = vmatprep.subr.mxu0 0.0
        %852 = vmatpush2.xpose.msra.mxu0 0.0
        %853 = vmatprep.subr.mxu0 0.0
        %854 = vmatpush2.xpose.msra.mxu0 0.0
        %855 = vmatprep.subr.mxu0 0.0
        %856 = vmatpush2.xpose.msra.mxu0 0.0
        %857 = vmatprep.mubr.f32.mxu0 0.0
        %858 = vmatmul.mubr.f32.gmra.mxu0 %v789
        %v859 = vpop.f32.mrf.mxu0
        %v860 = vadd.f32 0.0, %v859
        %v861 = vpop.f32.mrf.mxu0
        %862 = vdwg.mxu0
        %v863 = vmul.f32 %v860, 0.35355338
        %v864 = vadd.f32 %v863, %v698
        %v865 = vsel %vm788, %v864, -inf
        %866 = vmax.xlane.f32.xlu0 %v865
        %v867 = vpop.xlane.xlu0 %866
        %v868 = vsub.f32 %v864, %v867
        %v869 = vmul.f32 %v868, 1.442695
        %v870 = vpow.pop %v869
        %v871 = vsel %vm788, %v870, 0.0
        %872 = vadd.xlane.f32.xlu0 %v871
        %v873 = vpop.xlane.xlu0 %872
        %v874 = vrcp.pop %v873
        %v875 = vmul.f32 %v870, %v874
        %876 = vrot.lane.b32.xlu0 %v778, 64
        %v877 = vpop.permute.xlu0 %876
        %v880 = vsel %vm788, %v875, 0
        %882 = vmatprep.subr.mxu0 0.0
        %883 = vmatpush1.msra.mxu0 0.0
        %884 = vmatprep.subr.mxu0 0.0
        %885 = vmatpush1.msra.mxu0 0.0
        %886 = vmatprep.subr.mxu0 0.0
        %887 = vmatpush1.msra.mxu0 0.0
        %888 = vmatprep.subr.mxu0 0.0
        %889 = vmatpush1.msra.mxu0 0.0
        %890 = vmatprep.subr.mxu0 0.0
        %891 = vmatpush1.msra.mxu0 0.0
        %892 = vmatprep.subr.mxu0 0.0
        %893 = vmatpush1.msra.mxu0 0.0
        %894 = vmatprep.subr.mxu0 0.0
        %895 = vmatpush1.msra.mxu0 0.0
        %896 = vmatprep.subr.mxu0 0.0
        %897 = vmatpush1.msra.mxu0 0.0
        %898 = vmatprep.subr.mxu0 0.0
        %899 = vmatpush1.msra.mxu0 0.0
        %900 = vmatprep.subr.mxu0 0.0
        %901 = vmatpush1.msra.mxu0 0.0
        %902 = vmatprep.subr.mxu0 0.0
        %903 = vmatpush1.msra.mxu0 0.0
        %904 = vmatprep.subr.mxu0 0.0
        %905 = vmatpush1.msra.mxu0 0.0
        %906 = vmatprep.subr.mxu0 0.0
        %907 = vmatpush1.msra.mxu0 0.0
        %908 = vmatprep.subr.mxu0 0.0
        %909 = vmatpush1.msra.mxu0 0.0
        %910 = vmatprep.subr.mxu0 0.0
        %911 = vmatpush1.msra.mxu0 0.0
        %912 = vmatprep.subr.mxu0 0.0
        %913 = vmatpush1.msra.mxu0 %v877
        %914 = vmatprep.subr.mxu0 0.0
        %915 = vmatpush2.msra.mxu0 0.0
        %916 = vmatprep.subr.mxu0 0.0
        %917 = vmatpush2.msra.mxu0 0.0
        %918 = vmatprep.subr.mxu0 0.0
        %919 = vmatpush2.msra.mxu0 0.0
        %920 = vmatprep.subr.mxu0 0.0
        %921 = vmatpush2.msra.mxu0 0.0
        %922 = vmatprep.subr.mxu0 0.0
        %923 = vmatpush2.msra.mxu0 0.0
        %924 = vmatprep.subr.mxu0 0.0
        %925 = vmatpush2.msra.mxu0 0.0
        %926 = vmatprep.subr.mxu0 0.0
        %927 = vmatpush2.msra.mxu0 0.0
        %928 = vmatprep.subr.mxu0 0.0
        %929 = vmatpush2.msra.mxu0 0.0
        %930 = vmatprep.subr.mxu0 0.0
        %931 = vmatpush2.msra.mxu0 0.0
        %932 = vmatprep.subr.mxu0 0.0
        %933 = vmatpush2.msra.mxu0 0.0
        %934 = vmatprep.subr.mxu0 0.0
        %935 = vmatpush2.msra.mxu0 0.0
        %936 = vmatprep.subr.mxu0 0.0
        %937 = vmatpush2.msra.mxu0 0.0
        %938 = vmatprep.subr.mxu0 0.0
        %939 = vmatpush2.msra.mxu0 0.0
        %940 = vmatprep.subr.mxu0 0.0
        %941 = vmatpush2.msra.mxu0 0.0
        %942 = vmatprep.subr.mxu0 0.0
        %943 = vmatpush2.msra.mxu0 0.0
        %944 = vmatprep.subr.mxu0 0.0
        %945 = vmatpush2.msra.mxu0 0.0
        %946 = vmatprep.mubr.f32.mxu0 0.0
        %947 = vmatmul.mubr.f32.gmra.mxu0 %v880
        %v948 = vpop.f32.mrf.mxu0
        %v949 = vadd.f32 0.0, %v948
        %v950 = vpop.f32.mrf.mxu0
        %951 = vdwg.mxu0
        %952 = vrot.lane.b32.xlu0 %v778, 120
        %v953 = vpop.permute.xlu0 %952
        %954 = vrot.lane.b32.xlu0 %v778, 88
        %v955 = vpop.permute.xlu0 %954
        %v956 = vsel %vm788, %v953, 0
        %v958 = vsel %vm788, %v955, 0
        %960 = vmatprep.subr.mxu0 0.0
        %961 = vmatpush1.xpose.msra.mxu0 0.0
        %962 = vmatprep.subr.mxu0 0.0
        %963 = vmatpush1.xpose.msra.mxu0 0.0
        %964 = vmatprep.subr.mxu0 0.0
        %965 = vmatpush1.xpose.msra.mxu0 0.0
        %966 = vmatprep.subr.mxu0 0.0
        %967 = vmatpush1.xpose.msra.mxu0 0.0
        %968 = vmatprep.subr.mxu0 0.0
        %969 = vmatpush1.xpose.msra.mxu0 0.0
        %970 = vmatprep.subr.mxu0 0.0
        %971 = vmatpush1.xpose.msra.mxu0 0.0
        %972 = vmatprep.subr.mxu0 0.0
        %973 = vmatpush1.xpose.msra.mxu0 0.0
        %974 = vmatprep.subr.mxu0 0.0
        %975 = vmatpush1.xpose.msra.mxu0 0.0
        %976 = vmatprep.subr.mxu0 0.0
        %977 = vmatpush1.xpose.msra.mxu0 0.0
        %978 = vmatprep.subr.mxu0 0.0
        %979 = vmatpush1.xpose.msra.mxu0 0.0
        %980 = vmatprep.subr.mxu0 0.0
        %981 = vmatpush1.xpose.msra.mxu0 0.0
        %982 = vmatprep.subr.mxu0 0.0
        %983 = vmatpush1.xpose.msra.mxu0 0.0
        %984 = vmatprep.subr.mxu0 0.0
        %985 = vmatpush1.xpose.msra.mxu0 0.0
        %986 = vmatprep.subr.mxu0 0.0
        %987 = vmatpush1.xpose.msra.mxu0 0.0
        %988 = vmatprep.subr.mxu0 0.0
        %989 = vmatpush1.xpose.msra.mxu0 0.0
        %990 = vmatprep.subr.mxu0 0.0
        %991 = vmatpush1.xpose.msra.mxu0 %v958
        %992 = vmatprep.subr.mxu0 0.0
        %993 = vmatpush2.xpose.msra.mxu0 0.0
        %994 = vmatprep.subr.mxu0 0.0
        %995 = vmatpush2.xpose.msra.mxu0 0.0
        %996 = vmatprep.subr.mxu0 0.0
        %997 = vmatpush2.xpose.msra.mxu0 0.0
        %998 = vmatprep.subr.mxu0 0.0
        %999 = vmatpush2.xpose.msra.mxu0 0.0
        %1000 = vmatprep.subr.mxu0 0.0
        %1001 = vmatpush2.xpose.msra.mxu0 0.0
        %1002 = vmatprep.subr.mxu0 0.0
        %1003 = vmatpush2.xpose.msra.mxu0 0.0
        %1004 = vmatprep.subr.mxu0 0.0
        %1005 = vmatpush2.xpose.msra.mxu0 0.0
        %1006 = vmatprep.subr.mxu0 0.0
        %1007 = vmatpush2.xpose.msra.mxu0 0.0
        %1008 = vmatprep.subr.mxu0 0.0
        %1009 = vmatpush2.xpose.msra.mxu0 0.0
        %1010 = vmatprep.subr.mxu0 0.0
        %1011 = vmatpush2.xpose.msra.mxu0 0.0
        %1012 = vmatprep.subr.mxu0 0.0
        %1013 = vmatpush2.xpose.msra.mxu0 0.0
        %1014 = vmatprep.subr.mxu0 0.0
        %1015 = vmatpush2.xpose.msra.mxu0 0.0
        %1016 = vmatprep.subr.mxu0 0.0
        %1017 = vmatpush2.xpose.msra.mxu0 0.0
        %1018 = vmatprep.subr.mxu0 0.0
        %1019 = vmatpush2.xpose.msra.mxu0 0.0
        %1020 = vmatprep.subr.mxu0 0.0
        %1021 = vmatpush2.xpose.msra.mxu0 0.0
        %1022 = vmatprep.subr.mxu0 0.0
        %1023 = vmatpush2.xpose.msra.mxu0 0.0
        %1024 = vmatprep.mubr.f32.mxu0 0.0
        %1025 = vmatmul.mubr.f32.gmra.mxu0 %v956
        %v1026 = vpop.f32.mrf.mxu0
        %v1027 = vadd.f32 0.0, %v1026
        %v1028 = vpop.f32.mrf.mxu0
        %1029 = vdwg.mxu0
        %v1030 = vmul.f32 %v1027, 0.35355338
        %v1031 = vadd.f32 %v1030, %v698
        %v1032 = vsel %vm788, %v1031, -inf
        %1033 = vmax.xlane.f32.xlu0 %v1032
        %v1034 = vpop.xlane.xlu0 %1033
        %v1035 = vsub.f32 %v1031, %v1034
        %v1036 = vmul.f32 %v1035, 1.442695
        %v1037 = vpow.pop %v1036
        %v1038 = vsel %vm788, %v1037, 0.0
        %1039 = vadd.xlane.f32.xlu0 %v1038
        %v1040 = vpop.xlane.xlu0 %1039
        %v1041 = vrcp.pop %v1040
        %v1042 = vmul.f32 %v1037, %v1041
        %1043 = vrot.lane.b32.xlu0 %v778, 56
        %v1044 = vpop.permute.xlu0 %1043
        %v1047 = vsel %vm788, %v1042, 0
        %1049 = vmatprep.subr.mxu0 0.0
        %1050 = vmatpush1.msra.mxu0 0.0
        %1051 = vmatprep.subr.mxu0 0.0
        %1052 = vmatpush1.msra.mxu0 0.0
        %1053 = vmatprep.subr.mxu0 0.0
        %1054 = vmatpush1.msra.mxu0 0.0
        %1055 = vmatprep.subr.mxu0 0.0
        %1056 = vmatpush1.msra.mxu0 0.0
        %1057 = vmatprep.subr.mxu0 0.0
        %1058 = vmatpush1.msra.mxu0 0.0
        %1059 = vmatprep.subr.mxu0 0.0
        %1060 = vmatpush1.msra.mxu0 0.0
        %1061 = vmatprep.subr.mxu0 0.0
        %1062 = vmatpush1.msra.mxu0 0.0
        %1063 = vmatprep.subr.mxu0 0.0
        %1064 = vmatpush1.msra.mxu0 0.0
        %1065 = vmatprep.subr.mxu0 0.0
        %1066 = vmatpush1.msra.mxu0 0.0
        %1067 = vmatprep.subr.mxu0 0.0
        %1068 = vmatpush1.msra.mxu0 0.0
        %1069 = vmatprep.subr.mxu0 0.0
        %1070 = vmatpush1.msra.mxu0 0.0
        %1071 = vmatprep.subr.mxu0 0.0
        %1072 = vmatpush1.msra.mxu0 0.0
        %1073 = vmatprep.subr.mxu0 0.0
        %1074 = vmatpush1.msra.mxu0 0.0
        %1075 = vmatprep.subr.mxu0 0.0
        %1076 = vmatpush1.msra.mxu0 0.0
        %1077 = vmatprep.subr.mxu0 0.0
        %1078 = vmatpush1.msra.mxu0 0.0
        %1079 = vmatprep.subr.mxu0 0.0
        %1080 = vmatpush1.msra.mxu0 %v1044
        %1081 = vmatprep.subr.mxu0 0.0
        %1082 = vmatpush2.msra.mxu0 0.0
        %1083 = vmatprep.subr.mxu0 0.0
        %1084 = vmatpush2.msra.mxu0 0.0
        %1085 = vmatprep.subr.mxu0 0.0
        %1086 = vmatpush2.msra.mxu0 0.0
        %1087 = vmatprep.subr.mxu0 0.0
        %1088 = vmatpush2.msra.mxu0 0.0
        %1089 = vmatprep.subr.mxu0 0.0
        %1090 = vmatpush2.msra.mxu0 0.0
        %1091 = vmatprep.subr.mxu0 0.0
        %1092 = vmatpush2.msra.mxu0 0.0
        %1093 = vmatprep.subr.mxu0 0.0
        %1094 = vmatpush2.msra.mxu0 0.0
        %1095 = vmatprep.subr.mxu0 0.0
        %1096 = vmatpush2.msra.mxu0 0.0
        %1097 = vmatprep.subr.mxu0 0.0
        %1098 = vmatpush2.msra.mxu0 0.0
        %1099 = vmatprep.subr.mxu0 0.0
        %1100 = vmatpush2.msra.mxu0 0.0
        %1101 = vmatprep.subr.mxu0 0.0
        %1102 = vmatpush2.msra.mxu0 0.0
        %1103 = vmatprep.subr.mxu0 0.0
        %1104 = vmatpush2.msra.mxu0 0.0
        %1105 = vmatprep.subr.mxu0 0.0
        %1106 = vmatpush2.msra.mxu0 0.0
        %1107 = vmatprep.subr.mxu0 0.0
        %1108 = vmatpush2.msra.mxu0 0.0
        %1109 = vmatprep.subr.mxu0 0.0
        %1110 = vmatpush2.msra.mxu0 0.0
        %1111 = vmatprep.subr.mxu0 0.0
        %1112 = vmatpush2.msra.mxu0 0.0
        %1113 = vmatprep.mubr.f32.mxu0 0.0
        %1114 = vmatmul.mubr.f32.gmra.mxu0 %v1047
        %v1115 = vpop.f32.mrf.mxu0
        %v1116 = vadd.f32 0.0, %v1115
        %v1117 = vpop.f32.mrf.mxu0
        %1118 = vdwg.mxu0
        %v1120 = vsel %vm788, %v1116, 0
        %1122 = vmatprep.subr.mxu0 0.0
        %1123 = vmatpush1.msra.mxu0 0.0
        %1124 = vmatprep.subr.mxu0 0.0
        %1125 = vmatpush1.msra.mxu0 0.0
        %1126 = vmatprep.subr.mxu0 0.0
        %1127 = vmatpush1.msra.mxu0 0.0
        %1128 = vmatprep.subr.mxu0 0.0
        %1129 = vmatpush1.msra.mxu0 0.0
        %1130 = vmatprep.subr.mxu0 0.0
        %1131 = vmatpush1.msra.mxu0 0.0
        %1132 = vmatprep.subr.mxu0 0.0
        %1133 = vmatpush1.msra.mxu0 0.0
        %1134 = vmatprep.subr.mxu0 0.0
        %1135 = vmatpush1.msra.mxu0 0.0
        %1136 = vmatprep.subr.mxu0 0.0
        %1137 = vmatpush1.msra.mxu0 0.0
        %1138 = vmatprep.subr.mxu0 0.0
        %1139 = vmatpush1.msra.mxu0 0.0
        %1140 = vmatprep.subr.mxu0 0.0
        %1141 = vmatpush1.msra.mxu0 0.0
        %1142 = vmatprep.subr.mxu0 0.0
        %1143 = vmatpush1.msra.mxu0 0.0
        %1144 = vmatprep.subr.mxu0 0.0
        %1145 = vmatpush1.msra.mxu0 0.0
        %1146 = vmatprep.subr.mxu0 0.0
        %1147 = vmatpush1.msra.mxu0 0.0
        %1148 = vmatprep.subr.mxu0 0.0
        %1149 = vmatpush1.msra.mxu0 0.0
        %1150 = vmatprep.subr.mxu0 0.0
        %1151 = vmatpush1.msra.mxu0 0.0
        %1152 = vmatprep.subr.mxu0 0.0
        %1153 = vmatpush1.msra.mxu0 %v782
        %1154 = vmatprep.subr.mxu0 0.0
        %1155 = vmatpush2.msra.mxu0 0.0
        %1156 = vmatprep.subr.mxu0 0.0
        %1157 = vmatpush2.msra.mxu0 0.0
        %1158 = vmatprep.subr.mxu0 0.0
        %1159 = vmatpush2.msra.mxu0 0.0
        %1160 = vmatprep.subr.mxu0 0.0
        %1161 = vmatpush2.msra.mxu0 0.0
        %1162 = vmatprep.subr.mxu0 0.0
        %1163 = vmatpush2.msra.mxu0 0.0
        %1164 = vmatprep.subr.mxu0 0.0
        %1165 = vmatpush2.msra.mxu0 0.0
        %1166 = vmatprep.subr.mxu0 0.0
        %1167 = vmatpush2.msra.mxu0 0.0
        %1168 = vmatprep.subr.mxu0 0.0
        %1169 = vmatpush2.msra.mxu0 0.0
        %1170 = vmatprep.subr.mxu0 0.0
        %1171 = vmatpush2.msra.mxu0 0.0
        %1172 = vmatprep.subr.mxu0 0.0
        %1173 = vmatpush2.msra.mxu0 0.0
        %1174 = vmatprep.subr.mxu0 0.0
        %1175 = vmatpush2.msra.mxu0 0.0
        %1176 = vmatprep.subr.mxu0 0.0
        %1177 = vmatpush2.msra.mxu0 0.0
        %1178 = vmatprep.subr.mxu0 0.0
        %1179 = vmatpush2.msra.mxu0 0.0
        %1180 = vmatprep.subr.mxu0 0.0
        %1181 = vmatpush2.msra.mxu0 0.0
        %1182 = vmatprep.subr.mxu0 0.0
        %1183 = vmatpush2.msra.mxu0 0.0
        %1184 = vmatprep.subr.mxu0 0.0
        %1185 = vmatpush2.msra.mxu0 0.0
        %1186 = vmatprep.mubr.f32.mxu0 0.0
        %1187 = vmatmul.mubr.f32.gmra.mxu0 %v1120
        %v1188 = vpop.f32.mrf.mxu0
        %v1189 = vadd.f32 0.0, %v1188
        %v1190 = vpop.f32.mrf.mxu0
        %1191 = vdwg.mxu0
        %v1193 = vsel %vm788, %v949, 0
        %1195 = vmatprep.subr.mxu0 0.0
        %1196 = vmatpush1.msra.mxu0 0.0
        %1197 = vmatprep.subr.mxu0 0.0
        %1198 = vmatpush1.msra.mxu0 0.0
        %1199 = vmatprep.subr.mxu0 0.0
        %1200 = vmatpush1.msra.mxu0 0.0
        %1201 = vmatprep.subr.mxu0 0.0
        %1202 = vmatpush1.msra.mxu0 0.0
        %1203 = vmatprep.subr.mxu0 0.0
        %1204 = vmatpush1.msra.mxu0 0.0
        %1205 = vmatprep.subr.mxu0 0.0
        %1206 = vmatpush1.msra.mxu0 0.0
        %1207 = vmatprep.subr.mxu0 0.0
        %1208 = vmatpush1.msra.mxu0 0.0
        %1209 = vmatprep.subr.mxu0 0.0
        %1210 = vmatpush1.msra.mxu0 0.0
        %1211 = vmatprep.subr.mxu0 0.0
        %1212 = vmatpush1.msra.mxu0 0.0
        %1213 = vmatprep.subr.mxu0 0.0
        %1214 = vmatpush1.msra.mxu0 0.0
        %1215 = vmatprep.subr.mxu0 0.0
        %1216 = vmatpush1.msra.mxu0 0.0
        %1217 = vmatprep.subr.mxu0 0.0
        %1218 = vmatpush1.msra.mxu0 0.0
        %1219 = vmatprep.subr.mxu0 0.0
        %1220 = vmatpush1.msra.mxu0 0.0
        %1221 = vmatprep.subr.mxu0 0.0
        %1222 = vmatpush1.msra.mxu0 0.0
        %1223 = vmatprep.subr.mxu0 0.0
        %1224 = vmatpush1.msra.mxu0 0.0
        %1225 = vmatprep.subr.mxu0 0.0
        %1226 = vmatpush1.msra.mxu0 %v781
        %1227 = vmatprep.subr.mxu0 0.0
        %1228 = vmatpush2.msra.mxu0 0.0
        %1229 = vmatprep.subr.mxu0 0.0
        %1230 = vmatpush2.msra.mxu0 0.0
        %1231 = vmatprep.subr.mxu0 0.0
        %1232 = vmatpush2.msra.mxu0 0.0
        %1233 = vmatprep.subr.mxu0 0.0
        %1234 = vmatpush2.msra.mxu0 0.0
        %1235 = vmatprep.subr.mxu0 0.0
        %1236 = vmatpush2.msra.mxu0 0.0
        %1237 = vmatprep.subr.mxu0 0.0
        %1238 = vmatpush2.msra.mxu0 0.0
        %1239 = vmatprep.subr.mxu0 0.0
        %1240 = vmatpush2.msra.mxu0 0.0
        %1241 = vmatprep.subr.mxu0 0.0
        %1242 = vmatpush2.msra.mxu0 0.0
        %1243 = vmatprep.subr.mxu0 0.0
        %1244 = vmatpush2.msra.mxu0 0.0
        %1245 = vmatprep.subr.mxu0 0.0
        %1246 = vmatpush2.msra.mxu0 0.0
        %1247 = vmatprep.subr.mxu0 0.0
        %1248 = vmatpush2.msra.mxu0 0.0
        %1249 = vmatprep.subr.mxu0 0.0
        %1250 = vmatpush2.msra.mxu0 0.0
        %1251 = vmatprep.subr.mxu0 0.0
        %1252 = vmatpush2.msra.mxu0 0.0
        %1253 = vmatprep.subr.mxu0 0.0
        %1254 = vmatpush2.msra.mxu0 0.0
        %1255 = vmatprep.subr.mxu0 0.0
        %1256 = vmatpush2.msra.mxu0 0.0
        %1257 = vmatprep.subr.mxu0 0.0
        %1258 = vmatpush2.msra.mxu0 0.0
        %1259 = vmatprep.mubr.f32.mxu0 0.0
        %1260 = vmatmul.mubr.f32.gmra.mxu0 %v1193
        %v1261 = vpop.f32.mrf.mxu0
        %v1262 = vadd.f32 %v1189, %v1261
        %v1263 = vpop.f32.mrf.mxu0
        %1264 = vdwg.mxu0
        %1265 = vrot.lane.b32.xlu0 %v778, 112
        %v1266 = vpop.permute.xlu0 %1265
        %1267 = vrot.lane.b32.xlu0 %v778, 80
        %v1268 = vpop.permute.xlu0 %1267
        %v1269 = vsel %vm788, %v1266, 0
        %v1271 = vsel %vm788, %v1268, 0
        %1273 = vmatprep.subr.mxu0 0.0
        %1274 = vmatpush1.xpose.msra.mxu0 0.0
        %1275 = vmatprep.subr.mxu0 0.0
        %1276 = vmatpush1.xpose.msra.mxu0 0.0
        %1277 = vmatprep.subr.mxu0 0.0
        %1278 = vmatpush1.xpose.msra.mxu0 0.0
        %1279 = vmatprep.subr.mxu0 0.0
        %1280 = vmatpush1.xpose.msra.mxu0 0.0
        %1281 = vmatprep.subr.mxu0 0.0
        %1282 = vmatpush1.xpose.msra.mxu0 0.0
        %1283 = vmatprep.subr.mxu0 0.0
        %1284 = vmatpush1.xpose.msra.mxu0 0.0
        %1285 = vmatprep.subr.mxu0 0.0
        %1286 = vmatpush1.xpose.msra.mxu0 0.0
        %1287 = vmatprep.subr.mxu0 0.0
        %1288 = vmatpush1.xpose.msra.mxu0 0.0
        %1289 = vmatprep.subr.mxu0 0.0
        %1290 = vmatpush1.xpose.msra.mxu0 0.0
        %1291 = vmatprep.subr.mxu0 0.0
        %1292 = vmatpush1.xpose.msra.mxu0 0.0
        %1293 = vmatprep.subr.mxu0 0.0
        %1294 = vmatpush1.xpose.msra.mxu0 0.0
        %1295 = vmatprep.subr.mxu0 0.0
        %1296 = vmatpush1.xpose.msra.mxu0 0.0
        %1297 = vmatprep.subr.mxu0 0.0
        %1298 = vmatpush1.xpose.msra.mxu0 0.0
        %1299 = vmatprep.subr.mxu0 0.0
        %1300 = vmatpush1.xpose.msra.mxu0 0.0
        %1301 = vmatprep.subr.mxu0 0.0
        %1302 = vmatpush1.xpose.msra.mxu0 0.0
        %1303 = vmatprep.subr.mxu0 0.0
        %1304 = vmatpush1.xpose.msra.mxu0 %v1271
        %1305 = vmatprep.subr.mxu0 0.0
        %1306 = vmatpush2.xpose.msra.mxu0 0.0
        %1307 = vmatprep.subr.mxu0 0.0
        %1308 = vmatpush2.xpose.msra.mxu0 0.0
        %1309 = vmatprep.subr.mxu0 0.0
        %1310 = vmatpush2.xpose.msra.mxu0 0.0
        %1311 = vmatprep.subr.mxu0 0.0
        %1312 = vmatpush2.xpose.msra.mxu0 0.0
        %1313 = vmatprep.subr.mxu0 0.0
        %1314 = vmatpush2.xpose.msra.mxu0 0.0
        %1315 = vmatprep.subr.mxu0 0.0
        %1316 = vmatpush2.xpose.msra.mxu0 0.0
        %1317 = vmatprep.subr.mxu0 0.0
        %1318 = vmatpush2.xpose.msra.mxu0 0.0
        %1319 = vmatprep.subr.mxu0 0.0
        %1320 = vmatpush2.xpose.msra.mxu0 0.0
        %1321 = vmatprep.subr.mxu0 0.0
        %1322 = vmatpush2.xpose.msra.mxu0 0.0
        %1323 = vmatprep.subr.mxu0 0.0
        %1324 = vmatpush2.xpose.msra.mxu0 0.0
        %1325 = vmatprep.subr.mxu0 0.0
        %1326 = vmatpush2.xpose.msra.mxu0 0.0
        %1327 = vmatprep.subr.mxu0 0.0
        %1328 = vmatpush2.xpose.msra.mxu0 0.0
        %1329 = vmatprep.subr.mxu0 0.0
        %1330 = vmatpush2.xpose.msra.mxu0 0.0
        %1331 = vmatprep.subr.mxu0 0.0
        %1332 = vmatpush2.xpose.msra.mxu0 0.0
        %1333 = vmatprep.subr.mxu0 0.0
        %1334 = vmatpush2.xpose.msra.mxu0 0.0
        %1335 = vmatprep.subr.mxu0 0.0
        %1336 = vmatpush2.xpose.msra.mxu0 0.0
        %1337 = vmatprep.mubr.f32.mxu0 0.0
        %1338 = vmatmul.mubr.f32.gmra.mxu0 %v1269
        %v1339 = vpop.f32.mrf.mxu0
        %v1340 = vadd.f32 0.0, %v1339
        %v1341 = vpop.f32.mrf.mxu0
        %1342 = vdwg.mxu0
        %v1343 = vmul.f32 %v1340, 0.35355338
        %v1344 = vadd.f32 %v1343, %v698
        %v1345 = vsel %vm788, %v1344, -inf
        %1346 = vmax.xlane.f32.xlu0 %v1345
        %v1347 = vpop.xlane.xlu0 %1346
        %v1348 = vsub.f32 %v1344, %v1347
        %v1349 = vmul.f32 %v1348, 1.442695
        %v1350 = vpow.pop %v1349
        %v1351 = vsel %vm788, %v1350, 0.0
        %1352 = vadd.xlane.f32.xlu0 %v1351
        %v1353 = vpop.xlane.xlu0 %1352
        %v1354 = vrcp.pop %v1353
        %v1355 = vmul.f32 %v1350, %v1354
        %1356 = vrot.lane.b32.xlu0 %v778, 48
        %v1357 = vpop.permute.xlu0 %1356
        %v1360 = vsel %vm788, %v1355, 0
        %1362 = vmatprep.subr.mxu0 0.0
        %1363 = vmatpush1.msra.mxu0 0.0
        %1364 = vmatprep.subr.mxu0 0.0
        %1365 = vmatpush1.msra.mxu0 0.0
        %1366 = vmatprep.subr.mxu0 0.0
        %1367 = vmatpush1.msra.mxu0 0.0
        %1368 = vmatprep.subr.mxu0 0.0
        %1369 = vmatpush1.msra.mxu0 0.0
        %1370 = vmatprep.subr.mxu0 0.0
        %1371 = vmatpush1.msra.mxu0 0.0
        %1372 = vmatprep.subr.mxu0 0.0
        %1373 = vmatpush1.msra.mxu0 0.0
        %1374 = vmatprep.subr.mxu0 0.0
        %1375 = vmatpush1.msra.mxu0 0.0
        %1376 = vmatprep.subr.mxu0 0.0
        %1377 = vmatpush1.msra.mxu0 0.0
        %1378 = vmatprep.subr.mxu0 0.0
        %1379 = vmatpush1.msra.mxu0 0.0
        %1380 = vmatprep.subr.mxu0 0.0
        %1381 = vmatpush1.msra.mxu0 0.0
        %1382 = vmatprep.subr.mxu0 0.0
        %1383 = vmatpush1.msra.mxu0 0.0
        %1384 = vmatprep.subr.mxu0 0.0
        %1385 = vmatpush1.msra.mxu0 0.0
        %1386 = vmatprep.subr.mxu0 0.0
        %1387 = vmatpush1.msra.mxu0 0.0
        %1388 = vmatprep.subr.mxu0 0.0
        %1389 = vmatpush1.msra.mxu0 0.0
        %1390 = vmatprep.subr.mxu0 0.0
        %1391 = vmatpush1.msra.mxu0 0.0
        %1392 = vmatprep.subr.mxu0 0.0
        %1393 = vmatpush1.msra.mxu0 %v1357
        %1394 = vmatprep.subr.mxu0 0.0
        %1395 = vmatpush2.msra.mxu0 0.0
        %1396 = vmatprep.subr.mxu0 0.0
        %1397 = vmatpush2.msra.mxu0 0.0
        %1398 = vmatprep.subr.mxu0 0.0
        %1399 = vmatpush2.msra.mxu0 0.0
        %1400 = vmatprep.subr.mxu0 0.0
        %1401 = vmatpush2.msra.mxu0 0.0
        %1402 = vmatprep.subr.mxu0 0.0
        %1403 = vmatpush2.msra.mxu0 0.0
        %1404 = vmatprep.subr.mxu0 0.0
        %1405 = vmatpush2.msra.mxu0 0.0
        %1406 = vmatprep.subr.mxu0 0.0
        %1407 = vmatpush2.msra.mxu0 0.0
        %1408 = vmatprep.subr.mxu0 0.0
        %1409 = vmatpush2.msra.mxu0 0.0
        %1410 = vmatprep.subr.mxu0 0.0
        %1411 = vmatpush2.msra.mxu0 0.0
        %1412 = vmatprep.subr.mxu0 0.0
        %1413 = vmatpush2.msra.mxu0 0.0
        %1414 = vmatprep.subr.mxu0 0.0
        %1415 = vmatpush2.msra.mxu0 0.0
        %1416 = vmatprep.subr.mxu0 0.0
        %1417 = vmatpush2.msra.mxu0 0.0
        %1418 = vmatprep.subr.mxu0 0.0
        %1419 = vmatpush2.msra.mxu0 0.0
        %1420 = vmatprep.subr.mxu0 0.0
        %1421 = vmatpush2.msra.mxu0 0.0
        %1422 = vmatprep.subr.mxu0 0.0
        %1423 = vmatpush2.msra.mxu0 0.0
        %1424 = vmatprep.subr.mxu0 0.0
        %1425 = vmatpush2.msra.mxu0 0.0
        %1426 = vmatprep.mubr.f32.mxu0 0.0
        %1427 = vmatmul.mubr.f32.gmra.mxu0 %v1360
        %v1428 = vpop.f32.mrf.mxu0
        %v1429 = vadd.f32 0.0, %v1428
        %v1430 = vpop.f32.mrf.mxu0
        %1431 = vdwg.mxu0
        %v1433 = vsel %vm788, %v1429, 0
        %1435 = vmatprep.subr.mxu0 0.0
        %1436 = vmatpush1.msra.mxu0 0.0
        %1437 = vmatprep.subr.mxu0 0.0
        %1438 = vmatpush1.msra.mxu0 0.0
        %1439 = vmatprep.subr.mxu0 0.0
        %1440 = vmatpush1.msra.mxu0 0.0
        %1441 = vmatprep.subr.mxu0 0.0
        %1442 = vmatpush1.msra.mxu0 0.0
        %1443 = vmatprep.subr.mxu0 0.0
        %1444 = vmatpush1.msra.mxu0 0.0
        %1445 = vmatprep.subr.mxu0 0.0
        %1446 = vmatpush1.msra.mxu0 0.0
        %1447 = vmatprep.subr.mxu0 0.0
        %1448 = vmatpush1.msra.mxu0 0.0
        %1449 = vmatprep.subr.mxu0 0.0
        %1450 = vmatpush1.msra.mxu0 0.0
        %1451 = vmatprep.subr.mxu0 0.0
        %1452 = vmatpush1.msra.mxu0 0.0
        %1453 = vmatprep.subr.mxu0 0.0
        %1454 = vmatpush1.msra.mxu0 0.0
        %1455 = vmatprep.subr.mxu0 0.0
        %1456 = vmatpush1.msra.mxu0 0.0
        %1457 = vmatprep.subr.mxu0 0.0
        %1458 = vmatpush1.msra.mxu0 0.0
        %1459 = vmatprep.subr.mxu0 0.0
        %1460 = vmatpush1.msra.mxu0 0.0
        %1461 = vmatprep.subr.mxu0 0.0
        %1462 = vmatpush1.msra.mxu0 0.0
        %1463 = vmatprep.subr.mxu0 0.0
        %1464 = vmatpush1.msra.mxu0 0.0
        %1465 = vmatprep.subr.mxu0 0.0
        %1466 = vmatpush1.msra.mxu0 %v783
        %1467 = vmatprep.subr.mxu0 0.0
        %1468 = vmatpush2.msra.mxu0 0.0
        %1469 = vmatprep.subr.mxu0 0.0
        %1470 = vmatpush2.msra.mxu0 0.0
        %1471 = vmatprep.subr.mxu0 0.0
        %1472 = vmatpush2.msra.mxu0 0.0
        %1473 = vmatprep.subr.mxu0 0.0
        %1474 = vmatpush2.msra.mxu0 0.0
        %1475 = vmatprep.subr.mxu0 0.0
        %1476 = vmatpush2.msra.mxu0 0.0
        %1477 = vmatprep.subr.mxu0 0.0
        %1478 = vmatpush2.msra.mxu0 0.0
        %1479 = vmatprep.subr.mxu0 0.0
        %1480 = vmatpush2.msra.mxu0 0.0
        %1481 = vmatprep.subr.mxu0 0.0
        %1482 = vmatpush2.msra.mxu0 0.0
        %1483 = vmatprep.subr.mxu0 0.0
        %1484 = vmatpush2.msra.mxu0 0.0
        %1485 = vmatprep.subr.mxu0 0.0
        %1486 = vmatpush2.msra.mxu0 0.0
        %1487 = vmatprep.subr.mxu0 0.0
        %1488 = vmatpush2.msra.mxu0 0.0
        %1489 = vmatprep.subr.mxu0 0.0
        %1490 = vmatpush2.msra.mxu0 0.0
        %1491 = vmatprep.subr.mxu0 0.0
        %1492 = vmatpush2.msra.mxu0 0.0
        %1493 = vmatprep.subr.mxu0 0.0
        %1494 = vmatpush2.msra.mxu0 0.0
        %1495 = vmatprep.subr.mxu0 0.0
        %1496 = vmatpush2.msra.mxu0 0.0
        %1497 = vmatprep.subr.mxu0 0.0
        %1498 = vmatpush2.msra.mxu0 0.0
        %1499 = vmatprep.mubr.f32.mxu0 0.0
        %1500 = vmatmul.mubr.f32.gmra.mxu0 %v1433
        %v1501 = vpop.f32.mrf.mxu0
        %v1502 = vadd.f32 0.0, %v1501
        %v1503 = vpop.f32.mrf.mxu0
        %1504 = vdwg.mxu0
        %v1505 = vadd.f32 %v1262, %v1502
        %1506 = vrot.lane.b32.xlu0 %v778, 104
        %v1507 = vpop.permute.xlu0 %1506
        %1508 = vrot.lane.b32.xlu0 %v778, 72
        %v1509 = vpop.permute.xlu0 %1508
        %v1510 = vsel %vm788, %v1507, 0
        %v1512 = vsel %vm788, %v1509, 0
        %1514 = vmatprep.subr.mxu0 0.0
        %1515 = vmatpush1.xpose.msra.mxu0 0.0
        %1516 = vmatprep.subr.mxu0 0.0
        %1517 = vmatpush1.xpose.msra.mxu0 0.0
        %1518 = vmatprep.subr.mxu0 0.0
        %1519 = vmatpush1.xpose.msra.mxu0 0.0
        %1520 = vmatprep.subr.mxu0 0.0
        %1521 = vmatpush1.xpose.msra.mxu0 0.0
        %1522 = vmatprep.subr.mxu0 0.0
        %1523 = vmatpush1.xpose.msra.mxu0 0.0
        %1524 = vmatprep.subr.mxu0 0.0
        %1525 = vmatpush1.xpose.msra.mxu0 0.0
        %1526 = vmatprep.subr.mxu0 0.0
        %1527 = vmatpush1.xpose.msra.mxu0 0.0
        %1528 = vmatprep.subr.mxu0 0.0
        %1529 = vmatpush1.xpose.msra.mxu0 0.0
        %1530 = vmatprep.subr.mxu0 0.0
        %1531 = vmatpush1.xpose.msra.mxu0 0.0
        %1532 = vmatprep.subr.mxu0 0.0
        %1533 = vmatpush1.xpose.msra.mxu0 0.0
        %1534 = vmatprep.subr.mxu0 0.0
        %1535 = vmatpush1.xpose.msra.mxu0 0.0
        %1536 = vmatprep.subr.mxu0 0.0
        %1537 = vmatpush1.xpose.msra.mxu0 0.0
        %1538 = vmatprep.subr.mxu0 0.0
        %1539 = vmatpush1.xpose.msra.mxu0 0.0
        %1540 = vmatprep.subr.mxu0 0.0
        %1541 = vmatpush1.xpose.msra.mxu0 0.0
        %1542 = vmatprep.subr.mxu0 0.0
        %1543 = vmatpush1.xpose.msra.mxu0 0.0
        %1544 = vmatprep.subr.mxu0 0.0
        %1545 = vmatpush1.xpose.msra.mxu0 %v1512
        %1546 = vmatprep.subr.mxu0 0.0
        %1547 = vmatpush2.xpose.msra.mxu0 0.0
        %1548 = vmatprep.subr.mxu0 0.0
        %1549 = vmatpush2.xpose.msra.mxu0 0.0
        %1550 = vmatprep.subr.mxu0 0.0
        %1551 = vmatpush2.xpose.msra.mxu0 0.0
        %1552 = vmatprep.subr.mxu0 0.0
        %1553 = vmatpush2.xpose.msra.mxu0 0.0
        %1554 = vmatprep.subr.mxu0 0.0
        %1555 = vmatpush2.xpose.msra.mxu0 0.0
        %1556 = vmatprep.subr.mxu0 0.0
        %1557 = vmatpush2.xpose.msra.mxu0 0.0
        %1558 = vmatprep.subr.mxu0 0.0
        %1559 = vmatpush2.xpose.msra.mxu0 0.0
        %1560 = vmatprep.subr.mxu0 0.0
        %1561 = vmatpush2.xpose.msra.mxu0 0.0
        %1562 = vmatprep.subr.mxu0 0.0
        %1563 = vmatpush2.xpose.msra.mxu0 0.0
        %1564 = vmatprep.subr.mxu0 0.0
        %1565 = vmatpush2.xpose.msra.mxu0 0.0
        %1566 = vmatprep.subr.mxu0 0.0
        %1567 = vmatpush2.xpose.msra.mxu0 0.0
        %1568 = vmatprep.subr.mxu0 0.0
        %1569 = vmatpush2.xpose.msra.mxu0 0.0
        %1570 = vmatprep.subr.mxu0 0.0
        %1571 = vmatpush2.xpose.msra.mxu0 0.0
        %1572 = vmatprep.subr.mxu0 0.0
        %1573 = vmatpush2.xpose.msra.mxu0 0.0
        %1574 = vmatprep.subr.mxu0 0.0
        %1575 = vmatpush2.xpose.msra.mxu0 0.0
        %1576 = vmatprep.subr.mxu0 0.0
        %1577 = vmatpush2.xpose.msra.mxu0 0.0
        %1578 = vmatprep.mubr.f32.mxu0 0.0
        %1579 = vmatmul.mubr.f32.gmra.mxu0 %v1510
        %v1580 = vpop.f32.mrf.mxu0
        %v1581 = vadd.f32 0.0, %v1580
        %v1582 = vpop.f32.mrf.mxu0
        %1583 = vdwg.mxu0
        %v1584 = vmul.f32 %v1581, 0.35355338
        %v1585 = vadd.f32 %v1584, %v698
        %v1586 = vsel %vm788, %v1585, -inf
        %1587 = vmax.xlane.f32.xlu0 %v1586
        %v1588 = vpop.xlane.xlu0 %1587
        %v1589 = vsub.f32 %v1585, %v1588
        %v1590 = vmul.f32 %v1589, 1.442695
        %v1591 = vpow.pop %v1590
        %v1592 = vsel %vm788, %v1591, 0.0
        %1593 = vadd.xlane.f32.xlu0 %v1592
        %v1594 = vpop.xlane.xlu0 %1593
        %v1595 = vrcp.pop %v1594
        %v1596 = vmul.f32 %v1591, %v1595
        %1597 = vrot.lane.b32.xlu0 %v778, 40
        %v1598 = vpop.permute.xlu0 %1597
        %v1601 = vsel %vm788, %v1596, 0
        %1603 = vmatprep.subr.mxu0 0.0
        %1604 = vmatpush1.msra.mxu0 0.0
        %1605 = vmatprep.subr.mxu0 0.0
        %1606 = vmatpush1.msra.mxu0 0.0
        %1607 = vmatprep.subr.mxu0 0.0
        %1608 = vmatpush1.msra.mxu0 0.0
        %1609 = vmatprep.subr.mxu0 0.0
        %1610 = vmatpush1.msra.mxu0 0.0
        %1611 = vmatprep.subr.mxu0 0.0
        %1612 = vmatpush1.msra.mxu0 0.0
        %1613 = vmatprep.subr.mxu0 0.0
        %1614 = vmatpush1.msra.mxu0 0.0
        %1615 = vmatprep.subr.mxu0 0.0
        %1616 = vmatpush1.msra.mxu0 0.0
        %1617 = vmatprep.subr.mxu0 0.0
        %1618 = vmatpush1.msra.mxu0 0.0
        %1619 = vmatprep.subr.mxu0 0.0
        %1620 = vmatpush1.msra.mxu0 0.0
        %1621 = vmatprep.subr.mxu0 0.0
        %1622 = vmatpush1.msra.mxu0 0.0
        %1623 = vmatprep.subr.mxu0 0.0
        %1624 = vmatpush1.msra.mxu0 0.0
        %1625 = vmatprep.subr.mxu0 0.0
        %1626 = vmatpush1.msra.mxu0 0.0
        %1627 = vmatprep.subr.mxu0 0.0
        %1628 = vmatpush1.msra.mxu0 0.0
        %1629 = vmatprep.subr.mxu0 0.0
        %1630 = vmatpush1.msra.mxu0 0.0
        %1631 = vmatprep.subr.mxu0 0.0
        %1632 = vmatpush1.msra.mxu0 0.0
        %1633 = vmatprep.subr.mxu0 0.0
        %1634 = vmatpush1.msra.mxu0 %v1598
        %1635 = vmatprep.subr.mxu0 0.0
        %1636 = vmatpush2.msra.mxu0 0.0
        %1637 = vmatprep.subr.mxu0 0.0
        %1638 = vmatpush2.msra.mxu0 0.0
        %1639 = vmatprep.subr.mxu0 0.0
        %1640 = vmatpush2.msra.mxu0 0.0
        %1641 = vmatprep.subr.mxu0 0.0
        %1642 = vmatpush2.msra.mxu0 0.0
        %1643 = vmatprep.subr.mxu0 0.0
        %1644 = vmatpush2.msra.mxu0 0.0
        %1645 = vmatprep.subr.mxu0 0.0
        %1646 = vmatpush2.msra.mxu0 0.0
        %1647 = vmatprep.subr.mxu0 0.0
        %1648 = vmatpush2.msra.mxu0 0.0
        %1649 = vmatprep.subr.mxu0 0.0
        %1650 = vmatpush2.msra.mxu0 0.0
        %1651 = vmatprep.subr.mxu0 0.0
        %1652 = vmatpush2.msra.mxu0 0.0
        %1653 = vmatprep.subr.mxu0 0.0
        %1654 = vmatpush2.msra.mxu0 0.0
        %1655 = vmatprep.subr.mxu0 0.0
        %1656 = vmatpush2.msra.mxu0 0.0
        %1657 = vmatprep.subr.mxu0 0.0
        %1658 = vmatpush2.msra.mxu0 0.0
        %1659 = vmatprep.subr.mxu0 0.0
        %1660 = vmatpush2.msra.mxu0 0.0
        %1661 = vmatprep.subr.mxu0 0.0
        %1662 = vmatpush2.msra.mxu0 0.0
        %1663 = vmatprep.subr.mxu0 0.0
        %1664 = vmatpush2.msra.mxu0 0.0
        %1665 = vmatprep.subr.mxu0 0.0
        %1666 = vmatpush2.msra.mxu0 0.0
        %1667 = vmatprep.mubr.f32.mxu0 0.0
        %1668 = vmatmul.mubr.f32.gmra.mxu0 %v1601
        %v1669 = vpop.f32.mrf.mxu0
        %v1670 = vadd.f32 0.0, %v1669
        %v1671 = vpop.f32.mrf.mxu0
        %1672 = vdwg.mxu0
        %v1674 = vsel %vm788, %v1670, 0
        %1676 = vmatprep.subr.mxu0 0.0
        %1677 = vmatpush1.msra.mxu0 0.0
        %1678 = vmatprep.subr.mxu0 0.0
        %1679 = vmatpush1.msra.mxu0 0.0
        %1680 = vmatprep.subr.mxu0 0.0
        %1681 = vmatpush1.msra.mxu0 0.0
        %1682 = vmatprep.subr.mxu0 0.0
        %1683 = vmatpush1.msra.mxu0 0.0
        %1684 = vmatprep.subr.mxu0 0.0
        %1685 = vmatpush1.msra.mxu0 0.0
        %1686 = vmatprep.subr.mxu0 0.0
        %1687 = vmatpush1.msra.mxu0 0.0
        %1688 = vmatprep.subr.mxu0 0.0
        %1689 = vmatpush1.msra.mxu0 0.0
        %1690 = vmatprep.subr.mxu0 0.0
        %1691 = vmatpush1.msra.mxu0 0.0
        %1692 = vmatprep.subr.mxu0 0.0
        %1693 = vmatpush1.msra.mxu0 0.0
        %1694 = vmatprep.subr.mxu0 0.0
        %1695 = vmatpush1.msra.mxu0 0.0
        %1696 = vmatprep.subr.mxu0 0.0
        %1697 = vmatpush1.msra.mxu0 0.0
        %1698 = vmatprep.subr.mxu0 0.0
        %1699 = vmatpush1.msra.mxu0 0.0
        %1700 = vmatprep.subr.mxu0 0.0
        %1701 = vmatpush1.msra.mxu0 0.0
        %1702 = vmatprep.subr.mxu0 0.0
        %1703 = vmatpush1.msra.mxu0 0.0
        %1704 = vmatprep.subr.mxu0 0.0
        %1705 = vmatpush1.msra.mxu0 0.0
        %1706 = vmatprep.subr.mxu0 0.0
        %1707 = vmatpush1.msra.mxu0 %v784
        %1708 = vmatprep.subr.mxu0 0.0
        %1709 = vmatpush2.msra.mxu0 0.0
        %1710 = vmatprep.subr.mxu0 0.0
        %1711 = vmatpush2.msra.mxu0 0.0
        %1712 = vmatprep.subr.mxu0 0.0
        %1713 = vmatpush2.msra.mxu0 0.0
        %1714 = vmatprep.subr.mxu0 0.0
        %1715 = vmatpush2.msra.mxu0 0.0
        %1716 = vmatprep.subr.mxu0 0.0
        %1717 = vmatpush2.msra.mxu0 0.0
        %1718 = vmatprep.subr.mxu0 0.0
        %1719 = vmatpush2.msra.mxu0 0.0
        %1720 = vmatprep.subr.mxu0 0.0
        %1721 = vmatpush2.msra.mxu0 0.0
        %1722 = vmatprep.subr.mxu0 0.0
        %1723 = vmatpush2.msra.mxu0 0.0
        %1724 = vmatprep.subr.mxu0 0.0
        %1725 = vmatpush2.msra.mxu0 0.0
        %1726 = vmatprep.subr.mxu0 0.0
        %1727 = vmatpush2.msra.mxu0 0.0
        %1728 = vmatprep.subr.mxu0 0.0
        %1729 = vmatpush2.msra.mxu0 0.0
        %1730 = vmatprep.subr.mxu0 0.0
        %1731 = vmatpush2.msra.mxu0 0.0
        %1732 = vmatprep.subr.mxu0 0.0
        %1733 = vmatpush2.msra.mxu0 0.0
        %1734 = vmatprep.subr.mxu0 0.0
        %1735 = vmatpush2.msra.mxu0 0.0
        %1736 = vmatprep.subr.mxu0 0.0
        %1737 = vmatpush2.msra.mxu0 0.0
        %1738 = vmatprep.subr.mxu0 0.0
        %1739 = vmatpush2.msra.mxu0 0.0
        %1740 = vmatprep.mubr.f32.mxu0 0.0
        %1741 = vmatmul.mubr.f32.gmra.mxu0 %v1674
        %v1742 = vpop.f32.mrf.mxu0
        %v1743 = vadd.f32 0.0, %v1742
        %v1744 = vpop.f32.mrf.mxu0
        %1745 = vdwg.mxu0
        %v1746 = vadd.f32 %v1505, %v1743
        %v1747 = vlaneseq
        %v1748 = vshrl.u32 %v1747, 7
        %v1749 = vsub.s32 1, %v1748
        %v1750 = vrot.slane %v691, %v1749
        %v1751 = vadd.f32 %v1746, %v1750
        %v1752 = vadd.f32 %v687, %v1751
        %v1753 = vsel %vm707, %v1752, 0.0
        %1754 = vadd.xlane.f32.xlu0 %v1753
        %v1755 = vpop.xlane.xlu0 %1754
        %v1756 = vrcp.pop 32.0
        %v1757 = vmul.f32 %v1755, %v1756
        %v1758 = vsub.f32 %v1752, %v1757
        %v1759 = vmul.f32 %v1758, %v1758
        %v1760 = vsel %vm707, %v1759, 0.0
        %1761 = vadd.xlane.f32.xlu0 %v1760
        %v1762 = vpop.xlane.xlu0 %1761
        %v1763 = vmul.f32 %v1762, %v1756
        %v1764 = vadd.f32 %v1763, 1e-05
        %v1765 = vrsqrt.pop %v1764
        %v1766 = vmul.f32 %v1758, %v1765
        %v1767 = vlaneseq
        %v1768 = vshrl.u32 %v1767, 7
        %v1769 = vsub.s32 2, %v1768
        %v1770 = vrot.slane %v691, %v1769
        %v1771 = vmul.f32 %v1766, %v1770
        %v1772 = vlaneseq
        %v1773 = vshrl.u32 %v1772, 7
        %v1774 = vsub.s32 3, %v1773
        %v1775 = vrot.slane %v691, %v1774
        %v1776 = vadd.f32 %v1771, %v1775
        %v1777 = vld [vmem:[%s650] sm:$0xff]
        %v1778 = vld [vmem:[%s650 + $0x8] sm:$0xff]
        %v1779 = vld [vmem:[%s650 + $0x10] sm:$0xff]
        %v1780 = vld [vmem:[%s650 + $0x18] sm:$0xff]
        %v1781 = vlaneseq
        %v1782 = vshrl.u32 %v1781, 7
        %v1783 = vsub.s32 4, %v1782
        %v1784 = vrot.slane %v691, %v1783
        %v1786 = vsel %vm707, %v1776, 0
        %1788 = vmatprep.subr.mxu0 0.0
        %1789 = vmatpush1.msra.mxu0 0.0
        %1790 = vmatprep.subr.mxu0 0.0
        %1791 = vmatpush1.msra.mxu0 0.0
        %1792 = vmatprep.subr.mxu0 0.0
        %1793 = vmatpush1.msra.mxu0 0.0
        %1794 = vmatprep.subr.mxu0 0.0
        %1795 = vmatpush1.msra.mxu0 0.0
        %1796 = vmatprep.subr.mxu0 0.0
        %1797 = vmatpush1.msra.mxu0 0.0
        %1798 = vmatprep.subr.mxu0 0.0
        %1799 = vmatpush1.msra.mxu0 0.0
        %1800 = vmatprep.subr.mxu0 0.0
        %1801 = vmatpush1.msra.mxu0 0.0
        %1802 = vmatprep.subr.mxu0 0.0
        %1803 = vmatpush1.msra.mxu0 0.0
        %1804 = vmatprep.subr.mxu0 0.0
        %1805 = vmatpush1.msra.mxu0 0.0
        %1806 = vmatprep.subr.mxu0 0.0
        %1807 = vmatpush1.msra.mxu0 0.0
        %1808 = vmatprep.subr.mxu0 0.0
        %1809 = vmatpush1.msra.mxu0 0.0
        %1810 = vmatprep.subr.mxu0 0.0
        %1811 = vmatpush1.msra.mxu0 0.0
        %1812 = vmatprep.subr.mxu0 0.0
        %1813 = vmatpush1.msra.mxu0 %v1780
        %1814 = vmatprep.subr.mxu0 0.0
        %1815 = vmatpush1.msra.mxu0 %v1779
        %1816 = vmatprep.subr.mxu0 0.0
        %1817 = vmatpush1.msra.mxu0 %v1778
        %1818 = vmatprep.subr.mxu0 0.0
        %1819 = vmatpush1.msra.mxu0 %v1777
        %1820 = vmatprep.subr.mxu0 0.0
        %1821 = vmatpush2.msra.mxu0 0.0
        %1822 = vmatprep.subr.mxu0 0.0
        %1823 = vmatpush2.msra.mxu0 0.0
        %1824 = vmatprep.subr.mxu0 0.0
        %1825 = vmatpush2.msra.mxu0 0.0
        %1826 = vmatprep.subr.mxu0 0.0
        %1827 = vmatpush2.msra.mxu0 0.0
        %1828 = vmatprep.subr.mxu0 0.0
        %1829 = vmatpush2.msra.mxu0 0.0
        %1830 = vmatprep.subr.mxu0 0.0
        %1831 = vmatpush2.msra.mxu0 0.0
        %1832 = vmatprep.subr.mxu0 0.0
        %1833 = vmatpush2.msra.mxu0 0.0
        %1834 = vmatprep.subr.mxu0 0.0
        %1835 = vmatpush2.msra.mxu0 0.0
        %1836 = vmatprep.subr.mxu0 0.0
        %1837 = vmatpush2.msra.mxu0 0.0
        %1838 = vmatprep.subr.mxu0 0.0
        %1839 = vmatpush2.msra.mxu0 0.0
        %1840 = vmatprep.subr.mxu0 0.0
        %1841 = vmatpush2.msra.mxu0 0.0
        %1842 = vmatprep.subr.mxu0 0.0
        %1843 = vmatpush2.msra.mxu0 0.0
        %1844 = vmatprep.subr.mxu0 0.0
        %1845 = vmatpush2.msra.mxu0 0.0
        %1846 = vmatprep.subr.mxu0 0.0
        %1847 = vmatpush2.msra.mxu0 0.0
        %1848 = vmatprep.subr.mxu0 0.0
        %1849 = vmatpush2.msra.mxu0 0.0
        %1850 = vmatprep.subr.mxu0 0.0
        %1851 = vmatpush2.msra.mxu0 0.0
        %1852 = vmatprep.mubr.f32.mxu0 0.0
        %1853 = vmatmul.mubr.f32.gmra.mxu0 %v1786
        %v1854 = vpop.f32.mrf.mxu0
        %v1855 = vadd.f32 %v1784, %v1854
        %v1856 = vpop.f32.mrf.mxu0
        %1857 = vdwg.mxu0
        %v1858 = vld [vmem:[%s655] sm:$0xff]
        %v1859 = vld [vmem:[%s655 + $0x8] sm:$0xff]
        %v1860 = vld [vmem:[%s655 + $0x10] sm:$0xff]
        %v1861 = vld [vmem:[%s655 + $0x18] sm:$0xff]
        %v1862 = vlaneseq
        %v1863 = vshrl.u32 %v1862, 7
        %v1864 = vsub.s32 5, %v1863
        %v1865 = vrot.slane %v691, %v1864
        %v1867 = vsel %vm707, %v688, 0
        %v1870 = vsel %vm707, %v689, 0
        %1872 = vmatprep.subr.mxu0 0.0
        %1873 = vmatpush1.msra.mxu0 0.0
        %1874 = vmatprep.subr.mxu0 0.0
        %1875 = vmatpush1.msra.mxu0 0.0
        %1876 = vmatprep.subr.mxu0 0.0
        %1877 = vmatpush1.msra.mxu0 0.0
        %1878 = vmatprep.subr.mxu0 0.0
        %1879 = vmatpush1.msra.mxu0 0.0
        %1880 = vmatprep.subr.mxu0 0.0
        %1881 = vmatpush1.msra.mxu0 0.0
        %1882 = vmatprep.subr.mxu0 0.0
        %1883 = vmatpush1.msra.mxu0 0.0
        %1884 = vmatprep.subr.mxu0 0.0
        %1885 = vmatpush1.msra.mxu0 0.0
        %1886 = vmatprep.subr.mxu0 0.0
        %1887 = vmatpush1.msra.mxu0 0.0
        %1888 = vmatprep.subr.mxu0 0.0
        %1889 = vmatpush1.msra.mxu0 0.0
        %1890 = vmatprep.subr.mxu0 0.0
        %1891 = vmatpush1.msra.mxu0 0.0
        %1892 = vmatprep.subr.mxu0 0.0
        %1893 = vmatpush1.msra.mxu0 0.0
        %1894 = vmatprep.subr.mxu0 0.0
        %1895 = vmatpush1.msra.mxu0 0.0
        %1896 = vmatprep.subr.mxu0 0.0
        %1897 = vmatpush1.msra.mxu0 %v1861
        %1898 = vmatprep.subr.mxu0 0.0
        %1899 = vmatpush1.msra.mxu0 %v1860
        %1900 = vmatprep.subr.mxu0 0.0
        %1901 = vmatpush1.msra.mxu0 %v1859
        %1902 = vmatprep.subr.mxu0 0.0
        %1903 = vmatpush1.msra.mxu0 %v1858
        %1904 = vmatprep.subr.mxu0 0.0
        %1905 = vmatpush2.msra.mxu0 0.0
        %1906 = vmatprep.subr.mxu0 0.0
        %1907 = vmatpush2.msra.mxu0 0.0
        %1908 = vmatprep.subr.mxu0 0.0
        %1909 = vmatpush2.msra.mxu0 0.0
        %1910 = vmatprep.subr.mxu0 0.0
        %1911 = vmatpush2.msra.mxu0 0.0
        %1912 = vmatprep.subr.mxu0 0.0
        %1913 = vmatpush2.msra.mxu0 0.0
        %1914 = vmatprep.subr.mxu0 0.0
        %1915 = vmatpush2.msra.mxu0 0.0
        %1916 = vmatprep.subr.mxu0 0.0
        %1917 = vmatpush2.msra.mxu0 0.0
        %1918 = vmatprep.subr.mxu0 0.0
        %1919 = vmatpush2.msra.mxu0 0.0
        %1920 = vmatprep.subr.mxu0 0.0
        %1921 = vmatpush2.msra.mxu0 0.0
        %1922 = vmatprep.subr.mxu0 0.0
        %1923 = vmatpush2.msra.mxu0 0.0
        %1924 = vmatprep.subr.mxu0 0.0
        %1925 = vmatpush2.msra.mxu0 0.0
        %1926 = vmatprep.subr.mxu0 0.0
        %1927 = vmatpush2.msra.mxu0 0.0
        %1928 = vmatprep.subr.mxu0 0.0
        %1929 = vmatpush2.msra.mxu0 0.0
        %1930 = vmatprep.subr.mxu0 0.0
        %1931 = vmatpush2.msra.mxu0 0.0
        %1932 = vmatprep.subr.mxu0 0.0
        %1933 = vmatpush2.msra.mxu0 0.0
        %1934 = vmatprep.subr.mxu0 0.0
        %1935 = vmatpush2.msra.mxu0 0.0
        %1936 = vmatprep.mubr.f32.mxu0 0.0
        %1937 = vmatmul.mubr.f32.gmra.mxu0 %v1867
        %v1938 = vpop.f32.mrf.mxu0
        %v1939 = vadd.f32 %v1865, %v1938
        %v1940 = vpop.f32.mrf.mxu0
        %1941 = vmatprep.mubr.f32.mxu0 0.0
        %1942 = vmatmul.mubr.f32.gmra.mxu0 %v1870
        %v1943 = vpop.f32.mrf.mxu0
        %v1944 = vadd.f32 %v1865, %v1943
        %v1945 = vpop.f32.mrf.mxu0
        %1946 = vdwg.mxu0
        %v1947 = vld [vmem:[%s660] sm:$0xff]
        %v1948 = vld [vmem:[%s660 + $0x8] sm:$0xff]
        %v1949 = vld [vmem:[%s660 + $0x10] sm:$0xff]
        %v1950 = vld [vmem:[%s660 + $0x18] sm:$0xff]
        %v1952 = vsel %vm788, %v1855, 0
        %v1955 = vsel %vm788, %v1939, 0
        %v1958 = vsel %vm788, %v1944, 0
        %1960 = vmatprep.subr.mxu0 0.0
        %1961 = vmatpush1.xpose.msra.mxu0 0.0
        %1962 = vmatprep.subr.mxu0 0.0
        %1963 = vmatpush1.xpose.msra.mxu0 0.0
        %1964 = vmatprep.subr.mxu0 0.0
        %1965 = vmatpush1.xpose.msra.mxu0 0.0
        %1966 = vmatprep.subr.mxu0 0.0
        %1967 = vmatpush1.xpose.msra.mxu0 0.0
        %1968 = vmatprep.subr.mxu0 0.0
        %1969 = vmatpush1.xpose.msra.mxu0 0.0
        %1970 = vmatprep.subr.mxu0 0.0
        %1971 = vmatpush1.xpose.msra.mxu0 0.0
        %1972 = vmatprep.subr.mxu0 0.0
        %1973 = vmatpush1.xpose.msra.mxu0 0.0
        %1974 = vmatprep.subr.mxu0 0.0
        %1975 = vmatpush1.xpose.msra.mxu0 0.0
        %1976 = vmatprep.subr.mxu0 0.0
        %1977 = vmatpush1.xpose.msra.mxu0 0.0
        %1978 = vmatprep.subr.mxu0 0.0
        %1979 = vmatpush1.xpose.msra.mxu0 0.0
        %1980 = vmatprep.subr.mxu0 0.0
        %1981 = vmatpush1.xpose.msra.mxu0 0.0
        %1982 = vmatprep.subr.mxu0 0.0
        %1983 = vmatpush1.xpose.msra.mxu0 0.0
        %1984 = vmatprep.subr.mxu0 0.0
        %1985 = vmatpush1.xpose.msra.mxu0 0.0
        %1986 = vmatprep.subr.mxu0 0.0
        %1987 = vmatpush1.xpose.msra.mxu0 0.0
        %1988 = vmatprep.subr.mxu0 0.0
        %1989 = vmatpush1.xpose.msra.mxu0 %v1958
        %1990 = vmatprep.subr.mxu0 0.0
        %1991 = vmatpush1.xpose.msra.mxu0 %v1955
        %1992 = vmatprep.subr.mxu0 0.0
        %1993 = vmatpush2.xpose.msra.mxu0 0.0
        %1994 = vmatprep.subr.mxu0 0.0
        %1995 = vmatpush2.xpose.msra.mxu0 0.0
        %1996 = vmatprep.subr.mxu0 0.0
        %1997 = vmatpush2.xpose.msra.mxu0 0.0
        %1998 = vmatprep.subr.mxu0 0.0
        %1999 = vmatpush2.xpose.msra.mxu0 0.0
        %2000 = vmatprep.subr.mxu0 0.0
        %2001 = vmatpush2.xpose.msra.mxu0 0.0
        %2002 = vmatprep.subr.mxu0 0.0
        %2003 = vmatpush2.xpose.msra.mxu0 0.0
        %2004 = vmatprep.subr.mxu0 0.0
        %2005 = vmatpush2.xpose.msra.mxu0 0.0
        %2006 = vmatprep.subr.mxu0 0.0
        %2007 = vmatpush2.xpose.msra.mxu0 0.0
        %2008 = vmatprep.subr.mxu0 0.0
        %2009 = vmatpush2.xpose.msra.mxu0 0.0
        %2010 = vmatprep.subr.mxu0 0.0
        %2011 = vmatpush2.xpose.msra.mxu0 0.0
        %2012 = vmatprep.subr.mxu0 0.0
        %2013 = vmatpush2.xpose.msra.mxu0 0.0
        %2014 = vmatprep.subr.mxu0 0.0
        %2015 = vmatpush2.xpose.msra.mxu0 0.0
        %2016 = vmatprep.subr.mxu0 0.0
        %2017 = vmatpush2.xpose.msra.mxu0 0.0
        %2018 = vmatprep.subr.mxu0 0.0
        %2019 = vmatpush2.xpose.msra.mxu0 0.0
        %2020 = vmatprep.subr.mxu0 0.0
        %2021 = vmatpush2.xpose.msra.mxu0 0.0
        %2022 = vmatprep.subr.mxu0 0.0
        %2023 = vmatpush2.xpose.msra.mxu0 0.0
        %2024 = vmatprep.mubr.f32.mxu0 0.0
        %2025 = vmatmul.mubr.f32.gmra.mxu0 %v1952
        %v2026 = vpop.f32.mrf.mxu0
        %v2027 = vadd.f32 0.0, %v2026
        %v2028 = vpop.f32.mrf.mxu0
        %2029 = vdwg.mxu0
        %v2030 = vmul.f32 %v2027, 0.35355338
        %v2032 = vlaneseq
        %v2033 = vshrl.u32 %v2032, 7
        %v2034 = vsub.s32 0, %v2033
        %v2035 = vrot.slane %v690, %v2034
        %v2037 = vadd.f32 %v2030, %v2035
        %vm2038 = vcmask 97280
        %v2039 = vsel %vm2038, %v2037, -inf
        %2040 = vmax.xlane.f32.xlu0 %v2039
        %v2041 = vpop.xlane.xlu0 %2040
        %v2042 = vsub.f32 %v2037, %v2041
        %v2043 = vmul.f32 %v2042, 1.442695
        %v2044 = vpow.pop %v2043
        %v2045 = vsel %vm2038, %v2044, 0.0
        %2046 = vadd.xlane.f32.xlu0 %v2045
        %v2047 = vpop.xlane.xlu0 %2046
        %v2048 = vrcp.pop %v2047
        %v2049 = vmul.f32 %v2044, %v2048
        %2050 = vrot.lane.b32.xlu0 %v1939, 96
        %v2051 = vpop.permute.xlu0 %2050
        %2052 = vrot.lane.b32.xlu0 %v1944, 96
        %v2053 = vpop.permute.xlu0 %2052
        %v2056 = vsel %vm2038, %v2049, 0
        %vm2058 = vcmask 1043456
        %v2059 = vsel %vm2058, %v2053, 0
        %2061 = vmatprep.subr.mxu0 0.0
        %2062 = vmatpush1.msra.mxu0 0.0
        %2063 = vmatprep.subr.mxu0 0.0
        %2064 = vmatpush1.msra.mxu0 0.0
        %2065 = vmatprep.subr.mxu0 0.0
        %2066 = vmatpush1.msra.mxu0 0.0
        %2067 = vmatprep.subr.mxu0 0.0
        %2068 = vmatpush1.msra.mxu0 0.0
        %2069 = vmatprep.subr.mxu0 0.0
        %2070 = vmatpush1.msra.mxu0 0.0
        %2071 = vmatprep.subr.mxu0 0.0
        %2072 = vmatpush1.msra.mxu0 0.0
        %2073 = vmatprep.subr.mxu0 0.0
        %2074 = vmatpush1.msra.mxu0 0.0
        %2075 = vmatprep.subr.mxu0 0.0
        %2076 = vmatpush1.msra.mxu0 0.0
        %2077 = vmatprep.subr.mxu0 0.0
        %2078 = vmatpush1.msra.mxu0 0.0
        %2079 = vmatprep.subr.mxu0 0.0
        %2080 = vmatpush1.msra.mxu0 0.0
        %2081 = vmatprep.subr.mxu0 0.0
        %2082 = vmatpush1.msra.mxu0 0.0
        %2083 = vmatprep.subr.mxu0 0.0
        %2084 = vmatpush1.msra.mxu0 0.0
        %2085 = vmatprep.subr.mxu0 0.0
        %2086 = vmatpush1.msra.mxu0 0.0
        %2087 = vmatprep.subr.mxu0 0.0
        %2088 = vmatpush1.msra.mxu0 0.0
        %2089 = vmatprep.subr.mxu0 0.0
        %2090 = vmatpush1.msra.mxu0 %v2059
        %2091 = vmatprep.subr.mxu0 0.0
        %2092 = vmatpush1.msra.mxu0 %v2051
        %2093 = vmatprep.subr.mxu0 0.0
        %2094 = vmatpush2.msra.mxu0 0.0
        %2095 = vmatprep.subr.mxu0 0.0
        %2096 = vmatpush2.msra.mxu0 0.0
        %2097 = vmatprep.subr.mxu0 0.0
        %2098 = vmatpush2.msra.mxu0 0.0
        %2099 = vmatprep.subr.mxu0 0.0
        %2100 = vmatpush2.msra.mxu0 0.0
        %2101 = vmatprep.subr.mxu0 0.0
        %2102 = vmatpush2.msra.mxu0 0.0
        %2103 = vmatprep.subr.mxu0 0.0
        %2104 = vmatpush2.msra.mxu0 0.0
        %2105 = vmatprep.subr.mxu0 0.0
        %2106 = vmatpush2.msra.mxu0 0.0
        %2107 = vmatprep.subr.mxu0 0.0
        %2108 = vmatpush2.msra.mxu0 0.0
        %2109 = vmatprep.subr.mxu0 0.0
        %2110 = vmatpush2.msra.mxu0 0.0
        %2111 = vmatprep.subr.mxu0 0.0
        %2112 = vmatpush2.msra.mxu0 0.0
        %2113 = vmatprep.subr.mxu0 0.0
        %2114 = vmatpush2.msra.mxu0 0.0
        %2115 = vmatprep.subr.mxu0 0.0
        %2116 = vmatpush2.msra.mxu0 0.0
        %2117 = vmatprep.subr.mxu0 0.0
        %2118 = vmatpush2.msra.mxu0 0.0
        %2119 = vmatprep.subr.mxu0 0.0
        %2120 = vmatpush2.msra.mxu0 0.0
        %2121 = vmatprep.subr.mxu0 0.0
        %2122 = vmatpush2.msra.mxu0 0.0
        %2123 = vmatprep.subr.mxu0 0.0
        %2124 = vmatpush2.msra.mxu0 0.0
        %2125 = vmatprep.mubr.f32.mxu0 0.0
        %2126 = vmatmul.mubr.f32.gmra.mxu0 %v2056
        %v2127 = vpop.f32.mrf.mxu0
        %v2128 = vadd.f32 0.0, %v2127
        %v2129 = vpop.f32.mrf.mxu0
        %2130 = vdwg.mxu0
        %2131 = vrot.lane.b32.xlu0 %v1855, 120
        %v2132 = vpop.permute.xlu0 %2131
        %2133 = vrot.lane.b32.xlu0 %v1939, 120
        %v2134 = vpop.permute.xlu0 %2133
        %2135 = vrot.lane.b32.xlu0 %v1944, 120
        %v2136 = vpop.permute.xlu0 %2135
        %v2137 = vsel %vm788, %v2132, 0
        %v2139 = vsel %vm788, %v2134, 0
        %v2141 = vsel %vm788, %v2136, 0
        %2143 = vmatprep.subr.mxu0 0.0
        %2144 = vmatpush1.xpose.msra.mxu0 0.0
        %2145 = vmatprep.subr.mxu0 0.0
        %2146 = vmatpush1.xpose.msra.mxu0 0.0
        %2147 = vmatprep.subr.mxu0 0.0
        %2148 = vmatpush1.xpose.msra.mxu0 0.0
        %2149 = vmatprep.subr.mxu0 0.0
        %2150 = vmatpush1.xpose.msra.mxu0 0.0
        %2151 = vmatprep.subr.mxu0 0.0
        %2152 = vmatpush1.xpose.msra.mxu0 0.0
        %2153 = vmatprep.subr.mxu0 0.0
        %2154 = vmatpush1.xpose.msra.mxu0 0.0
        %2155 = vmatprep.subr.mxu0 0.0
        %2156 = vmatpush1.xpose.msra.mxu0 0.0
        %2157 = vmatprep.subr.mxu0 0.0
        %2158 = vmatpush1.xpose.msra.mxu0 0.0
        %2159 = vmatprep.subr.mxu0 0.0
        %2160 = vmatpush1.xpose.msra.mxu0 0.0
        %2161 = vmatprep.subr.mxu0 0.0
        %2162 = vmatpush1.xpose.msra.mxu0 0.0
        %2163 = vmatprep.subr.mxu0 0.0
        %2164 = vmatpush1.xpose.msra.mxu0 0.0
        %2165 = vmatprep.subr.mxu0 0.0
        %2166 = vmatpush1.xpose.msra.mxu0 0.0
        %2167 = vmatprep.subr.mxu0 0.0
        %2168 = vmatpush1.xpose.msra.mxu0 0.0
        %2169 = vmatprep.subr.mxu0 0.0
        %2170 = vmatpush1.xpose.msra.mxu0 0.0
        %2171 = vmatprep.subr.mxu0 0.0
        %2172 = vmatpush1.xpose.msra.mxu0 %v2141
        %2173 = vmatprep.subr.mxu0 0.0
        %2174 = vmatpush1.xpose.msra.mxu0 %v2139
        %2175 = vmatprep.subr.mxu0 0.0
        %2176 = vmatpush2.xpose.msra.mxu0 0.0
        %2177 = vmatprep.subr.mxu0 0.0
        %2178 = vmatpush2.xpose.msra.mxu0 0.0
        %2179 = vmatprep.subr.mxu0 0.0
        %2180 = vmatpush2.xpose.msra.mxu0 0.0
        %2181 = vmatprep.subr.mxu0 0.0
        %2182 = vmatpush2.xpose.msra.mxu0 0.0
        %2183 = vmatprep.subr.mxu0 0.0
        %2184 = vmatpush2.xpose.msra.mxu0 0.0
        %2185 = vmatprep.subr.mxu0 0.0
        %2186 = vmatpush2.xpose.msra.mxu0 0.0
        %2187 = vmatprep.subr.mxu0 0.0
        %2188 = vmatpush2.xpose.msra.mxu0 0.0
        %2189 = vmatprep.subr.mxu0 0.0
        %2190 = vmatpush2.xpose.msra.mxu0 0.0
        %2191 = vmatprep.subr.mxu0 0.0
        %2192 = vmatpush2.xpose.msra.mxu0 0.0
        %2193 = vmatprep.subr.mxu0 0.0
        %2194 = vmatpush2.xpose.msra.mxu0 0.0
        %2195 = vmatprep.subr.mxu0 0.0
        %2196 = vmatpush2.xpose.msra.mxu0 0.0
        %2197 = vmatprep.subr.mxu0 0.0
        %2198 = vmatpush2.xpose.msra.mxu0 0.0
        %2199 = vmatprep.subr.mxu0 0.0
        %2200 = vmatpush2.xpose.msra.mxu0 0.0
        %2201 = vmatprep.subr.mxu0 0.0
        %2202 = vmatpush2.xpose.msra.mxu0 0.0
        %2203 = vmatprep.subr.mxu0 0.0
        %2204 = vmatpush2.xpose.msra.mxu0 0.0
        %2205 = vmatprep.subr.mxu0 0.0
        %2206 = vmatpush2.xpose.msra.mxu0 0.0
        %2207 = vmatprep.mubr.f32.mxu0 0.0
        %2208 = vmatmul.mubr.f32.gmra.mxu0 %v2137
        %v2209 = vpop.f32.mrf.mxu0
        %v2210 = vadd.f32 0.0, %v2209
        %v2211 = vpop.f32.mrf.mxu0
        %2212 = vdwg.mxu0
        %v2213 = vmul.f32 %v2210, 0.35355338
        %v2214 = vadd.f32 %v2213, %v2035
        %v2215 = vsel %vm2038, %v2214, -inf
        %2216 = vmax.xlane.f32.xlu0 %v2215
        %v2217 = vpop.xlane.xlu0 %2216
        %v2218 = vsub.f32 %v2214, %v2217
        %v2219 = vmul.f32 %v2218, 1.442695
        %v2220 = vpow.pop %v2219
        %v2221 = vsel %vm2038, %v2220, 0.0
        %2222 = vadd.xlane.f32.xlu0 %v2221
        %v2223 = vpop.xlane.xlu0 %2222
        %v2224 = vrcp.pop %v2223
        %v2225 = vmul.f32 %v2220, %v2224
        %2226 = vrot.lane.b32.xlu0 %v1939, 88
        %v2227 = vpop.permute.xlu0 %2226
        %2228 = vrot.lane.b32.xlu0 %v1944, 88
        %v2229 = vpop.permute.xlu0 %2228
        %v2232 = vsel %vm2038, %v2225, 0
        %v2234 = vsel %vm2058, %v2229, 0
        %2236 = vmatprep.subr.mxu0 0.0
        %2237 = vmatpush1.msra.mxu0 0.0
        %2238 = vmatprep.subr.mxu0 0.0
        %2239 = vmatpush1.msra.mxu0 0.0
        %2240 = vmatprep.subr.mxu0 0.0
        %2241 = vmatpush1.msra.mxu0 0.0
        %2242 = vmatprep.subr.mxu0 0.0
        %2243 = vmatpush1.msra.mxu0 0.0
        %2244 = vmatprep.subr.mxu0 0.0
        %2245 = vmatpush1.msra.mxu0 0.0
        %2246 = vmatprep.subr.mxu0 0.0
        %2247 = vmatpush1.msra.mxu0 0.0
        %2248 = vmatprep.subr.mxu0 0.0
        %2249 = vmatpush1.msra.mxu0 0.0
        %2250 = vmatprep.subr.mxu0 0.0
        %2251 = vmatpush1.msra.mxu0 0.0
        %2252 = vmatprep.subr.mxu0 0.0
        %2253 = vmatpush1.msra.mxu0 0.0
        %2254 = vmatprep.subr.mxu0 0.0
        %2255 = vmatpush1.msra.mxu0 0.0
        %2256 = vmatprep.subr.mxu0 0.0
        %2257 = vmatpush1.msra.mxu0 0.0
        %2258 = vmatprep.subr.mxu0 0.0
        %2259 = vmatpush1.msra.mxu0 0.0
        %2260 = vmatprep.subr.mxu0 0.0
        %2261 = vmatpush1.msra.mxu0 0.0
        %2262 = vmatprep.subr.mxu0 0.0
        %2263 = vmatpush1.msra.mxu0 0.0
        %2264 = vmatprep.subr.mxu0 0.0
        %2265 = vmatpush1.msra.mxu0 %v2234
        %2266 = vmatprep.subr.mxu0 0.0
        %2267 = vmatpush1.msra.mxu0 %v2227
        %2268 = vmatprep.subr.mxu0 0.0
        %2269 = vmatpush2.msra.mxu0 0.0
        %2270 = vmatprep.subr.mxu0 0.0
        %2271 = vmatpush2.msra.mxu0 0.0
        %2272 = vmatprep.subr.mxu0 0.0
        %2273 = vmatpush2.msra.mxu0 0.0
        %2274 = vmatprep.subr.mxu0 0.0
        %2275 = vmatpush2.msra.mxu0 0.0
        %2276 = vmatprep.subr.mxu0 0.0
        %2277 = vmatpush2.msra.mxu0 0.0
        %2278 = vmatprep.subr.mxu0 0.0
        %2279 = vmatpush2.msra.mxu0 0.0
        %2280 = vmatprep.subr.mxu0 0.0
        %2281 = vmatpush2.msra.mxu0 0.0
        %2282 = vmatprep.subr.mxu0 0.0
        %2283 = vmatpush2.msra.mxu0 0.0
        %2284 = vmatprep.subr.mxu0 0.0
        %2285 = vmatpush2.msra.mxu0 0.0
        %2286 = vmatprep.subr.mxu0 0.0
        %2287 = vmatpush2.msra.mxu0 0.0
        %2288 = vmatprep.subr.mxu0 0.0
        %2289 = vmatpush2.msra.mxu0 0.0
        %2290 = vmatprep.subr.mxu0 0.0
        %2291 = vmatpush2.msra.mxu0 0.0
        %2292 = vmatprep.subr.mxu0 0.0
        %2293 = vmatpush2.msra.mxu0 0.0
        %2294 = vmatprep.subr.mxu0 0.0
        %2295 = vmatpush2.msra.mxu0 0.0
        %2296 = vmatprep.subr.mxu0 0.0
        %2297 = vmatpush2.msra.mxu0 0.0
        %2298 = vmatprep.subr.mxu0 0.0
        %2299 = vmatpush2.msra.mxu0 0.0
        %2300 = vmatprep.mubr.f32.mxu0 0.0
        %2301 = vmatmul.mubr.f32.gmra.mxu0 %v2232
        %v2302 = vpop.f32.mrf.mxu0
        %v2303 = vadd.f32 0.0, %v2302
        %v2304 = vpop.f32.mrf.mxu0
        %2305 = vdwg.mxu0
        %v2307 = vsel %vm788, %v2303, 0
        %2309 = vmatprep.subr.mxu0 0.0
        %2310 = vmatpush1.msra.mxu0 0.0
        %2311 = vmatprep.subr.mxu0 0.0
        %2312 = vmatpush1.msra.mxu0 0.0
        %2313 = vmatprep.subr.mxu0 0.0
        %2314 = vmatpush1.msra.mxu0 0.0
        %2315 = vmatprep.subr.mxu0 0.0
        %2316 = vmatpush1.msra.mxu0 0.0
        %2317 = vmatprep.subr.mxu0 0.0
        %2318 = vmatpush1.msra.mxu0 0.0
        %2319 = vmatprep.subr.mxu0 0.0
        %2320 = vmatpush1.msra.mxu0 0.0
        %2321 = vmatprep.subr.mxu0 0.0
        %2322 = vmatpush1.msra.mxu0 0.0
        %2323 = vmatprep.subr.mxu0 0.0
        %2324 = vmatpush1.msra.mxu0 0.0
        %2325 = vmatprep.subr.mxu0 0.0
        %2326 = vmatpush1.msra.mxu0 0.0
        %2327 = vmatprep.subr.mxu0 0.0
        %2328 = vmatpush1.msra.mxu0 0.0
        %2329 = vmatprep.subr.mxu0 0.0
        %2330 = vmatpush1.msra.mxu0 0.0
        %2331 = vmatprep.subr.mxu0 0.0
        %2332 = vmatpush1.msra.mxu0 0.0
        %2333 = vmatprep.subr.mxu0 0.0
        %2334 = vmatpush1.msra.mxu0 0.0
        %2335 = vmatprep.subr.mxu0 0.0
        %2336 = vmatpush1.msra.mxu0 0.0
        %2337 = vmatprep.subr.mxu0 0.0
        %2338 = vmatpush1.msra.mxu0 0.0
        %2339 = vmatprep.subr.mxu0 0.0
        %2340 = vmatpush1.msra.mxu0 %v1948
        %2341 = vmatprep.subr.mxu0 0.0
        %2342 = vmatpush2.msra.mxu0 0.0
        %2343 = vmatprep.subr.mxu0 0.0
        %2344 = vmatpush2.msra.mxu0 0.0
        %2345 = vmatprep.subr.mxu0 0.0
        %2346 = vmatpush2.msra.mxu0 0.0
        %2347 = vmatprep.subr.mxu0 0.0
        %2348 = vmatpush2.msra.mxu0 0.0
        %2349 = vmatprep.subr.mxu0 0.0
        %2350 = vmatpush2.msra.mxu0 0.0
        %2351 = vmatprep.subr.mxu0 0.0
        %2352 = vmatpush2.msra.mxu0 0.0
        %2353 = vmatprep.subr.mxu0 0.0
        %2354 = vmatpush2.msra.mxu0 0.0
        %2355 = vmatprep.subr.mxu0 0.0
        %2356 = vmatpush2.msra.mxu0 0.0
        %2357 = vmatprep.subr.mxu0 0.0
        %2358 = vmatpush2.msra.mxu0 0.0
        %2359 = vmatprep.subr.mxu0 0.0
        %2360 = vmatpush2.msra.mxu0 0.0
        %2361 = vmatprep.subr.mxu0 0.0
        %2362 = vmatpush2.msra.mxu0 0.0
        %2363 = vmatprep.subr.mxu0 0.0
        %2364 = vmatpush2.msra.mxu0 0.0
        %2365 = vmatprep.subr.mxu0 0.0
        %2366 = vmatpush2.msra.mxu0 0.0
        %2367 = vmatprep.subr.mxu0 0.0
        %2368 = vmatpush2.msra.mxu0 0.0
        %2369 = vmatprep.subr.mxu0 0.0
        %2370 = vmatpush2.msra.mxu0 0.0
        %2371 = vmatprep.subr.mxu0 0.0
        %2372 = vmatpush2.msra.mxu0 0.0
        %2373 = vmatprep.mubr.f32.mxu0 0.0
        %2374 = vmatmul.mubr.f32.gmra.mxu0 %v2307
        %v2375 = vpop.f32.mrf.mxu0
        %v2376 = vadd.f32 0.0, %v2375
        %v2377 = vpop.f32.mrf.mxu0
        %2378 = vdwg.mxu0
        %v2380 = vsel %vm788, %v2128, 0
        %2382 = vmatprep.subr.mxu0 0.0
        %2383 = vmatpush1.msra.mxu0 0.0
        %2384 = vmatprep.subr.mxu0 0.0
        %2385 = vmatpush1.msra.mxu0 0.0
        %2386 = vmatprep.subr.mxu0 0.0
        %2387 = vmatpush1.msra.mxu0 0.0
        %2388 = vmatprep.subr.mxu0 0.0
        %2389 = vmatpush1.msra.mxu0 0.0
        %2390 = vmatprep.subr.mxu0 0.0
        %2391 = vmatpush1.msra.mxu0 0.0
        %2392 = vmatprep.subr.mxu0 0.0
        %2393 = vmatpush1.msra.mxu0 0.0
        %2394 = vmatprep.subr.mxu0 0.0
        %2395 = vmatpush1.msra.mxu0 0.0
        %2396 = vmatprep.subr.mxu0 0.0
        %2397 = vmatpush1.msra.mxu0 0.0
        %2398 = vmatprep.subr.mxu0 0.0
        %2399 = vmatpush1.msra.mxu0 0.0
        %2400 = vmatprep.subr.mxu0 0.0
        %2401 = vmatpush1.msra.mxu0 0.0
        %2402 = vmatprep.subr.mxu0 0.0
        %2403 = vmatpush1.msra.mxu0 0.0
        %2404 = vmatprep.subr.mxu0 0.0
        %2405 = vmatpush1.msra.mxu0 0.0
        %2406 = vmatprep.subr.mxu0 0.0
        %2407 = vmatpush1.msra.mxu0 0.0
        %2408 = vmatprep.subr.mxu0 0.0
        %2409 = vmatpush1.msra.mxu0 0.0
        %2410 = vmatprep.subr.mxu0 0.0
        %2411 = vmatpush1.msra.mxu0 0.0
        %2412 = vmatprep.subr.mxu0 0.0
        %2413 = vmatpush1.msra.mxu0 %v1947
        %2414 = vmatprep.subr.mxu0 0.0
        %2415 = vmatpush2.msra.mxu0 0.0
        %2416 = vmatprep.subr.mxu0 0.0
        %2417 = vmatpush2.msra.mxu0 0.0
        %2418 = vmatprep.subr.mxu0 0.0
        %2419 = vmatpush2.msra.mxu0 0.0
        %2420 = vmatprep.subr.mxu0 0.0
        %2421 = vmatpush2.msra.mxu0 0.0
        %2422 = vmatprep.subr.mxu0 0.0
        %2423 = vmatpush2.msra.mxu0 0.0
        %2424 = vmatprep.subr.mxu0 0.0
        %2425 = vmatpush2.msra.mxu0 0.0
        %2426 = vmatprep.subr.mxu0 0.0
        %2427 = vmatpush2.msra.mxu0 0.0
        %2428 = vmatprep.subr.mxu0 0.0
        %2429 = vmatpush2.msra.mxu0 0.0
        %2430 = vmatprep.subr.mxu0 0.0
        %2431 = vmatpush2.msra.mxu0 0.0
        %2432 = vmatprep.subr.mxu0 0.0
        %2433 = vmatpush2.msra.mxu0 0.0
        %2434 = vmatprep.subr.mxu0 0.0
        %2435 = vmatpush2.msra.mxu0 0.0
        %2436 = vmatprep.subr.mxu0 0.0
        %2437 = vmatpush2.msra.mxu0 0.0
        %2438 = vmatprep.subr.mxu0 0.0
        %2439 = vmatpush2.msra.mxu0 0.0
        %2440 = vmatprep.subr.mxu0 0.0
        %2441 = vmatpush2.msra.mxu0 0.0
        %2442 = vmatprep.subr.mxu0 0.0
        %2443 = vmatpush2.msra.mxu0 0.0
        %2444 = vmatprep.subr.mxu0 0.0
        %2445 = vmatpush2.msra.mxu0 0.0
        %2446 = vmatprep.mubr.f32.mxu0 0.0
        %2447 = vmatmul.mubr.f32.gmra.mxu0 %v2380
        %v2448 = vpop.f32.mrf.mxu0
        %v2449 = vadd.f32 %v2376, %v2448
        %v2450 = vpop.f32.mrf.mxu0
        %2451 = vdwg.mxu0
        %v2452 = vadd.f32 %v2049, %v2225
        %2453 = vrot.lane.b32.xlu0 %v1855, 112
        %v2454 = vpop.permute.xlu0 %2453
        %2455 = vrot.lane.b32.xlu0 %v1939, 112
        %v2456 = vpop.permute.xlu0 %2455
        %2457 = vrot.lane.b32.xlu0 %v1944, 112
        %v2458 = vpop.permute.xlu0 %2457
        %v2459 = vsel %vm788, %v2454, 0
        %v2461 = vsel %vm788, %v2456, 0
        %v2463 = vsel %vm788, %v2458, 0
        %2465 = vmatprep.subr.mxu0 0.0
        %2466 = vmatpush1.xpose.msra.mxu0 0.0
        %2467 = vmatprep.subr.mxu0 0.0
        %2468 = vmatpush1.xpose.msra.mxu0 0.0
        %2469 = vmatprep.subr.mxu0 0.0
        %2470 = vmatpush1.xpose.msra.mxu0 0.0
        %2471 = vmatprep.subr.mxu0 0.0
        %2472 = vmatpush1.xpose.msra.mxu0 0.0
        %2473 = vmatprep.subr.mxu0 0.0
        %2474 = vmatpush1.xpose.msra.mxu0 0.0
        %2475 = vmatprep.subr.mxu0 0.0
        %2476 = vmatpush1.xpose.msra.mxu0 0.0
        %2477 = vmatprep.subr.mxu0 0.0
        %2478 = vmatpush1.xpose.msra.mxu0 0.0
        %2479 = vmatprep.subr.mxu0 0.0
        %2480 = vmatpush1.xpose.msra.mxu0 0.0
        %2481 = vmatprep.subr.mxu0 0.0
        %2482 = vmatpush1.xpose.msra.mxu0 0.0
        %2483 = vmatprep.subr.mxu0 0.0
        %2484 = vmatpush1.xpose.msra.mxu0 0.0
        %2485 = vmatprep.subr.mxu0 0.0
        %2486 = vmatpush1.xpose.msra.mxu0 0.0
        %2487 = vmatprep.subr.mxu0 0.0
        %2488 = vmatpush1.xpose.msra.mxu0 0.0
        %2489 = vmatprep.subr.mxu0 0.0
        %2490 = vmatpush1.xpose.msra.mxu0 0.0
        %2491 = vmatprep.subr.mxu0 0.0
        %2492 = vmatpush1.xpose.msra.mxu0 0.0
        %2493 = vmatprep.subr.mxu0 0.0
        %2494 = vmatpush1.xpose.msra.mxu0 %v2463
        %2495 = vmatprep.subr.mxu0 0.0
        %2496 = vmatpush1.xpose.msra.mxu0 %v2461
        %2497 = vmatprep.subr.mxu0 0.0
        %2498 = vmatpush2.xpose.msra.mxu0 0.0
        %2499 = vmatprep.subr.mxu0 0.0
        %2500 = vmatpush2.xpose.msra.mxu0 0.0
        %2501 = vmatprep.subr.mxu0 0.0
        %2502 = vmatpush2.xpose.msra.mxu0 0.0
        %2503 = vmatprep.subr.mxu0 0.0
        %2504 = vmatpush2.xpose.msra.mxu0 0.0
        %2505 = vmatprep.subr.mxu0 0.0
        %2506 = vmatpush2.xpose.msra.mxu0 0.0
        %2507 = vmatprep.subr.mxu0 0.0
        %2508 = vmatpush2.xpose.msra.mxu0 0.0
        %2509 = vmatprep.subr.mxu0 0.0
        %2510 = vmatpush2.xpose.msra.mxu0 0.0
        %2511 = vmatprep.subr.mxu0 0.0
        %2512 = vmatpush2.xpose.msra.mxu0 0.0
        %2513 = vmatprep.subr.mxu0 0.0
        %2514 = vmatpush2.xpose.msra.mxu0 0.0
        %2515 = vmatprep.subr.mxu0 0.0
        %2516 = vmatpush2.xpose.msra.mxu0 0.0
        %2517 = vmatprep.subr.mxu0 0.0
        %2518 = vmatpush2.xpose.msra.mxu0 0.0
        %2519 = vmatprep.subr.mxu0 0.0
        %2520 = vmatpush2.xpose.msra.mxu0 0.0
        %2521 = vmatprep.subr.mxu0 0.0
        %2522 = vmatpush2.xpose.msra.mxu0 0.0
        %2523 = vmatprep.subr.mxu0 0.0
        %2524 = vmatpush2.xpose.msra.mxu0 0.0
        %2525 = vmatprep.subr.mxu0 0.0
        %2526 = vmatpush2.xpose.msra.mxu0 0.0
        %2527 = vmatprep.subr.mxu0 0.0
        %2528 = vmatpush2.xpose.msra.mxu0 0.0
        %2529 = vmatprep.mubr.f32.mxu0 0.0
        %2530 = vmatmul.mubr.f32.gmra.mxu0 %v2459
        %v2531 = vpop.f32.mrf.mxu0
        %v2532 = vadd.f32 0.0, %v2531
        %v2533 = vpop.f32.mrf.mxu0
        %2534 = vdwg.mxu0
        %v2535 = vmul.f32 %v2532, 0.35355338
        %v2536 = vadd.f32 %v2535, %v2035
        %v2537 = vsel %vm2038, %v2536, -inf
        %2538 = vmax.xlane.f32.xlu0 %v2537
        %v2539 = vpop.xlane.xlu0 %2538
        %v2540 = vsub.f32 %v2536, %v2539
        %v2541 = vmul.f32 %v2540, 1.442695
        %v2542 = vpow.pop %v2541
        %v2543 = vsel %vm2038, %v2542, 0.0
        %2544 = vadd.xlane.f32.xlu0 %v2543
        %v2545 = vpop.xlane.xlu0 %2544
        %v2546 = vrcp.pop %v2545
        %v2547 = vmul.f32 %v2542, %v2546
        %2548 = vrot.lane.b32.xlu0 %v1939, 80
        %v2549 = vpop.permute.xlu0 %2548
        %2550 = vrot.lane.b32.xlu0 %v1944, 80
        %v2551 = vpop.permute.xlu0 %2550
        %v2554 = vsel %vm2038, %v2547, 0
        %v2556 = vsel %vm2058, %v2551, 0
        %2558 = vmatprep.subr.mxu0 0.0
        %2559 = vmatpush1.msra.mxu0 0.0
        %2560 = vmatprep.subr.mxu0 0.0
        %2561 = vmatpush1.msra.mxu0 0.0
        %2562 = vmatprep.subr.mxu0 0.0
        %2563 = vmatpush1.msra.mxu0 0.0
        %2564 = vmatprep.subr.mxu0 0.0
        %2565 = vmatpush1.msra.mxu0 0.0
        %2566 = vmatprep.subr.mxu0 0.0
        %2567 = vmatpush1.msra.mxu0 0.0
        %2568 = vmatprep.subr.mxu0 0.0
        %2569 = vmatpush1.msra.mxu0 0.0
        %2570 = vmatprep.subr.mxu0 0.0
        %2571 = vmatpush1.msra.mxu0 0.0
        %2572 = vmatprep.subr.mxu0 0.0
        %2573 = vmatpush1.msra.mxu0 0.0
        %2574 = vmatprep.subr.mxu0 0.0
        %2575 = vmatpush1.msra.mxu0 0.0
        %2576 = vmatprep.subr.mxu0 0.0
        %2577 = vmatpush1.msra.mxu0 0.0
        %2578 = vmatprep.subr.mxu0 0.0
        %2579 = vmatpush1.msra.mxu0 0.0
        %2580 = vmatprep.subr.mxu0 0.0
        %2581 = vmatpush1.msra.mxu0 0.0
        %2582 = vmatprep.subr.mxu0 0.0
        %2583 = vmatpush1.msra.mxu0 0.0
        %2584 = vmatprep.subr.mxu0 0.0
        %2585 = vmatpush1.msra.mxu0 0.0
        %2586 = vmatprep.subr.mxu0 0.0
        %2587 = vmatpush1.msra.mxu0 %v2556
        %2588 = vmatprep.subr.mxu0 0.0
        %2589 = vmatpush1.msra.mxu0 %v2549
        %2590 = vmatprep.subr.mxu0 0.0
        %2591 = vmatpush2.msra.mxu0 0.0
        %2592 = vmatprep.subr.mxu0 0.0
        %2593 = vmatpush2.msra.mxu0 0.0
        %2594 = vmatprep.subr.mxu0 0.0
        %2595 = vmatpush2.msra.mxu0 0.0
        %2596 = vmatprep.subr.mxu0 0.0
        %2597 = vmatpush2.msra.mxu0 0.0
        %2598 = vmatprep.subr.mxu0 0.0
        %2599 = vmatpush2.msra.mxu0 0.0
        %2600 = vmatprep.subr.mxu0 0.0
        %2601 = vmatpush2.msra.mxu0 0.0
        %2602 = vmatprep.subr.mxu0 0.0
        %2603 = vmatpush2.msra.mxu0 0.0
        %2604 = vmatprep.subr.mxu0 0.0
        %2605 = vmatpush2.msra.mxu0 0.0
        %2606 = vmatprep.subr.mxu0 0.0
        %2607 = vmatpush2.msra.mxu0 0.0
        %2608 = vmatprep.subr.mxu0 0.0
        %2609 = vmatpush2.msra.mxu0 0.0
        %2610 = vmatprep.subr.mxu0 0.0
        %2611 = vmatpush2.msra.mxu0 0.0
        %2612 = vmatprep.subr.mxu0 0.0
        %2613 = vmatpush2.msra.mxu0 0.0
        %2614 = vmatprep.subr.mxu0 0.0
        %2615 = vmatpush2.msra.mxu0 0.0
        %2616 = vmatprep.subr.mxu0 0.0
        %2617 = vmatpush2.msra.mxu0 0.0
        %2618 = vmatprep.subr.mxu0 0.0
        %2619 = vmatpush2.msra.mxu0 0.0
        %2620 = vmatprep.subr.mxu0 0.0
        %2621 = vmatpush2.msra.mxu0 0.0
        %2622 = vmatprep.mubr.f32.mxu0 0.0
        %2623 = vmatmul.mubr.f32.gmra.mxu0 %v2554
        %v2624 = vpop.f32.mrf.mxu0
        %v2625 = vadd.f32 0.0, %v2624
        %v2626 = vpop.f32.mrf.mxu0
        %2627 = vdwg.mxu0
        %v2629 = vsel %vm788, %v2625, 0
        %2631 = vmatprep.subr.mxu0 0.0
        %2632 = vmatpush1.msra.mxu0 0.0
        %2633 = vmatprep.subr.mxu0 0.0
        %2634 = vmatpush1.msra.mxu0 0.0
        %2635 = vmatprep.subr.mxu0 0.0
        %2636 = vmatpush1.msra.mxu0 0.0
        %2637 = vmatprep.subr.mxu0 0.0
        %2638 = vmatpush1.msra.mxu0 0.0
        %2639 = vmatprep.subr.mxu0 0.0
        %2640 = vmatpush1.msra.mxu0 0.0
        %2641 = vmatprep.subr.mxu0 0.0
        %2642 = vmatpush1.msra.mxu0 0.0
        %2643 = vmatprep.subr.mxu0 0.0
        %2644 = vmatpush1.msra.mxu0 0.0
        %2645 = vmatprep.subr.mxu0 0.0
        %2646 = vmatpush1.msra.mxu0 0.0
        %2647 = vmatprep.subr.mxu0 0.0
        %2648 = vmatpush1.msra.mxu0 0.0
        %2649 = vmatprep.subr.mxu0 0.0
        %2650 = vmatpush1.msra.mxu0 0.0
        %2651 = vmatprep.subr.mxu0 0.0
        %2652 = vmatpush1.msra.mxu0 0.0
        %2653 = vmatprep.subr.mxu0 0.0
        %2654 = vmatpush1.msra.mxu0 0.0
        %2655 = vmatprep.subr.mxu0 0.0
        %2656 = vmatpush1.msra.mxu0 0.0
        %2657 = vmatprep.subr.mxu0 0.0
        %2658 = vmatpush1.msra.mxu0 0.0
        %2659 = vmatprep.subr.mxu0 0.0
        %2660 = vmatpush1.msra.mxu0 0.0
        %2661 = vmatprep.subr.mxu0 0.0
        %2662 = vmatpush1.msra.mxu0 %v1949
        %2663 = vmatprep.subr.mxu0 0.0
        %2664 = vmatpush2.msra.mxu0 0.0
        %2665 = vmatprep.subr.mxu0 0.0
        %2666 = vmatpush2.msra.mxu0 0.0
        %2667 = vmatprep.subr.mxu0 0.0
        %2668 = vmatpush2.msra.mxu0 0.0
        %2669 = vmatprep.subr.mxu0 0.0
        %2670 = vmatpush2.msra.mxu0 0.0
        %2671 = vmatprep.subr.mxu0 0.0
        %2672 = vmatpush2.msra.mxu0 0.0
        %2673 = vmatprep.subr.mxu0 0.0
        %2674 = vmatpush2.msra.mxu0 0.0
        %2675 = vmatprep.subr.mxu0 0.0
        %2676 = vmatpush2.msra.mxu0 0.0
        %2677 = vmatprep.subr.mxu0 0.0
        %2678 = vmatpush2.msra.mxu0 0.0
        %2679 = vmatprep.subr.mxu0 0.0
        %2680 = vmatpush2.msra.mxu0 0.0
        %2681 = vmatprep.subr.mxu0 0.0
        %2682 = vmatpush2.msra.mxu0 0.0
        %2683 = vmatprep.subr.mxu0 0.0
        %2684 = vmatpush2.msra.mxu0 0.0
        %2685 = vmatprep.subr.mxu0 0.0
        %2686 = vmatpush2.msra.mxu0 0.0
        %2687 = vmatprep.subr.mxu0 0.0
        %2688 = vmatpush2.msra.mxu0 0.0
        %2689 = vmatprep.subr.mxu0 0.0
        %2690 = vmatpush2.msra.mxu0 0.0
        %2691 = vmatprep.subr.mxu0 0.0
        %2692 = vmatpush2.msra.mxu0 0.0
        %2693 = vmatprep.subr.mxu0 0.0
        %2694 = vmatpush2.msra.mxu0 0.0
        %2695 = vmatprep.mubr.f32.mxu0 0.0
        %2696 = vmatmul.mubr.f32.gmra.mxu0 %v2629
        %v2697 = vpop.f32.mrf.mxu0
        %v2698 = vadd.f32 0.0, %v2697
        %v2699 = vpop.f32.mrf.mxu0
        %2700 = vdwg.mxu0
        %v2701 = vadd.f32 %v2449, %v2698
        %v2702 = vadd.f32 %v2452, %v2547
        %2703 = vrot.lane.b32.xlu0 %v1855, 104
        %v2704 = vpop.permute.xlu0 %2703
        %2705 = vrot.lane.b32.xlu0 %v1939, 104
        %v2706 = vpop.permute.xlu0 %2705
        %2707 = vrot.lane.b32.xlu0 %v1944, 104
        %v2708 = vpop.permute.xlu0 %2707
        %v2709 = vsel %vm788, %v2704, 0
        %v2711 = vsel %vm788, %v2706, 0
        %v2713 = vsel %vm788, %v2708, 0
        %2715 = vmatprep.subr.mxu0 0.0
        %2716 = vmatpush1.xpose.msra.mxu0 0.0
        %2717 = vmatprep.subr.mxu0 0.0
        %2718 = vmatpush1.xpose.msra.mxu0 0.0
        %2719 = vmatprep.subr.mxu0 0.0
        %2720 = vmatpush1.xpose.msra.mxu0 0.0
        %2721 = vmatprep.subr.mxu0 0.0
        %2722 = vmatpush1.xpose.msra.mxu0 0.0
        %2723 = vmatprep.subr.mxu0 0.0
        %2724 = vmatpush1.xpose.msra.mxu0 0.0
        %2725 = vmatprep.subr.mxu0 0.0
        %2726 = vmatpush1.xpose.msra.mxu0 0.0
        %2727 = vmatprep.subr.mxu0 0.0
        %2728 = vmatpush1.xpose.msra.mxu0 0.0
        %2729 = vmatprep.subr.mxu0 0.0
        %2730 = vmatpush1.xpose.msra.mxu0 0.0
        %2731 = vmatprep.subr.mxu0 0.0
        %2732 = vmatpush1.xpose.msra.mxu0 0.0
        %2733 = vmatprep.subr.mxu0 0.0
        %2734 = vmatpush1.xpose.msra.mxu0 0.0
        %2735 = vmatprep.subr.mxu0 0.0
        %2736 = vmatpush1.xpose.msra.mxu0 0.0
        %2737 = vmatprep.subr.mxu0 0.0
        %2738 = vmatpush1.xpose.msra.mxu0 0.0
        %2739 = vmatprep.subr.mxu0 0.0
        %2740 = vmatpush1.xpose.msra.mxu0 0.0
        %2741 = vmatprep.subr.mxu0 0.0
        %2742 = vmatpush1.xpose.msra.mxu0 0.0
        %2743 = vmatprep.subr.mxu0 0.0
        %2744 = vmatpush1.xpose.msra.mxu0 %v2713
        %2745 = vmatprep.subr.mxu0 0.0
        %2746 = vmatpush1.xpose.msra.mxu0 %v2711
        %2747 = vmatprep.subr.mxu0 0.0
        %2748 = vmatpush2.xpose.msra.mxu0 0.0
        %2749 = vmatprep.subr.mxu0 0.0
        %2750 = vmatpush2.xpose.msra.mxu0 0.0
        %2751 = vmatprep.subr.mxu0 0.0
        %2752 = vmatpush2.xpose.msra.mxu0 0.0
        %2753 = vmatprep.subr.mxu0 0.0
        %2754 = vmatpush2.xpose.msra.mxu0 0.0
        %2755 = vmatprep.subr.mxu0 0.0
        %2756 = vmatpush2.xpose.msra.mxu0 0.0
        %2757 = vmatprep.subr.mxu0 0.0
        %2758 = vmatpush2.xpose.msra.mxu0 0.0
        %2759 = vmatprep.subr.mxu0 0.0
        %2760 = vmatpush2.xpose.msra.mxu0 0.0
        %2761 = vmatprep.subr.mxu0 0.0
        %2762 = vmatpush2.xpose.msra.mxu0 0.0
        %2763 = vmatprep.subr.mxu0 0.0
        %2764 = vmatpush2.xpose.msra.mxu0 0.0
        %2765 = vmatprep.subr.mxu0 0.0
        %2766 = vmatpush2.xpose.msra.mxu0 0.0
        %2767 = vmatprep.subr.mxu0 0.0
        %2768 = vmatpush2.xpose.msra.mxu0 0.0
        %2769 = vmatprep.subr.mxu0 0.0
        %2770 = vmatpush2.xpose.msra.mxu0 0.0
        %2771 = vmatprep.subr.mxu0 0.0
        %2772 = vmatpush2.xpose.msra.mxu0 0.0
        %2773 = vmatprep.subr.mxu0 0.0
        %2774 = vmatpush2.xpose.msra.mxu0 0.0
        %2775 = vmatprep.subr.mxu0 0.0
        %2776 = vmatpush2.xpose.msra.mxu0 0.0
        %2777 = vmatprep.subr.mxu0 0.0
        %2778 = vmatpush2.xpose.msra.mxu0 0.0
        %2779 = vmatprep.mubr.f32.mxu0 0.0
        %2780 = vmatmul.mubr.f32.gmra.mxu0 %v2709
        %v2781 = vpop.f32.mrf.mxu0
        %v2782 = vadd.f32 0.0, %v2781
        %v2783 = vpop.f32.mrf.mxu0
        %2784 = vdwg.mxu0
        %v2785 = vmul.f32 %v2782, 0.35355338
        %v2786 = vadd.f32 %v2785, %v2035
        %v2787 = vsel %vm2038, %v2786, -inf
        %2788 = vmax.xlane.f32.xlu0 %v2787
        %v2789 = vpop.xlane.xlu0 %2788
        %v2790 = vsub.f32 %v2786, %v2789
        %v2791 = vmul.f32 %v2790, 1.442695
        %v2792 = vpow.pop %v2791
        %v2793 = vsel %vm2038, %v2792, 0.0
        %2794 = vadd.xlane.f32.xlu0 %v2793
        %v2795 = vpop.xlane.xlu0 %2794
        %v2796 = vrcp.pop %v2795
        %v2797 = vmul.f32 %v2792, %v2796
        %2798 = vrot.lane.b32.xlu0 %v1939, 72
        %v2799 = vpop.permute.xlu0 %2798
        %2800 = vrot.lane.b32.xlu0 %v1944, 72
        %v2801 = vpop.permute.xlu0 %2800
        %v2804 = vsel %vm2038, %v2797, 0
        %v2806 = vsel %vm2058, %v2801, 0
        %2808 = vmatprep.subr.mxu0 0.0
        %2809 = vmatpush1.msra.mxu0 0.0
        %2810 = vmatprep.subr.mxu0 0.0
        %2811 = vmatpush1.msra.mxu0 0.0
        %2812 = vmatprep.subr.mxu0 0.0
        %2813 = vmatpush1.msra.mxu0 0.0
        %2814 = vmatprep.subr.mxu0 0.0
        %2815 = vmatpush1.msra.mxu0 0.0
        %2816 = vmatprep.subr.mxu0 0.0
        %2817 = vmatpush1.msra.mxu0 0.0
        %2818 = vmatprep.subr.mxu0 0.0
        %2819 = vmatpush1.msra.mxu0 0.0
        %2820 = vmatprep.subr.mxu0 0.0
        %2821 = vmatpush1.msra.mxu0 0.0
        %2822 = vmatprep.subr.mxu0 0.0
        %2823 = vmatpush1.msra.mxu0 0.0
        %2824 = vmatprep.subr.mxu0 0.0
        %2825 = vmatpush1.msra.mxu0 0.0
        %2826 = vmatprep.subr.mxu0 0.0
        %2827 = vmatpush1.msra.mxu0 0.0
        %2828 = vmatprep.subr.mxu0 0.0
        %2829 = vmatpush1.msra.mxu0 0.0
        %2830 = vmatprep.subr.mxu0 0.0
        %2831 = vmatpush1.msra.mxu0 0.0
        %2832 = vmatprep.subr.mxu0 0.0
        %2833 = vmatpush1.msra.mxu0 0.0
        %2834 = vmatprep.subr.mxu0 0.0
        %2835 = vmatpush1.msra.mxu0 0.0
        %2836 = vmatprep.subr.mxu0 0.0
        %2837 = vmatpush1.msra.mxu0 %v2806
        %2838 = vmatprep.subr.mxu0 0.0
        %2839 = vmatpush1.msra.mxu0 %v2799
        %2840 = vmatprep.subr.mxu0 0.0
        %2841 = vmatpush2.msra.mxu0 0.0
        %2842 = vmatprep.subr.mxu0 0.0
        %2843 = vmatpush2.msra.mxu0 0.0
        %2844 = vmatprep.subr.mxu0 0.0
        %2845 = vmatpush2.msra.mxu0 0.0
        %2846 = vmatprep.subr.mxu0 0.0
        %2847 = vmatpush2.msra.mxu0 0.0
        %2848 = vmatprep.subr.mxu0 0.0
        %2849 = vmatpush2.msra.mxu0 0.0
        %2850 = vmatprep.subr.mxu0 0.0
        %2851 = vmatpush2.msra.mxu0 0.0
        %2852 = vmatprep.subr.mxu0 0.0
        %2853 = vmatpush2.msra.mxu0 0.0
        %2854 = vmatprep.subr.mxu0 0.0
        %2855 = vmatpush2.msra.mxu0 0.0
        %2856 = vmatprep.subr.mxu0 0.0
        %2857 = vmatpush2.msra.mxu0 0.0
        %2858 = vmatprep.subr.mxu0 0.0
        %2859 = vmatpush2.msra.mxu0 0.0
        %2860 = vmatprep.subr.mxu0 0.0
        %2861 = vmatpush2.msra.mxu0 0.0
        %2862 = vmatprep.subr.mxu0 0.0
        %2863 = vmatpush2.msra.mxu0 0.0
        %2864 = vmatprep.subr.mxu0 0.0
        %2865 = vmatpush2.msra.mxu0 0.0
        %2866 = vmatprep.subr.mxu0 0.0
        %2867 = vmatpush2.msra.mxu0 0.0
        %2868 = vmatprep.subr.mxu0 0.0
        %2869 = vmatpush2.msra.mxu0 0.0
        %2870 = vmatprep.subr.mxu0 0.0
        %2871 = vmatpush2.msra.mxu0 0.0
        %2872 = vmatprep.mubr.f32.mxu0 0.0
        %2873 = vmatmul.mubr.f32.gmra.mxu0 %v2804
        %v2874 = vpop.f32.mrf.mxu0
        %v2875 = vadd.f32 0.0, %v2874
        %v2876 = vpop.f32.mrf.mxu0
        %2877 = vdwg.mxu0
        %v2879 = vsel %vm788, %v2875, 0
        %2881 = vmatprep.subr.mxu0 0.0
        %2882 = vmatpush1.msra.mxu0 0.0
        %2883 = vmatprep.subr.mxu0 0.0
        %2884 = vmatpush1.msra.mxu0 0.0
        %2885 = vmatprep.subr.mxu0 0.0
        %2886 = vmatpush1.msra.mxu0 0.0
        %2887 = vmatprep.subr.mxu0 0.0
        %2888 = vmatpush1.msra.mxu0 0.0
        %2889 = vmatprep.subr.mxu0 0.0
        %2890 = vmatpush1.msra.mxu0 0.0
        %2891 = vmatprep.subr.mxu0 0.0
        %2892 = vmatpush1.msra.mxu0 0.0
        %2893 = vmatprep.subr.mxu0 0.0
        %2894 = vmatpush1.msra.mxu0 0.0
        %2895 = vmatprep.subr.mxu0 0.0
        %2896 = vmatpush1.msra.mxu0 0.0
        %2897 = vmatprep.subr.mxu0 0.0
        %2898 = vmatpush1.msra.mxu0 0.0
        %2899 = vmatprep.subr.mxu0 0.0
        %2900 = vmatpush1.msra.mxu0 0.0
        %2901 = vmatprep.subr.mxu0 0.0
        %2902 = vmatpush1.msra.mxu0 0.0
        %2903 = vmatprep.subr.mxu0 0.0
        %2904 = vmatpush1.msra.mxu0 0.0
        %2905 = vmatprep.subr.mxu0 0.0
        %2906 = vmatpush1.msra.mxu0 0.0
        %2907 = vmatprep.subr.mxu0 0.0
        %2908 = vmatpush1.msra.mxu0 0.0
        %2909 = vmatprep.subr.mxu0 0.0
        %2910 = vmatpush1.msra.mxu0 0.0
        %2911 = vmatprep.subr.mxu0 0.0
        %2912 = vmatpush1.msra.mxu0 %v1950
        %2913 = vmatprep.subr.mxu0 0.0
        %2914 = vmatpush2.msra.mxu0 0.0
        %2915 = vmatprep.subr.mxu0 0.0
        %2916 = vmatpush2.msra.mxu0 0.0
        %2917 = vmatprep.subr.mxu0 0.0
        %2918 = vmatpush2.msra.mxu0 0.0
        %2919 = vmatprep.subr.mxu0 0.0
        %2920 = vmatpush2.msra.mxu0 0.0
        %2921 = vmatprep.subr.mxu0 0.0
        %2922 = vmatpush2.msra.mxu0 0.0
        %2923 = vmatprep.subr.mxu0 0.0
        %2924 = vmatpush2.msra.mxu0 0.0
        %2925 = vmatprep.subr.mxu0 0.0
        %2926 = vmatpush2.msra.mxu0 0.0
        %2927 = vmatprep.subr.mxu0 0.0
        %2928 = vmatpush2.msra.mxu0 0.0
        %2929 = vmatprep.subr.mxu0 0.0
        %2930 = vmatpush2.msra.mxu0 0.0
        %2931 = vmatprep.subr.mxu0 0.0
        %2932 = vmatpush2.msra.mxu0 0.0
        %2933 = vmatprep.subr.mxu0 0.0
        %2934 = vmatpush2.msra.mxu0 0.0
        %2935 = vmatprep.subr.mxu0 0.0
        %2936 = vmatpush2.msra.mxu0 0.0
        %2937 = vmatprep.subr.mxu0 0.0
        %2938 = vmatpush2.msra.mxu0 0.0
        %2939 = vmatprep.subr.mxu0 0.0
        %2940 = vmatpush2.msra.mxu0 0.0
        %2941 = vmatprep.subr.mxu0 0.0
        %2942 = vmatpush2.msra.mxu0 0.0
        %2943 = vmatprep.subr.mxu0 0.0
        %2944 = vmatpush2.msra.mxu0 0.0
        %2945 = vmatprep.mubr.f32.mxu0 0.0
        %2946 = vmatmul.mubr.f32.gmra.mxu0 %v2879
        %v2947 = vpop.f32.mrf.mxu0
        %v2948 = vadd.f32 0.0, %v2947
        %v2949 = vpop.f32.mrf.mxu0
        %2950 = vdwg.mxu0
        %v2951 = vadd.f32 %v2701, %v2948
        %v2952 = vadd.f32 %v2702, %v2797
        %v2953 = vlaneseq
        %v2954 = vshrl.u32 %v2953, 7
        %v2955 = vsub.s32 6, %v2954
        %v2956 = vrot.slane %v691, %v2955
        %v2957 = vadd.f32 %v2951, %v2956
        %v2958 = vadd.f32 %v1776, %v2957
        %v2959 = vsel %vm707, %v2958, 0.0
        %2960 = vadd.xlane.f32.xlu0 %v2959
        %v2961 = vpop.xlane.xlu0 %2960
        %v2962 = vmul.f32 %v2961, %v1756
        %v2963 = vsub.f32 %v2958, %v2962
        %v2964 = vmul.f32 %v2963, %v2963
        %v2965 = vsel %vm707, %v2964, 0.0
        %2966 = vadd.xlane.f32.xlu0 %v2965
        %v2967 = vpop.xlane.xlu0 %2966
        %v2968 = vmul.f32 %v2967, %v1756
        %v2969 = vadd.f32 %v2968, 1e-05
        %v2970 = vrsqrt.pop %v2969
        %v2971 = vmul.f32 %v2963, %v2970
        %v2972 = vlaneseq
        %v2973 = vshrl.u32 %v2972, 7
        %v2974 = vsub.s32 7, %v2973
        %v2975 = vrot.slane %v691, %v2974
        %v2976 = vmul.f32 %v2971, %v2975
        %v2977 = vlaneseq
        %v2978 = vshrl.u32 %v2977, 7
        %v2979 = vsub.s32 0, %v2978
        %v2980 = vrot.slane %v692, %v2979
        %v2981 = vadd.f32 %v2976, %v2980
        %v2982 = vld [vmem:[%s665] sm:$0xff]
        %v2983 = vld [vmem:[%s665 + $0x8] sm:$0xff]
        %v2984 = vld [vmem:[%s665 + $0x10] sm:$0xff]
        %v2985 = vld [vmem:[%s665 + $0x18] sm:$0xff]
        %v2986 = vlaneseq
        %v2987 = vshrl.u32 %v2986, 7
        %v2988 = vsub.s32 1, %v2987
        %v2989 = vrot.slane %v692, %v2988
        %v2991 = vsel %vm707, %v2981, 0
        %2993 = vmatprep.subr.mxu0 0.0
        %2994 = vmatpush1.msra.mxu0 0.0
        %2995 = vmatprep.subr.mxu0 0.0
        %2996 = vmatpush1.msra.mxu0 0.0
        %2997 = vmatprep.subr.mxu0 0.0
        %2998 = vmatpush1.msra.mxu0 0.0
        %2999 = vmatprep.subr.mxu0 0.0
        %3000 = vmatpush1.msra.mxu0 0.0
        %3001 = vmatprep.subr.mxu0 0.0
        %3002 = vmatpush1.msra.mxu0 0.0
        %3003 = vmatprep.subr.mxu0 0.0
        %3004 = vmatpush1.msra.mxu0 0.0
        %3005 = vmatprep.subr.mxu0 0.0
        %3006 = vmatpush1.msra.mxu0 0.0
        %3007 = vmatprep.subr.mxu0 0.0
        %3008 = vmatpush1.msra.mxu0 0.0
        %3009 = vmatprep.subr.mxu0 0.0
        %3010 = vmatpush1.msra.mxu0 0.0
        %3011 = vmatprep.subr.mxu0 0.0
        %3012 = vmatpush1.msra.mxu0 0.0
        %3013 = vmatprep.subr.mxu0 0.0
        %3014 = vmatpush1.msra.mxu0 0.0
        %3015 = vmatprep.subr.mxu0 0.0
        %3016 = vmatpush1.msra.mxu0 0.0
        %3017 = vmatprep.subr.mxu0 0.0
        %3018 = vmatpush1.msra.mxu0 %v2985
        %3019 = vmatprep.subr.mxu0 0.0
        %3020 = vmatpush1.msra.mxu0 %v2984
        %3021 = vmatprep.subr.mxu0 0.0
        %3022 = vmatpush1.msra.mxu0 %v2983
        %3023 = vmatprep.subr.mxu0 0.0
        %3024 = vmatpush1.msra.mxu0 %v2982
        %3025 = vmatprep.subr.mxu0 0.0
        %3026 = vmatpush2.msra.mxu0 0.0
        %3027 = vmatprep.subr.mxu0 0.0
        %3028 = vmatpush2.msra.mxu0 0.0
        %3029 = vmatprep.subr.mxu0 0.0
        %3030 = vmatpush2.msra.mxu0 0.0
        %3031 = vmatprep.subr.mxu0 0.0
        %3032 = vmatpush2.msra.mxu0 0.0
        %3033 = vmatprep.subr.mxu0 0.0
        %3034 = vmatpush2.msra.mxu0 0.0
        %3035 = vmatprep.subr.mxu0 0.0
        %3036 = vmatpush2.msra.mxu0 0.0
        %3037 = vmatprep.subr.mxu0 0.0
        %3038 = vmatpush2.msra.mxu0 0.0
        %3039 = vmatprep.subr.mxu0 0.0
        %3040 = vmatpush2.msra.mxu0 0.0
        %3041 = vmatprep.subr.mxu0 0.0
        %3042 = vmatpush2.msra.mxu0 0.0
        %3043 = vmatprep.subr.mxu0 0.0
        %3044 = vmatpush2.msra.mxu0 0.0
        %3045 = vmatprep.subr.mxu0 0.0
        %3046 = vmatpush2.msra.mxu0 0.0
        %3047 = vmatprep.subr.mxu0 0.0
        %3048 = vmatpush2.msra.mxu0 0.0
        %3049 = vmatprep.subr.mxu0 0.0
        %3050 = vmatpush2.msra.mxu0 0.0
        %3051 = vmatprep.subr.mxu0 0.0
        %3052 = vmatpush2.msra.mxu0 0.0
        %3053 = vmatprep.subr.mxu0 0.0
        %3054 = vmatpush2.msra.mxu0 0.0
        %3055 = vmatprep.subr.mxu0 0.0
        %3056 = vmatpush2.msra.mxu0 0.0
        %3057 = vmatprep.mubr.f32.mxu0 0.0
        %3058 = vmatmul.mubr.f32.gmra.mxu0 %v2991
        %v3059 = vpop.f32.mrf.mxu0
        %v3060 = vadd.f32 %v2989, %v3059
        %v3061 = vpop.f32.mrf.mxu0
        %3062 = vdwg.mxu0
        %v3063 = vmax.f32 %v3060, 0.0
        %v3064 = vld [vmem:[%s670] sm:$0xff]
        %v3065 = vld [vmem:[%s670 + $0x8] sm:$0xff]
        %v3066 = vld [vmem:[%s670 + $0x10] sm:$0xff]
        %v3067 = vld [vmem:[%s670 + $0x18] sm:$0xff]
        %v3068 = vld [vmem:[%s670 + $0x20] sm:$0xff]
        %v3069 = vld [vmem:[%s670 + $0x28] sm:$0xff]
        %v3070 = vld [vmem:[%s670 + $0x30] sm:$0xff]
        %v3071 = vld [vmem:[%s670 + $0x38] sm:$0xff]
        %v3072 = vlaneseq
        %v3073 = vshrl.u32 %v3072, 7
        %v3074 = vsub.s32 2, %v3073
        %v3075 = vrot.slane %v692, %v3074
        %vm3076 = vcmask 523264
        %v3078 = vsel %vm3076, %v3063, 0
        %3080 = vmatprep.subr.mxu0 0.0
        %3081 = vmatpush1.msra.mxu0 0.0
        %3082 = vmatprep.subr.mxu0 0.0
        %3083 = vmatpush1.msra.mxu0 0.0
        %3084 = vmatprep.subr.mxu0 0.0
        %3085 = vmatpush1.msra.mxu0 0.0
        %3086 = vmatprep.subr.mxu0 0.0
        %3087 = vmatpush1.msra.mxu0 0.0
        %3088 = vmatprep.subr.mxu0 0.0
        %3089 = vmatpush1.msra.mxu0 0.0
        %3090 = vmatprep.subr.mxu0 0.0
        %3091 = vmatpush1.msra.mxu0 0.0
        %3092 = vmatprep.subr.mxu0 0.0
        %3093 = vmatpush1.msra.mxu0 0.0
        %3094 = vmatprep.subr.mxu0 0.0
        %3095 = vmatpush1.msra.mxu0 0.0
        %3096 = vmatprep.subr.mxu0 0.0
        %3097 = vmatpush1.msra.mxu0 %v3071
        %3098 = vmatprep.subr.mxu0 0.0
        %3099 = vmatpush1.msra.mxu0 %v3070
        %3100 = vmatprep.subr.mxu0 0.0
        %3101 = vmatpush1.msra.mxu0 %v3069
        %3102 = vmatprep.subr.mxu0 0.0
        %3103 = vmatpush1.msra.mxu0 %v3068
        %3104 = vmatprep.subr.mxu0 0.0
        %3105 = vmatpush1.msra.mxu0 %v3067
        %3106 = vmatprep.subr.mxu0 0.0
        %3107 = vmatpush1.msra.mxu0 %v3066
        %3108 = vmatprep.subr.mxu0 0.0
        %3109 = vmatpush1.msra.mxu0 %v3065
        %3110 = vmatprep.subr.mxu0 0.0
        %3111 = vmatpush1.msra.mxu0 %v3064
        %3112 = vmatprep.subr.mxu0 0.0
        %3113 = vmatpush2.msra.mxu0 0.0
        %3114 = vmatprep.subr.mxu0 0.0
        %3115 = vmatpush2.msra.mxu0 0.0
        %3116 = vmatprep.subr.mxu0 0.0
        %3117 = vmatpush2.msra.mxu0 0.0
        %3118 = vmatprep.subr.mxu0 0.0
        %3119 = vmatpush2.msra.mxu0 0.0
        %3120 = vmatprep.subr.mxu0 0.0
        %3121 = vmatpush2.msra.mxu0 0.0
        %3122 = vmatprep.subr.mxu0 0.0
        %3123 = vmatpush2.msra.mxu0 0.0
        %3124 = vmatprep.subr.mxu0 0.0
        %3125 = vmatpush2.msra.mxu0 0.0
        %3126 = vmatprep.subr.mxu0 0.0
        %3127 = vmatpush2.msra.mxu0 0.0
        %3128 = vmatprep.subr.mxu0 0.0
        %3129 = vmatpush2.msra.mxu0 0.0
        %3130 = vmatprep.subr.mxu0 0.0
        %3131 = vmatpush2.msra.mxu0 0.0
        %3132 = vmatprep.subr.mxu0 0.0
        %3133 = vmatpush2.msra.mxu0 0.0
        %3134 = vmatprep.subr.mxu0 0.0
        %3135 = vmatpush2.msra.mxu0 0.0
        %3136 = vmatprep.subr.mxu0 0.0
        %3137 = vmatpush2.msra.mxu0 0.0
        %3138 = vmatprep.subr.mxu0 0.0
        %3139 = vmatpush2.msra.mxu0 0.0
        %3140 = vmatprep.subr.mxu0 0.0
        %3141 = vmatpush2.msra.mxu0 0.0
        %3142 = vmatprep.subr.mxu0 0.0
        %3143 = vmatpush2.msra.mxu0 0.0
        %3144 = vmatprep.mubr.f32.mxu0 0.0
        %3145 = vmatmul.mubr.f32.gmra.mxu0 %v3078
        %v3146 = vpop.f32.mrf.mxu0
        %v3147 = vadd.f32 %v3075, %v3146
        %v3148 = vpop.f32.mrf.mxu0
        %3149 = vdwg.mxu0
        %v3150 = vadd.f32 %v2981, %v3147
        %v3151 = vsel %vm707, %v3150, 0.0
        %3152 = vadd.xlane.f32.xlu0 %v3151
        %v3153 = vpop.xlane.xlu0 %3152
        %v3154 = vmul.f32 %v3153, %v1756
        %v3155 = vsub.f32 %v3150, %v3154
        %v3156 = vmul.f32 %v3155, %v3155
        %v3157 = vsel %vm707, %v3156, 0.0
        %3158 = vadd.xlane.f32.xlu0 %v3157
        %v3159 = vpop.xlane.xlu0 %3158
        %v3160 = vmul.f32 %v3159, %v1756
        %v3161 = vadd.f32 %v3160, 1e-05
        %v3162 = vrsqrt.pop %v3161
        %v3163 = vmul.f32 %v3155, %v3162
        %v3164 = vlaneseq
        %v3165 = vshrl.u32 %v3164, 7
        %v3166 = vsub.s32 3, %v3165
        %v3167 = vrot.slane %v692, %v3166
        %v3168 = vmul.f32 %v3163, %v3167
        %v3169 = vlaneseq
        %v3170 = vshrl.u32 %v3169, 7
        %v3171 = vsub.s32 4, %v3170
        %v3172 = vrot.slane %v692, %v3171
        %v3173 = vadd.f32 %v3168, %v3172
        %3174 = vst.msk [vmem:[#allocation2] sm:$0xff] %vm707, %v3173
        %p3175 = scmp.eq.s32.totalorder %s34, 1
        // Predicated region
        $region77: #{_lambda_.5} parent=71 // pred_check
          %p3176 = pneg %p3175
        $region78: #{_lambda_.5} parent=71 // pred_check_branch
          %3178 = sbr.rel (%p3176) target = $region80
        $region79: #{_lambda_.5} parent=71 // pred_region
          %v3179 = vmul.f32 %v2952, 0.25
          %v3180 = vmax.f32 %v3179, 1e-07
          %v3181 = vmin.f32 %v3180, 0.9999999
          %v3182 = vlog2.pop %v3181
          %v3183 = vmul.f32 %v3182, 0.6931472
          %vm3184 = vcmask 97312
          %v3185 = vsel %vm3184, %v3183, -inf
          %3186 = vmax.xlane.f32.xlu0 %v3185
          %v3187 = vpop.xlane.xlu0 %3186
          %v3188 = vsub.f32 %v3183, %v3187
          %v3189 = vmul.f32 %v3188, 1.442695
          %v3190 = vpow.pop %v3189
          %3192 = vrot.lane.b32.xlu0 %v3190, 124
          %v3193 = vpop.permute.xlu0 %3192
          %v3195 = vsel %vm788, %v3193, 0.0
          %3196 = vadd.xlane.f32.xlu0 %v3195
          %v3197 = vpop.xlane.xlu0 %3196
          %v3198 = vlog2.pop %v3197
          %v3199 = vmul.f32 %v3198, 0.6931472
          %v3200 = vsub.f32 %v3188, %v3199
          %3202 = vrot.lane.b32.xlu0 %v3200, 124
          %v3203 = vpop.permute.xlu0 %3202
          %3205 = vst.msk [vmem:[%s623] sm:$0xff] %vm788, %v3203
          %v3206 = vld [vmem:[%s11] sm:$0xff]
          %v3207 = vld [vmem:[%s11 + $0x8] sm:$0xff]
          %v3208 = vld [vmem:[%s11 + $0x10] sm:$0xff]
          %v3209 = vld [vmem:[%s11 + $0x18] sm:$0xff]
          %v3210 = vld [vmem:[%s12] sm:$0x1]
          %v3212 = vlaneseq
          %v3213 = vshrl.u32 %v3212, 7
          %v3214 = vsub.s32 0, %v3213
          %v3215 = vrot.slane %v3210, %v3214
          %v3218 = vsel %vm707, %v3173, 0
          %3220 = vmatprep.subr.mxu0 0.0
          %3221 = vmatpush1.msra.mxu0 0.0
          %3222 = vmatprep.subr.mxu0 0.0
          %3223 = vmatpush1.msra.mxu0 0.0
          %3224 = vmatprep.subr.mxu0 0.0
          %3225 = vmatpush1.msra.mxu0 0.0
          %3226 = vmatprep.subr.mxu0 0.0
          %3227 = vmatpush1.msra.mxu0 0.0
          %3228 = vmatprep.subr.mxu0 0.0
          %3229 = vmatpush1.msra.mxu0 0.0
          %3230 = vmatprep.subr.mxu0 0.0
          %3231 = vmatpush1.msra.mxu0 0.0
          %3232 = vmatprep.subr.mxu0 0.0
          %3233 = vmatpush1.msra.mxu0 0.0
          %3234 = vmatprep.subr.mxu0 0.0
          %3235 = vmatpush1.msra.mxu0 0.0
          %3236 = vmatprep.subr.mxu0 0.0
          %3237 = vmatpush1.msra.mxu0 0.0
          %3238 = vmatprep.subr.mxu0 0.0
          %3239 = vmatpush1.msra.mxu0 0.0
          %3240 = vmatprep.subr.mxu0 0.0
          %3241 = vmatpush1.msra.mxu0 0.0
          %3242 = vmatprep.subr.mxu0 0.0
          %3243 = vmatpush1.msra.mxu0 0.0
          %3244 = vmatprep.subr.mxu0 0.0
          %3245 = vmatpush1.msra.mxu0 %v3209
          %3246 = vmatprep.subr.mxu0 0.0
          %3247 = vmatpush1.msra.mxu0 %v3208
          %3248 = vmatprep.subr.mxu0 0.0
          %3249 = vmatpush1.msra.mxu0 %v3207
          %3250 = vmatprep.subr.mxu0 0.0
          %3251 = vmatpush1.msra.mxu0 %v3206
          %3252 = vmatprep.subr.mxu0 0.0
          %3253 = vmatpush2.msra.mxu0 0.0
          %3254 = vmatprep.subr.mxu0 0.0
          %3255 = vmatpush2.msra.mxu0 0.0
          %3256 = vmatprep.subr.mxu0 0.0
          %3257 = vmatpush2.msra.mxu0 0.0
          %3258 = vmatprep.subr.mxu0 0.0
          %3259 = vmatpush2.msra.mxu0 0.0
          %3260 = vmatprep.subr.mxu0 0.0
          %3261 = vmatpush2.msra.mxu0 0.0
          %3262 = vmatprep.subr.mxu0 0.0
          %3263 = vmatpush2.msra.mxu0 0.0
          %3264 = vmatprep.subr.mxu0 0.0
          %3265 = vmatpush2.msra.mxu0 0.0
          %3266 = vmatprep.subr.mxu0 0.0
          %3267 = vmatpush2.msra.mxu0 0.0
          %3268 = vmatprep.subr.mxu0 0.0
          %3269 = vmatpush2.msra.mxu0 0.0
          %3270 = vmatprep.subr.mxu0 0.0
          %3271 = vmatpush2.msra.mxu0 0.0
          %3272 = vmatprep.subr.mxu0 0.0
          %3273 = vmatpush2.msra.mxu0 0.0
          %3274 = vmatprep.subr.mxu0 0.0
          %3275 = vmatpush2.msra.mxu0 0.0
          %3276 = vmatprep.subr.mxu0 0.0
          %3277 = vmatpush2.msra.mxu0 0.0
          %3278 = vmatprep.subr.mxu0 0.0
          %3279 = vmatpush2.msra.mxu0 0.0
          %3280 = vmatprep.subr.mxu0 0.0
          %3281 = vmatpush2.msra.mxu0 0.0
          %3282 = vmatprep.subr.mxu0 0.0
          %3283 = vmatpush2.msra.mxu0 0.0
          %3284 = vmatprep.mubr.f32.mxu0 0.0
          %3285 = vmatmul.mubr.f32.gmra.mxu0 %v3218
          %v3286 = vpop.f32.mrf.mxu0
          %v3287 = vadd.f32 %v3215, %v3286
          %v3288 = vpop.f32.mrf.mxu0
          %3289 = vdwg.mxu0
          %vm3290 = vcmask 23552
          %v3291 = vsel %vm3290, %v3287, -inf
          %3292 = vmax.xlane.f32.xlu0 %v3291
          %v3293 = vpop.xlane.xlu0 %3292
          %v3294 = vsub.f32 %v3287, %v3293
          %v3295 = vmul.f32 %v3294, 1.442695
          %v3296 = vpow.pop %v3295
          %v3297 = vsel %vm3290, %v3296, 0.0
          %3298 = vadd.xlane.f32.xlu0 %v3297
          %v3299 = vpop.xlane.xlu0 %3298
          %v3300 = vlog2.pop %v3299
          %v3301 = vmul.f32 %v3300, 0.6931472
          %v3302 = vsub.f32 %v3294, %v3301
          %vm3303 = vcmask 154648
          %v3304 = vsel %vm3303, %v3287, -inf
          %3305 = vmax.xlane.f32.xlu0 %v3304
          %v3306 = vpop.xlane.xlu0 %3305
          %v3307 = vsub.f32 %v3287, %v3306
          %v3308 = vmul.f32 %v3307, 1.442695
          %v3309 = vpow.pop %v3308
          %3311 = vrot.lane.b32.xlu0 %v3309, 125
          %v3312 = vpop.permute.xlu0 %3311
          %vm3314 = vcmask 130048
          %v3315 = vsel %vm3314, %v3312, 0.0
          %3316 = vadd.xlane.f32.xlu0 %v3315
          %v3317 = vpop.xlane.xlu0 %3316
          %v3318 = vlog2.pop %v3317
          %v3319 = vmul.f32 %v3318, 0.6931472
          %v3320 = vsub.f32 %v3307, %v3319
          %v3321 = vsel %vm3290, %v3302, %v3320
          %vm3322 = vcmask 154624
          %3323 = vst.msk [vmem:[%s679] sm:$0xff] %vm3322, %v3321
        $region80: #{_lambda_.5} parent=71 // pred_fallthru
          _
        %p3324 = scmp.lt.s32.totalorder %s33, 1
        %s3325 = scalar_select %p3324, %s33, 1
        %s3326 = smul.addr %s3325, 8
        %s3327 = scalar_lea.vmem %s13, %s3326
        %s3328 = sand.u32 %s403, 1
        %s3329 = scalar_lea.sflag [#allocation4], %s3328
        %s3330 = sand.u32 %s403, 1
        %s3331 = smul.addr %s3330, 8
        %s3332 = scalar_lea.vmem [#allocation3], %s3331
        // Predicated region
        $region81: #{_lambda_.5} parent=71 // pred_check
          %p3333 = pneg %p387
        $region82: #{_lambda_.5} parent=71 // pred_check_branch
          %3335 = sbr.rel (%p3333) target = $region84
        $region83: #{_lambda_.5} parent=71 // pred_region
          _
        $region84: #{_lambda_.5} parent=71 // pred_fallthru
          _
        // Predicated region
        $region85: #{_lambda_.5} parent=71 // pred_check
          %p3336 = pneg %p413
        $region86: #{_lambda_.5} parent=71 // pred_check_branch
          %3338 = sbr.rel (%p3336) target = $region88
        $region87: #{_lambda_.5} parent=71 // pred_region
          %s3340 = ssub.s32 128, 128
          %3341 = vsyncadd %s3329, %s3340
          %s3342 = smul.addr %s33, 128
          %s3343 = scalar_lea.hbm %s14, %s3342
          %s3345 = sshll.u32 %s3332, 4
          %s3346 = int_to_ptr.vmem [resolvable:$true] %s3345
          %3348 = dma.vmem_to_hbm [thread:$0]  %s3346, 128, %s3343, %s3329
        $region88: #{_lambda_.5} parent=71 // pred_fallthru
          _
      $region72: #{_lambda_.5} parent=5 // pred_fallthru
        _
      %p3349 = scmp.le.s32.totalorder 2, %s24
      // Predicated region
      $region89: #{_lambda_.5} parent=5 // pred_check
        %p3350 = pneg %p3349
      $region90: #{_lambda_.5} parent=5 // pred_check_branch
        %3352 = sbr.rel (%p3350) target = $region92
      $region91: #{_lambda_.5} parent=5 // pred_region
        %s3353 = ssub.s32 %s24, 2
        // Predicated region
        $region93: #{_lambda_.5} parent=91 // pred_check
          %p3354 = pneg %p393
        $region94: #{_lambda_.5} parent=91 // pred_check_branch
          %3356 = sbr.rel (%p3354) target = $region96
        $region95: #{_lambda_.5} parent=91 // pred_region
          %p3357 = scmp.lt.s32.totalorder %s35, 1
          %s3358 = scalar_select %p3357, %s35, 1
          %s3359 = smul.addr %s3358, 8
          %s3360 = scalar_lea.vmem %s13, %s3359
        $region96: #{_lambda_.5} parent=91 // pred_fallthru
          _
        // Predicated region
        $region97: #{_lambda_.5} parent=91 // pred_check
          %p3361 = pneg %p419
        $region98: #{_lambda_.5} parent=91 // pred_check_branch
          %3363 = sbr.rel (%p3361) target = $region100
        $region99: #{_lambda_.5} parent=91 // pred_region
          %s3364 = sand.u32 %s404, 1
          %s3365 = scalar_lea.sflag [#allocation4], %s3364
          %s3366 = sand.u32 %s404, 1
          %s3367 = smul.addr %s3366, 8
          %s3368 = scalar_lea.vmem [#allocation3], %s3367
          %3369 = dma.done %s3365, 128
        $region100: #{_lambda_.5} parent=91 // pred_fallthru
          _
      $region92: #{_lambda_.5} parent=5 // pred_fallthru
        _
    $region6: #{_lambda_.5} parent=1 // loop_footer
      %s28 = sadd.s32 1, %s24
    $region7: #{_lambda_.5} parent=1 // loop_footer_branch
      %23 = sbr.rel target = $region3
    $region8: #{_lambda_.5} parent=1 // loop_exit
      _
    %3370 = vsyncpa [#allocation4], 1
    %s3371 = scalar_lea.sflag [#allocation4], 1
    %3372 = vsyncpa %s3371, 1

</llo_original>
